<compile_context>
chip_gen: v7x
topology: tpu7x:2x2x1
jax: 0.10.0
libtpu: 0.0.40
codegen_flags: <defaults>
</compile_context>

<pallas_src>
import jax
import jax.numpy as jnp
from jax import lax
from jax.experimental import pallas as pl
from jax.experimental.pallas import tpu as pltpu

H, W = 14, 14
HW = H * W                      # 196
C_IN = 240
C_OUT = 48
EPS = 1e-5

C_BLK = 40                      # channel strip size (240 = 6 * 40)
N_BLK = C_IN // C_BLK
PAD_OFF = 128                   # lane offset of valid data inside the scratch (aligned)
PAD_W = 384                     # scratch lane width (>= PAD_OFF + HW + 15)
HALO = 16                       # zero-halo lanes actually read on each side


def _fused_kernel(x_ref, s1_ref, b1_ref, wd_ref, b2_ref, w1s_ref,
                  ml_ref, mr_ref, o_ref, apad_ref):
    # x_ref:   (240, 196)     input activations, channel-major
    # s1/b1:   (240, 1)       folded BN1 scale / bias
    # wd_ref:  (9, 240, 1)    depthwise 3x3 taps, tap-major, BN2 scale pre-folded
    # b2_ref:  (240, 1)       folded BN2 bias
    # w1s_ref: (6, 48, 40)    1x1 conv weights pre-split per channel strip
    # ml/mr:   (1, 196)       column-boundary masks for dc = -1 / +1 taps
    # o_ref:   (48, 196)      output (lane-dense, already NCHW-flat)
    # apad_ref:(40, 384)      VMEM scratch, one channel strip with zero halos

    ml = ml_ref[...]            # 1.0 where col >= 1   (taps with dc == -1)
    mr = mr_ref[...]            # 1.0 where col <= 12  (taps with dc == +1)

    # Zero only the halo lanes actually read (16 each side); once per grid step.
    apad_ref[:, PAD_OFF - HALO:PAD_OFF] = jnp.zeros((C_BLK, HALO), jnp.float32)
    apad_ref[:, PAD_OFF + HW:PAD_OFF + HW + HALO] = jnp.zeros(
        (C_BLK, HALO), jnp.float32)

    for s in range(N_BLK):
        c0 = s * C_BLK
        cs = pl.ds(c0, C_BLK)

        # ---- BN1 + ReLU for this channel strip ----
        a = jnp.maximum(x_ref[cs, :] * s1_ref[cs, :] + b1_ref[cs, :], 0.0)

        # ---- lane-aligned interior store; halos stay zero ----
        apad_ref[:, PAD_OFF:PAD_OFF + HW] = a

        def w(k):
            return wd_ref[k, cs, :]                 # (C_BLK, 1)

        def sh(off):
            return apad_ref[:, off:off + HW]        # shifted neighbourhood read

        # ---- depthwise 3x3 (stride 1, pad 1, groups=C); BN2 scale folded ----
        # Vertical out-of-image reads hit the zero halo; horizontal ones are
        # masked once per column-shift group.
        acc = a * w(4)
        acc = acc + sh(PAD_OFF - W) * w(1)          # (dr=-1, dc= 0)
        acc = acc + sh(PAD_OFF + W) * w(7)          # (dr=+1, dc= 0)

        left = sh(PAD_OFF - W - 1) * w(0)           # (dr=-1, dc=-1)
        left = left + sh(PAD_OFF - 1) * w(3)        # (dr= 0, dc=-1)
        left = left + sh(PAD_OFF + W - 1) * w(6)    # (dr=+1, dc=-1)
        acc = acc + ml * left

        right = sh(PAD_OFF - W + 1) * w(2)          # (dr=-1, dc=+1)
        right = right + sh(PAD_OFF + 1) * w(5)      # (dr= 0, dc=+1)
        right = right + sh(PAD_OFF + W + 1) * w(8)  # (dr=+1, dc=+1)
        acc = acc + mr * right

        # ---- BN2 bias + ReLU (scale already folded into the taps) ----
        z = jnp.maximum(acc + b2_ref[cs, :], 0.0)

        # ---- partial 1x1 conv for this K-strip: (48,40) @ (40,196) on MXU ----
        part = jnp.dot(w1s_ref[s], z, preferred_element_type=jnp.float32)
        if s == 0:
            o_ref[...] = part
        else:
            o_ref[...] = o_ref[...] + part


def fused_block(x_nchw, bn1, wd, bn2, w1x1):
    """x_nchw: (B, 240, 14, 14) f32 -> (B, 48, 14, 14) f32 (eval-mode BN)."""
    B = x_nchw.shape[0]
    g1, be1, m1, v1 = bn1
    g2, be2, m2, v2 = bn2

    # Fold eval-mode BN into per-channel scale / bias.
    s1 = g1 / jnp.sqrt(v1 + EPS)
    b1 = be1 - m1 * s1
    s2 = g2 / jnp.sqrt(v2 + EPS)
    b2 = be2 - m2 * s2

    # BN2 scale folds into the depthwise weights; only its bias stays additive.
    wd_taps = (wd.reshape(C_IN, 9) * s2[:, None]).T.reshape(9, C_IN, 1)

    # 1x1 weights pre-split per channel strip: (48,240) -> (6, 48, 40) so the
    # kernel never does unaligned lane slices of the weight matrix.
    w1s = w1x1.reshape(C_OUT, C_IN).reshape(C_OUT, N_BLK, C_BLK).transpose(1, 0, 2)

    # Column-boundary masks for the horizontal (dc = +/-1) taps (tiny, weight-like).
    col = jnp.arange(HW, dtype=jnp.int32) % W
    mask_l = (col >= 1).astype(jnp.float32).reshape(1, HW)
    mask_r = (col <= W - 2).astype(jnp.float32).reshape(1, HW)

    x2 = x_nchw.reshape(B, C_IN, HW)                # free reshape, no transpose

    flops = B * (2 * C_OUT * C_IN * HW              # 1x1 conv
                 + 2 * 9 * C_IN * HW                # depthwise 3x3
                 + 10 * C_IN * HW)                  # BN/ReLU/masks
    bytes_accessed = (B * (C_IN * HW + C_OUT * HW) * 4
                      + (9 * C_IN + 3 * C_IN + C_OUT * C_IN + 2 * HW) * 4)

    out = pl.pallas_call(
        _fused_kernel,
        out_shape=jax.ShapeDtypeStruct((B, C_OUT, HW), jnp.float32),
        grid=(B,),
        in_specs=[
            pl.BlockSpec((None, C_IN, HW), lambda b: (b, 0, 0)),       # x
            pl.BlockSpec((C_IN, 1), lambda b: (0, 0)),                 # s1
            pl.BlockSpec((C_IN, 1), lambda b: (0, 0)),                 # b1
            pl.BlockSpec((9, C_IN, 1), lambda b: (0, 0, 0)),           # dw taps
            pl.BlockSpec((C_IN, 1), lambda b: (0, 0)),                 # b2
            pl.BlockSpec((N_BLK, C_OUT, C_BLK), lambda b: (0, 0, 0)),  # w1 strips
            pl.BlockSpec((1, HW), lambda b: (0, 0)),                   # mask_l
            pl.BlockSpec((1, HW), lambda b: (0, 0)),                   # mask_r
        ],
        out_specs=pl.BlockSpec((None, C_OUT, HW), lambda b: (b, 0, 0)),
        scratch_shapes=[pltpu.VMEM((C_BLK, PAD_W), jnp.float32)],
        compiler_params=pltpu.CompilerParams(
            dimension_semantics=("parallel",)),
        cost_estimate=pl.CostEstimate(
            flops=flops, transcendentals=0, bytes_accessed=bytes_accessed),
    )(x2, s1.reshape(C_IN, 1), b1.reshape(C_IN, 1), wd_taps,
      b2.reshape(C_IN, 1), w1s, mask_l, mask_r)

    return out.reshape(B, C_OUT, H, W)


def _reference(x, bn1, wd, bn2, w1x1):
    """Pure-JAX reference (NCHW) for validation."""
    (g1, be1, m1, v1) = bn1
    (g2, be2, m2, v2) = bn2

    def bn(x, g, b, m, v):
        sh = (1, -1, 1, 1)
        return (x - m.reshape(sh)) / jnp.sqrt(v.reshape(sh) + EPS) * g.reshape(sh) + b.reshape(sh)

    a = jax.nn.relu(bn(x, g1, be1, m1, v1))
    dw = lax.conv_general_dilated(
        a, wd, window_strides=(1, 1), padding=[(1, 1), (1, 1)],
        feature_group_count=C_IN,
        dimension_numbers=("NCHW", "OIHW", "NCHW"))
    z = jax.nn.relu(bn(dw, g2, be2, m2, v2))
    return lax.conv_general_dilated(
        z, w1x1, window_strides=(1, 1), padding=[(0, 0), (0, 0)],
        dimension_numbers=("NCHW", "OIHW", "NCHW"))


if __name__ == "__main__":
    key = jax.random.PRNGKey(0)
    keys = jax.random.split(key, 11)

    B = 2   # module spec is batch 1; use 2 to exercise the grid / megacore path
    x = jax.random.normal(keys[0], (B, C_IN, H, W), jnp.float32)

    # BN1 params (gamma, beta, running_mean, running_var)
    bn1 = (1.0 + 0.1 * jax.random.normal(keys[1], (C_IN,), jnp.float32),
           0.1 * jax.random.normal(keys[2], (C_IN,), jnp.float32),
           0.1 * jax.random.normal(keys[3], (C_IN,), jnp.float32),
           jnp.abs(jax.random.normal(keys[4], (C_IN,), jnp.float32)) + 0.5)
    # depthwise conv weight (240, 1, 3, 3)
    wd = 0.1 * jax.random.normal(keys[5], (C_IN, 1, 3, 3), jnp.float32)
    # BN2 params
    bn2 = (1.0 + 0.1 * jax.random.normal(keys[6], (C_IN,), jnp.float32),
           0.1 * jax.random.normal(keys[7], (C_IN,), jnp.float32),
           0.1 * jax.random.normal(keys[8], (C_IN,), jnp.float32),
           jnp.abs(jax.random.normal(keys[9], (C_IN,), jnp.float32)) + 0.5)
    # 1x1 conv weight (48, 240, 1, 1)
    w1x1 = 0.05 * jax.random.normal(keys[10], (C_OUT, C_IN, 1, 1), jnp.float32)

    out = jax.block_until_ready(fused_block(x, bn1, wd, bn2, w1x1))
    ref = jax.block_until_ready(_reference(x, bn1, wd, bn2, w1x1))

    assert out.shape == (B, C_OUT, H, W), out.shape
    max_err = float(jnp.max(jnp.abs(out - ref)))
    assert jnp.allclose(out, ref, atol=2e-4, rtol=2e-4), max_err
    print("KERNEL_OK")
</pallas_src>

<mosaic_0001>
module attributes {stable_mosaic.version = 11 : i64} {
  func.func @_fused_kernel(%arg0: i32, %arg1: memref<1x240x196xf32, #tpu.memory_space<vmem>>, %arg2: memref<240x1xf32, #tpu.memory_space<vmem>>, %arg3: memref<240x1xf32, #tpu.memory_space<vmem>>, %arg4: memref<9x240x1xf32, #tpu.memory_space<vmem>>, %arg5: memref<240x1xf32, #tpu.memory_space<vmem>>, %arg6: memref<6x48x40xf32, #tpu.memory_space<vmem>>, %arg7: memref<1x196xf32, #tpu.memory_space<vmem>>, %arg8: memref<1x196xf32, #tpu.memory_space<vmem>>, %arg9: memref<1x48x196xf32, #tpu.memory_space<vmem>>, %arg10: memref<40x384xf32, #tpu.memory_space<vmem>>) attributes {dimension_semantics = [#tpu.dimension_semantics<parallel>], iteration_bounds = array<i64: 2>, scalar_prefetch = 0 : i64, scratch_operands = 1 : i64, tpu.core_type = #tpu.core_type<tc>, window_params = [{transform_indices = @transform_0, window_bounds = array<i64: 1, 240, 196>}, {pipeline_mode = #tpu.pipeline_mode<synchronous>, transform_indices = @transform_1, window_bounds = array<i64: 240, 1>}, {pipeline_mode = #tpu.pipeline_mode<synchronous>, transform_indices = @transform_2, window_bounds = array<i64: 240, 1>}, {pipeline_mode = #tpu.pipeline_mode<synchronous>, transform_indices = @transform_3, window_bounds = array<i64: 9, 240, 1>}, {pipeline_mode = #tpu.pipeline_mode<synchronous>, transform_indices = @transform_4, window_bounds = array<i64: 240, 1>}, {pipeline_mode = #tpu.pipeline_mode<synchronous>, transform_indices = @transform_5, window_bounds = array<i64: 6, 48, 40>}, {pipeline_mode = #tpu.pipeline_mode<synchronous>, transform_indices = @transform_6, window_bounds = array<i64: 1, 196>}, {pipeline_mode = #tpu.pipeline_mode<synchronous>, transform_indices = @transform_7, window_bounds = array<i64: 1, 196>}, {transform_indices = @transform_8, window_bounds = array<i64: 1, 48, 196>}]} {
    %c0 = arith.constant 0 : index
    %c0_0 = arith.constant 0 : index
    %0 = vector.load %arg7[%c0, %c0_0] : memref<1x196xf32, #tpu.memory_space<vmem>>, vector<1x196xf32>
    %c0_1 = arith.constant 0 : index
    %c0_2 = arith.constant 0 : index
    %1 = vector.load %arg8[%c0_1, %c0_2] : memref<1x196xf32, #tpu.memory_space<vmem>>, vector<1x196xf32>
    %cst = arith.constant 0.000000e+00 : f32
    %2 = vector.broadcast %cst : f32 to vector<40x16xf32>
    %c0_3 = arith.constant 0 : index
    %c112 = arith.constant 112 : index
    %3 = vector.load %arg10[%c0_3, %c112] : memref<40x384xf32, #tpu.memory_space<vmem>>, vector<40x16xf32>
    tpu.vector_store %arg10[%c0_3, %c112], %2 {strides = array<i32>} : memref<40x384xf32, #tpu.memory_space<vmem>>, vector<40x16xf32>,
    %cst_4 = arith.constant 0.000000e+00 : f32
    %4 = vector.broadcast %cst_4 : f32 to vector<40x16xf32>
    %c0_5 = arith.constant 0 : index
    %c324 = arith.constant 324 : index
    %5 = vector.load %arg10[%c0_5, %c324] : memref<40x384xf32, #tpu.memory_space<vmem>>, vector<40x16xf32>
    tpu.vector_store %arg10[%c0_5, %c324], %4 {strides = array<i32>} : memref<40x384xf32, #tpu.memory_space<vmem>>, vector<40x16xf32>,
    %c0_6 = arith.constant 0 : index
    %c0_7 = arith.constant 0 : index
    %c0_8 = arith.constant 0 : index
    %6 = vector.load %arg1[%c0_6, %c0_7, %c0_8] : memref<1x240x196xf32, #tpu.memory_space<vmem>>, vector<1x40x196xf32>
    %7 = vector.shape_cast %6 : vector<1x40x196xf32> to vector<40x196xf32>
    %c0_9 = arith.constant 0 : index
    %c0_10 = arith.constant 0 : index
    %8 = vector.load %arg2[%c0_9, %c0_10] : memref<240x1xf32, #tpu.memory_space<vmem>>, vector<40x1xf32>
    %9 = vector.broadcast %8 : vector<40x1xf32> to vector<40x196xf32>
    %10 = arith.mulf %7, %9 : vector<40x196xf32>
    %c0_11 = arith.constant 0 : index
    %c0_12 = arith.constant 0 : index
    %11 = vector.load %arg3[%c0_11, %c0_12] : memref<240x1xf32, #tpu.memory_space<vmem>>, vector<40x1xf32>
    %12 = vector.broadcast %11 : vector<40x1xf32> to vector<40x196xf32>
    %13 = arith.addf %10, %12 : vector<40x196xf32>
    %cst_13 = arith.constant 0.000000e+00 : f32
    %14 = vector.broadcast %cst_13 : f32 to vector<40x196xf32>
    %15 = arith.maximumf %13, %14 : vector<40x196xf32>
    %c0_14 = arith.constant 0 : index
    %c128 = arith.constant 128 : index
    %16 = vector.load %arg10[%c0_14, %c128] : memref<40x384xf32, #tpu.memory_space<vmem>>, vector<40x196xf32>
    tpu.vector_store %arg10[%c0_14, %c128], %15 {strides = array<i32>} : memref<40x384xf32, #tpu.memory_space<vmem>>, vector<40x196xf32>,
    %c4 = arith.constant 4 : index
    %c0_15 = arith.constant 0 : index
    %c0_16 = arith.constant 0 : index
    %17 = vector.load %arg4[%c4, %c0_15, %c0_16] : memref<9x240x1xf32, #tpu.memory_space<vmem>>, vector<1x40x1xf32>
    %18 = vector.shape_cast %17 : vector<1x40x1xf32> to vector<40x1xf32>
    %19 = vector.broadcast %18 : vector<40x1xf32> to vector<40x196xf32>
    %20 = arith.mulf %15, %19 : vector<40x196xf32>
    %c0_17 = arith.constant 0 : index
    %c114 = arith.constant 114 : index
    %21 = vector.load %arg10[%c0_17, %c114] : memref<40x384xf32, #tpu.memory_space<vmem>>, vector<40x196xf32>
    %c1 = arith.constant 1 : index
    %c0_18 = arith.constant 0 : index
    %c0_19 = arith.constant 0 : index
    %22 = vector.load %arg4[%c1, %c0_18, %c0_19] : memref<9x240x1xf32, #tpu.memory_space<vmem>>, vector<1x40x1xf32>
    %23 = vector.shape_cast %22 : vector<1x40x1xf32> to vector<40x1xf32>
    %24 = vector.broadcast %23 : vector<40x1xf32> to vector<40x196xf32>
    %25 = arith.mulf %21, %24 : vector<40x196xf32>
    %26 = arith.addf %20, %25 : vector<40x196xf32>
    %c0_20 = arith.constant 0 : index
    %c142 = arith.constant 142 : index
    %27 = vector.load %arg10[%c0_20, %c142] : memref<40x384xf32, #tpu.memory_space<vmem>>, vector<40x196xf32>
    %c7 = arith.constant 7 : index
    %c0_21 = arith.constant 0 : index
    %c0_22 = arith.constant 0 : index
    %28 = vector.load %arg4[%c7, %c0_21, %c0_22] : memref<9x240x1xf32, #tpu.memory_space<vmem>>, vector<1x40x1xf32>
    %29 = vector.shape_cast %28 : vector<1x40x1xf32> to vector<40x1xf32>
    %30 = vector.broadcast %29 : vector<40x1xf32> to vector<40x196xf32>
    %31 = arith.mulf %27, %30 : vector<40x196xf32>
    %32 = arith.addf %26, %31 : vector<40x196xf32>
    %c0_23 = arith.constant 0 : index
    %c113 = arith.constant 113 : index
    %33 = vector.load %arg10[%c0_23, %c113] : memref<40x384xf32, #tpu.memory_space<vmem>>, vector<40x196xf32>
    %c0_24 = arith.constant 0 : index
    %c0_25 = arith.constant 0 : index
    %c0_26 = arith.constant 0 : index
    %34 = vector.load %arg4[%c0_24, %c0_25, %c0_26] : memref<9x240x1xf32, #tpu.memory_space<vmem>>, vector<1x40x1xf32>
    %35 = vector.shape_cast %34 : vector<1x40x1xf32> to vector<40x1xf32>
    %36 = vector.broadcast %35 : vector<40x1xf32> to vector<40x196xf32>
    %37 = arith.mulf %33, %36 : vector<40x196xf32>
    %c0_27 = arith.constant 0 : index
    %c127 = arith.constant 127 : index
    %38 = vector.load %arg10[%c0_27, %c127] : memref<40x384xf32, #tpu.memory_space<vmem>>, vector<40x196xf32>
    %c3 = arith.constant 3 : index
    %c0_28 = arith.constant 0 : index
    %c0_29 = arith.constant 0 : index
    %39 = vector.load %arg4[%c3, %c0_28, %c0_29] : memref<9x240x1xf32, #tpu.memory_space<vmem>>, vector<1x40x1xf32>
    %40 = vector.shape_cast %39 : vector<1x40x1xf32> to vector<40x1xf32>
    %41 = vector.broadcast %40 : vector<40x1xf32> to vector<40x196xf32>
    %42 = arith.mulf %38, %41 : vector<40x196xf32>
    %43 = arith.addf %37, %42 : vector<40x196xf32>
    %c0_30 = arith.constant 0 : index
    %c141 = arith.constant 141 : index
    %44 = vector.load %arg10[%c0_30, %c141] : memref<40x384xf32, #tpu.memory_space<vmem>>, vector<40x196xf32>
    %c6 = arith.constant 6 : index
    %c0_31 = arith.constant 0 : index
    %c0_32 = arith.constant 0 : index
    %45 = vector.load %arg4[%c6, %c0_31, %c0_32] : memref<9x240x1xf32, #tpu.memory_space<vmem>>, vector<1x40x1xf32>
    %46 = vector.shape_cast %45 : vector<1x40x1xf32> to vector<40x1xf32>
    %47 = vector.broadcast %46 : vector<40x1xf32> to vector<40x196xf32>
    %48 = arith.mulf %44, %47 : vector<40x196xf32>
    %49 = arith.addf %43, %48 : vector<40x196xf32>
    %50 = vector.broadcast %0 : vector<1x196xf32> to vector<40x196xf32>
    %51 = arith.mulf %50, %49 : vector<40x196xf32>
    %52 = arith.addf %32, %51 : vector<40x196xf32>
    %c0_33 = arith.constant 0 : index
    %c115 = arith.constant 115 : index
    %53 = vector.load %arg10[%c0_33, %c115] : memref<40x384xf32, #tpu.memory_space<vmem>>, vector<40x196xf32>
    %c2 = arith.constant 2 : index
    %c0_34 = arith.constant 0 : index
    %c0_35 = arith.constant 0 : index
    %54 = vector.load %arg4[%c2, %c0_34, %c0_35] : memref<9x240x1xf32, #tpu.memory_space<vmem>>, vector<1x40x1xf32>
    %55 = vector.shape_cast %54 : vector<1x40x1xf32> to vector<40x1xf32>
    %56 = vector.broadcast %55 : vector<40x1xf32> to vector<40x196xf32>
    %57 = arith.mulf %53, %56 : vector<40x196xf32>
    %c0_36 = arith.constant 0 : index
    %c129 = arith.constant 129 : index
    %58 = vector.load %arg10[%c0_36, %c129] : memref<40x384xf32, #tpu.memory_space<vmem>>, vector<40x196xf32>
    %c5 = arith.constant 5 : index
    %c0_37 = arith.constant 0 : index
    %c0_38 = arith.constant 0 : index
    %59 = vector.load %arg4[%c5, %c0_37, %c0_38] : memref<9x240x1xf32, #tpu.memory_space<vmem>>, vector<1x40x1xf32>
    %60 = vector.shape_cast %59 : vector<1x40x1xf32> to vector<40x1xf32>
    %61 = vector.broadcast %60 : vector<40x1xf32> to vector<40x196xf32>
    %62 = arith.mulf %58, %61 : vector<40x196xf32>
    %63 = arith.addf %57, %62 : vector<40x196xf32>
    %c0_39 = arith.constant 0 : index
    %c143 = arith.constant 143 : index
    %64 = vector.load %arg10[%c0_39, %c143] : memref<40x384xf32, #tpu.memory_space<vmem>>, vector<40x196xf32>
    %c8 = arith.constant 8 : index
    %c0_40 = arith.constant 0 : index
    %c0_41 = arith.constant 0 : index
    %65 = vector.load %arg4[%c8, %c0_40, %c0_41] : memref<9x240x1xf32, #tpu.memory_space<vmem>>, vector<1x40x1xf32>
    %66 = vector.shape_cast %65 : vector<1x40x1xf32> to vector<40x1xf32>
    %67 = vector.broadcast %66 : vector<40x1xf32> to vector<40x196xf32>
    %68 = arith.mulf %64, %67 : vector<40x196xf32>
    %69 = arith.addf %63, %68 : vector<40x196xf32>
    %70 = vector.broadcast %1 : vector<1x196xf32> to vector<40x196xf32>
    %71 = arith.mulf %70, %69 : vector<40x196xf32>
    %72 = arith.addf %52, %71 : vector<40x196xf32>
    %c0_42 = arith.constant 0 : index
    %c0_43 = arith.constant 0 : index
    %73 = vector.load %arg5[%c0_42, %c0_43] : memref<240x1xf32, #tpu.memory_space<vmem>>, vector<40x1xf32>
    %74 = vector.broadcast %73 : vector<40x1xf32> to vector<40x196xf32>
    %75 = arith.addf %72, %74 : vector<40x196xf32>
    %cst_44 = arith.constant 0.000000e+00 : f32
    %76 = vector.broadcast %cst_44 : f32 to vector<40x196xf32>
    %77 = arith.maximumf %75, %76 : vector<40x196xf32>
    %c0_45 = arith.constant 0 : index
    %c0_46 = arith.constant 0 : index
    %c0_47 = arith.constant 0 : index
    %78 = vector.load %arg6[%c0_45, %c0_46, %c0_47] : memref<6x48x40xf32, #tpu.memory_space<vmem>>, vector<1x48x40xf32>
    %79 = vector.shape_cast %78 : vector<1x48x40xf32> to vector<48x40xf32>
    %cst_48 = arith.constant dense<0.000000e+00> : vector<48x196xf32>
    %80 = tpu.matmul %79, %77, %cst_48 {dimension_numbers = #tpu.dot_dimension_numbers<[1], [0], [0], [1], [0, 0, 1, 1], [], []>} : vector<48x40xf32>, vector<40x196xf32>, vector<48x196xf32> -> vector<48x196xf32>
    %c0_49 = arith.constant 0 : index
    %c0_50 = arith.constant 0 : index
    %c0_51 = arith.constant 0 : index
    %81 = vector.load %arg9[%c0_49, %c0_50, %c0_51] : memref<1x48x196xf32, #tpu.memory_space<vmem>>, vector<1x48x196xf32>
    %82 = vector.shape_cast %81 : vector<1x48x196xf32> to vector<48x196xf32>
    %83 = vector.shape_cast %80 : vector<48x196xf32> to vector<1x48x196xf32>
    tpu.vector_store %arg9[%c0_49, %c0_50, %c0_51], %83 {strides = array<i32>} : memref<1x48x196xf32, #tpu.memory_space<vmem>>, vector<1x48x196xf32>,
    %c0_52 = arith.constant 0 : index
    %c40 = arith.constant 40 : index
    %c0_53 = arith.constant 0 : index
    %84 = vector.load %arg1[%c0_52, %c40, %c0_53] : memref<1x240x196xf32, #tpu.memory_space<vmem>>, vector<1x40x196xf32>
    %85 = vector.shape_cast %84 : vector<1x40x196xf32> to vector<40x196xf32>
    %c40_54 = arith.constant 40 : index
    %c0_55 = arith.constant 0 : index
    %86 = vector.load %arg2[%c40_54, %c0_55] : memref<240x1xf32, #tpu.memory_space<vmem>>, vector<40x1xf32>
    %87 = vector.broadcast %86 : vector<40x1xf32> to vector<40x196xf32>
    %88 = arith.mulf %85, %87 : vector<40x196xf32>
    %c40_56 = arith.constant 40 : index
    %c0_57 = arith.constant 0 : index
    %89 = vector.load %arg3[%c40_56, %c0_57] : memref<240x1xf32, #tpu.memory_space<vmem>>, vector<40x1xf32>
    %90 = vector.broadcast %89 : vector<40x1xf32> to vector<40x196xf32>
    %91 = arith.addf %88, %90 : vector<40x196xf32>
    %cst_58 = arith.constant 0.000000e+00 : f32
    %92 = vector.broadcast %cst_58 : f32 to vector<40x196xf32>
    %93 = arith.maximumf %91, %92 : vector<40x196xf32>
    %c0_59 = arith.constant 0 : index
    %c128_60 = arith.constant 128 : index
    %94 = vector.load %arg10[%c0_59, %c128_60] : memref<40x384xf32, #tpu.memory_space<vmem>>, vector<40x196xf32>
    tpu.vector_store %arg10[%c0_59, %c128_60], %93 {strides = array<i32>} : memref<40x384xf32, #tpu.memory_space<vmem>>, vector<40x196xf32>,
    %c4_61 = arith.constant 4 : index
    %c40_62 = arith.constant 40 : index
    %c0_63 = arith.constant 0 : index
    %95 = vector.load %arg4[%c4_61, %c40_62, %c0_63] : memref<9x240x1xf32, #tpu.memory_space<vmem>>, vector<1x40x1xf32>
    %96 = vector.shape_cast %95 : vector<1x40x1xf32> to vector<40x1xf32>
    %97 = vector.broadcast %96 : vector<40x1xf32> to vector<40x196xf32>
    %98 = arith.mulf %93, %97 : vector<40x196xf32>
    %c0_64 = arith.constant 0 : index
    %c114_65 = arith.constant 114 : index
    %99 = vector.load %arg10[%c0_64, %c114_65] : memref<40x384xf32, #tpu.memory_space<vmem>>, vector<40x196xf32>
    %c1_66 = arith.constant 1 : index
    %c40_67 = arith.constant 40 : index
    %c0_68 = arith.constant 0 : index
    %100 = vector.load %arg4[%c1_66, %c40_67, %c0_68] : memref<9x240x1xf32, #tpu.memory_space<vmem>>, vector<1x40x1xf32>
    %101 = vector.shape_cast %100 : vector<1x40x1xf32> to vector<40x1xf32>
    %102 = vector.broadcast %101 : vector<40x1xf32> to vector<40x196xf32>
    %103 = arith.mulf %99, %102 : vector<40x196xf32>
    %104 = arith.addf %98, %103 : vector<40x196xf32>
    %c0_69 = arith.constant 0 : index
    %c142_70 = arith.constant 142 : index
    %105 = vector.load %arg10[%c0_69, %c142_70] : memref<40x384xf32, #tpu.memory_space<vmem>>, vector<40x196xf32>
    %c7_71 = arith.constant 7 : index
    %c40_72 = arith.constant 40 : index
    %c0_73 = arith.constant 0 : index
    %106 = vector.load %arg4[%c7_71, %c40_72, %c0_73] : memref<9x240x1xf32, #tpu.memory_space<vmem>>, vector<1x40x1xf32>
    %107 = vector.shape_cast %106 : vector<1x40x1xf32> to vector<40x1xf32>
    %108 = vector.broadcast %107 : vector<40x1xf32> to vector<40x196xf32>
    %109 = arith.mulf %105, %108 : vector<40x196xf32>
    %110 = arith.addf %104, %109 : vector<40x196xf32>
    %c0_74 = arith.constant 0 : index
    %c113_75 = arith.constant 113 : index
    %111 = vector.load %arg10[%c0_74, %c113_75] : memref<40x384xf32, #tpu.memory_space<vmem>>, vector<40x196xf32>
    %c0_76 = arith.constant 0 : index
    %c40_77 = arith.constant 40 : index
    %c0_78 = arith.constant 0 : index
    %112 = vector.load %arg4[%c0_76, %c40_77, %c0_78] : memref<9x240x1xf32, #tpu.memory_space<vmem>>, vector<1x40x1xf32>
    %113 = vector.shape_cast %112 : vector<1x40x1xf32> to vector<40x1xf32>
    %114 = vector.broadcast %113 : vector<40x1xf32> to vector<40x196xf32>
    %115 = arith.mulf %111, %114 : vector<40x196xf32>
    %c0_79 = arith.constant 0 : index
    %c127_80 = arith.constant 127 : index
    %116 = vector.load %arg10[%c0_79, %c127_80] : memref<40x384xf32, #tpu.memory_space<vmem>>, vector<40x196xf32>
    %c3_81 = arith.constant 3 : index
    %c40_82 = arith.constant 40 : index
    %c0_83 = arith.constant 0 : index
    %117 = vector.load %arg4[%c3_81, %c40_82, %c0_83] : memref<9x240x1xf32, #tpu.memory_space<vmem>>, vector<1x40x1xf32>
    %118 = vector.shape_cast %117 : vector<1x40x1xf32> to vector<40x1xf32>
    %119 = vector.broadcast %118 : vector<40x1xf32> to vector<40x196xf32>
    %120 = arith.mulf %116, %119 : vector<40x196xf32>
    %121 = arith.addf %115, %120 : vector<40x196xf32>
    %c0_84 = arith.constant 0 : index
    %c141_85 = arith.constant 141 : index
    %122 = vector.load %arg10[%c0_84, %c141_85] : memref<40x384xf32, #tpu.memory_space<vmem>>, vector<40x196xf32>
    %c6_86 = arith.constant 6 : index
    %c40_87 = arith.constant 40 : index
    %c0_88 = arith.constant 0 : index
    %123 = vector.load %arg4[%c6_86, %c40_87, %c0_88] : memref<9x240x1xf32, #tpu.memory_space<vmem>>, vector<1x40x1xf32>
    %124 = vector.shape_cast %123 : vector<1x40x1xf32> to vector<40x1xf32>
    %125 = vector.broadcast %124 : vector<40x1xf32> to vector<40x196xf32>
    %126 = arith.mulf %122, %125 : vector<40x196xf32>
    %127 = arith.addf %121, %126 : vector<40x196xf32>
    %128 = vector.broadcast %0 : vector<1x196xf32> to vector<40x196xf32>
    %129 = arith.mulf %128, %127 : vector<40x196xf32>
    %130 = arith.addf %110, %129 : vector<40x196xf32>
    %c0_89 = arith.constant 0 : index
    %c115_90 = arith.constant 115 : index
    %131 = vector.load %arg10[%c0_89, %c115_90] : memref<40x384xf32, #tpu.memory_space<vmem>>, vector<40x196xf32>
    %c2_91 = arith.constant 2 : index
    %c40_92 = arith.constant 40 : index
    %c0_93 = arith.constant 0 : index
    %132 = vector.load %arg4[%c2_91, %c40_92, %c0_93] : memref<9x240x1xf32, #tpu.memory_space<vmem>>, vector<1x40x1xf32>
    %133 = vector.shape_cast %132 : vector<1x40x1xf32> to vector<40x1xf32>
    %134 = vector.broadcast %133 : vector<40x1xf32> to vector<40x196xf32>
    %135 = arith.mulf %131, %134 : vector<40x196xf32>
    %c0_94 = arith.constant 0 : index
    %c129_95 = arith.constant 129 : index
    %136 = vector.load %arg10[%c0_94, %c129_95] : memref<40x384xf32, #tpu.memory_space<vmem>>, vector<40x196xf32>
    %c5_96 = arith.constant 5 : index
    %c40_97 = arith.constant 40 : index
    %c0_98 = arith.constant 0 : index
    %137 = vector.load %arg4[%c5_96, %c40_97, %c0_98] : memref<9x240x1xf32, #tpu.memory_space<vmem>>, vector<1x40x1xf32>
    %138 = vector.shape_cast %137 : vector<1x40x1xf32> to vector<40x1xf32>
    %139 = vector.broadcast %138 : vector<40x1xf32> to vector<40x196xf32>
    %140 = arith.mulf %136, %139 : vector<40x196xf32>
    %141 = arith.addf %135, %140 : vector<40x196xf32>
    %c0_99 = arith.constant 0 : index
    %c143_100 = arith.constant 143 : index
    %142 = vector.load %arg10[%c0_99, %c143_100] : memref<40x384xf32, #tpu.memory_space<vmem>>, vector<40x196xf32>
    %c8_101 = arith.constant 8 : index
    %c40_102 = arith.constant 40 : index
    %c0_103 = arith.constant 0 : index
    %143 = vector.load %arg4[%c8_101, %c40_102, %c0_103] : memref<9x240x1xf32, #tpu.memory_space<vmem>>, vector<1x40x1xf32>
    %144 = vector.shape_cast %143 : vector<1x40x1xf32> to vector<40x1xf32>
    %145 = vector.broadcast %144 : vector<40x1xf32> to vector<40x196xf32>
    %146 = arith.mulf %142, %145 : vector<40x196xf32>
    %147 = arith.addf %141, %146 : vector<40x196xf32>
    %148 = vector.broadcast %1 : vector<1x196xf32> to vector<40x196xf32>
    %149 = arith.mulf %148, %147 : vector<40x196xf32>
    %150 = arith.addf %130, %149 : vector<40x196xf32>
    %c40_104 = arith.constant 40 : index
    %c0_105 = arith.constant 0 : index
    %151 = vector.load %arg5[%c40_104, %c0_105] : memref<240x1xf32, #tpu.memory_space<vmem>>, vector<40x1xf32>
    %152 = vector.broadcast %151 : vector<40x1xf32> to vector<40x196xf32>
    %153 = arith.addf %150, %152 : vector<40x196xf32>
    %cst_106 = arith.constant 0.000000e+00 : f32
    %154 = vector.broadcast %cst_106 : f32 to vector<40x196xf32>
    %155 = arith.maximumf %153, %154 : vector<40x196xf32>
    %c1_107 = arith.constant 1 : index
    %c0_108 = arith.constant 0 : index
    %c0_109 = arith.constant 0 : index
    %156 = vector.load %arg6[%c1_107, %c0_108, %c0_109] : memref<6x48x40xf32, #tpu.memory_space<vmem>>, vector<1x48x40xf32>
    %157 = vector.shape_cast %156 : vector<1x48x40xf32> to vector<48x40xf32>
    %cst_110 = arith.constant dense<0.000000e+00> : vector<48x196xf32>
    %158 = tpu.matmul %157, %155, %cst_110 {dimension_numbers = #tpu.dot_dimension_numbers<[1], [0], [0], [1], [0, 0, 1, 1], [], []>} : vector<48x40xf32>, vector<40x196xf32>, vector<48x196xf32> -> vector<48x196xf32>
    %c0_111 = arith.constant 0 : index
    %c0_112 = arith.constant 0 : index
    %c0_113 = arith.constant 0 : index
    %159 = vector.load %arg9[%c0_111, %c0_112, %c0_113] : memref<1x48x196xf32, #tpu.memory_space<vmem>>, vector<1x48x196xf32>
    %160 = vector.shape_cast %159 : vector<1x48x196xf32> to vector<48x196xf32>
    %161 = arith.addf %160, %158 : vector<48x196xf32>
    %c0_114 = arith.constant 0 : index
    %c0_115 = arith.constant 0 : index
    %c0_116 = arith.constant 0 : index
    %162 = vector.load %arg9[%c0_114, %c0_115, %c0_116] : memref<1x48x196xf32, #tpu.memory_space<vmem>>, vector<1x48x196xf32>
    %163 = vector.shape_cast %162 : vector<1x48x196xf32> to vector<48x196xf32>
    %164 = vector.shape_cast %161 : vector<48x196xf32> to vector<1x48x196xf32>
    tpu.vector_store %arg9[%c0_114, %c0_115, %c0_116], %164 {strides = array<i32>} : memref<1x48x196xf32, #tpu.memory_space<vmem>>, vector<1x48x196xf32>,
    %c0_117 = arith.constant 0 : index
    %c80 = arith.constant 80 : index
    %c0_118 = arith.constant 0 : index
    %165 = vector.load %arg1[%c0_117, %c80, %c0_118] : memref<1x240x196xf32, #tpu.memory_space<vmem>>, vector<1x40x196xf32>
    %166 = vector.shape_cast %165 : vector<1x40x196xf32> to vector<40x196xf32>
    %c80_119 = arith.constant 80 : index
    %c0_120 = arith.constant 0 : index
    %167 = vector.load %arg2[%c80_119, %c0_120] : memref<240x1xf32, #tpu.memory_space<vmem>>, vector<40x1xf32>
    %168 = vector.broadcast %167 : vector<40x1xf32> to vector<40x196xf32>
    %169 = arith.mulf %166, %168 : vector<40x196xf32>
    %c80_121 = arith.constant 80 : index
    %c0_122 = arith.constant 0 : index
    %170 = vector.load %arg3[%c80_121, %c0_122] : memref<240x1xf32, #tpu.memory_space<vmem>>, vector<40x1xf32>
    %171 = vector.broadcast %170 : vector<40x1xf32> to vector<40x196xf32>
    %172 = arith.addf %169, %171 : vector<40x196xf32>
    %cst_123 = arith.constant 0.000000e+00 : f32
    %173 = vector.broadcast %cst_123 : f32 to vector<40x196xf32>
    %174 = arith.maximumf %172, %173 : vector<40x196xf32>
    %c0_124 = arith.constant 0 : index
    %c128_125 = arith.constant 128 : index
    %175 = vector.load %arg10[%c0_124, %c128_125] : memref<40x384xf32, #tpu.memory_space<vmem>>, vector<40x196xf32>
    tpu.vector_store %arg10[%c0_124, %c128_125], %174 {strides = array<i32>} : memref<40x384xf32, #tpu.memory_space<vmem>>, vector<40x196xf32>,
    %c4_126 = arith.constant 4 : index
    %c80_127 = arith.constant 80 : index
    %c0_128 = arith.constant 0 : index
    %176 = vector.load %arg4[%c4_126, %c80_127, %c0_128] : memref<9x240x1xf32, #tpu.memory_space<vmem>>, vector<1x40x1xf32>
    %177 = vector.shape_cast %176 : vector<1x40x1xf32> to vector<40x1xf32>
    %178 = vector.broadcast %177 : vector<40x1xf32> to vector<40x196xf32>
    %179 = arith.mulf %174, %178 : vector<40x196xf32>
    %c0_129 = arith.constant 0 : index
    %c114_130 = arith.constant 114 : index
    %180 = vector.load %arg10[%c0_129, %c114_130] : memref<40x384xf32, #tpu.memory_space<vmem>>, vector<40x196xf32>
    %c1_131 = arith.constant 1 : index
    %c80_132 = arith.constant 80 : index
    %c0_133 = arith.constant 0 : index
    %181 = vector.load %arg4[%c1_131, %c80_132, %c0_133] : memref<9x240x1xf32, #tpu.memory_space<vmem>>, vector<1x40x1xf32>
    %182 = vector.shape_cast %181 : vector<1x40x1xf32> to vector<40x1xf32>
    %183 = vector.broadcast %182 : vector<40x1xf32> to vector<40x196xf32>
    %184 = arith.mulf %180, %183 : vector<40x196xf32>
    %185 = arith.addf %179, %184 : vector<40x196xf32>
    %c0_134 = arith.constant 0 : index
    %c142_135 = arith.constant 142 : index
    %186 = vector.load %arg10[%c0_134, %c142_135] : memref<40x384xf32, #tpu.memory_space<vmem>>, vector<40x196xf32>
    %c7_136 = arith.constant 7 : index
    %c80_137 = arith.constant 80 : index
    %c0_138 = arith.constant 0 : index
    %187 = vector.load %arg4[%c7_136, %c80_137, %c0_138] : memref<9x240x1xf32, #tpu.memory_space<vmem>>, vector<1x40x1xf32>
    %188 = vector.shape_cast %187 : vector<1x40x1xf32> to vector<40x1xf32>
    %189 = vector.broadcast %188 : vector<40x1xf32> to vector<40x196xf32>
    %190 = arith.mulf %186, %189 : vector<40x196xf32>
    %191 = arith.addf %185, %190 : vector<40x196xf32>
    %c0_139 = arith.constant 0 : index
    %c113_140 = arith.constant 113 : index
    %192 = vector.load %arg10[%c0_139, %c113_140] : memref<40x384xf32, #tpu.memory_space<vmem>>, vector<40x196xf32>
    %c0_141 = arith.constant 0 : index
    %c80_142 = arith.constant 80 : index
    %c0_143 = arith.constant 0 : index
    %193 = vector.load %arg4[%c0_141, %c80_142, %c0_143] : memref<9x240x1xf32, #tpu.memory_space<vmem>>, vector<1x40x1xf32>
    %194 = vector.shape_cast %193 : vector<1x40x1xf32> to vector<40x1xf32>
    %195 = vector.broadcast %194 : vector<40x1xf32> to vector<40x196xf32>
    %196 = arith.mulf %192, %195 : vector<40x196xf32>
    %c0_144 = arith.constant 0 : index
    %c127_145 = arith.constant 127 : index
    %197 = vector.load %arg10[%c0_144, %c127_145] : memref<40x384xf32, #tpu.memory_space<vmem>>, vector<40x196xf32>
    %c3_146 = arith.constant 3 : index
    %c80_147 = arith.constant 80 : index
    %c0_148 = arith.constant 0 : index
    %198 = vector.load %arg4[%c3_146, %c80_147, %c0_148] : memref<9x240x1xf32, #tpu.memory_space<vmem>>, vector<1x40x1xf32>
    %199 = vector.shape_cast %198 : vector<1x40x1xf32> to vector<40x1xf32>
    %200 = vector.broadcast %199 : vector<40x1xf32> to vector<40x196xf32>
    %201 = arith.mulf %197, %200 : vector<40x196xf32>
    %202 = arith.addf %196, %201 : vector<40x196xf32>
    %c0_149 = arith.constant 0 : index
    %c141_150 = arith.constant 141 : index
    %203 = vector.load %arg10[%c0_149, %c141_150] : memref<40x384xf32, #tpu.memory_space<vmem>>, vector<40x196xf32>
    %c6_151 = arith.constant 6 : index
    %c80_152 = arith.constant 80 : index
    %c0_153 = arith.constant 0 : index
    %204 = vector.load %arg4[%c6_151, %c80_152, %c0_153] : memref<9x240x1xf32, #tpu.memory_space<vmem>>, vector<1x40x1xf32>
    %205 = vector.shape_cast %204 : vector<1x40x1xf32> to vector<40x1xf32>
    %206 = vector.broadcast %205 : vector<40x1xf32> to vector<40x196xf32>
    %207 = arith.mulf %203, %206 : vector<40x196xf32>
    %208 = arith.addf %202, %207 : vector<40x196xf32>
    %209 = vector.broadcast %0 : vector<1x196xf32> to vector<40x196xf32>
    %210 = arith.mulf %209, %208 : vector<40x196xf32>
    %211 = arith.addf %191, %210 : vector<40x196xf32>
    %c0_154 = arith.constant 0 : index
    %c115_155 = arith.constant 115 : index
    %212 = vector.load %arg10[%c0_154, %c115_155] : memref<40x384xf32, #tpu.memory_space<vmem>>, vector<40x196xf32>
    %c2_156 = arith.constant 2 : index
    %c80_157 = arith.constant 80 : index
    %c0_158 = arith.constant 0 : index
    %213 = vector.load %arg4[%c2_156, %c80_157, %c0_158] : memref<9x240x1xf32, #tpu.memory_space<vmem>>, vector<1x40x1xf32>
    %214 = vector.shape_cast %213 : vector<1x40x1xf32> to vector<40x1xf32>
    %215 = vector.broadcast %214 : vector<40x1xf32> to vector<40x196xf32>
    %216 = arith.mulf %212, %215 : vector<40x196xf32>
    %c0_159 = arith.constant 0 : index
    %c129_160 = arith.constant 129 : index
    %217 = vector.load %arg10[%c0_159, %c129_160] : memref<40x384xf32, #tpu.memory_space<vmem>>, vector<40x196xf32>
    %c5_161 = arith.constant 5 : index
    %c80_162 = arith.constant 80 : index
    %c0_163 = arith.constant 0 : index
    %218 = vector.load %arg4[%c5_161, %c80_162, %c0_163] : memref<9x240x1xf32, #tpu.memory_space<vmem>>, vector<1x40x1xf32>
    %219 = vector.shape_cast %218 : vector<1x40x1xf32> to vector<40x1xf32>
    %220 = vector.broadcast %219 : vector<40x1xf32> to vector<40x196xf32>
    %221 = arith.mulf %217, %220 : vector<40x196xf32>
    %222 = arith.addf %216, %221 : vector<40x196xf32>
    %c0_164 = arith.constant 0 : index
    %c143_165 = arith.constant 143 : index
    %223 = vector.load %arg10[%c0_164, %c143_165] : memref<40x384xf32, #tpu.memory_space<vmem>>, vector<40x196xf32>
    %c8_166 = arith.constant 8 : index
    %c80_167 = arith.constant 80 : index
    %c0_168 = arith.constant 0 : index
    %224 = vector.load %arg4[%c8_166, %c80_167, %c0_168] : memref<9x240x1xf32, #tpu.memory_space<vmem>>, vector<1x40x1xf32>
    %225 = vector.shape_cast %224 : vector<1x40x1xf32> to vector<40x1xf32>
    %226 = vector.broadcast %225 : vector<40x1xf32> to vector<40x196xf32>
    %227 = arith.mulf %223, %226 : vector<40x196xf32>
    %228 = arith.addf %222, %227 : vector<40x196xf32>
    %229 = vector.broadcast %1 : vector<1x196xf32> to vector<40x196xf32>
    %230 = arith.mulf %229, %228 : vector<40x196xf32>
    %231 = arith.addf %211, %230 : vector<40x196xf32>
    %c80_169 = arith.constant 80 : index
    %c0_170 = arith.constant 0 : index
    %232 = vector.load %arg5[%c80_169, %c0_170] : memref<240x1xf32, #tpu.memory_space<vmem>>, vector<40x1xf32>
    %233 = vector.broadcast %232 : vector<40x1xf32> to vector<40x196xf32>
    %234 = arith.addf %231, %233 : vector<40x196xf32>
    %cst_171 = arith.constant 0.000000e+00 : f32
    %235 = vector.broadcast %cst_171 : f32 to vector<40x196xf32>
    %236 = arith.maximumf %234, %235 : vector<40x196xf32>
    %c2_172 = arith.constant 2 : index
    %c0_173 = arith.constant 0 : index
    %c0_174 = arith.constant 0 : index
    %237 = vector.load %arg6[%c2_172, %c0_173, %c0_174] : memref<6x48x40xf32, #tpu.memory_space<vmem>>, vector<1x48x40xf32>
    %238 = vector.shape_cast %237 : vector<1x48x40xf32> to vector<48x40xf32>
    %cst_175 = arith.constant dense<0.000000e+00> : vector<48x196xf32>
    %239 = tpu.matmul %238, %236, %cst_175 {dimension_numbers = #tpu.dot_dimension_numbers<[1], [0], [0], [1], [0, 0, 1, 1], [], []>} : vector<48x40xf32>, vector<40x196xf32>, vector<48x196xf32> -> vector<48x196xf32>
    %c0_176 = arith.constant 0 : index
    %c0_177 = arith.constant 0 : index
    %c0_178 = arith.constant 0 : index
    %240 = vector.load %arg9[%c0_176, %c0_177, %c0_178] : memref<1x48x196xf32, #tpu.memory_space<vmem>>, vector<1x48x196xf32>
    %241 = vector.shape_cast %240 : vector<1x48x196xf32> to vector<48x196xf32>
    %242 = arith.addf %241, %239 : vector<48x196xf32>
    %c0_179 = arith.constant 0 : index
    %c0_180 = arith.constant 0 : index
    %c0_181 = arith.constant 0 : index
    %243 = vector.load %arg9[%c0_179, %c0_180, %c0_181] : memref<1x48x196xf32, #tpu.memory_space<vmem>>, vector<1x48x196xf32>
    %244 = vector.shape_cast %243 : vector<1x48x196xf32> to vector<48x196xf32>
    %245 = vector.shape_cast %242 : vector<48x196xf32> to vector<1x48x196xf32>
    tpu.vector_store %arg9[%c0_179, %c0_180, %c0_181], %245 {strides = array<i32>} : memref<1x48x196xf32, #tpu.memory_space<vmem>>, vector<1x48x196xf32>,
    %c0_182 = arith.constant 0 : index
    %c120 = arith.constant 120 : index
    %c0_183 = arith.constant 0 : index
    %246 = vector.load %arg1[%c0_182, %c120, %c0_183] : memref<1x240x196xf32, #tpu.memory_space<vmem>>, vector<1x40x196xf32>
    %247 = vector.shape_cast %246 : vector<1x40x196xf32> to vector<40x196xf32>
    %c120_184 = arith.constant 120 : index
    %c0_185 = arith.constant 0 : index
    %248 = vector.load %arg2[%c120_184, %c0_185] : memref<240x1xf32, #tpu.memory_space<vmem>>, vector<40x1xf32>
    %249 = vector.broadcast %248 : vector<40x1xf32> to vector<40x196xf32>
    %250 = arith.mulf %247, %249 : vector<40x196xf32>
    %c120_186 = arith.constant 120 : index
    %c0_187 = arith.constant 0 : index
    %251 = vector.load %arg3[%c120_186, %c0_187] : memref<240x1xf32, #tpu.memory_space<vmem>>, vector<40x1xf32>
    %252 = vector.broadcast %251 : vector<40x1xf32> to vector<40x196xf32>
    %253 = arith.addf %250, %252 : vector<40x196xf32>
    %cst_188 = arith.constant 0.000000e+00 : f32
    %254 = vector.broadcast %cst_188 : f32 to vector<40x196xf32>
    %255 = arith.maximumf %253, %254 : vector<40x196xf32>
    %c0_189 = arith.constant 0 : index
    %c128_190 = arith.constant 128 : index
    %256 = vector.load %arg10[%c0_189, %c128_190] : memref<40x384xf32, #tpu.memory_space<vmem>>, vector<40x196xf32>
    tpu.vector_store %arg10[%c0_189, %c128_190], %255 {strides = array<i32>} : memref<40x384xf32, #tpu.memory_space<vmem>>, vector<40x196xf32>,
    %c4_191 = arith.constant 4 : index
    %c120_192 = arith.constant 120 : index
    %c0_193 = arith.constant 0 : index
    %257 = vector.load %arg4[%c4_191, %c120_192, %c0_193] : memref<9x240x1xf32, #tpu.memory_space<vmem>>, vector<1x40x1xf32>
    %258 = vector.shape_cast %257 : vector<1x40x1xf32> to vector<40x1xf32>
    %259 = vector.broadcast %258 : vector<40x1xf32> to vector<40x196xf32>
    %260 = arith.mulf %255, %259 : vector<40x196xf32>
    %c0_194 = arith.constant 0 : index
    %c114_195 = arith.constant 114 : index
    %261 = vector.load %arg10[%c0_194, %c114_195] : memref<40x384xf32, #tpu.memory_space<vmem>>, vector<40x196xf32>
    %c1_196 = arith.constant 1 : index
    %c120_197 = arith.constant 120 : index
    %c0_198 = arith.constant 0 : index
    %262 = vector.load %arg4[%c1_196, %c120_197, %c0_198] : memref<9x240x1xf32, #tpu.memory_space<vmem>>, vector<1x40x1xf32>
    %263 = vector.shape_cast %262 : vector<1x40x1xf32> to vector<40x1xf32>
    %264 = vector.broadcast %263 : vector<40x1xf32> to vector<40x196xf32>
    %265 = arith.mulf %261, %264 : vector<40x196xf32>
    %266 = arith.addf %260, %265 : vector<40x196xf32>
    %c0_199 = arith.constant 0 : index
    %c142_200 = arith.constant 142 : index
    %267 = vector.load %arg10[%c0_199, %c142_200] : memref<40x384xf32, #tpu.memory_space<vmem>>, vector<40x196xf32>
    %c7_201 = arith.constant 7 : index
    %c120_202 = arith.constant 120 : index
    %c0_203 = arith.constant 0 : index
    %268 = vector.load %arg4[%c7_201, %c120_202, %c0_203] : memref<9x240x1xf32, #tpu.memory_space<vmem>>, vector<1x40x1xf32>
    %269 = vector.shape_cast %268 : vector<1x40x1xf32> to vector<40x1xf32>
    %270 = vector.broadcast %269 : vector<40x1xf32> to vector<40x196xf32>
    %271 = arith.mulf %267, %270 : vector<40x196xf32>
    %272 = arith.addf %266, %271 : vector<40x196xf32>
    %c0_204 = arith.constant 0 : index
    %c113_205 = arith.constant 113 : index
    %273 = vector.load %arg10[%c0_204, %c113_205] : memref<40x384xf32, #tpu.memory_space<vmem>>, vector<40x196xf32>
    %c0_206 = arith.constant 0 : index
    %c120_207 = arith.constant 120 : index
    %c0_208 = arith.constant 0 : index
    %274 = vector.load %arg4[%c0_206, %c120_207, %c0_208] : memref<9x240x1xf32, #tpu.memory_space<vmem>>, vector<1x40x1xf32>
    %275 = vector.shape_cast %274 : vector<1x40x1xf32> to vector<40x1xf32>
    %276 = vector.broadcast %275 : vector<40x1xf32> to vector<40x196xf32>
    %277 = arith.mulf %273, %276 : vector<40x196xf32>
    %c0_209 = arith.constant 0 : index
    %c127_210 = arith.constant 127 : index
    %278 = vector.load %arg10[%c0_209, %c127_210] : memref<40x384xf32, #tpu.memory_space<vmem>>, vector<40x196xf32>
    %c3_211 = arith.constant 3 : index
    %c120_212 = arith.constant 120 : index
    %c0_213 = arith.constant 0 : index
    %279 = vector.load %arg4[%c3_211, %c120_212, %c0_213] : memref<9x240x1xf32, #tpu.memory_space<vmem>>, vector<1x40x1xf32>
    %280 = vector.shape_cast %279 : vector<1x40x1xf32> to vector<40x1xf32>
    %281 = vector.broadcast %280 : vector<40x1xf32> to vector<40x196xf32>
    %282 = arith.mulf %278, %281 : vector<40x196xf32>
    %283 = arith.addf %277, %282 : vector<40x196xf32>
    %c0_214 = arith.constant 0 : index
    %c141_215 = arith.constant 141 : index
    %284 = vector.load %arg10[%c0_214, %c141_215] : memref<40x384xf32, #tpu.memory_space<vmem>>, vector<40x196xf32>
    %c6_216 = arith.constant 6 : index
    %c120_217 = arith.constant 120 : index
    %c0_218 = arith.constant 0 : index
    %285 = vector.load %arg4[%c6_216, %c120_217, %c0_218] : memref<9x240x1xf32, #tpu.memory_space<vmem>>, vector<1x40x1xf32>
    %286 = vector.shape_cast %285 : vector<1x40x1xf32> to vector<40x1xf32>
    %287 = vector.broadcast %286 : vector<40x1xf32> to vector<40x196xf32>
    %288 = arith.mulf %284, %287 : vector<40x196xf32>
    %289 = arith.addf %283, %288 : vector<40x196xf32>
    %290 = vector.broadcast %0 : vector<1x196xf32> to vector<40x196xf32>
    %291 = arith.mulf %290, %289 : vector<40x196xf32>
    %292 = arith.addf %272, %291 : vector<40x196xf32>
    %c0_219 = arith.constant 0 : index
    %c115_220 = arith.constant 115 : index
    %293 = vector.load %arg10[%c0_219, %c115_220] : memref<40x384xf32, #tpu.memory_space<vmem>>, vector<40x196xf32>
    %c2_221 = arith.constant 2 : index
    %c120_222 = arith.constant 120 : index
    %c0_223 = arith.constant 0 : index
    %294 = vector.load %arg4[%c2_221, %c120_222, %c0_223] : memref<9x240x1xf32, #tpu.memory_space<vmem>>, vector<1x40x1xf32>
    %295 = vector.shape_cast %294 : vector<1x40x1xf32> to vector<40x1xf32>
    %296 = vector.broadcast %295 : vector<40x1xf32> to vector<40x196xf32>
    %297 = arith.mulf %293, %296 : vector<40x196xf32>
    %c0_224 = arith.constant 0 : index
    %c129_225 = arith.constant 129 : index
    %298 = vector.load %arg10[%c0_224, %c129_225] : memref<40x384xf32, #tpu.memory_space<vmem>>, vector<40x196xf32>
    %c5_226 = arith.constant 5 : index
    %c120_227 = arith.constant 120 : index
    %c0_228 = arith.constant 0 : index
    %299 = vector.load %arg4[%c5_226, %c120_227, %c0_228] : memref<9x240x1xf32, #tpu.memory_space<vmem>>, vector<1x40x1xf32>
    %300 = vector.shape_cast %299 : vector<1x40x1xf32> to vector<40x1xf32>
    %301 = vector.broadcast %300 : vector<40x1xf32> to vector<40x196xf32>
    %302 = arith.mulf %298, %301 : vector<40x196xf32>
    %303 = arith.addf %297, %302 : vector<40x196xf32>
    %c0_229 = arith.constant 0 : index
    %c143_230 = arith.constant 143 : index
    %304 = vector.load %arg10[%c0_229, %c143_230] : memref<40x384xf32, #tpu.memory_space<vmem>>, vector<40x196xf32>
    %c8_231 = arith.constant 8 : index
    %c120_232 = arith.constant 120 : index
    %c0_233 = arith.constant 0 : index
    %305 = vector.load %arg4[%c8_231, %c120_232, %c0_233] : memref<9x240x1xf32, #tpu.memory_space<vmem>>, vector<1x40x1xf32>
    %306 = vector.shape_cast %305 : vector<1x40x1xf32> to vector<40x1xf32>
    %307 = vector.broadcast %306 : vector<40x1xf32> to vector<40x196xf32>
    %308 = arith.mulf %304, %307 : vector<40x196xf32>
    %309 = arith.addf %303, %308 : vector<40x196xf32>
    %310 = vector.broadcast %1 : vector<1x196xf32> to vector<40x196xf32>
    %311 = arith.mulf %310, %309 : vector<40x196xf32>
    %312 = arith.addf %292, %311 : vector<40x196xf32>
    %c120_234 = arith.constant 120 : index
    %c0_235 = arith.constant 0 : index
    %313 = vector.load %arg5[%c120_234, %c0_235] : memref<240x1xf32, #tpu.memory_space<vmem>>, vector<40x1xf32>
    %314 = vector.broadcast %313 : vector<40x1xf32> to vector<40x196xf32>
    %315 = arith.addf %312, %314 : vector<40x196xf32>
    %cst_236 = arith.constant 0.000000e+00 : f32
    %316 = vector.broadcast %cst_236 : f32 to vector<40x196xf32>
    %317 = arith.maximumf %315, %316 : vector<40x196xf32>
    %c3_237 = arith.constant 3 : index
    %c0_238 = arith.constant 0 : index
    %c0_239 = arith.constant 0 : index
    %318 = vector.load %arg6[%c3_237, %c0_238, %c0_239] : memref<6x48x40xf32, #tpu.memory_space<vmem>>, vector<1x48x40xf32>
    %319 = vector.shape_cast %318 : vector<1x48x40xf32> to vector<48x40xf32>
    %cst_240 = arith.constant dense<0.000000e+00> : vector<48x196xf32>
    %320 = tpu.matmul %319, %317, %cst_240 {dimension_numbers = #tpu.dot_dimension_numbers<[1], [0], [0], [1], [0, 0, 1, 1], [], []>} : vector<48x40xf32>, vector<40x196xf32>, vector<48x196xf32> -> vector<48x196xf32>
    %c0_241 = arith.constant 0 : index
    %c0_242 = arith.constant 0 : index
    %c0_243 = arith.constant 0 : index
    %321 = vector.load %arg9[%c0_241, %c0_242, %c0_243] : memref<1x48x196xf32, #tpu.memory_space<vmem>>, vector<1x48x196xf32>
    %322 = vector.shape_cast %321 : vector<1x48x196xf32> to vector<48x196xf32>
    %323 = arith.addf %322, %320 : vector<48x196xf32>
    %c0_244 = arith.constant 0 : index
    %c0_245 = arith.constant 0 : index
    %c0_246 = arith.constant 0 : index
    %324 = vector.load %arg9[%c0_244, %c0_245, %c0_246] : memref<1x48x196xf32, #tpu.memory_space<vmem>>, vector<1x48x196xf32>
    %325 = vector.shape_cast %324 : vector<1x48x196xf32> to vector<48x196xf32>
    %326 = vector.shape_cast %323 : vector<48x196xf32> to vector<1x48x196xf32>
    tpu.vector_store %arg9[%c0_244, %c0_245, %c0_246], %326 {strides = array<i32>} : memref<1x48x196xf32, #tpu.memory_space<vmem>>, vector<1x48x196xf32>,
    %c0_247 = arith.constant 0 : index
    %c160 = arith.constant 160 : index
    %c0_248 = arith.constant 0 : index
    %327 = vector.load %arg1[%c0_247, %c160, %c0_248] : memref<1x240x196xf32, #tpu.memory_space<vmem>>, vector<1x40x196xf32>
    %328 = vector.shape_cast %327 : vector<1x40x196xf32> to vector<40x196xf32>
    %c160_249 = arith.constant 160 : index
    %c0_250 = arith.constant 0 : index
    %329 = vector.load %arg2[%c160_249, %c0_250] : memref<240x1xf32, #tpu.memory_space<vmem>>, vector<40x1xf32>
    %330 = vector.broadcast %329 : vector<40x1xf32> to vector<40x196xf32>
    %331 = arith.mulf %328, %330 : vector<40x196xf32>
    %c160_251 = arith.constant 160 : index
    %c0_252 = arith.constant 0 : index
    %332 = vector.load %arg3[%c160_251, %c0_252] : memref<240x1xf32, #tpu.memory_space<vmem>>, vector<40x1xf32>
    %333 = vector.broadcast %332 : vector<40x1xf32> to vector<40x196xf32>
    %334 = arith.addf %331, %333 : vector<40x196xf32>
    %cst_253 = arith.constant 0.000000e+00 : f32
    %335 = vector.broadcast %cst_253 : f32 to vector<40x196xf32>
    %336 = arith.maximumf %334, %335 : vector<40x196xf32>
    %c0_254 = arith.constant 0 : index
    %c128_255 = arith.constant 128 : index
    %337 = vector.load %arg10[%c0_254, %c128_255] : memref<40x384xf32, #tpu.memory_space<vmem>>, vector<40x196xf32>
    tpu.vector_store %arg10[%c0_254, %c128_255], %336 {strides = array<i32>} : memref<40x384xf32, #tpu.memory_space<vmem>>, vector<40x196xf32>,
    %c4_256 = arith.constant 4 : index
    %c160_257 = arith.constant 160 : index
    %c0_258 = arith.constant 0 : index
    %338 = vector.load %arg4[%c4_256, %c160_257, %c0_258] : memref<9x240x1xf32, #tpu.memory_space<vmem>>, vector<1x40x1xf32>
    %339 = vector.shape_cast %338 : vector<1x40x1xf32> to vector<40x1xf32>
    %340 = vector.broadcast %339 : vector<40x1xf32> to vector<40x196xf32>
    %341 = arith.mulf %336, %340 : vector<40x196xf32>
    %c0_259 = arith.constant 0 : index
    %c114_260 = arith.constant 114 : index
    %342 = vector.load %arg10[%c0_259, %c114_260] : memref<40x384xf32, #tpu.memory_space<vmem>>, vector<40x196xf32>
    %c1_261 = arith.constant 1 : index
    %c160_262 = arith.constant 160 : index
    %c0_263 = arith.constant 0 : index
    %343 = vector.load %arg4[%c1_261, %c160_262, %c0_263] : memref<9x240x1xf32, #tpu.memory_space<vmem>>, vector<1x40x1xf32>
    %344 = vector.shape_cast %343 : vector<1x40x1xf32> to vector<40x1xf32>
    %345 = vector.broadcast %344 : vector<40x1xf32> to vector<40x196xf32>
    %346 = arith.mulf %342, %345 : vector<40x196xf32>
    %347 = arith.addf %341, %346 : vector<40x196xf32>
    %c0_264 = arith.constant 0 : index
    %c142_265 = arith.constant 142 : index
    %348 = vector.load %arg10[%c0_264, %c142_265] : memref<40x384xf32, #tpu.memory_space<vmem>>, vector<40x196xf32>
    %c7_266 = arith.constant 7 : index
    %c160_267 = arith.constant 160 : index
    %c0_268 = arith.constant 0 : index
    %349 = vector.load %arg4[%c7_266, %c160_267, %c0_268] : memref<9x240x1xf32, #tpu.memory_space<vmem>>, vector<1x40x1xf32>
    %350 = vector.shape_cast %349 : vector<1x40x1xf32> to vector<40x1xf32>
    %351 = vector.broadcast %350 : vector<40x1xf32> to vector<40x196xf32>
    %352 = arith.mulf %348, %351 : vector<40x196xf32>
    %353 = arith.addf %347, %352 : vector<40x196xf32>
    %c0_269 = arith.constant 0 : index
    %c113_270 = arith.constant 113 : index
    %354 = vector.load %arg10[%c0_269, %c113_270] : memref<40x384xf32, #tpu.memory_space<vmem>>, vector<40x196xf32>
    %c0_271 = arith.constant 0 : index
    %c160_272 = arith.constant 160 : index
    %c0_273 = arith.constant 0 : index
    %355 = vector.load %arg4[%c0_271, %c160_272, %c0_273] : memref<9x240x1xf32, #tpu.memory_space<vmem>>, vector<1x40x1xf32>
    %356 = vector.shape_cast %355 : vector<1x40x1xf32> to vector<40x1xf32>
    %357 = vector.broadcast %356 : vector<40x1xf32> to vector<40x196xf32>
    %358 = arith.mulf %354, %357 : vector<40x196xf32>
    %c0_274 = arith.constant 0 : index
    %c127_275 = arith.constant 127 : index
    %359 = vector.load %arg10[%c0_274, %c127_275] : memref<40x384xf32, #tpu.memory_space<vmem>>, vector<40x196xf32>
    %c3_276 = arith.constant 3 : index
    %c160_277 = arith.constant 160 : index
    %c0_278 = arith.constant 0 : index
    %360 = vector.load %arg4[%c3_276, %c160_277, %c0_278] : memref<9x240x1xf32, #tpu.memory_space<vmem>>, vector<1x40x1xf32>
    %361 = vector.shape_cast %360 : vector<1x40x1xf32> to vector<40x1xf32>
    %362 = vector.broadcast %361 : vector<40x1xf32> to vector<40x196xf32>
    %363 = arith.mulf %359, %362 : vector<40x196xf32>
    %364 = arith.addf %358, %363 : vector<40x196xf32>
    %c0_279 = arith.constant 0 : index
    %c141_280 = arith.constant 141 : index
    %365 = vector.load %arg10[%c0_279, %c141_280] : memref<40x384xf32, #tpu.memory_space<vmem>>, vector<40x196xf32>
    %c6_281 = arith.constant 6 : index
    %c160_282 = arith.constant 160 : index
    %c0_283 = arith.constant 0 : index
    %366 = vector.load %arg4[%c6_281, %c160_282, %c0_283] : memref<9x240x1xf32, #tpu.memory_space<vmem>>, vector<1x40x1xf32>
    %367 = vector.shape_cast %366 : vector<1x40x1xf32> to vector<40x1xf32>
    %368 = vector.broadcast %367 : vector<40x1xf32> to vector<40x196xf32>
    %369 = arith.mulf %365, %368 : vector<40x196xf32>
    %370 = arith.addf %364, %369 : vector<40x196xf32>
    %371 = vector.broadcast %0 : vector<1x196xf32> to vector<40x196xf32>
    %372 = arith.mulf %371, %370 : vector<40x196xf32>
    %373 = arith.addf %353, %372 : vector<40x196xf32>
    %c0_284 = arith.constant 0 : index
    %c115_285 = arith.constant 115 : index
    %374 = vector.load %arg10[%c0_284, %c115_285] : memref<40x384xf32, #tpu.memory_space<vmem>>, vector<40x196xf32>
    %c2_286 = arith.constant 2 : index
    %c160_287 = arith.constant 160 : index
    %c0_288 = arith.constant 0 : index
    %375 = vector.load %arg4[%c2_286, %c160_287, %c0_288] : memref<9x240x1xf32, #tpu.memory_space<vmem>>, vector<1x40x1xf32>
    %376 = vector.shape_cast %375 : vector<1x40x1xf32> to vector<40x1xf32>
    %377 = vector.broadcast %376 : vector<40x1xf32> to vector<40x196xf32>
    %378 = arith.mulf %374, %377 : vector<40x196xf32>
    %c0_289 = arith.constant 0 : index
    %c129_290 = arith.constant 129 : index
    %379 = vector.load %arg10[%c0_289, %c129_290] : memref<40x384xf32, #tpu.memory_space<vmem>>, vector<40x196xf32>
    %c5_291 = arith.constant 5 : index
    %c160_292 = arith.constant 160 : index
    %c0_293 = arith.constant 0 : index
    %380 = vector.load %arg4[%c5_291, %c160_292, %c0_293] : memref<9x240x1xf32, #tpu.memory_space<vmem>>, vector<1x40x1xf32>
    %381 = vector.shape_cast %380 : vector<1x40x1xf32> to vector<40x1xf32>
    %382 = vector.broadcast %381 : vector<40x1xf32> to vector<40x196xf32>
    %383 = arith.mulf %379, %382 : vector<40x196xf32>
    %384 = arith.addf %378, %383 : vector<40x196xf32>
    %c0_294 = arith.constant 0 : index
    %c143_295 = arith.constant 143 : index
    %385 = vector.load %arg10[%c0_294, %c143_295] : memref<40x384xf32, #tpu.memory_space<vmem>>, vector<40x196xf32>
    %c8_296 = arith.constant 8 : index
    %c160_297 = arith.constant 160 : index
    %c0_298 = arith.constant 0 : index
    %386 = vector.load %arg4[%c8_296, %c160_297, %c0_298] : memref<9x240x1xf32, #tpu.memory_space<vmem>>, vector<1x40x1xf32>
    %387 = vector.shape_cast %386 : vector<1x40x1xf32> to vector<40x1xf32>
    %388 = vector.broadcast %387 : vector<40x1xf32> to vector<40x196xf32>
    %389 = arith.mulf %385, %388 : vector<40x196xf32>
    %390 = arith.addf %384, %389 : vector<40x196xf32>
    %391 = vector.broadcast %1 : vector<1x196xf32> to vector<40x196xf32>
    %392 = arith.mulf %391, %390 : vector<40x196xf32>
    %393 = arith.addf %373, %392 : vector<40x196xf32>
    %c160_299 = arith.constant 160 : index
    %c0_300 = arith.constant 0 : index
    %394 = vector.load %arg5[%c160_299, %c0_300] : memref<240x1xf32, #tpu.memory_space<vmem>>, vector<40x1xf32>
    %395 = vector.broadcast %394 : vector<40x1xf32> to vector<40x196xf32>
    %396 = arith.addf %393, %395 : vector<40x196xf32>
    %cst_301 = arith.constant 0.000000e+00 : f32
    %397 = vector.broadcast %cst_301 : f32 to vector<40x196xf32>
    %398 = arith.maximumf %396, %397 : vector<40x196xf32>
    %c4_302 = arith.constant 4 : index
    %c0_303 = arith.constant 0 : index
    %c0_304 = arith.constant 0 : index
    %399 = vector.load %arg6[%c4_302, %c0_303, %c0_304] : memref<6x48x40xf32, #tpu.memory_space<vmem>>, vector<1x48x40xf32>
    %400 = vector.shape_cast %399 : vector<1x48x40xf32> to vector<48x40xf32>
    %cst_305 = arith.constant dense<0.000000e+00> : vector<48x196xf32>
    %401 = tpu.matmul %400, %398, %cst_305 {dimension_numbers = #tpu.dot_dimension_numbers<[1], [0], [0], [1], [0, 0, 1, 1], [], []>} : vector<48x40xf32>, vector<40x196xf32>, vector<48x196xf32> -> vector<48x196xf32>
    %c0_306 = arith.constant 0 : index
    %c0_307 = arith.constant 0 : index
    %c0_308 = arith.constant 0 : index
    %402 = vector.load %arg9[%c0_306, %c0_307, %c0_308] : memref<1x48x196xf32, #tpu.memory_space<vmem>>, vector<1x48x196xf32>
    %403 = vector.shape_cast %402 : vector<1x48x196xf32> to vector<48x196xf32>
    %404 = arith.addf %403, %401 : vector<48x196xf32>
    %c0_309 = arith.constant 0 : index
    %c0_310 = arith.constant 0 : index
    %c0_311 = arith.constant 0 : index
    %405 = vector.load %arg9[%c0_309, %c0_310, %c0_311] : memref<1x48x196xf32, #tpu.memory_space<vmem>>, vector<1x48x196xf32>
    %406 = vector.shape_cast %405 : vector<1x48x196xf32> to vector<48x196xf32>
    %407 = vector.shape_cast %404 : vector<48x196xf32> to vector<1x48x196xf32>
    tpu.vector_store %arg9[%c0_309, %c0_310, %c0_311], %407 {strides = array<i32>} : memref<1x48x196xf32, #tpu.memory_space<vmem>>, vector<1x48x196xf32>,
    %c0_312 = arith.constant 0 : index
    %c200 = arith.constant 200 : index
    %c0_313 = arith.constant 0 : index
    %408 = vector.load %arg1[%c0_312, %c200, %c0_313] : memref<1x240x196xf32, #tpu.memory_space<vmem>>, vector<1x40x196xf32>
    %409 = vector.shape_cast %408 : vector<1x40x196xf32> to vector<40x196xf32>
    %c200_314 = arith.constant 200 : index
    %c0_315 = arith.constant 0 : index
    %410 = vector.load %arg2[%c200_314, %c0_315] : memref<240x1xf32, #tpu.memory_space<vmem>>, vector<40x1xf32>
    %411 = vector.broadcast %410 : vector<40x1xf32> to vector<40x196xf32>
    %412 = arith.mulf %409, %411 : vector<40x196xf32>
    %c200_316 = arith.constant 200 : index
    %c0_317 = arith.constant 0 : index
    %413 = vector.load %arg3[%c200_316, %c0_317] : memref<240x1xf32, #tpu.memory_space<vmem>>, vector<40x1xf32>
    %414 = vector.broadcast %413 : vector<40x1xf32> to vector<40x196xf32>
    %415 = arith.addf %412, %414 : vector<40x196xf32>
    %cst_318 = arith.constant 0.000000e+00 : f32
    %416 = vector.broadcast %cst_318 : f32 to vector<40x196xf32>
    %417 = arith.maximumf %415, %416 : vector<40x196xf32>
    %c0_319 = arith.constant 0 : index
    %c128_320 = arith.constant 128 : index
    %418 = vector.load %arg10[%c0_319, %c128_320] : memref<40x384xf32, #tpu.memory_space<vmem>>, vector<40x196xf32>
    tpu.vector_store %arg10[%c0_319, %c128_320], %417 {strides = array<i32>} : memref<40x384xf32, #tpu.memory_space<vmem>>, vector<40x196xf32>,
    %c4_321 = arith.constant 4 : index
    %c200_322 = arith.constant 200 : index
    %c0_323 = arith.constant 0 : index
    %419 = vector.load %arg4[%c4_321, %c200_322, %c0_323] : memref<9x240x1xf32, #tpu.memory_space<vmem>>, vector<1x40x1xf32>
    %420 = vector.shape_cast %419 : vector<1x40x1xf32> to vector<40x1xf32>
    %421 = vector.broadcast %420 : vector<40x1xf32> to vector<40x196xf32>
    %422 = arith.mulf %417, %421 : vector<40x196xf32>
    %c0_324 = arith.constant 0 : index
    %c114_325 = arith.constant 114 : index
    %423 = vector.load %arg10[%c0_324, %c114_325] : memref<40x384xf32, #tpu.memory_space<vmem>>, vector<40x196xf32>
    %c1_326 = arith.constant 1 : index
    %c200_327 = arith.constant 200 : index
    %c0_328 = arith.constant 0 : index
    %424 = vector.load %arg4[%c1_326, %c200_327, %c0_328] : memref<9x240x1xf32, #tpu.memory_space<vmem>>, vector<1x40x1xf32>
    %425 = vector.shape_cast %424 : vector<1x40x1xf32> to vector<40x1xf32>
    %426 = vector.broadcast %425 : vector<40x1xf32> to vector<40x196xf32>
    %427 = arith.mulf %423, %426 : vector<40x196xf32>
    %428 = arith.addf %422, %427 : vector<40x196xf32>
    %c0_329 = arith.constant 0 : index
    %c142_330 = arith.constant 142 : index
    %429 = vector.load %arg10[%c0_329, %c142_330] : memref<40x384xf32, #tpu.memory_space<vmem>>, vector<40x196xf32>
    %c7_331 = arith.constant 7 : index
    %c200_332 = arith.constant 200 : index
    %c0_333 = arith.constant 0 : index
    %430 = vector.load %arg4[%c7_331, %c200_332, %c0_333] : memref<9x240x1xf32, #tpu.memory_space<vmem>>, vector<1x40x1xf32>
    %431 = vector.shape_cast %430 : vector<1x40x1xf32> to vector<40x1xf32>
    %432 = vector.broadcast %431 : vector<40x1xf32> to vector<40x196xf32>
    %433 = arith.mulf %429, %432 : vector<40x196xf32>
    %434 = arith.addf %428, %433 : vector<40x196xf32>
    %c0_334 = arith.constant 0 : index
    %c113_335 = arith.constant 113 : index
    %435 = vector.load %arg10[%c0_334, %c113_335] : memref<40x384xf32, #tpu.memory_space<vmem>>, vector<40x196xf32>
    %c0_336 = arith.constant 0 : index
    %c200_337 = arith.constant 200 : index
    %c0_338 = arith.constant 0 : index
    %436 = vector.load %arg4[%c0_336, %c200_337, %c0_338] : memref<9x240x1xf32, #tpu.memory_space<vmem>>, vector<1x40x1xf32>
    %437 = vector.shape_cast %436 : vector<1x40x1xf32> to vector<40x1xf32>
    %438 = vector.broadcast %437 : vector<40x1xf32> to vector<40x196xf32>
    %439 = arith.mulf %435, %438 : vector<40x196xf32>
    %c0_339 = arith.constant 0 : index
    %c127_340 = arith.constant 127 : index
    %440 = vector.load %arg10[%c0_339, %c127_340] : memref<40x384xf32, #tpu.memory_space<vmem>>, vector<40x196xf32>
    %c3_341 = arith.constant 3 : index
    %c200_342 = arith.constant 200 : index
    %c0_343 = arith.constant 0 : index
    %441 = vector.load %arg4[%c3_341, %c200_342, %c0_343] : memref<9x240x1xf32, #tpu.memory_space<vmem>>, vector<1x40x1xf32>
    %442 = vector.shape_cast %441 : vector<1x40x1xf32> to vector<40x1xf32>
    %443 = vector.broadcast %442 : vector<40x1xf32> to vector<40x196xf32>
    %444 = arith.mulf %440, %443 : vector<40x196xf32>
    %445 = arith.addf %439, %444 : vector<40x196xf32>
    %c0_344 = arith.constant 0 : index
    %c141_345 = arith.constant 141 : index
    %446 = vector.load %arg10[%c0_344, %c141_345] : memref<40x384xf32, #tpu.memory_space<vmem>>, vector<40x196xf32>
    %c6_346 = arith.constant 6 : index
    %c200_347 = arith.constant 200 : index
    %c0_348 = arith.constant 0 : index
    %447 = vector.load %arg4[%c6_346, %c200_347, %c0_348] : memref<9x240x1xf32, #tpu.memory_space<vmem>>, vector<1x40x1xf32>
    %448 = vector.shape_cast %447 : vector<1x40x1xf32> to vector<40x1xf32>
    %449 = vector.broadcast %448 : vector<40x1xf32> to vector<40x196xf32>
    %450 = arith.mulf %446, %449 : vector<40x196xf32>
    %451 = arith.addf %445, %450 : vector<40x196xf32>
    %452 = vector.broadcast %0 : vector<1x196xf32> to vector<40x196xf32>
    %453 = arith.mulf %452, %451 : vector<40x196xf32>
    %454 = arith.addf %434, %453 : vector<40x196xf32>
    %c0_349 = arith.constant 0 : index
    %c115_350 = arith.constant 115 : index
    %455 = vector.load %arg10[%c0_349, %c115_350] : memref<40x384xf32, #tpu.memory_space<vmem>>, vector<40x196xf32>
    %c2_351 = arith.constant 2 : index
    %c200_352 = arith.constant 200 : index
    %c0_353 = arith.constant 0 : index
    %456 = vector.load %arg4[%c2_351, %c200_352, %c0_353] : memref<9x240x1xf32, #tpu.memory_space<vmem>>, vector<1x40x1xf32>
    %457 = vector.shape_cast %456 : vector<1x40x1xf32> to vector<40x1xf32>
    %458 = vector.broadcast %457 : vector<40x1xf32> to vector<40x196xf32>
    %459 = arith.mulf %455, %458 : vector<40x196xf32>
    %c0_354 = arith.constant 0 : index
    %c129_355 = arith.constant 129 : index
    %460 = vector.load %arg10[%c0_354, %c129_355] : memref<40x384xf32, #tpu.memory_space<vmem>>, vector<40x196xf32>
    %c5_356 = arith.constant 5 : index
    %c200_357 = arith.constant 200 : index
    %c0_358 = arith.constant 0 : index
    %461 = vector.load %arg4[%c5_356, %c200_357, %c0_358] : memref<9x240x1xf32, #tpu.memory_space<vmem>>, vector<1x40x1xf32>
    %462 = vector.shape_cast %461 : vector<1x40x1xf32> to vector<40x1xf32>
    %463 = vector.broadcast %462 : vector<40x1xf32> to vector<40x196xf32>
    %464 = arith.mulf %460, %463 : vector<40x196xf32>
    %465 = arith.addf %459, %464 : vector<40x196xf32>
    %c0_359 = arith.constant 0 : index
    %c143_360 = arith.constant 143 : index
    %466 = vector.load %arg10[%c0_359, %c143_360] : memref<40x384xf32, #tpu.memory_space<vmem>>, vector<40x196xf32>
    %c8_361 = arith.constant 8 : index
    %c200_362 = arith.constant 200 : index
    %c0_363 = arith.constant 0 : index
    %467 = vector.load %arg4[%c8_361, %c200_362, %c0_363] : memref<9x240x1xf32, #tpu.memory_space<vmem>>, vector<1x40x1xf32>
    %468 = vector.shape_cast %467 : vector<1x40x1xf32> to vector<40x1xf32>
    %469 = vector.broadcast %468 : vector<40x1xf32> to vector<40x196xf32>
    %470 = arith.mulf %466, %469 : vector<40x196xf32>
    %471 = arith.addf %465, %470 : vector<40x196xf32>
    %472 = vector.broadcast %1 : vector<1x196xf32> to vector<40x196xf32>
    %473 = arith.mulf %472, %471 : vector<40x196xf32>
    %474 = arith.addf %454, %473 : vector<40x196xf32>
    %c200_364 = arith.constant 200 : index
    %c0_365 = arith.constant 0 : index
    %475 = vector.load %arg5[%c200_364, %c0_365] : memref<240x1xf32, #tpu.memory_space<vmem>>, vector<40x1xf32>
    %476 = vector.broadcast %475 : vector<40x1xf32> to vector<40x196xf32>
    %477 = arith.addf %474, %476 : vector<40x196xf32>
    %cst_366 = arith.constant 0.000000e+00 : f32
    %478 = vector.broadcast %cst_366 : f32 to vector<40x196xf32>
    %479 = arith.maximumf %477, %478 : vector<40x196xf32>
    %c5_367 = arith.constant 5 : index
    %c0_368 = arith.constant 0 : index
    %c0_369 = arith.constant 0 : index
    %480 = vector.load %arg6[%c5_367, %c0_368, %c0_369] : memref<6x48x40xf32, #tpu.memory_space<vmem>>, vector<1x48x40xf32>
    %481 = vector.shape_cast %480 : vector<1x48x40xf32> to vector<48x40xf32>
    %cst_370 = arith.constant dense<0.000000e+00> : vector<48x196xf32>
    %482 = tpu.matmul %481, %479, %cst_370 {dimension_numbers = #tpu.dot_dimension_numbers<[1], [0], [0], [1], [0, 0, 1, 1], [], []>} : vector<48x40xf32>, vector<40x196xf32>, vector<48x196xf32> -> vector<48x196xf32>
    %c0_371 = arith.constant 0 : index
    %c0_372 = arith.constant 0 : index
    %c0_373 = arith.constant 0 : index
    %483 = vector.load %arg9[%c0_371, %c0_372, %c0_373] : memref<1x48x196xf32, #tpu.memory_space<vmem>>, vector<1x48x196xf32>
    %484 = vector.shape_cast %483 : vector<1x48x196xf32> to vector<48x196xf32>
    %485 = arith.addf %484, %482 : vector<48x196xf32>
    %c0_374 = arith.constant 0 : index
    %c0_375 = arith.constant 0 : index
    %c0_376 = arith.constant 0 : index
    %486 = vector.load %arg9[%c0_374, %c0_375, %c0_376] : memref<1x48x196xf32, #tpu.memory_space<vmem>>, vector<1x48x196xf32>
    %487 = vector.shape_cast %486 : vector<1x48x196xf32> to vector<48x196xf32>
    %488 = vector.shape_cast %485 : vector<48x196xf32> to vector<1x48x196xf32>
    tpu.vector_store %arg9[%c0_374, %c0_375, %c0_376], %488 {strides = array<i32>} : memref<1x48x196xf32, #tpu.memory_space<vmem>>, vector<1x48x196xf32>,
    return
  }
  func.func @transform_0(%arg0: i32) -> (i32, i32, i32) {
    %c0_i32 = arith.constant 0 : i32
    %c0_i32_0 = arith.constant 0 : i32
    %c0_i32_1 = arith.constant 0 : i32
    return %arg0, %c0_i32, %c0_i32_0 : i32, i32, i32
  }
  func.func @transform_1(%arg0: i32) -> (i32, i32) {
    %c0_i32 = arith.constant 0 : i32
    %c0_i32_0 = arith.constant 0 : i32
    %c0_i32_1 = arith.constant 0 : i32
    return %c0_i32, %c0_i32_0 : i32, i32
  }
  func.func @transform_2(%arg0: i32) -> (i32, i32) {
    %c0_i32 = arith.constant 0 : i32
    %c0_i32_0 = arith.constant 0 : i32
    %c0_i32_1 = arith.constant 0 : i32
    return %c0_i32, %c0_i32_0 : i32, i32
  }
  func.func @transform_3(%arg0: i32) -> (i32, i32, i32) {
    %c0_i32 = arith.constant 0 : i32
    %c0_i32_0 = arith.constant 0 : i32
    %c0_i32_1 = arith.constant 0 : i32
    %c0_i32_2 = arith.constant 0 : i32
    return %c0_i32, %c0_i32_0, %c0_i32_1 : i32, i32, i32
  }
  func.func @transform_4(%arg0: i32) -> (i32, i32) {
    %c0_i32 = arith.constant 0 : i32
    %c0_i32_0 = arith.constant 0 : i32
    %c0_i32_1 = arith.constant 0 : i32
    return %c0_i32, %c0_i32_0 : i32, i32
  }
  func.func @transform_5(%arg0: i32) -> (i32, i32, i32) {
    %c0_i32 = arith.constant 0 : i32
    %c0_i32_0 = arith.constant 0 : i32
    %c0_i32_1 = arith.constant 0 : i32
    %c0_i32_2 = arith.constant 0 : i32
    return %c0_i32, %c0_i32_0, %c0_i32_1 : i32, i32, i32
  }
  func.func @transform_6(%arg0: i32) -> (i32, i32) {
    %c0_i32 = arith.constant 0 : i32
    %c0_i32_0 = arith.constant 0 : i32
    %c0_i32_1 = arith.constant 0 : i32
    return %c0_i32, %c0_i32_0 : i32, i32
  }
  func.func @transform_7(%arg0: i32) -> (i32, i32) {
    %c0_i32 = arith.constant 0 : i32
    %c0_i32_0 = arith.constant 0 : i32
    %c0_i32_1 = arith.constant 0 : i32
    return %c0_i32, %c0_i32_0 : i32, i32
  }
  func.func @transform_8(%arg0: i32) -> (i32, i32, i32) {
    %c0_i32 = arith.constant 0 : i32
    %c0_i32_0 = arith.constant 0 : i32
    %c0_i32_1 = arith.constant 0 : i32
    return %arg0, %c0_i32, %c0_i32_0 : i32, i32, i32
  }
}

</mosaic_0001>

<llo_original>
// kernel: tpu_custom_call.1
$region0: #{tpu_custom_call.1}
  #allocation0 [shape = 'u32[]', space=smem, size = 0x4, offset = 0x4, fixed_abs, tag = 'smem constant byte address 0x4 - core index']
  #allocation1 [shape = 'u32[144,128]{1,0:T(1,128)}', space=vmem, size = 0x12000, scoped, tag = 'internal scratch']
  #allocation2 [shape = 'f32[40,384]{1,0:T(8,128)}', space=vmem, size = 0xf000, scoped, tag = 'scratch operand']
  %s0 = inlined_call_operand.vmem [shape: f32[2,240,196], index: 0, kind: input, shape index: {}]
  %s1 = inlined_call_operand.vmem [shape: f32[240,1], index: 1, kind: input, shape index: {}]
  %s2 = inlined_call_operand.vmem [shape: f32[240,1], index: 2, kind: input, shape index: {}]
  %s3 = inlined_call_operand.vmem [shape: f32[9,240,1], index: 3, kind: input, shape index: {}]
  %s4 = inlined_call_operand.vmem [shape: f32[240,1], index: 4, kind: input, shape index: {}]
  %s5 = inlined_call_operand.vmem [shape: f32[6,48,40], index: 5, kind: input, shape index: {}]
  %s6 = inlined_call_operand.vmem [shape: f32[1,196], index: 6, kind: input, shape index: {}]
  %s7 = inlined_call_operand.vmem [shape: f32[1,196], index: 7, kind: input, shape index: {}]
  %s8 = inlined_call_operand.hbm [shape: f32[2,48,196], index: 8, kind: output, shape index: {}]
  %s9 = sld [smem:[#allocation0]]
  $region65: #{tpu_custom_call.1} parent=0
    _
  %s11 = ssub.s32 1, %s9
  %s12 = scalar_select 0, %s11, %s9
  $region1: #{tpu_custom_call.1} parent=0
    #allocation3 [shape = 'u8[98304]{0}', space=vmem, size = 0x18000, scoped, tag = 'output window, operand 0']
    #allocation4 [shape = 's32[2]{0}', space=sflag, size = 0x8, scoped, tag = 'scoped memory for tpu_custom_call.1']
    %13 = vsyncpa [#allocation4], 0
    %s14 = scalar_lea.sflag [#allocation4], 1
    %15 = vsyncpa %s14, 0
    loop: start=0, step=1, limit=4
    $region2: #{tpu_custom_call.1} parent=1 // loop_pre_header
      _
    $region3: #{tpu_custom_call.1} parent=1 // loop_header
      %s17 = sphi 0, %s21
      %p18 = scmp.ge.s32.totalorder %s17, 4
      %s27 = sphi 0, %s29
      %s30 = sphi 0, %s27
      %s31 = sphi 0, %s30
      %s47 = sphi 0, %s31
      %s51 = sphi 0, %s51
      %s53 = sphi 0, %s51
      %s54 = sphi 0, %s53
      %s68 = sphi 0, %s54
      %s72 = sphi 0, %s72
      %s74 = sphi 0, %s72
      %s75 = sphi 0, %s74
      %s89 = sphi 0, %s75
      %s93 = sphi 0, %s93
      %s95 = sphi 0, %s93
      %s96 = sphi 0, %s95
      %s110 = sphi 0, %s96
      %s114 = sphi 0, %s114
      %s116 = sphi 0, %s114
      %s117 = sphi 0, %s116
      %s131 = sphi 0, %s117
      %s135 = sphi 0, %s135
      %s137 = sphi 0, %s135
      %s138 = sphi 0, %s137
      %s152 = sphi 0, %s138
      %s156 = sphi 0, %s156
      %s158 = sphi 0, %s156
      %s159 = sphi 0, %s158
      %s173 = sphi 0, %s159
      %s177 = sphi 0, %s177
      %s179 = sphi 0, %s177
      %s180 = sphi 0, %s179
      %s194 = sphi 0, %s180
      %s200 = sphi 0, %s202
      %s203 = sphi 0, %s200
      %s204 = sphi 0, %s203
      %s220 = sphi 0, %s204
    $region4: #{tpu_custom_call.1} parent=1 // loop_header_branch
      %20 = sbr.rel (%p18) target = $region8
    $region5: #{tpu_custom_call.1} parent=1 // loop_body
      %s22 = ssub.s32 %s17, 1
      %s23 = ssub.s32 %s17, 2
      %s24 = sadd.s32 %s17, 1
      %s25 = ssub.s32 %s17, %s24
      %p26 = scmp.eq.s32.totalorder %s25, 0
      %s28 = sadd.s32 %s27, 1
      %s29 = scalar_select %p26, %s27, %s28
      %p32 = pneg %p26
      %p33 = scmp.eq.s32.totalorder %s17, 1
      %p34 = por %p32, %p33
      %p35 = scmp.ne.s32.totalorder %s27, %s30
      %p36 = scmp.eq.s32.totalorder %s17, 0
      %p37 = por %p35, %p36
      %p38 = scmp.ne.s32.totalorder %s27, %s30
      %p39 = scmp.eq.s32.totalorder %s22, 1
      %p40 = por %p38, %p39
      %p41 = scmp.ne.s32.totalorder %s30, %s31
      %p42 = scmp.eq.s32.totalorder %s22, 0
      %p43 = por %p41, %p42
      %p44 = scmp.ne.s32.totalorder %s30, %s31
      %p45 = scmp.eq.s32.totalorder %s23, 1
      %p46 = por %p44, %p45
      %p48 = scmp.ne.s32.totalorder %s31, %s47
      %p49 = scmp.eq.s32.totalorder %s23, 0
      %p50 = por %p48, %p49
      %s52 = sadd.s32 %s51, 1
      %p55 = scmp.eq.s32.totalorder %s17, 1
      %p56 = scmp.ne.s32.totalorder %s51, %s53
      %p57 = scmp.eq.s32.totalorder %s17, 0
      %p58 = por %p56, %p57
      %p59 = scmp.ne.s32.totalorder %s51, %s53
      %p60 = scmp.eq.s32.totalorder %s22, 1
      %p61 = por %p59, %p60
      %p62 = scmp.ne.s32.totalorder %s53, %s54
      %p63 = scmp.eq.s32.totalorder %s22, 0
      %p64 = por %p62, %p63
      %p65 = scmp.ne.s32.totalorder %s53, %s54
      %p66 = scmp.eq.s32.totalorder %s23, 1
      %p67 = por %p65, %p66
      %p69 = scmp.ne.s32.totalorder %s54, %s68
      %p70 = scmp.eq.s32.totalorder %s23, 0
      %p71 = por %p69, %p70
      %s73 = sadd.s32 %s72, 1
      %p76 = scmp.eq.s32.totalorder %s17, 1
      %p77 = scmp.ne.s32.totalorder %s72, %s74
      %p78 = scmp.eq.s32.totalorder %s17, 0
      %p79 = por %p77, %p78
      %p80 = scmp.ne.s32.totalorder %s72, %s74
      %p81 = scmp.eq.s32.totalorder %s22, 1
      %p82 = por %p80, %p81
      %p83 = scmp.ne.s32.totalorder %s74, %s75
      %p84 = scmp.eq.s32.totalorder %s22, 0
      %p85 = por %p83, %p84
      %p86 = scmp.ne.s32.totalorder %s74, %s75
      %p87 = scmp.eq.s32.totalorder %s23, 1
      %p88 = por %p86, %p87
      %p90 = scmp.ne.s32.totalorder %s75, %s89
      %p91 = scmp.eq.s32.totalorder %s23, 0
      %p92 = por %p90, %p91
      %s94 = sadd.s32 %s93, 1
      %p97 = scmp.eq.s32.totalorder %s17, 1
      %p98 = scmp.ne.s32.totalorder %s93, %s95
      %p99 = scmp.eq.s32.totalorder %s17, 0
      %p100 = por %p98, %p99
      %p101 = scmp.ne.s32.totalorder %s93, %s95
      %p102 = scmp.eq.s32.totalorder %s22, 1
      %p103 = por %p101, %p102
      %p104 = scmp.ne.s32.totalorder %s95, %s96
      %p105 = scmp.eq.s32.totalorder %s22, 0
      %p106 = por %p104, %p105
      %p107 = scmp.ne.s32.totalorder %s95, %s96
      %p108 = scmp.eq.s32.totalorder %s23, 1
      %p109 = por %p107, %p108
      %p111 = scmp.ne.s32.totalorder %s96, %s110
      %p112 = scmp.eq.s32.totalorder %s23, 0
      %p113 = por %p111, %p112
      %s115 = sadd.s32 %s114, 1
      %p118 = scmp.eq.s32.totalorder %s17, 1
      %p119 = scmp.ne.s32.totalorder %s114, %s116
      %p120 = scmp.eq.s32.totalorder %s17, 0
      %p121 = por %p119, %p120
      %p122 = scmp.ne.s32.totalorder %s114, %s116
      %p123 = scmp.eq.s32.totalorder %s22, 1
      %p124 = por %p122, %p123
      %p125 = scmp.ne.s32.totalorder %s116, %s117
      %p126 = scmp.eq.s32.totalorder %s22, 0
      %p127 = por %p125, %p126
      %p128 = scmp.ne.s32.totalorder %s116, %s117
      %p129 = scmp.eq.s32.totalorder %s23, 1
      %p130 = por %p128, %p129
      %p132 = scmp.ne.s32.totalorder %s117, %s131
      %p133 = scmp.eq.s32.totalorder %s23, 0
      %p134 = por %p132, %p133
      %s136 = sadd.s32 %s135, 1
      %p139 = scmp.eq.s32.totalorder %s17, 1
      %p140 = scmp.ne.s32.totalorder %s135, %s137
      %p141 = scmp.eq.s32.totalorder %s17, 0
      %p142 = por %p140, %p141
      %p143 = scmp.ne.s32.totalorder %s135, %s137
      %p144 = scmp.eq.s32.totalorder %s22, 1
      %p145 = por %p143, %p144
      %p146 = scmp.ne.s32.totalorder %s137, %s138
      %p147 = scmp.eq.s32.totalorder %s22, 0
      %p148 = por %p146, %p147
      %p149 = scmp.ne.s32.totalorder %s137, %s138
      %p150 = scmp.eq.s32.totalorder %s23, 1
      %p151 = por %p149, %p150
      %p153 = scmp.ne.s32.totalorder %s138, %s152
      %p154 = scmp.eq.s32.totalorder %s23, 0
      %p155 = por %p153, %p154
      %s157 = sadd.s32 %s156, 1
      %p160 = scmp.eq.s32.totalorder %s17, 1
      %p161 = scmp.ne.s32.totalorder %s156, %s158
      %p162 = scmp.eq.s32.totalorder %s17, 0
      %p163 = por %p161, %p162
      %p164 = scmp.ne.s32.totalorder %s156, %s158
      %p165 = scmp.eq.s32.totalorder %s22, 1
      %p166 = por %p164, %p165
      %p167 = scmp.ne.s32.totalorder %s158, %s159
      %p168 = scmp.eq.s32.totalorder %s22, 0
      %p169 = por %p167, %p168
      %p170 = scmp.ne.s32.totalorder %s158, %s159
      %p171 = scmp.eq.s32.totalorder %s23, 1
      %p172 = por %p170, %p171
      %p174 = scmp.ne.s32.totalorder %s159, %s173
      %p175 = scmp.eq.s32.totalorder %s23, 0
      %p176 = por %p174, %p175
      %s178 = sadd.s32 %s177, 1
      %p181 = scmp.eq.s32.totalorder %s17, 1
      %p182 = scmp.ne.s32.totalorder %s177, %s179
      %p183 = scmp.eq.s32.totalorder %s17, 0
      %p184 = por %p182, %p183
      %p185 = scmp.ne.s32.totalorder %s177, %s179
      %p186 = scmp.eq.s32.totalorder %s22, 1
      %p187 = por %p185, %p186
      %p188 = scmp.ne.s32.totalorder %s179, %s180
      %p189 = scmp.eq.s32.totalorder %s22, 0
      %p190 = por %p188, %p189
      %p191 = scmp.ne.s32.totalorder %s179, %s180
      %p192 = scmp.eq.s32.totalorder %s23, 1
      %p193 = por %p191, %p192
      %p195 = scmp.ne.s32.totalorder %s180, %s194
      %p196 = scmp.eq.s32.totalorder %s23, 0
      %p197 = por %p195, %p196
      %s198 = ssub.s32 %s17, %s24
      %p199 = scmp.eq.s32.totalorder %s198, 0
      %s201 = sadd.s32 %s200, 1
      %s202 = scalar_select %p199, %s200, %s201
      %p205 = pneg %p199
      %p206 = scmp.eq.s32.totalorder %s17, 1
      %p207 = por %p205, %p206
      %p208 = scmp.ne.s32.totalorder %s200, %s203
      %p209 = scmp.eq.s32.totalorder %s17, 0
      %p210 = por %p208, %p209
      %p211 = scmp.ne.s32.totalorder %s200, %s203
      %p212 = scmp.eq.s32.totalorder %s22, 1
      %p213 = por %p211, %p212
      %p214 = scmp.ne.s32.totalorder %s203, %s204
      %p215 = scmp.eq.s32.totalorder %s22, 0
      %p216 = por %p214, %p215
      %p217 = scmp.ne.s32.totalorder %s203, %s204
      %p218 = scmp.eq.s32.totalorder %s23, 1
      %p219 = por %p217, %p218
      %p221 = scmp.ne.s32.totalorder %s204, %s220
      %p222 = scmp.eq.s32.totalorder %s23, 0
      %p223 = por %p221, %p222
      %p224 = scmp.le.s32.totalorder 1, %s17
      %p225 = scmp.lt.s32.totalorder %s17, 3
      %p226 = pnand %p224, %p225
      %p227 = pneg %p226
      // Predicated region
      $region9: #{tpu_custom_call.1} parent=5 // pred_check
        _
      $region10: #{tpu_custom_call.1} parent=5 // pred_check_branch
        %229 = sbr.rel (%p226) target = $region12
      $region11: #{tpu_custom_call.1} parent=5 // pred_region
        %s230 = ssub.s32 %s17, 1
        // Predicated region
        $region13: #{tpu_custom_call.1} parent=11 // pred_check
          %p231 = pneg %p64
        $region14: #{tpu_custom_call.1} parent=11 // pred_check_branch
          %233 = sbr.rel (%p231) target = $region16
        $region15: #{tpu_custom_call.1} parent=11 // pred_region
          _
        $region16: #{tpu_custom_call.1} parent=11 // pred_fallthru
          _
        // Predicated region
        $region17: #{tpu_custom_call.1} parent=11 // pred_check
          %p234 = pneg %p85
        $region18: #{tpu_custom_call.1} parent=11 // pred_check_branch
          %236 = sbr.rel (%p234) target = $region20
        $region19: #{tpu_custom_call.1} parent=11 // pred_region
          _
        $region20: #{tpu_custom_call.1} parent=11 // pred_fallthru
          _
        // Predicated region
        $region21: #{tpu_custom_call.1} parent=11 // pred_check
          %p237 = pneg %p106
        $region22: #{tpu_custom_call.1} parent=11 // pred_check_branch
          %239 = sbr.rel (%p237) target = $region24
        $region23: #{tpu_custom_call.1} parent=11 // pred_region
          _
        $region24: #{tpu_custom_call.1} parent=11 // pred_fallthru
          _
        // Predicated region
        $region25: #{tpu_custom_call.1} parent=11 // pred_check
          %p240 = pneg %p127
        $region26: #{tpu_custom_call.1} parent=11 // pred_check_branch
          %242 = sbr.rel (%p240) target = $region28
        $region27: #{tpu_custom_call.1} parent=11 // pred_region
          _
        $region28: #{tpu_custom_call.1} parent=11 // pred_fallthru
          _
        // Predicated region
        $region29: #{tpu_custom_call.1} parent=11 // pred_check
          %p243 = pneg %p148
        $region30: #{tpu_custom_call.1} parent=11 // pred_check_branch
          %245 = sbr.rel (%p243) target = $region32
        $region31: #{tpu_custom_call.1} parent=11 // pred_region
          _
        $region32: #{tpu_custom_call.1} parent=11 // pred_fallthru
          _
        // Predicated region
        $region33: #{tpu_custom_call.1} parent=11 // pred_check
          %p246 = pneg %p169
        $region34: #{tpu_custom_call.1} parent=11 // pred_check_branch
          %248 = sbr.rel (%p246) target = $region36
        $region35: #{tpu_custom_call.1} parent=11 // pred_region
          _
        $region36: #{tpu_custom_call.1} parent=11 // pred_fallthru
          _
        // Predicated region
        $region37: #{tpu_custom_call.1} parent=11 // pred_check
          %p249 = pneg %p190
        $region38: #{tpu_custom_call.1} parent=11 // pred_check_branch
          %251 = sbr.rel (%p249) target = $region40
        $region39: #{tpu_custom_call.1} parent=11 // pred_region
          _
        $region40: #{tpu_custom_call.1} parent=11 // pred_fallthru
          _
      $region12: #{tpu_custom_call.1} parent=5 // pred_fallthru
        _
      %p252 = scmp.lt.s32.totalorder %s17, 2
      // Predicated region
      $region41: #{tpu_custom_call.1} parent=5 // pred_check
        %p253 = pneg %p252
      $region42: #{tpu_custom_call.1} parent=5 // pred_check_branch
        %255 = sbr.rel (%p253) target = $region44
      $region43: #{tpu_custom_call.1} parent=5 // pred_region
        // Predicated region
        $region45: #{tpu_custom_call.1} parent=43 // pred_check
          %p256 = pneg %p37
        $region46: #{tpu_custom_call.1} parent=43 // pred_check_branch
          %258 = sbr.rel (%p256) target = $region48
        $region47: #{tpu_custom_call.1} parent=43 // pred_region
          %p259 = scmp.lt.s32.totalorder %s17, 1
          %s260 = scalar_select %p259, %s17, 1
          %s261 = smul.addr %s260, 60
          %s262 = smul.addr %s261, 8
          %s263 = scalar_lea.vmem %s0, %s262
        $region48: #{tpu_custom_call.1} parent=43 // pred_fallthru
          _
      $region44: #{tpu_custom_call.1} parent=5 // pred_fallthru
        _
      %p264 = scmp.le.s32.totalorder 1, %s17
      %p265 = scmp.lt.s32.totalorder %s17, 3
      %p266 = pnand %p264, %p265
      %p267 = pneg %p266
      // Predicated region
      $region49: #{tpu_custom_call.1} parent=5 // pred_check
        _
      $region50: #{tpu_custom_call.1} parent=5 // pred_check_branch
        %269 = sbr.rel (%p266) target = $region52
      $region51: #{tpu_custom_call.1} parent=5 // pred_region
        %s270 = ssub.s32 %s17, 1
        %p271 = scmp.lt.s32.totalorder %s22, 1
        %s272 = scalar_select %p271, %s22, 1
        %s273 = smul.addr %s272, 60
        %s274 = smul.addr %s273, 8
        %s275 = scalar_lea.vmem %s0, %s274
        %p276 = pneg %p43
        %p277 = pneg %p40
        %p278 = pneg %p64
        %p279 = pneg %p61
        %p280 = pneg %p85
        %p281 = pneg %p82
        %p282 = pneg %p106
        %p283 = pneg %p103
        %p284 = pneg %p127
        %p285 = pneg %p124
        %p286 = pneg %p148
        %p287 = pneg %p145
        %p288 = pneg %p169
        %p289 = pneg %p166
        %p290 = pneg %p190
        %p291 = pneg %p187
        %p292 = pneg %p216
        %p293 = pneg %p213
        %s294 = sand.u32 %s203, 1
        %s295 = scalar_lea.sflag [#allocation4], %s294
        %s296 = sand.u32 %s203, 1
        %s297 = smul.addr %s296, 96
        %s298 = scalar_lea.vmem [#allocation3], %s297
        %p299 = scmp.lt.s32.totalorder %s22, 1
        %s300 = scalar_select %p299, %s22, 1
        %s301 = smul.addr %s300, 60
        %s302 = smul.addr %s301, 8
        %s303 = scalar_lea.vmem %s0, %s302
        %v304 = vld [vmem:[%s6] sm:$0x3]
        %v305 = vld [vmem:[%s7] sm:$0x3]
        %vm306 = vcmask 1048448
        %307 = vst.msk [vmem:[#allocation2] sm:$0xff] %vm306, 0.0
        %308 = vst.msk [vmem:[#allocation2 + $0x18] sm:$0xff] %vm306, 0.0
        %309 = vst.msk [vmem:[#allocation2 + $0x30] sm:$0xff] %vm306, 0.0
        %310 = vst.msk [vmem:[#allocation2 + $0x48] sm:$0xff] %vm306, 0.0
        %311 = vst.msk [vmem:[#allocation2 + $0x60] sm:$0xff] %vm306, 0.0
        %vm312 = vcmask 687648
        %313 = vst.msk [vmem:[#allocation2 + $0x10] sm:$0xff] %vm312, 0.0
        %314 = vst.msk [vmem:[#allocation2 + $0x28] sm:$0xff] %vm312, 0.0
        %315 = vst.msk [vmem:[#allocation2 + $0x40] sm:$0xff] %vm312, 0.0
        %316 = vst.msk [vmem:[#allocation2 + $0x58] sm:$0xff] %vm312, 0.0
        %317 = vst.msk [vmem:[#allocation2 + $0x70] sm:$0xff] %vm312, 0.0
        %v318 = vld [vmem:[%s303] sm:$0xff]
        %v319 = vld [vmem:[%s303 + $0x8] sm:$0xff]
        %v320 = vld [vmem:[%s303 + $0x10] sm:$0xff]
        %v321 = vld [vmem:[%s303 + $0x18] sm:$0xff]
        %v322 = vld [vmem:[%s303 + $0x20] sm:$0xff]
        %v323 = vld [vmem:[%s303 + $0x28] sm:$0xff]
        %v324 = vld [vmem:[%s303 + $0x30] sm:$0xff]
        %v325 = vld [vmem:[%s303 + $0x38] sm:$0xff]
        %v326 = vld [vmem:[%s303 + $0x40] sm:$0xff]
        %v327 = vld [vmem:[%s303 + $0x48] sm:$0xff]
        %v328 = vld [vmem:[%s1] sm:$0xff]
        %v329 = vld [vmem:[%s1 + $0x8] sm:$0xff]
        %v330 = vld [vmem:[%s1 + $0x10] sm:$0xff]
        %v331 = vld [vmem:[%s1 + $0x18] sm:$0xff]
        %v332 = vld [vmem:[%s1 + $0x20] sm:$0xff]
        %334 = vset.pattern.permute.xlu0 0
        %335 = vperm.xlu0 %334, %v328
        %v336 = vpop.permute.xlu0 %335
        %339 = vset.pattern.permute.xlu0 0
        %340 = vperm.xlu0 %339, %v329
        %v341 = vpop.permute.xlu0 %340
        %344 = vset.pattern.permute.xlu0 0
        %345 = vperm.xlu0 %344, %v330
        %v346 = vpop.permute.xlu0 %345
        %349 = vset.pattern.permute.xlu0 0
        %350 = vperm.xlu0 %349, %v331
        %v351 = vpop.permute.xlu0 %350
        %354 = vset.pattern.permute.xlu0 0
        %355 = vperm.xlu0 %354, %v332
        %v356 = vpop.permute.xlu0 %355
        %v358 = vmul.f32 %v318, %v336
        %v359 = vmul.f32 %v319, %v336
        %v360 = vmul.f32 %v320, %v341
        %v361 = vmul.f32 %v321, %v341
        %v362 = vmul.f32 %v322, %v346
        %v363 = vmul.f32 %v323, %v346
        %v364 = vmul.f32 %v324, %v351
        %v365 = vmul.f32 %v325, %v351
        %v366 = vmul.f32 %v326, %v356
        %v367 = vmul.f32 %v327, %v356
        %v368 = vld [vmem:[%s2] sm:$0xff]
        %v369 = vld [vmem:[%s2 + $0x8] sm:$0xff]
        %v370 = vld [vmem:[%s2 + $0x10] sm:$0xff]
        %v371 = vld [vmem:[%s2 + $0x18] sm:$0xff]
        %v372 = vld [vmem:[%s2 + $0x20] sm:$0xff]
        %374 = vset.pattern.permute.xlu0 0
        %375 = vperm.xlu0 %374, %v368
        %v376 = vpop.permute.xlu0 %375
        %379 = vset.pattern.permute.xlu0 0
        %380 = vperm.xlu0 %379, %v369
        %v381 = vpop.permute.xlu0 %380
        %384 = vset.pattern.permute.xlu0 0
        %385 = vperm.xlu0 %384, %v370
        %v386 = vpop.permute.xlu0 %385
        %389 = vset.pattern.permute.xlu0 0
        %390 = vperm.xlu0 %389, %v371
        %v391 = vpop.permute.xlu0 %390
        %394 = vset.pattern.permute.xlu0 0
        %395 = vperm.xlu0 %394, %v372
        %v396 = vpop.permute.xlu0 %395
        %v398 = vadd.f32 %v358, %v376
        %v399 = vadd.f32 %v359, %v376
        %v400 = vadd.f32 %v360, %v381
        %v401 = vadd.f32 %v361, %v381
        %v402 = vadd.f32 %v362, %v386
        %v403 = vadd.f32 %v363, %v386
        %v404 = vadd.f32 %v364, %v391
        %v405 = vadd.f32 %v365, %v391
        %v406 = vadd.f32 %v366, %v396
        %v407 = vadd.f32 %v367, %v396
        %v408 = vmax.f32 %v398, 0.0
        %v409 = vmax.f32 %v399, 0.0
        %v410 = vmax.f32 %v400, 0.0
        %v411 = vmax.f32 %v401, 0.0
        %v412 = vmax.f32 %v402, 0.0
        %v413 = vmax.f32 %v403, 0.0
        %v414 = vmax.f32 %v404, 0.0
        %v415 = vmax.f32 %v405, 0.0
        %v416 = vmax.f32 %v406, 0.0
        %v417 = vmax.f32 %v407, 0.0
        %418 = vst [vmem:[#allocation2 + $0x8] sm:$0xff] %v408
        %vm419 = vcmask 556032
        %420 = vst.msk [vmem:[#allocation2 + $0x10] sm:$0xff] %vm419, %v409
        %421 = vst [vmem:[#allocation2 + $0x20] sm:$0xff] %v410
        %422 = vst.msk [vmem:[#allocation2 + $0x28] sm:$0xff] %vm419, %v411
        %423 = vst [vmem:[#allocation2 + $0x38] sm:$0xff] %v412
        %424 = vst.msk [vmem:[#allocation2 + $0x40] sm:$0xff] %vm419, %v413
        %425 = vst [vmem:[#allocation2 + $0x50] sm:$0xff] %v414
        %426 = vst.msk [vmem:[#allocation2 + $0x58] sm:$0xff] %vm419, %v415
        %427 = vst [vmem:[#allocation2 + $0x68] sm:$0xff] %v416
        %428 = vst.msk [vmem:[#allocation2 + $0x70] sm:$0xff] %vm419, %v417
        %s429 = scalar_lea.vmem %s3, 960
        %v430 = vld [vmem:[%s429] sm:$0xff]
        %v431 = vld [vmem:[%s429 + $0x8] sm:$0xff]
        %v432 = vld [vmem:[%s429 + $0x10] sm:$0xff]
        %v433 = vld [vmem:[%s429 + $0x18] sm:$0xff]
        %v434 = vld [vmem:[%s429 + $0x20] sm:$0xff]
        %436 = vset.pattern.permute.xlu0 0
        %437 = vperm.xlu0 %436, %v430
        %v438 = vpop.permute.xlu0 %437
        %441 = vset.pattern.permute.xlu0 0
        %442 = vperm.xlu0 %441, %v431
        %v443 = vpop.permute.xlu0 %442
        %446 = vset.pattern.permute.xlu0 0
        %447 = vperm.xlu0 %446, %v432
        %v448 = vpop.permute.xlu0 %447
        %451 = vset.pattern.permute.xlu0 0
        %452 = vperm.xlu0 %451, %v433
        %v453 = vpop.permute.xlu0 %452
        %456 = vset.pattern.permute.xlu0 0
        %457 = vperm.xlu0 %456, %v434
        %v458 = vpop.permute.xlu0 %457
        %v460 = vmul.f32 %v408, %v438
        %v461 = vmul.f32 %v409, %v438
        %v462 = vmul.f32 %v410, %v443
        %v463 = vmul.f32 %v411, %v443
        %v464 = vmul.f32 %v412, %v448
        %v465 = vmul.f32 %v413, %v448
        %v466 = vmul.f32 %v414, %v453
        %v467 = vmul.f32 %v415, %v453
        %v468 = vmul.f32 %v416, %v458
        %v469 = vmul.f32 %v417, %v458
        %v470 = vld [vmem:[#allocation2] sm:$0xff]
        %v471 = vld [vmem:[#allocation2 + $0x8] sm:$0xff]
        %v472 = vld [vmem:[#allocation2 + $0x10] sm:$0xff]
        %v473 = vld [vmem:[#allocation2 + $0x18] sm:$0xff]
        %v474 = vld [vmem:[#allocation2 + $0x20] sm:$0xff]
        %v475 = vld [vmem:[#allocation2 + $0x28] sm:$0xff]
        %v476 = vld [vmem:[#allocation2 + $0x30] sm:$0xff]
        %v477 = vld [vmem:[#allocation2 + $0x38] sm:$0xff]
        %v478 = vld [vmem:[#allocation2 + $0x40] sm:$0xff]
        %v479 = vld [vmem:[#allocation2 + $0x48] sm:$0xff]
        %v480 = vld [vmem:[#allocation2 + $0x50] sm:$0xff]
        %v481 = vld [vmem:[#allocation2 + $0x58] sm:$0xff]
        %v482 = vld [vmem:[#allocation2 + $0x60] sm:$0xff]
        %v483 = vld [vmem:[#allocation2 + $0x68] sm:$0xff]
        %v484 = vld [vmem:[#allocation2 + $0x70] sm:$0xff]
        %s485 = scalar_lea.vmem %s3, 240
        %v486 = vld [vmem:[%s485] sm:$0xff]
        %v487 = vld [vmem:[%s485 + $0x8] sm:$0xff]
        %v488 = vld [vmem:[%s485 + $0x10] sm:$0xff]
        %v489 = vld [vmem:[%s485 + $0x18] sm:$0xff]
        %v490 = vld [vmem:[%s485 + $0x20] sm:$0xff]
        %492 = vset.pattern.permute.xlu0 0
        %493 = vperm.xlu0 %492, %v486
        %v494 = vpop.permute.xlu0 %493
        %497 = vset.pattern.permute.xlu0 0
        %498 = vperm.xlu0 %497, %v487
        %v499 = vpop.permute.xlu0 %498
        %502 = vset.pattern.permute.xlu0 0
        %503 = vperm.xlu0 %502, %v488
        %v504 = vpop.permute.xlu0 %503
        %507 = vset.pattern.permute.xlu0 0
        %508 = vperm.xlu0 %507, %v489
        %v509 = vpop.permute.xlu0 %508
        %512 = vset.pattern.permute.xlu0 0
        %513 = vperm.xlu0 %512, %v490
        %v514 = vpop.permute.xlu0 %513
        %v516 = vmul.f32 %v470, %v494
        %v517 = vmul.f32 %v471, %v494
        %v518 = vmul.f32 %v472, %v494
        %v519 = vmul.f32 %v473, %v499
        %v520 = vmul.f32 %v474, %v499
        %v521 = vmul.f32 %v475, %v499
        %v522 = vmul.f32 %v476, %v504
        %v523 = vmul.f32 %v477, %v504
        %v524 = vmul.f32 %v478, %v504
        %v525 = vmul.f32 %v479, %v509
        %v526 = vmul.f32 %v480, %v509
        %v527 = vmul.f32 %v481, %v509
        %v528 = vmul.f32 %v482, %v514
        %v529 = vmul.f32 %v483, %v514
        %v530 = vmul.f32 %v484, %v514
        %546 = vrot.lane.b32.xlu0 %v516, 14
        %v547 = vpop.permute.xlu0 %546
        %548 = vrot.lane.b32.xlu0 %v517, 14
        %v549 = vpop.permute.xlu0 %548
        %550 = vrot.lane.b32.xlu0 %v518, 14
        %v551 = vpop.permute.xlu0 %550
        %552 = vrot.lane.b32.xlu0 %v519, 14
        %v553 = vpop.permute.xlu0 %552
        %554 = vrot.lane.b32.xlu0 %v520, 14
        %v555 = vpop.permute.xlu0 %554
        %556 = vrot.lane.b32.xlu0 %v521, 14
        %v557 = vpop.permute.xlu0 %556
        %558 = vrot.lane.b32.xlu0 %v522, 14
        %v559 = vpop.permute.xlu0 %558
        %560 = vrot.lane.b32.xlu0 %v523, 14
        %v561 = vpop.permute.xlu0 %560
        %562 = vrot.lane.b32.xlu0 %v524, 14
        %v563 = vpop.permute.xlu0 %562
        %564 = vrot.lane.b32.xlu0 %v525, 14
        %v565 = vpop.permute.xlu0 %564
        %566 = vrot.lane.b32.xlu0 %v526, 14
        %v567 = vpop.permute.xlu0 %566
        %568 = vrot.lane.b32.xlu0 %v527, 14
        %v569 = vpop.permute.xlu0 %568
        %570 = vrot.lane.b32.xlu0 %v528, 14
        %v571 = vpop.permute.xlu0 %570
        %572 = vrot.lane.b32.xlu0 %v529, 14
        %v573 = vpop.permute.xlu0 %572
        %574 = vrot.lane.b32.xlu0 %v530, 14
        %v575 = vpop.permute.xlu0 %574
        %vm576 = vcmask 113664
        %v577 = vsel %vm576, %v547, %v549
        %v578 = vsel %vm576, %v549, %v551
        %v579 = vsel %vm576, %v553, %v555
        %v580 = vsel %vm576, %v555, %v557
        %v581 = vsel %vm576, %v559, %v561
        %v582 = vsel %vm576, %v561, %v563
        %v583 = vsel %vm576, %v565, %v567
        %v584 = vsel %vm576, %v567, %v569
        %v585 = vsel %vm576, %v571, %v573
        %v586 = vsel %vm576, %v573, %v575
        %v597 = vadd.f32 %v460, %v577
        %v598 = vadd.f32 %v461, %v578
        %v599 = vadd.f32 %v462, %v579
        %v600 = vadd.f32 %v463, %v580
        %v601 = vadd.f32 %v464, %v581
        %v602 = vadd.f32 %v465, %v582
        %v603 = vadd.f32 %v466, %v583
        %v604 = vadd.f32 %v467, %v584
        %v605 = vadd.f32 %v468, %v585
        %v606 = vadd.f32 %v469, %v586
        %s607 = scalar_lea.vmem %s3, 1680
        %v608 = vld [vmem:[%s607] sm:$0xff]
        %v609 = vld [vmem:[%s607 + $0x8] sm:$0xff]
        %v610 = vld [vmem:[%s607 + $0x10] sm:$0xff]
        %v611 = vld [vmem:[%s607 + $0x18] sm:$0xff]
        %v612 = vld [vmem:[%s607 + $0x20] sm:$0xff]
        %614 = vset.pattern.permute.xlu0 0
        %615 = vperm.xlu0 %614, %v608
        %v616 = vpop.permute.xlu0 %615
        %619 = vset.pattern.permute.xlu0 0
        %620 = vperm.xlu0 %619, %v609
        %v621 = vpop.permute.xlu0 %620
        %624 = vset.pattern.permute.xlu0 0
        %625 = vperm.xlu0 %624, %v610
        %v626 = vpop.permute.xlu0 %625
        %629 = vset.pattern.permute.xlu0 0
        %630 = vperm.xlu0 %629, %v611
        %v631 = vpop.permute.xlu0 %630
        %634 = vset.pattern.permute.xlu0 0
        %635 = vperm.xlu0 %634, %v612
        %v636 = vpop.permute.xlu0 %635
        %v638 = vmul.f32 %v471, %v616
        %v639 = vmul.f32 %v472, %v616
        %v640 = vmul.f32 %v474, %v621
        %v641 = vmul.f32 %v475, %v621
        %v642 = vmul.f32 %v477, %v626
        %v643 = vmul.f32 %v478, %v626
        %v644 = vmul.f32 %v480, %v631
        %v645 = vmul.f32 %v481, %v631
        %v646 = vmul.f32 %v483, %v636
        %v647 = vmul.f32 %v484, %v636
        %658 = vrot.lane.b32.xlu0 %v638, 114
        %v659 = vpop.permute.xlu0 %658
        %660 = vrot.lane.b32.xlu0 %v639, 114
        %v661 = vpop.permute.xlu0 %660
        %662 = vrot.lane.b32.xlu0 %v640, 114
        %v663 = vpop.permute.xlu0 %662
        %664 = vrot.lane.b32.xlu0 %v641, 114
        %v665 = vpop.permute.xlu0 %664
        %666 = vrot.lane.b32.xlu0 %v642, 114
        %v667 = vpop.permute.xlu0 %666
        %668 = vrot.lane.b32.xlu0 %v643, 114
        %v669 = vpop.permute.xlu0 %668
        %670 = vrot.lane.b32.xlu0 %v644, 114
        %v671 = vpop.permute.xlu0 %670
        %672 = vrot.lane.b32.xlu0 %v645, 114
        %v673 = vpop.permute.xlu0 %672
        %674 = vrot.lane.b32.xlu0 %v646, 114
        %v675 = vpop.permute.xlu0 %674
        %676 = vrot.lane.b32.xlu0 %v647, 114
        %v677 = vpop.permute.xlu0 %676
        %vm678 = vcmask 932864
        %v679 = vsel %vm678, %v659, %v661
        %v680 = vsel %vm678, %v663, %v665
        %v681 = vsel %vm678, %v667, %v669
        %v682 = vsel %vm678, %v671, %v673
        %v683 = vsel %vm678, %v675, %v677
        %v694 = vadd.f32 %v597, %v679
        %v695 = vadd.f32 %v598, %v661
        %v696 = vadd.f32 %v599, %v680
        %v697 = vadd.f32 %v600, %v665
        %v698 = vadd.f32 %v601, %v681
        %v699 = vadd.f32 %v602, %v669
        %v700 = vadd.f32 %v603, %v682
        %v701 = vadd.f32 %v604, %v673
        %v702 = vadd.f32 %v605, %v683
        %v703 = vadd.f32 %v606, %v677
        %v704 = vld [vmem:[%s3] sm:$0xff]
        %v705 = vld [vmem:[%s3 + $0x8] sm:$0xff]
        %v706 = vld [vmem:[%s3 + $0x10] sm:$0xff]
        %v707 = vld [vmem:[%s3 + $0x18] sm:$0xff]
        %v708 = vld [vmem:[%s3 + $0x20] sm:$0xff]
        %710 = vset.pattern.permute.xlu0 0
        %711 = vperm.xlu0 %710, %v704
        %v712 = vpop.permute.xlu0 %711
        %715 = vset.pattern.permute.xlu0 0
        %716 = vperm.xlu0 %715, %v705
        %v717 = vpop.permute.xlu0 %716
        %720 = vset.pattern.permute.xlu0 0
        %721 = vperm.xlu0 %720, %v706
        %v722 = vpop.permute.xlu0 %721
        %725 = vset.pattern.permute.xlu0 0
        %726 = vperm.xlu0 %725, %v707
        %v727 = vpop.permute.xlu0 %726
        %730 = vset.pattern.permute.xlu0 0
        %731 = vperm.xlu0 %730, %v708
        %v732 = vpop.permute.xlu0 %731
        %v734 = vmul.f32 %v470, %v712
        %v735 = vmul.f32 %v471, %v712
        %v736 = vmul.f32 %v472, %v712
        %v737 = vmul.f32 %v473, %v717
        %v738 = vmul.f32 %v474, %v717
        %v739 = vmul.f32 %v475, %v717
        %v740 = vmul.f32 %v476, %v722
        %v741 = vmul.f32 %v477, %v722
        %v742 = vmul.f32 %v478, %v722
        %v743 = vmul.f32 %v479, %v727
        %v744 = vmul.f32 %v480, %v727
        %v745 = vmul.f32 %v481, %v727
        %v746 = vmul.f32 %v482, %v732
        %v747 = vmul.f32 %v483, %v732
        %v748 = vmul.f32 %v484, %v732
        %s749 = scalar_lea.vmem %s3, 720
        %v750 = vld [vmem:[%s749] sm:$0xff]
        %v751 = vld [vmem:[%s749 + $0x8] sm:$0xff]
        %v752 = vld [vmem:[%s749 + $0x10] sm:$0xff]
        %v753 = vld [vmem:[%s749 + $0x18] sm:$0xff]
        %v754 = vld [vmem:[%s749 + $0x20] sm:$0xff]
        %756 = vset.pattern.permute.xlu0 0
        %757 = vperm.xlu0 %756, %v750
        %v758 = vpop.permute.xlu0 %757
        %761 = vset.pattern.permute.xlu0 0
        %762 = vperm.xlu0 %761, %v751
        %v763 = vpop.permute.xlu0 %762
        %766 = vset.pattern.permute.xlu0 0
        %767 = vperm.xlu0 %766, %v752
        %v768 = vpop.permute.xlu0 %767
        %771 = vset.pattern.permute.xlu0 0
        %772 = vperm.xlu0 %771, %v753
        %v773 = vpop.permute.xlu0 %772
        %776 = vset.pattern.permute.xlu0 0
        %777 = vperm.xlu0 %776, %v754
        %v778 = vpop.permute.xlu0 %777
        %v780 = vmul.f32 %v470, %v758
        %v781 = vmul.f32 %v471, %v758
        %v782 = vmul.f32 %v472, %v758
        %v783 = vmul.f32 %v473, %v763
        %v784 = vmul.f32 %v474, %v763
        %v785 = vmul.f32 %v475, %v763
        %v786 = vmul.f32 %v476, %v768
        %v787 = vmul.f32 %v477, %v768
        %v788 = vmul.f32 %v478, %v768
        %v789 = vmul.f32 %v479, %v773
        %v790 = vmul.f32 %v480, %v773
        %v791 = vmul.f32 %v481, %v773
        %v792 = vmul.f32 %v482, %v778
        %v793 = vmul.f32 %v483, %v778
        %v794 = vmul.f32 %v484, %v778
        %810 = vrot.lane.b32.xlu0 %v780, 114
        %v811 = vpop.permute.xlu0 %810
        %812 = vrot.lane.b32.xlu0 %v781, 114
        %v813 = vpop.permute.xlu0 %812
        %814 = vrot.lane.b32.xlu0 %v782, 114
        %v815 = vpop.permute.xlu0 %814
        %816 = vrot.lane.b32.xlu0 %v783, 114
        %v817 = vpop.permute.xlu0 %816
        %818 = vrot.lane.b32.xlu0 %v784, 114
        %v819 = vpop.permute.xlu0 %818
        %820 = vrot.lane.b32.xlu0 %v785, 114
        %v821 = vpop.permute.xlu0 %820
        %822 = vrot.lane.b32.xlu0 %v786, 114
        %v823 = vpop.permute.xlu0 %822
        %824 = vrot.lane.b32.xlu0 %v787, 114
        %v825 = vpop.permute.xlu0 %824
        %826 = vrot.lane.b32.xlu0 %v788, 114
        %v827 = vpop.permute.xlu0 %826
        %828 = vrot.lane.b32.xlu0 %v789, 114
        %v829 = vpop.permute.xlu0 %828
        %830 = vrot.lane.b32.xlu0 %v790, 114
        %v831 = vpop.permute.xlu0 %830
        %832 = vrot.lane.b32.xlu0 %v791, 114
        %v833 = vpop.permute.xlu0 %832
        %834 = vrot.lane.b32.xlu0 %v792, 114
        %v835 = vpop.permute.xlu0 %834
        %836 = vrot.lane.b32.xlu0 %v793, 114
        %v837 = vpop.permute.xlu0 %836
        %838 = vrot.lane.b32.xlu0 %v794, 114
        %v839 = vpop.permute.xlu0 %838
        %v840 = vsel %vm678, %v811, %v813
        %v841 = vsel %vm678, %v813, %v815
        %v842 = vsel %vm678, %v817, %v819
        %v843 = vsel %vm678, %v819, %v821
        %v844 = vsel %vm678, %v823, %v825
        %v845 = vsel %vm678, %v825, %v827
        %v846 = vsel %vm678, %v829, %v831
        %v847 = vsel %vm678, %v831, %v833
        %v848 = vsel %vm678, %v835, %v837
        %v849 = vsel %vm678, %v837, %v839
        %v865 = vadd.f32 %v734, %v840
        %v866 = vadd.f32 %v735, %v841
        %v867 = vadd.f32 %v736, %v815
        %v868 = vadd.f32 %v737, %v842
        %v869 = vadd.f32 %v738, %v843
        %v870 = vadd.f32 %v739, %v821
        %v871 = vadd.f32 %v740, %v844
        %v872 = vadd.f32 %v741, %v845
        %v873 = vadd.f32 %v742, %v827
        %v874 = vadd.f32 %v743, %v846
        %v875 = vadd.f32 %v744, %v847
        %v876 = vadd.f32 %v745, %v833
        %v877 = vadd.f32 %v746, %v848
        %v878 = vadd.f32 %v747, %v849
        %v879 = vadd.f32 %v748, %v839
        %s880 = scalar_lea.vmem %s3, 1440
        %v881 = vld [vmem:[%s880] sm:$0xff]
        %v882 = vld [vmem:[%s880 + $0x8] sm:$0xff]
        %v883 = vld [vmem:[%s880 + $0x10] sm:$0xff]
        %v884 = vld [vmem:[%s880 + $0x18] sm:$0xff]
        %v885 = vld [vmem:[%s880 + $0x20] sm:$0xff]
        %887 = vset.pattern.permute.xlu0 0
        %888 = vperm.xlu0 %887, %v881
        %v889 = vpop.permute.xlu0 %888
        %892 = vset.pattern.permute.xlu0 0
        %893 = vperm.xlu0 %892, %v882
        %v894 = vpop.permute.xlu0 %893
        %897 = vset.pattern.permute.xlu0 0
        %898 = vperm.xlu0 %897, %v883
        %v899 = vpop.permute.xlu0 %898
        %902 = vset.pattern.permute.xlu0 0
        %903 = vperm.xlu0 %902, %v884
        %v904 = vpop.permute.xlu0 %903
        %907 = vset.pattern.permute.xlu0 0
        %908 = vperm.xlu0 %907, %v885
        %v909 = vpop.permute.xlu0 %908
        %v911 = vmul.f32 %v471, %v889
        %v912 = vmul.f32 %v472, %v889
        %v913 = vmul.f32 %v474, %v894
        %v914 = vmul.f32 %v475, %v894
        %v915 = vmul.f32 %v477, %v899
        %v916 = vmul.f32 %v478, %v899
        %v917 = vmul.f32 %v480, %v904
        %v918 = vmul.f32 %v481, %v904
        %v919 = vmul.f32 %v483, %v909
        %v920 = vmul.f32 %v484, %v909
        %931 = vrot.lane.b32.xlu0 %v911, 100
        %v932 = vpop.permute.xlu0 %931
        %933 = vrot.lane.b32.xlu0 %v912, 100
        %v934 = vpop.permute.xlu0 %933
        %935 = vrot.lane.b32.xlu0 %v913, 100
        %v936 = vpop.permute.xlu0 %935
        %937 = vrot.lane.b32.xlu0 %v914, 100
        %v938 = vpop.permute.xlu0 %937
        %939 = vrot.lane.b32.xlu0 %v915, 100
        %v940 = vpop.permute.xlu0 %939
        %941 = vrot.lane.b32.xlu0 %v916, 100
        %v942 = vpop.permute.xlu0 %941
        %943 = vrot.lane.b32.xlu0 %v917, 100
        %v944 = vpop.permute.xlu0 %943
        %945 = vrot.lane.b32.xlu0 %v918, 100
        %v946 = vpop.permute.xlu0 %945
        %947 = vrot.lane.b32.xlu0 %v919, 100
        %v948 = vpop.permute.xlu0 %947
        %949 = vrot.lane.b32.xlu0 %v920, 100
        %v950 = vpop.permute.xlu0 %949
        %vm951 = vcmask 818176
        %v952 = vsel %vm951, %v932, %v934
        %v953 = vsel %vm951, %v936, %v938
        %v954 = vsel %vm951, %v940, %v942
        %v955 = vsel %vm951, %v944, %v946
        %v956 = vsel %vm951, %v948, %v950
        %v972 = vadd.f32 %v865, %v932
        %v973 = vadd.f32 %v866, %v952
        %v974 = vadd.f32 %v867, %v934
        %v975 = vadd.f32 %v868, %v936
        %v976 = vadd.f32 %v869, %v953
        %v977 = vadd.f32 %v870, %v938
        %v978 = vadd.f32 %v871, %v940
        %v979 = vadd.f32 %v872, %v954
        %v980 = vadd.f32 %v873, %v942
        %v981 = vadd.f32 %v874, %v944
        %v982 = vadd.f32 %v875, %v955
        %v983 = vadd.f32 %v876, %v946
        %v984 = vadd.f32 %v877, %v948
        %v985 = vadd.f32 %v878, %v956
        %v986 = vadd.f32 %v879, %v950
        %v988 = vlaneseq
        %v989 = vshrl.u32 %v988, 7
        %v990 = vsub.s32 0, %v989
        %v991 = vrot.slane %v304, %v990
        %v992 = vlaneseq
        %v993 = vshrl.u32 %v992, 7
        %v994 = vsub.s32 1, %v993
        %v995 = vrot.slane %v304, %v994
        %1013 = vrot.lane.b32.xlu0 %v972, 15
        %v1014 = vpop.permute.xlu0 %1013
        %1015 = vrot.lane.b32.xlu0 %v973, 15
        %v1016 = vpop.permute.xlu0 %1015
        %1017 = vrot.lane.b32.xlu0 %v974, 15
        %v1018 = vpop.permute.xlu0 %1017
        %1019 = vrot.lane.b32.xlu0 %v975, 15
        %v1020 = vpop.permute.xlu0 %1019
        %1021 = vrot.lane.b32.xlu0 %v976, 15
        %v1022 = vpop.permute.xlu0 %1021
        %1023 = vrot.lane.b32.xlu0 %v977, 15
        %v1024 = vpop.permute.xlu0 %1023
        %1025 = vrot.lane.b32.xlu0 %v978, 15
        %v1026 = vpop.permute.xlu0 %1025
        %1027 = vrot.lane.b32.xlu0 %v979, 15
        %v1028 = vpop.permute.xlu0 %1027
        %1029 = vrot.lane.b32.xlu0 %v980, 15
        %v1030 = vpop.permute.xlu0 %1029
        %1031 = vrot.lane.b32.xlu0 %v981, 15
        %v1032 = vpop.permute.xlu0 %1031
        %1033 = vrot.lane.b32.xlu0 %v982, 15
        %v1034 = vpop.permute.xlu0 %1033
        %1035 = vrot.lane.b32.xlu0 %v983, 15
        %v1036 = vpop.permute.xlu0 %1035
        %1037 = vrot.lane.b32.xlu0 %v984, 15
        %v1038 = vpop.permute.xlu0 %1037
        %1039 = vrot.lane.b32.xlu0 %v985, 15
        %v1040 = vpop.permute.xlu0 %1039
        %1041 = vrot.lane.b32.xlu0 %v986, 15
        %v1042 = vpop.permute.xlu0 %1041
        %vm1043 = vcmask 121856
        %v1044 = vsel %vm1043, %v1014, %v1016
        %v1045 = vsel %vm1043, %v1016, %v1018
        %v1046 = vsel %vm1043, %v1020, %v1022
        %v1047 = vsel %vm1043, %v1022, %v1024
        %v1048 = vsel %vm1043, %v1026, %v1028
        %v1049 = vsel %vm1043, %v1028, %v1030
        %v1050 = vsel %vm1043, %v1032, %v1034
        %v1051 = vsel %vm1043, %v1034, %v1036
        %v1052 = vsel %vm1043, %v1038, %v1040
        %v1053 = vsel %vm1043, %v1040, %v1042
        %v1064 = vmul.f32 %v991, %v1044
        %v1065 = vmul.f32 %v995, %v1045
        %v1066 = vmul.f32 %v991, %v1046
        %v1067 = vmul.f32 %v995, %v1047
        %v1068 = vmul.f32 %v991, %v1048
        %v1069 = vmul.f32 %v995, %v1049
        %v1070 = vmul.f32 %v991, %v1050
        %v1071 = vmul.f32 %v995, %v1051
        %v1072 = vmul.f32 %v991, %v1052
        %v1073 = vmul.f32 %v995, %v1053
        %v1074 = vadd.f32 %v694, %v1064
        %v1075 = vadd.f32 %v695, %v1065
        %v1076 = vadd.f32 %v696, %v1066
        %v1077 = vadd.f32 %v697, %v1067
        %v1078 = vadd.f32 %v698, %v1068
        %v1079 = vadd.f32 %v699, %v1069
        %v1080 = vadd.f32 %v700, %v1070
        %v1081 = vadd.f32 %v701, %v1071
        %v1082 = vadd.f32 %v702, %v1072
        %v1083 = vadd.f32 %v703, %v1073
        %s1084 = scalar_lea.vmem %s3, 480
        %v1085 = vld [vmem:[%s1084] sm:$0xff]
        %v1086 = vld [vmem:[%s1084 + $0x8] sm:$0xff]
        %v1087 = vld [vmem:[%s1084 + $0x10] sm:$0xff]
        %v1088 = vld [vmem:[%s1084 + $0x18] sm:$0xff]
        %v1089 = vld [vmem:[%s1084 + $0x20] sm:$0xff]
        %1091 = vset.pattern.permute.xlu0 0
        %1092 = vperm.xlu0 %1091, %v1085
        %v1093 = vpop.permute.xlu0 %1092
        %1096 = vset.pattern.permute.xlu0 0
        %1097 = vperm.xlu0 %1096, %v1086
        %v1098 = vpop.permute.xlu0 %1097
        %1101 = vset.pattern.permute.xlu0 0
        %1102 = vperm.xlu0 %1101, %v1087
        %v1103 = vpop.permute.xlu0 %1102
        %1106 = vset.pattern.permute.xlu0 0
        %1107 = vperm.xlu0 %1106, %v1088
        %v1108 = vpop.permute.xlu0 %1107
        %1111 = vset.pattern.permute.xlu0 0
        %1112 = vperm.xlu0 %1111, %v1089
        %v1113 = vpop.permute.xlu0 %1112
        %v1115 = vmul.f32 %v470, %v1093
        %v1116 = vmul.f32 %v471, %v1093
        %v1117 = vmul.f32 %v472, %v1093
        %v1118 = vmul.f32 %v473, %v1098
        %v1119 = vmul.f32 %v474, %v1098
        %v1120 = vmul.f32 %v475, %v1098
        %v1121 = vmul.f32 %v476, %v1103
        %v1122 = vmul.f32 %v477, %v1103
        %v1123 = vmul.f32 %v478, %v1103
        %v1124 = vmul.f32 %v479, %v1108
        %v1125 = vmul.f32 %v480, %v1108
        %v1126 = vmul.f32 %v481, %v1108
        %v1127 = vmul.f32 %v482, %v1113
        %v1128 = vmul.f32 %v483, %v1113
        %v1129 = vmul.f32 %v484, %v1113
        %s1130 = scalar_lea.vmem %s3, 1200
        %v1131 = vld [vmem:[%s1130] sm:$0xff]
        %v1132 = vld [vmem:[%s1130 + $0x8] sm:$0xff]
        %v1133 = vld [vmem:[%s1130 + $0x10] sm:$0xff]
        %v1134 = vld [vmem:[%s1130 + $0x18] sm:$0xff]
        %v1135 = vld [vmem:[%s1130 + $0x20] sm:$0xff]
        %1137 = vset.pattern.permute.xlu0 0
        %1138 = vperm.xlu0 %1137, %v1131
        %v1139 = vpop.permute.xlu0 %1138
        %1142 = vset.pattern.permute.xlu0 0
        %1143 = vperm.xlu0 %1142, %v1132
        %v1144 = vpop.permute.xlu0 %1143
        %1147 = vset.pattern.permute.xlu0 0
        %1148 = vperm.xlu0 %1147, %v1133
        %v1149 = vpop.permute.xlu0 %1148
        %1152 = vset.pattern.permute.xlu0 0
        %1153 = vperm.xlu0 %1152, %v1134
        %v1154 = vpop.permute.xlu0 %1153
        %1157 = vset.pattern.permute.xlu0 0
        %1158 = vperm.xlu0 %1157, %v1135
        %v1159 = vpop.permute.xlu0 %1158
        %v1161 = vmul.f32 %v471, %v1139
        %v1162 = vmul.f32 %v472, %v1139
        %v1163 = vmul.f32 %v474, %v1144
        %v1164 = vmul.f32 %v475, %v1144
        %v1165 = vmul.f32 %v477, %v1149
        %v1166 = vmul.f32 %v478, %v1149
        %v1167 = vmul.f32 %v480, %v1154
        %v1168 = vmul.f32 %v481, %v1154
        %v1169 = vmul.f32 %v483, %v1159
        %v1170 = vmul.f32 %v484, %v1159
        %1181 = vrot.lane.b32.xlu0 %v1161, 114
        %v1182 = vpop.permute.xlu0 %1181
        %1183 = vrot.lane.b32.xlu0 %v1162, 114
        %v1184 = vpop.permute.xlu0 %1183
        %1185 = vrot.lane.b32.xlu0 %v1163, 114
        %v1186 = vpop.permute.xlu0 %1185
        %1187 = vrot.lane.b32.xlu0 %v1164, 114
        %v1188 = vpop.permute.xlu0 %1187
        %1189 = vrot.lane.b32.xlu0 %v1165, 114
        %v1190 = vpop.permute.xlu0 %1189
        %1191 = vrot.lane.b32.xlu0 %v1166, 114
        %v1192 = vpop.permute.xlu0 %1191
        %1193 = vrot.lane.b32.xlu0 %v1167, 114
        %v1194 = vpop.permute.xlu0 %1193
        %1195 = vrot.lane.b32.xlu0 %v1168, 114
        %v1196 = vpop.permute.xlu0 %1195
        %1197 = vrot.lane.b32.xlu0 %v1169, 114
        %v1198 = vpop.permute.xlu0 %1197
        %1199 = vrot.lane.b32.xlu0 %v1170, 114
        %v1200 = vpop.permute.xlu0 %1199
        %v1201 = vsel %vm678, %v1182, %v1184
        %v1202 = vsel %vm678, %v1186, %v1188
        %v1203 = vsel %vm678, %v1190, %v1192
        %v1204 = vsel %vm678, %v1194, %v1196
        %v1205 = vsel %vm678, %v1198, %v1200
        %v1221 = vadd.f32 %v1115, %v1182
        %v1222 = vadd.f32 %v1116, %v1201
        %v1223 = vadd.f32 %v1117, %v1184
        %v1224 = vadd.f32 %v1118, %v1186
        %v1225 = vadd.f32 %v1119, %v1202
        %v1226 = vadd.f32 %v1120, %v1188
        %v1227 = vadd.f32 %v1121, %v1190
        %v1228 = vadd.f32 %v1122, %v1203
        %v1229 = vadd.f32 %v1123, %v1192
        %v1230 = vadd.f32 %v1124, %v1194
        %v1231 = vadd.f32 %v1125, %v1204
        %v1232 = vadd.f32 %v1126, %v1196
        %v1233 = vadd.f32 %v1127, %v1198
        %v1234 = vadd.f32 %v1128, %v1205
        %v1235 = vadd.f32 %v1129, %v1200
        %s1236 = scalar_lea.vmem %s3, 1920
        %v1237 = vld [vmem:[%s1236] sm:$0xff]
        %v1238 = vld [vmem:[%s1236 + $0x8] sm:$0xff]
        %v1239 = vld [vmem:[%s1236 + $0x10] sm:$0xff]
        %v1240 = vld [vmem:[%s1236 + $0x18] sm:$0xff]
        %v1241 = vld [vmem:[%s1236 + $0x20] sm:$0xff]
        %1243 = vset.pattern.permute.xlu0 0
        %1244 = vperm.xlu0 %1243, %v1237
        %v1245 = vpop.permute.xlu0 %1244
        %1248 = vset.pattern.permute.xlu0 0
        %1249 = vperm.xlu0 %1248, %v1238
        %v1250 = vpop.permute.xlu0 %1249
        %1253 = vset.pattern.permute.xlu0 0
        %1254 = vperm.xlu0 %1253, %v1239
        %v1255 = vpop.permute.xlu0 %1254
        %1258 = vset.pattern.permute.xlu0 0
        %1259 = vperm.xlu0 %1258, %v1240
        %v1260 = vpop.permute.xlu0 %1259
        %1263 = vset.pattern.permute.xlu0 0
        %1264 = vperm.xlu0 %1263, %v1241
        %v1265 = vpop.permute.xlu0 %1264
        %v1267 = vmul.f32 %v471, %v1245
        %v1268 = vmul.f32 %v472, %v1245
        %v1269 = vmul.f32 %v474, %v1250
        %v1270 = vmul.f32 %v475, %v1250
        %v1271 = vmul.f32 %v477, %v1255
        %v1272 = vmul.f32 %v478, %v1255
        %v1273 = vmul.f32 %v480, %v1260
        %v1274 = vmul.f32 %v481, %v1260
        %v1275 = vmul.f32 %v483, %v1265
        %v1276 = vmul.f32 %v484, %v1265
        %1287 = vrot.lane.b32.xlu0 %v1267, 100
        %v1288 = vpop.permute.xlu0 %1287
        %1289 = vrot.lane.b32.xlu0 %v1268, 100
        %v1290 = vpop.permute.xlu0 %1289
        %1291 = vrot.lane.b32.xlu0 %v1269, 100
        %v1292 = vpop.permute.xlu0 %1291
        %1293 = vrot.lane.b32.xlu0 %v1270, 100
        %v1294 = vpop.permute.xlu0 %1293
        %1295 = vrot.lane.b32.xlu0 %v1271, 100
        %v1296 = vpop.permute.xlu0 %1295
        %1297 = vrot.lane.b32.xlu0 %v1272, 100
        %v1298 = vpop.permute.xlu0 %1297
        %1299 = vrot.lane.b32.xlu0 %v1273, 100
        %v1300 = vpop.permute.xlu0 %1299
        %1301 = vrot.lane.b32.xlu0 %v1274, 100
        %v1302 = vpop.permute.xlu0 %1301
        %1303 = vrot.lane.b32.xlu0 %v1275, 100
        %v1304 = vpop.permute.xlu0 %1303
        %1305 = vrot.lane.b32.xlu0 %v1276, 100
        %v1306 = vpop.permute.xlu0 %1305
        %v1307 = vsel %vm951, %v1288, %v1290
        %v1308 = vsel %vm951, %v1292, %v1294
        %v1309 = vsel %vm951, %v1296, %v1298
        %v1310 = vsel %vm951, %v1300, %v1302
        %v1311 = vsel %vm951, %v1304, %v1306
        %v1327 = vadd.f32 %v1221, %v1288
        %v1328 = vadd.f32 %v1222, %v1307
        %v1329 = vadd.f32 %v1223, %v1290
        %v1330 = vadd.f32 %v1224, %v1292
        %v1331 = vadd.f32 %v1225, %v1308
        %v1332 = vadd.f32 %v1226, %v1294
        %v1333 = vadd.f32 %v1227, %v1296
        %v1334 = vadd.f32 %v1228, %v1309
        %v1335 = vadd.f32 %v1229, %v1298
        %v1336 = vadd.f32 %v1230, %v1300
        %v1337 = vadd.f32 %v1231, %v1310
        %v1338 = vadd.f32 %v1232, %v1302
        %v1339 = vadd.f32 %v1233, %v1304
        %v1340 = vadd.f32 %v1234, %v1311
        %v1341 = vadd.f32 %v1235, %v1306
        %v1343 = vlaneseq
        %v1344 = vshrl.u32 %v1343, 7
        %v1345 = vsub.s32 0, %v1344
        %v1346 = vrot.slane %v305, %v1345
        %v1347 = vlaneseq
        %v1348 = vshrl.u32 %v1347, 7
        %v1349 = vsub.s32 1, %v1348
        %v1350 = vrot.slane %v305, %v1349
        %1368 = vrot.lane.b32.xlu0 %v1327, 13
        %v1369 = vpop.permute.xlu0 %1368
        %1370 = vrot.lane.b32.xlu0 %v1328, 13
        %v1371 = vpop.permute.xlu0 %1370
        %1372 = vrot.lane.b32.xlu0 %v1329, 13
        %v1373 = vpop.permute.xlu0 %1372
        %1374 = vrot.lane.b32.xlu0 %v1330, 13
        %v1375 = vpop.permute.xlu0 %1374
        %1376 = vrot.lane.b32.xlu0 %v1331, 13
        %v1377 = vpop.permute.xlu0 %1376
        %1378 = vrot.lane.b32.xlu0 %v1332, 13
        %v1379 = vpop.permute.xlu0 %1378
        %1380 = vrot.lane.b32.xlu0 %v1333, 13
        %v1381 = vpop.permute.xlu0 %1380
        %1382 = vrot.lane.b32.xlu0 %v1334, 13
        %v1383 = vpop.permute.xlu0 %1382
        %1384 = vrot.lane.b32.xlu0 %v1335, 13
        %v1385 = vpop.permute.xlu0 %1384
        %1386 = vrot.lane.b32.xlu0 %v1336, 13
        %v1387 = vpop.permute.xlu0 %1386
        %1388 = vrot.lane.b32.xlu0 %v1337, 13
        %v1389 = vpop.permute.xlu0 %1388
        %1390 = vrot.lane.b32.xlu0 %v1338, 13
        %v1391 = vpop.permute.xlu0 %1390
        %1392 = vrot.lane.b32.xlu0 %v1339, 13
        %v1393 = vpop.permute.xlu0 %1392
        %1394 = vrot.lane.b32.xlu0 %v1340, 13
        %v1395 = vpop.permute.xlu0 %1394
        %1396 = vrot.lane.b32.xlu0 %v1341, 13
        %v1397 = vpop.permute.xlu0 %1396
        %vm1398 = vcmask 105472
        %v1399 = vsel %vm1398, %v1369, %v1371
        %v1400 = vsel %vm1398, %v1371, %v1373
        %v1401 = vsel %vm1398, %v1375, %v1377
        %v1402 = vsel %vm1398, %v1377, %v1379
        %v1403 = vsel %vm1398, %v1381, %v1383
        %v1404 = vsel %vm1398, %v1383, %v1385
        %v1405 = vsel %vm1398, %v1387, %v1389
        %v1406 = vsel %vm1398, %v1389, %v1391
        %v1407 = vsel %vm1398, %v1393, %v1395
        %v1408 = vsel %vm1398, %v1395, %v1397
        %v1419 = vmul.f32 %v1346, %v1399
        %v1420 = vmul.f32 %v1350, %v1400
        %v1421 = vmul.f32 %v1346, %v1401
        %v1422 = vmul.f32 %v1350, %v1402
        %v1423 = vmul.f32 %v1346, %v1403
        %v1424 = vmul.f32 %v1350, %v1404
        %v1425 = vmul.f32 %v1346, %v1405
        %v1426 = vmul.f32 %v1350, %v1406
        %v1427 = vmul.f32 %v1346, %v1407
        %v1428 = vmul.f32 %v1350, %v1408
        %v1429 = vadd.f32 %v1074, %v1419
        %v1430 = vadd.f32 %v1075, %v1420
        %v1431 = vadd.f32 %v1076, %v1421
        %v1432 = vadd.f32 %v1077, %v1422
        %v1433 = vadd.f32 %v1078, %v1423
        %v1434 = vadd.f32 %v1079, %v1424
        %v1435 = vadd.f32 %v1080, %v1425
        %v1436 = vadd.f32 %v1081, %v1426
        %v1437 = vadd.f32 %v1082, %v1427
        %v1438 = vadd.f32 %v1083, %v1428
        %v1439 = vld [vmem:[%s4] sm:$0xff]
        %v1440 = vld [vmem:[%s4 + $0x8] sm:$0xff]
        %v1441 = vld [vmem:[%s4 + $0x10] sm:$0xff]
        %v1442 = vld [vmem:[%s4 + $0x18] sm:$0xff]
        %v1443 = vld [vmem:[%s4 + $0x20] sm:$0xff]
        %1445 = vset.pattern.permute.xlu0 0
        %1446 = vperm.xlu0 %1445, %v1439
        %v1447 = vpop.permute.xlu0 %1446
        %1450 = vset.pattern.permute.xlu0 0
        %1451 = vperm.xlu0 %1450, %v1440
        %v1452 = vpop.permute.xlu0 %1451
        %1455 = vset.pattern.permute.xlu0 0
        %1456 = vperm.xlu0 %1455, %v1441
        %v1457 = vpop.permute.xlu0 %1456
        %1460 = vset.pattern.permute.xlu0 0
        %1461 = vperm.xlu0 %1460, %v1442
        %v1462 = vpop.permute.xlu0 %1461
        %1465 = vset.pattern.permute.xlu0 0
        %1466 = vperm.xlu0 %1465, %v1443
        %v1467 = vpop.permute.xlu0 %1466
        %v1469 = vadd.f32 %v1429, %v1447
        %v1470 = vadd.f32 %v1430, %v1447
        %v1471 = vadd.f32 %v1431, %v1452
        %v1472 = vadd.f32 %v1432, %v1452
        %v1473 = vadd.f32 %v1433, %v1457
        %v1474 = vadd.f32 %v1434, %v1457
        %v1475 = vadd.f32 %v1435, %v1462
        %v1476 = vadd.f32 %v1436, %v1462
        %v1477 = vadd.f32 %v1437, %v1467
        %v1478 = vadd.f32 %v1438, %v1467
        %v1479 = vmax.f32 %v1469, 0.0
        %v1480 = vmax.f32 %v1470, 0.0
        %v1481 = vmax.f32 %v1471, 0.0
        %v1482 = vmax.f32 %v1472, 0.0
        %v1483 = vmax.f32 %v1473, 0.0
        %v1484 = vmax.f32 %v1474, 0.0
        %v1485 = vmax.f32 %v1475, 0.0
        %v1486 = vmax.f32 %v1476, 0.0
        %v1487 = vmax.f32 %v1477, 0.0
        %v1488 = vmax.f32 %v1478, 0.0
        %v1489 = vld [vmem:[%s5] sm:$0xff]
        %v1490 = vld [vmem:[%s5 + $0x8] sm:$0xff]
        %v1491 = vld [vmem:[%s5 + $0x10] sm:$0xff]
        %v1492 = vld [vmem:[%s5 + $0x18] sm:$0xff]
        %v1493 = vld [vmem:[%s5 + $0x20] sm:$0xff]
        %v1494 = vld [vmem:[%s5 + $0x28] sm:$0xff]
        %vm1495 = vcmask 326656
        %v1497 = vsel %vm1495, %v1489, 0
        %v1500 = vsel %vm1495, %v1490, 0
        %v1503 = vsel %vm1495, %v1491, 0
        %v1506 = vsel %vm1495, %v1492, 0
        %v1509 = vsel %vm1495, %v1493, 0
        %v1512 = vsel %vm1495, %v1494, 0
        %1514 = vmatprep.subr.mxu0 %v1480
        %1515 = vmatpush1.msra.mxu0 %v1479
        %1516 = vmatprep.subr.mxu0 %v1482
        %1517 = vmatpush1.msra.mxu0 %v1481
        %1518 = vmatprep.subr.mxu0 %v1484
        %1519 = vmatpush1.msra.mxu0 %v1483
        %1520 = vmatprep.subr.mxu0 %v1486
        %1521 = vmatpush1.msra.mxu0 %v1485
        %1522 = vmatprep.subr.mxu0 %v1488
        %1523 = vmatpush1.msra.mxu0 %v1487
        %1524 = vmatprep.subr.mxu0 0.0
        %1525 = vmatpush1.msra.mxu0 0.0
        %1526 = vmatprep.subr.mxu0 0.0
        %1527 = vmatpush1.msra.mxu0 0.0
        %1528 = vmatprep.subr.mxu0 0.0
        %1529 = vmatpush1.msra.mxu0 0.0
        %1530 = vmatprep.subr.mxu0 0.0
        %1531 = vmatpush1.msra.mxu0 0.0
        %1532 = vmatprep.subr.mxu0 0.0
        %1533 = vmatpush1.msra.mxu0 0.0
        %1534 = vmatprep.subr.mxu0 0.0
        %1535 = vmatpush1.msra.mxu0 0.0
        %1536 = vmatprep.subr.mxu0 0.0
        %1537 = vmatpush1.msra.mxu0 0.0
        %1538 = vmatprep.subr.mxu0 0.0
        %1539 = vmatpush1.msra.mxu0 0.0
        %1540 = vmatprep.subr.mxu0 0.0
        %1541 = vmatpush1.msra.mxu0 0.0
        %1542 = vmatprep.subr.mxu0 0.0
        %1543 = vmatpush1.msra.mxu0 0.0
        %1544 = vmatprep.subr.mxu0 0.0
        %1545 = vmatpush1.msra.mxu0 0.0
        %1546 = vmatprep.subr.mxu0 0.0
        %1547 = vmatpush1.msra.mxu0 0.0
        %1548 = vmatprep.subr.mxu0 0.0
        %1549 = vmatpush1.msra.mxu0 0.0
        %1550 = vmatprep.subr.mxu0 0.0
        %1551 = vmatpush1.msra.mxu0 0.0
        %1552 = vmatprep.subr.mxu0 0.0
        %1553 = vmatpush1.msra.mxu0 0.0
        %1554 = vmatprep.subr.mxu0 0.0
        %1555 = vmatpush1.msra.mxu0 0.0
        %1556 = vmatprep.subr.mxu0 0.0
        %1557 = vmatpush1.msra.mxu0 0.0
        %1558 = vmatprep.subr.mxu0 0.0
        %1559 = vmatpush1.msra.mxu0 0.0
        %1560 = vmatprep.subr.mxu0 0.0
        %1561 = vmatpush1.msra.mxu0 0.0
        %1562 = vmatprep.subr.mxu0 0.0
        %1563 = vmatpush1.msra.mxu0 0.0
        %1564 = vmatprep.subr.mxu0 0.0
        %1565 = vmatpush1.msra.mxu0 0.0
        %1566 = vmatprep.subr.mxu0 0.0
        %1567 = vmatpush1.msra.mxu0 0.0
        %1568 = vmatprep.subr.mxu0 0.0
        %1569 = vmatpush1.msra.mxu0 0.0
        %1570 = vmatprep.subr.mxu0 0.0
        %1571 = vmatpush1.msra.mxu0 0.0
        %1572 = vmatprep.subr.mxu0 0.0
        %1573 = vmatpush1.msra.mxu0 0.0
        %1574 = vmatprep.subr.mxu0 0.0
        %1575 = vmatpush1.msra.mxu0 0.0
        %1576 = vmatprep.subr.mxu0 0.0
        %1577 = vmatpush1.msra.mxu0 0.0
        %1578 = vmatprep.mubr.f32.mxu0 0.0
        %1579 = vmatmul.mubr.f32.gmra.mrb[0].mxu0 %v1497
        %v1580 = vpop.f32.mrb[0].mxu0
        %v1581 = vadd.f32 0.0, %v1580
        %v1582 = vpop.f32.mrb[0].mxu0
        %v1583 = vadd.f32 0.0, %v1582
        %1584 = vmatprep.mubr.f32.mxu0 0.0
        %1585 = vmatmul.mubr.f32.gmra.mrb[0].mxu0 %v1500
        %v1586 = vpop.f32.mrb[0].mxu0
        %v1587 = vadd.f32 0.0, %v1586
        %v1588 = vpop.f32.mrb[0].mxu0
        %v1589 = vadd.f32 0.0, %v1588
        %1590 = vmatprep.mubr.f32.mxu0 0.0
        %1591 = vmatmul.mubr.f32.gmra.mrb[0].mxu0 %v1503
        %v1592 = vpop.f32.mrb[0].mxu0
        %v1593 = vadd.f32 0.0, %v1592
        %v1594 = vpop.f32.mrb[0].mxu0
        %v1595 = vadd.f32 0.0, %v1594
        %1596 = vmatprep.mubr.f32.mxu0 0.0
        %1597 = vmatmul.mubr.f32.gmra.mrb[0].mxu0 %v1506
        %v1598 = vpop.f32.mrb[0].mxu0
        %v1599 = vadd.f32 0.0, %v1598
        %v1600 = vpop.f32.mrb[0].mxu0
        %v1601 = vadd.f32 0.0, %v1600
        %1602 = vmatprep.mubr.f32.mxu0 0.0
        %1603 = vmatmul.mubr.f32.gmra.mrb[0].mxu0 %v1509
        %v1604 = vpop.f32.mrb[0].mxu0
        %v1605 = vadd.f32 0.0, %v1604
        %v1606 = vpop.f32.mrb[0].mxu0
        %v1607 = vadd.f32 0.0, %v1606
        %1608 = vmatprep.mubr.f32.mxu0 0.0
        %1609 = vmatmul.mubr.f32.gmra.mrb[0].mxu0 %v1512
        %v1610 = vpop.f32.mrb[0].mxu0
        %v1611 = vadd.f32 0.0, %v1610
        %v1612 = vpop.f32.mrb[0].mxu0
        %v1613 = vadd.f32 0.0, %v1612
        %1614 = vdwg.mxu0
        %1615 = vst [vmem:[%s298] sm:$0xff] %v1581
        %1616 = vst.msk [vmem:[%s298 + $0x8] sm:$0xff] %vm419, %v1583
        %1617 = vst [vmem:[%s298 + $0x10] sm:$0xff] %v1587
        %1618 = vst.msk [vmem:[%s298 + $0x18] sm:$0xff] %vm419, %v1589
        %1619 = vst [vmem:[%s298 + $0x20] sm:$0xff] %v1593
        %1620 = vst.msk [vmem:[%s298 + $0x28] sm:$0xff] %vm419, %v1595
        %1621 = vst [vmem:[%s298 + $0x30] sm:$0xff] %v1599
        %1622 = vst.msk [vmem:[%s298 + $0x38] sm:$0xff] %vm419, %v1601
        %1623 = vst [vmem:[%s298 + $0x40] sm:$0xff] %v1605
        %1624 = vst.msk [vmem:[%s298 + $0x48] sm:$0xff] %vm419, %v1607
        %1625 = vst [vmem:[%s298 + $0x50] sm:$0xff] %v1611
        %1626 = vst.msk [vmem:[%s298 + $0x58] sm:$0xff] %vm419, %v1613
        %v1627 = vld [vmem:[%s303 + $0x50] sm:$0xff]
        %v1628 = vld [vmem:[%s303 + $0x58] sm:$0xff]
        %v1629 = vld [vmem:[%s303 + $0x60] sm:$0xff]
        %v1630 = vld [vmem:[%s303 + $0x68] sm:$0xff]
        %v1631 = vld [vmem:[%s303 + $0x70] sm:$0xff]
        %v1632 = vld [vmem:[%s303 + $0x78] sm:$0xff]
        %v1633 = vld [vmem:[%s303 + $0x80] sm:$0xff]
        %v1634 = vld [vmem:[%s303 + $0x88] sm:$0xff]
        %v1635 = vld [vmem:[%s303 + $0x90] sm:$0xff]
        %v1636 = vld [vmem:[%s303 + $0x98] sm:$0xff]
        %v1637 = vld [vmem:[%s1 + $0x28] sm:$0xff]
        %v1638 = vld [vmem:[%s1 + $0x30] sm:$0xff]
        %v1639 = vld [vmem:[%s1 + $0x38] sm:$0xff]
        %v1640 = vld [vmem:[%s1 + $0x40] sm:$0xff]
        %v1641 = vld [vmem:[%s1 + $0x48] sm:$0xff]
        %1643 = vset.pattern.permute.xlu0 0
        %1644 = vperm.xlu0 %1643, %v1637
        %v1645 = vpop.permute.xlu0 %1644
        %1648 = vset.pattern.permute.xlu0 0
        %1649 = vperm.xlu0 %1648, %v1638
        %v1650 = vpop.permute.xlu0 %1649
        %1653 = vset.pattern.permute.xlu0 0
        %1654 = vperm.xlu0 %1653, %v1639
        %v1655 = vpop.permute.xlu0 %1654
        %1658 = vset.pattern.permute.xlu0 0
        %1659 = vperm.xlu0 %1658, %v1640
        %v1660 = vpop.permute.xlu0 %1659
        %1663 = vset.pattern.permute.xlu0 0
        %1664 = vperm.xlu0 %1663, %v1641
        %v1665 = vpop.permute.xlu0 %1664
        %v1667 = vmul.f32 %v1627, %v1645
        %v1668 = vmul.f32 %v1628, %v1645
        %v1669 = vmul.f32 %v1629, %v1650
        %v1670 = vmul.f32 %v1630, %v1650
        %v1671 = vmul.f32 %v1631, %v1655
        %v1672 = vmul.f32 %v1632, %v1655
        %v1673 = vmul.f32 %v1633, %v1660
        %v1674 = vmul.f32 %v1634, %v1660
        %v1675 = vmul.f32 %v1635, %v1665
        %v1676 = vmul.f32 %v1636, %v1665
        %v1677 = vld [vmem:[%s2 + $0x28] sm:$0xff]
        %v1678 = vld [vmem:[%s2 + $0x30] sm:$0xff]
        %v1679 = vld [vmem:[%s2 + $0x38] sm:$0xff]
        %v1680 = vld [vmem:[%s2 + $0x40] sm:$0xff]
        %v1681 = vld [vmem:[%s2 + $0x48] sm:$0xff]
        %1683 = vset.pattern.permute.xlu0 0
        %1684 = vperm.xlu0 %1683, %v1677
        %v1685 = vpop.permute.xlu0 %1684
        %1688 = vset.pattern.permute.xlu0 0
        %1689 = vperm.xlu0 %1688, %v1678
        %v1690 = vpop.permute.xlu0 %1689
        %1693 = vset.pattern.permute.xlu0 0
        %1694 = vperm.xlu0 %1693, %v1679
        %v1695 = vpop.permute.xlu0 %1694
        %1698 = vset.pattern.permute.xlu0 0
        %1699 = vperm.xlu0 %1698, %v1680
        %v1700 = vpop.permute.xlu0 %1699
        %1703 = vset.pattern.permute.xlu0 0
        %1704 = vperm.xlu0 %1703, %v1681
        %v1705 = vpop.permute.xlu0 %1704
        %v1707 = vadd.f32 %v1667, %v1685
        %v1708 = vadd.f32 %v1668, %v1685
        %v1709 = vadd.f32 %v1669, %v1690
        %v1710 = vadd.f32 %v1670, %v1690
        %v1711 = vadd.f32 %v1671, %v1695
        %v1712 = vadd.f32 %v1672, %v1695
        %v1713 = vadd.f32 %v1673, %v1700
        %v1714 = vadd.f32 %v1674, %v1700
        %v1715 = vadd.f32 %v1675, %v1705
        %v1716 = vadd.f32 %v1676, %v1705
        %v1717 = vmax.f32 %v1707, 0.0
        %v1718 = vmax.f32 %v1708, 0.0
        %v1719 = vmax.f32 %v1709, 0.0
        %v1720 = vmax.f32 %v1710, 0.0
        %v1721 = vmax.f32 %v1711, 0.0
        %v1722 = vmax.f32 %v1712, 0.0
        %v1723 = vmax.f32 %v1713, 0.0
        %v1724 = vmax.f32 %v1714, 0.0
        %v1725 = vmax.f32 %v1715, 0.0
        %v1726 = vmax.f32 %v1716, 0.0
        %1727 = vst [vmem:[#allocation2 + $0x8] sm:$0xff] %v1717
        %1728 = vst.msk [vmem:[#allocation2 + $0x10] sm:$0xff] %vm419, %v1718
        %1729 = vst [vmem:[#allocation2 + $0x20] sm:$0xff] %v1719
        %1730 = vst.msk [vmem:[#allocation2 + $0x28] sm:$0xff] %vm419, %v1720
        %1731 = vst [vmem:[#allocation2 + $0x38] sm:$0xff] %v1721
        %1732 = vst.msk [vmem:[#allocation2 + $0x40] sm:$0xff] %vm419, %v1722
        %1733 = vst [vmem:[#allocation2 + $0x50] sm:$0xff] %v1723
        %1734 = vst.msk [vmem:[#allocation2 + $0x58] sm:$0xff] %vm419, %v1724
        %1735 = vst [vmem:[#allocation2 + $0x68] sm:$0xff] %v1725
        %1736 = vst.msk [vmem:[#allocation2 + $0x70] sm:$0xff] %vm419, %v1726
        %v1737 = vld [vmem:[%s429 + $0x28] sm:$0xff]
        %v1738 = vld [vmem:[%s429 + $0x30] sm:$0xff]
        %v1739 = vld [vmem:[%s429 + $0x38] sm:$0xff]
        %v1740 = vld [vmem:[%s429 + $0x40] sm:$0xff]
        %v1741 = vld [vmem:[%s429 + $0x48] sm:$0xff]
        %1743 = vset.pattern.permute.xlu0 0
        %1744 = vperm.xlu0 %1743, %v1737
        %v1745 = vpop.permute.xlu0 %1744
        %1748 = vset.pattern.permute.xlu0 0
        %1749 = vperm.xlu0 %1748, %v1738
        %v1750 = vpop.permute.xlu0 %1749
        %1753 = vset.pattern.permute.xlu0 0
        %1754 = vperm.xlu0 %1753, %v1739
        %v1755 = vpop.permute.xlu0 %1754
        %1758 = vset.pattern.permute.xlu0 0
        %1759 = vperm.xlu0 %1758, %v1740
        %v1760 = vpop.permute.xlu0 %1759
        %1763 = vset.pattern.permute.xlu0 0
        %1764 = vperm.xlu0 %1763, %v1741
        %v1765 = vpop.permute.xlu0 %1764
        %v1767 = vmul.f32 %v1717, %v1745
        %v1768 = vmul.f32 %v1718, %v1745
        %v1769 = vmul.f32 %v1719, %v1750
        %v1770 = vmul.f32 %v1720, %v1750
        %v1771 = vmul.f32 %v1721, %v1755
        %v1772 = vmul.f32 %v1722, %v1755
        %v1773 = vmul.f32 %v1723, %v1760
        %v1774 = vmul.f32 %v1724, %v1760
        %v1775 = vmul.f32 %v1725, %v1765
        %v1776 = vmul.f32 %v1726, %v1765
        %v1777 = vld [vmem:[#allocation2] sm:$0xff]
        %v1778 = vld [vmem:[#allocation2 + $0x8] sm:$0xff]
        %v1779 = vld [vmem:[#allocation2 + $0x10] sm:$0xff]
        %v1780 = vld [vmem:[#allocation2 + $0x18] sm:$0xff]
        %v1781 = vld [vmem:[#allocation2 + $0x20] sm:$0xff]
        %v1782 = vld [vmem:[#allocation2 + $0x28] sm:$0xff]
        %v1783 = vld [vmem:[#allocation2 + $0x30] sm:$0xff]
        %v1784 = vld [vmem:[#allocation2 + $0x38] sm:$0xff]
        %v1785 = vld [vmem:[#allocation2 + $0x40] sm:$0xff]
        %v1786 = vld [vmem:[#allocation2 + $0x48] sm:$0xff]
        %v1787 = vld [vmem:[#allocation2 + $0x50] sm:$0xff]
        %v1788 = vld [vmem:[#allocation2 + $0x58] sm:$0xff]
        %v1789 = vld [vmem:[#allocation2 + $0x60] sm:$0xff]
        %v1790 = vld [vmem:[#allocation2 + $0x68] sm:$0xff]
        %v1791 = vld [vmem:[#allocation2 + $0x70] sm:$0xff]
        %v1792 = vld [vmem:[%s485 + $0x28] sm:$0xff]
        %v1793 = vld [vmem:[%s485 + $0x30] sm:$0xff]
        %v1794 = vld [vmem:[%s485 + $0x38] sm:$0xff]
        %v1795 = vld [vmem:[%s485 + $0x40] sm:$0xff]
        %v1796 = vld [vmem:[%s485 + $0x48] sm:$0xff]
        %1798 = vset.pattern.permute.xlu0 0
        %1799 = vperm.xlu0 %1798, %v1792
        %v1800 = vpop.permute.xlu0 %1799
        %1803 = vset.pattern.permute.xlu0 0
        %1804 = vperm.xlu0 %1803, %v1793
        %v1805 = vpop.permute.xlu0 %1804
        %1808 = vset.pattern.permute.xlu0 0
        %1809 = vperm.xlu0 %1808, %v1794
        %v1810 = vpop.permute.xlu0 %1809
        %1813 = vset.pattern.permute.xlu0 0
        %1814 = vperm.xlu0 %1813, %v1795
        %v1815 = vpop.permute.xlu0 %1814
        %1818 = vset.pattern.permute.xlu0 0
        %1819 = vperm.xlu0 %1818, %v1796
        %v1820 = vpop.permute.xlu0 %1819
        %v1822 = vmul.f32 %v1777, %v1800
        %v1823 = vmul.f32 %v1778, %v1800
        %v1824 = vmul.f32 %v1779, %v1800
        %v1825 = vmul.f32 %v1780, %v1805
        %v1826 = vmul.f32 %v1781, %v1805
        %v1827 = vmul.f32 %v1782, %v1805
        %v1828 = vmul.f32 %v1783, %v1810
        %v1829 = vmul.f32 %v1784, %v1810
        %v1830 = vmul.f32 %v1785, %v1810
        %v1831 = vmul.f32 %v1786, %v1815
        %v1832 = vmul.f32 %v1787, %v1815
        %v1833 = vmul.f32 %v1788, %v1815
        %v1834 = vmul.f32 %v1789, %v1820
        %v1835 = vmul.f32 %v1790, %v1820
        %v1836 = vmul.f32 %v1791, %v1820
        %1852 = vrot.lane.b32.xlu0 %v1822, 14
        %v1853 = vpop.permute.xlu0 %1852
        %1854 = vrot.lane.b32.xlu0 %v1823, 14
        %v1855 = vpop.permute.xlu0 %1854
        %1856 = vrot.lane.b32.xlu0 %v1824, 14
        %v1857 = vpop.permute.xlu0 %1856
        %1858 = vrot.lane.b32.xlu0 %v1825, 14
        %v1859 = vpop.permute.xlu0 %1858
        %1860 = vrot.lane.b32.xlu0 %v1826, 14
        %v1861 = vpop.permute.xlu0 %1860
        %1862 = vrot.lane.b32.xlu0 %v1827, 14
        %v1863 = vpop.permute.xlu0 %1862
        %1864 = vrot.lane.b32.xlu0 %v1828, 14
        %v1865 = vpop.permute.xlu0 %1864
        %1866 = vrot.lane.b32.xlu0 %v1829, 14
        %v1867 = vpop.permute.xlu0 %1866
        %1868 = vrot.lane.b32.xlu0 %v1830, 14
        %v1869 = vpop.permute.xlu0 %1868
        %1870 = vrot.lane.b32.xlu0 %v1831, 14
        %v1871 = vpop.permute.xlu0 %1870
        %1872 = vrot.lane.b32.xlu0 %v1832, 14
        %v1873 = vpop.permute.xlu0 %1872
        %1874 = vrot.lane.b32.xlu0 %v1833, 14
        %v1875 = vpop.permute.xlu0 %1874
        %1876 = vrot.lane.b32.xlu0 %v1834, 14
        %v1877 = vpop.permute.xlu0 %1876
        %1878 = vrot.lane.b32.xlu0 %v1835, 14
        %v1879 = vpop.permute.xlu0 %1878
        %1880 = vrot.lane.b32.xlu0 %v1836, 14
        %v1881 = vpop.permute.xlu0 %1880
        %v1882 = vsel %vm576, %v1853, %v1855
        %v1883 = vsel %vm576, %v1855, %v1857
        %v1884 = vsel %vm576, %v1859, %v1861
        %v1885 = vsel %vm576, %v1861, %v1863
        %v1886 = vsel %vm576, %v1865, %v1867
        %v1887 = vsel %vm576, %v1867, %v1869
        %v1888 = vsel %vm576, %v1871, %v1873
        %v1889 = vsel %vm576, %v1873, %v1875
        %v1890 = vsel %vm576, %v1877, %v1879
        %v1891 = vsel %vm576, %v1879, %v1881
        %v1902 = vadd.f32 %v1767, %v1882
        %v1903 = vadd.f32 %v1768, %v1883
        %v1904 = vadd.f32 %v1769, %v1884
        %v1905 = vadd.f32 %v1770, %v1885
        %v1906 = vadd.f32 %v1771, %v1886
        %v1907 = vadd.f32 %v1772, %v1887
        %v1908 = vadd.f32 %v1773, %v1888
        %v1909 = vadd.f32 %v1774, %v1889
        %v1910 = vadd.f32 %v1775, %v1890
        %v1911 = vadd.f32 %v1776, %v1891
        %v1912 = vld [vmem:[%s607 + $0x28] sm:$0xff]
        %v1913 = vld [vmem:[%s607 + $0x30] sm:$0xff]
        %v1914 = vld [vmem:[%s607 + $0x38] sm:$0xff]
        %v1915 = vld [vmem:[%s607 + $0x40] sm:$0xff]
        %v1916 = vld [vmem:[%s607 + $0x48] sm:$0xff]
        %1918 = vset.pattern.permute.xlu0 0
        %1919 = vperm.xlu0 %1918, %v1912
        %v1920 = vpop.permute.xlu0 %1919
        %1923 = vset.pattern.permute.xlu0 0
        %1924 = vperm.xlu0 %1923, %v1913
        %v1925 = vpop.permute.xlu0 %1924
        %1928 = vset.pattern.permute.xlu0 0
        %1929 = vperm.xlu0 %1928, %v1914
        %v1930 = vpop.permute.xlu0 %1929
        %1933 = vset.pattern.permute.xlu0 0
        %1934 = vperm.xlu0 %1933, %v1915
        %v1935 = vpop.permute.xlu0 %1934
        %1938 = vset.pattern.permute.xlu0 0
        %1939 = vperm.xlu0 %1938, %v1916
        %v1940 = vpop.permute.xlu0 %1939
        %v1942 = vmul.f32 %v1778, %v1920
        %v1943 = vmul.f32 %v1779, %v1920
        %v1944 = vmul.f32 %v1781, %v1925
        %v1945 = vmul.f32 %v1782, %v1925
        %v1946 = vmul.f32 %v1784, %v1930
        %v1947 = vmul.f32 %v1785, %v1930
        %v1948 = vmul.f32 %v1787, %v1935
        %v1949 = vmul.f32 %v1788, %v1935
        %v1950 = vmul.f32 %v1790, %v1940
        %v1951 = vmul.f32 %v1791, %v1940
        %1962 = vrot.lane.b32.xlu0 %v1942, 114
        %v1963 = vpop.permute.xlu0 %1962
        %1964 = vrot.lane.b32.xlu0 %v1943, 114
        %v1965 = vpop.permute.xlu0 %1964
        %1966 = vrot.lane.b32.xlu0 %v1944, 114
        %v1967 = vpop.permute.xlu0 %1966
        %1968 = vrot.lane.b32.xlu0 %v1945, 114
        %v1969 = vpop.permute.xlu0 %1968
        %1970 = vrot.lane.b32.xlu0 %v1946, 114
        %v1971 = vpop.permute.xlu0 %1970
        %1972 = vrot.lane.b32.xlu0 %v1947, 114
        %v1973 = vpop.permute.xlu0 %1972
        %1974 = vrot.lane.b32.xlu0 %v1948, 114
        %v1975 = vpop.permute.xlu0 %1974
        %1976 = vrot.lane.b32.xlu0 %v1949, 114
        %v1977 = vpop.permute.xlu0 %1976
        %1978 = vrot.lane.b32.xlu0 %v1950, 114
        %v1979 = vpop.permute.xlu0 %1978
        %1980 = vrot.lane.b32.xlu0 %v1951, 114
        %v1981 = vpop.permute.xlu0 %1980
        %v1982 = vsel %vm678, %v1963, %v1965
        %v1983 = vsel %vm678, %v1967, %v1969
        %v1984 = vsel %vm678, %v1971, %v1973
        %v1985 = vsel %vm678, %v1975, %v1977
        %v1986 = vsel %vm678, %v1979, %v1981
        %v1997 = vadd.f32 %v1902, %v1982
        %v1998 = vadd.f32 %v1903, %v1965
        %v1999 = vadd.f32 %v1904, %v1983
        %v2000 = vadd.f32 %v1905, %v1969
        %v2001 = vadd.f32 %v1906, %v1984
        %v2002 = vadd.f32 %v1907, %v1973
        %v2003 = vadd.f32 %v1908, %v1985
        %v2004 = vadd.f32 %v1909, %v1977
        %v2005 = vadd.f32 %v1910, %v1986
        %v2006 = vadd.f32 %v1911, %v1981
        %v2007 = vld [vmem:[%s3 + $0x28] sm:$0xff]
        %v2008 = vld [vmem:[%s3 + $0x30] sm:$0xff]
        %v2009 = vld [vmem:[%s3 + $0x38] sm:$0xff]
        %v2010 = vld [vmem:[%s3 + $0x40] sm:$0xff]
        %v2011 = vld [vmem:[%s3 + $0x48] sm:$0xff]
        %2013 = vset.pattern.permute.xlu0 0
        %2014 = vperm.xlu0 %2013, %v2007
        %v2015 = vpop.permute.xlu0 %2014
        %2018 = vset.pattern.permute.xlu0 0
        %2019 = vperm.xlu0 %2018, %v2008
        %v2020 = vpop.permute.xlu0 %2019
        %2023 = vset.pattern.permute.xlu0 0
        %2024 = vperm.xlu0 %2023, %v2009
        %v2025 = vpop.permute.xlu0 %2024
        %2028 = vset.pattern.permute.xlu0 0
        %2029 = vperm.xlu0 %2028, %v2010
        %v2030 = vpop.permute.xlu0 %2029
        %2033 = vset.pattern.permute.xlu0 0
        %2034 = vperm.xlu0 %2033, %v2011
        %v2035 = vpop.permute.xlu0 %2034
        %v2037 = vmul.f32 %v1777, %v2015
        %v2038 = vmul.f32 %v1778, %v2015
        %v2039 = vmul.f32 %v1779, %v2015
        %v2040 = vmul.f32 %v1780, %v2020
        %v2041 = vmul.f32 %v1781, %v2020
        %v2042 = vmul.f32 %v1782, %v2020
        %v2043 = vmul.f32 %v1783, %v2025
        %v2044 = vmul.f32 %v1784, %v2025
        %v2045 = vmul.f32 %v1785, %v2025
        %v2046 = vmul.f32 %v1786, %v2030
        %v2047 = vmul.f32 %v1787, %v2030
        %v2048 = vmul.f32 %v1788, %v2030
        %v2049 = vmul.f32 %v1789, %v2035
        %v2050 = vmul.f32 %v1790, %v2035
        %v2051 = vmul.f32 %v1791, %v2035
        %v2052 = vld [vmem:[%s749 + $0x28] sm:$0xff]
        %v2053 = vld [vmem:[%s749 + $0x30] sm:$0xff]
        %v2054 = vld [vmem:[%s749 + $0x38] sm:$0xff]
        %v2055 = vld [vmem:[%s749 + $0x40] sm:$0xff]
        %v2056 = vld [vmem:[%s749 + $0x48] sm:$0xff]
        %2058 = vset.pattern.permute.xlu0 0
        %2059 = vperm.xlu0 %2058, %v2052
        %v2060 = vpop.permute.xlu0 %2059
        %2063 = vset.pattern.permute.xlu0 0
        %2064 = vperm.xlu0 %2063, %v2053
        %v2065 = vpop.permute.xlu0 %2064
        %2068 = vset.pattern.permute.xlu0 0
        %2069 = vperm.xlu0 %2068, %v2054
        %v2070 = vpop.permute.xlu0 %2069
        %2073 = vset.pattern.permute.xlu0 0
        %2074 = vperm.xlu0 %2073, %v2055
        %v2075 = vpop.permute.xlu0 %2074
        %2078 = vset.pattern.permute.xlu0 0
        %2079 = vperm.xlu0 %2078, %v2056
        %v2080 = vpop.permute.xlu0 %2079
        %v2082 = vmul.f32 %v1777, %v2060
        %v2083 = vmul.f32 %v1778, %v2060
        %v2084 = vmul.f32 %v1779, %v2060
        %v2085 = vmul.f32 %v1780, %v2065
        %v2086 = vmul.f32 %v1781, %v2065
        %v2087 = vmul.f32 %v1782, %v2065
        %v2088 = vmul.f32 %v1783, %v2070
        %v2089 = vmul.f32 %v1784, %v2070
        %v2090 = vmul.f32 %v1785, %v2070
        %v2091 = vmul.f32 %v1786, %v2075
        %v2092 = vmul.f32 %v1787, %v2075
        %v2093 = vmul.f32 %v1788, %v2075
        %v2094 = vmul.f32 %v1789, %v2080
        %v2095 = vmul.f32 %v1790, %v2080
        %v2096 = vmul.f32 %v1791, %v2080
        %2112 = vrot.lane.b32.xlu0 %v2082, 114
        %v2113 = vpop.permute.xlu0 %2112
        %2114 = vrot.lane.b32.xlu0 %v2083, 114
        %v2115 = vpop.permute.xlu0 %2114
        %2116 = vrot.lane.b32.xlu0 %v2084, 114
        %v2117 = vpop.permute.xlu0 %2116
        %2118 = vrot.lane.b32.xlu0 %v2085, 114
        %v2119 = vpop.permute.xlu0 %2118
        %2120 = vrot.lane.b32.xlu0 %v2086, 114
        %v2121 = vpop.permute.xlu0 %2120
        %2122 = vrot.lane.b32.xlu0 %v2087, 114
        %v2123 = vpop.permute.xlu0 %2122
        %2124 = vrot.lane.b32.xlu0 %v2088, 114
        %v2125 = vpop.permute.xlu0 %2124
        %2126 = vrot.lane.b32.xlu0 %v2089, 114
        %v2127 = vpop.permute.xlu0 %2126
        %2128 = vrot.lane.b32.xlu0 %v2090, 114
        %v2129 = vpop.permute.xlu0 %2128
        %2130 = vrot.lane.b32.xlu0 %v2091, 114
        %v2131 = vpop.permute.xlu0 %2130
        %2132 = vrot.lane.b32.xlu0 %v2092, 114
        %v2133 = vpop.permute.xlu0 %2132
        %2134 = vrot.lane.b32.xlu0 %v2093, 114
        %v2135 = vpop.permute.xlu0 %2134
        %2136 = vrot.lane.b32.xlu0 %v2094, 114
        %v2137 = vpop.permute.xlu0 %2136
        %2138 = vrot.lane.b32.xlu0 %v2095, 114
        %v2139 = vpop.permute.xlu0 %2138
        %2140 = vrot.lane.b32.xlu0 %v2096, 114
        %v2141 = vpop.permute.xlu0 %2140
        %v2142 = vsel %vm678, %v2113, %v2115
        %v2143 = vsel %vm678, %v2115, %v2117
        %v2144 = vsel %vm678, %v2119, %v2121
        %v2145 = vsel %vm678, %v2121, %v2123
        %v2146 = vsel %vm678, %v2125, %v2127
        %v2147 = vsel %vm678, %v2127, %v2129
        %v2148 = vsel %vm678, %v2131, %v2133
        %v2149 = vsel %vm678, %v2133, %v2135
        %v2150 = vsel %vm678, %v2137, %v2139
        %v2151 = vsel %vm678, %v2139, %v2141
        %v2167 = vadd.f32 %v2037, %v2142
        %v2168 = vadd.f32 %v2038, %v2143
        %v2169 = vadd.f32 %v2039, %v2117
        %v2170 = vadd.f32 %v2040, %v2144
        %v2171 = vadd.f32 %v2041, %v2145
        %v2172 = vadd.f32 %v2042, %v2123
        %v2173 = vadd.f32 %v2043, %v2146
        %v2174 = vadd.f32 %v2044, %v2147
        %v2175 = vadd.f32 %v2045, %v2129
        %v2176 = vadd.f32 %v2046, %v2148
        %v2177 = vadd.f32 %v2047, %v2149
        %v2178 = vadd.f32 %v2048, %v2135
        %v2179 = vadd.f32 %v2049, %v2150
        %v2180 = vadd.f32 %v2050, %v2151
        %v2181 = vadd.f32 %v2051, %v2141
        %v2182 = vld [vmem:[%s880 + $0x28] sm:$0xff]
        %v2183 = vld [vmem:[%s880 + $0x30] sm:$0xff]
        %v2184 = vld [vmem:[%s880 + $0x38] sm:$0xff]
        %v2185 = vld [vmem:[%s880 + $0x40] sm:$0xff]
        %v2186 = vld [vmem:[%s880 + $0x48] sm:$0xff]
        %2188 = vset.pattern.permute.xlu0 0
        %2189 = vperm.xlu0 %2188, %v2182
        %v2190 = vpop.permute.xlu0 %2189
        %2193 = vset.pattern.permute.xlu0 0
        %2194 = vperm.xlu0 %2193, %v2183
        %v2195 = vpop.permute.xlu0 %2194
        %2198 = vset.pattern.permute.xlu0 0
        %2199 = vperm.xlu0 %2198, %v2184
        %v2200 = vpop.permute.xlu0 %2199
        %2203 = vset.pattern.permute.xlu0 0
        %2204 = vperm.xlu0 %2203, %v2185
        %v2205 = vpop.permute.xlu0 %2204
        %2208 = vset.pattern.permute.xlu0 0
        %2209 = vperm.xlu0 %2208, %v2186
        %v2210 = vpop.permute.xlu0 %2209
        %v2212 = vmul.f32 %v1778, %v2190
        %v2213 = vmul.f32 %v1779, %v2190
        %v2214 = vmul.f32 %v1781, %v2195
        %v2215 = vmul.f32 %v1782, %v2195
        %v2216 = vmul.f32 %v1784, %v2200
        %v2217 = vmul.f32 %v1785, %v2200
        %v2218 = vmul.f32 %v1787, %v2205
        %v2219 = vmul.f32 %v1788, %v2205
        %v2220 = vmul.f32 %v1790, %v2210
        %v2221 = vmul.f32 %v1791, %v2210
        %2232 = vrot.lane.b32.xlu0 %v2212, 100
        %v2233 = vpop.permute.xlu0 %2232
        %2234 = vrot.lane.b32.xlu0 %v2213, 100
        %v2235 = vpop.permute.xlu0 %2234
        %2236 = vrot.lane.b32.xlu0 %v2214, 100
        %v2237 = vpop.permute.xlu0 %2236
        %2238 = vrot.lane.b32.xlu0 %v2215, 100
        %v2239 = vpop.permute.xlu0 %2238
        %2240 = vrot.lane.b32.xlu0 %v2216, 100
        %v2241 = vpop.permute.xlu0 %2240
        %2242 = vrot.lane.b32.xlu0 %v2217, 100
        %v2243 = vpop.permute.xlu0 %2242
        %2244 = vrot.lane.b32.xlu0 %v2218, 100
        %v2245 = vpop.permute.xlu0 %2244
        %2246 = vrot.lane.b32.xlu0 %v2219, 100
        %v2247 = vpop.permute.xlu0 %2246
        %2248 = vrot.lane.b32.xlu0 %v2220, 100
        %v2249 = vpop.permute.xlu0 %2248
        %2250 = vrot.lane.b32.xlu0 %v2221, 100
        %v2251 = vpop.permute.xlu0 %2250
        %v2252 = vsel %vm951, %v2233, %v2235
        %v2253 = vsel %vm951, %v2237, %v2239
        %v2254 = vsel %vm951, %v2241, %v2243
        %v2255 = vsel %vm951, %v2245, %v2247
        %v2256 = vsel %vm951, %v2249, %v2251
        %v2272 = vadd.f32 %v2167, %v2233
        %v2273 = vadd.f32 %v2168, %v2252
        %v2274 = vadd.f32 %v2169, %v2235
        %v2275 = vadd.f32 %v2170, %v2237
        %v2276 = vadd.f32 %v2171, %v2253
        %v2277 = vadd.f32 %v2172, %v2239
        %v2278 = vadd.f32 %v2173, %v2241
        %v2279 = vadd.f32 %v2174, %v2254
        %v2280 = vadd.f32 %v2175, %v2243
        %v2281 = vadd.f32 %v2176, %v2245
        %v2282 = vadd.f32 %v2177, %v2255
        %v2283 = vadd.f32 %v2178, %v2247
        %v2284 = vadd.f32 %v2179, %v2249
        %v2285 = vadd.f32 %v2180, %v2256
        %v2286 = vadd.f32 %v2181, %v2251
        %2302 = vrot.lane.b32.xlu0 %v2272, 15
        %v2303 = vpop.permute.xlu0 %2302
        %2304 = vrot.lane.b32.xlu0 %v2273, 15
        %v2305 = vpop.permute.xlu0 %2304
        %2306 = vrot.lane.b32.xlu0 %v2274, 15
        %v2307 = vpop.permute.xlu0 %2306
        %2308 = vrot.lane.b32.xlu0 %v2275, 15
        %v2309 = vpop.permute.xlu0 %2308
        %2310 = vrot.lane.b32.xlu0 %v2276, 15
        %v2311 = vpop.permute.xlu0 %2310
        %2312 = vrot.lane.b32.xlu0 %v2277, 15
        %v2313 = vpop.permute.xlu0 %2312
        %2314 = vrot.lane.b32.xlu0 %v2278, 15
        %v2315 = vpop.permute.xlu0 %2314
        %2316 = vrot.lane.b32.xlu0 %v2279, 15
        %v2317 = vpop.permute.xlu0 %2316
        %2318 = vrot.lane.b32.xlu0 %v2280, 15
        %v2319 = vpop.permute.xlu0 %2318
        %2320 = vrot.lane.b32.xlu0 %v2281, 15
        %v2321 = vpop.permute.xlu0 %2320
        %2322 = vrot.lane.b32.xlu0 %v2282, 15
        %v2323 = vpop.permute.xlu0 %2322
        %2324 = vrot.lane.b32.xlu0 %v2283, 15
        %v2325 = vpop.permute.xlu0 %2324
        %2326 = vrot.lane.b32.xlu0 %v2284, 15
        %v2327 = vpop.permute.xlu0 %2326
        %2328 = vrot.lane.b32.xlu0 %v2285, 15
        %v2329 = vpop.permute.xlu0 %2328
        %2330 = vrot.lane.b32.xlu0 %v2286, 15
        %v2331 = vpop.permute.xlu0 %2330
        %v2332 = vsel %vm1043, %v2303, %v2305
        %v2333 = vsel %vm1043, %v2305, %v2307
        %v2334 = vsel %vm1043, %v2309, %v2311
        %v2335 = vsel %vm1043, %v2311, %v2313
        %v2336 = vsel %vm1043, %v2315, %v2317
        %v2337 = vsel %vm1043, %v2317, %v2319
        %v2338 = vsel %vm1043, %v2321, %v2323
        %v2339 = vsel %vm1043, %v2323, %v2325
        %v2340 = vsel %vm1043, %v2327, %v2329
        %v2341 = vsel %vm1043, %v2329, %v2331
        %v2352 = vmul.f32 %v991, %v2332
        %v2353 = vmul.f32 %v995, %v2333
        %v2354 = vmul.f32 %v991, %v2334
        %v2355 = vmul.f32 %v995, %v2335
        %v2356 = vmul.f32 %v991, %v2336
        %v2357 = vmul.f32 %v995, %v2337
        %v2358 = vmul.f32 %v991, %v2338
        %v2359 = vmul.f32 %v995, %v2339
        %v2360 = vmul.f32 %v991, %v2340
        %v2361 = vmul.f32 %v995, %v2341
        %v2362 = vadd.f32 %v1997, %v2352
        %v2363 = vadd.f32 %v1998, %v2353
        %v2364 = vadd.f32 %v1999, %v2354
        %v2365 = vadd.f32 %v2000, %v2355
        %v2366 = vadd.f32 %v2001, %v2356
        %v2367 = vadd.f32 %v2002, %v2357
        %v2368 = vadd.f32 %v2003, %v2358
        %v2369 = vadd.f32 %v2004, %v2359
        %v2370 = vadd.f32 %v2005, %v2360
        %v2371 = vadd.f32 %v2006, %v2361
        %v2372 = vld [vmem:[%s1084 + $0x28] sm:$0xff]
        %v2373 = vld [vmem:[%s1084 + $0x30] sm:$0xff]
        %v2374 = vld [vmem:[%s1084 + $0x38] sm:$0xff]
        %v2375 = vld [vmem:[%s1084 + $0x40] sm:$0xff]
        %v2376 = vld [vmem:[%s1084 + $0x48] sm:$0xff]
        %2378 = vset.pattern.permute.xlu0 0
        %2379 = vperm.xlu0 %2378, %v2372
        %v2380 = vpop.permute.xlu0 %2379
        %2383 = vset.pattern.permute.xlu0 0
        %2384 = vperm.xlu0 %2383, %v2373
        %v2385 = vpop.permute.xlu0 %2384
        %2388 = vset.pattern.permute.xlu0 0
        %2389 = vperm.xlu0 %2388, %v2374
        %v2390 = vpop.permute.xlu0 %2389
        %2393 = vset.pattern.permute.xlu0 0
        %2394 = vperm.xlu0 %2393, %v2375
        %v2395 = vpop.permute.xlu0 %2394
        %2398 = vset.pattern.permute.xlu0 0
        %2399 = vperm.xlu0 %2398, %v2376
        %v2400 = vpop.permute.xlu0 %2399
        %v2402 = vmul.f32 %v1777, %v2380
        %v2403 = vmul.f32 %v1778, %v2380
        %v2404 = vmul.f32 %v1779, %v2380
        %v2405 = vmul.f32 %v1780, %v2385
        %v2406 = vmul.f32 %v1781, %v2385
        %v2407 = vmul.f32 %v1782, %v2385
        %v2408 = vmul.f32 %v1783, %v2390
        %v2409 = vmul.f32 %v1784, %v2390
        %v2410 = vmul.f32 %v1785, %v2390
        %v2411 = vmul.f32 %v1786, %v2395
        %v2412 = vmul.f32 %v1787, %v2395
        %v2413 = vmul.f32 %v1788, %v2395
        %v2414 = vmul.f32 %v1789, %v2400
        %v2415 = vmul.f32 %v1790, %v2400
        %v2416 = vmul.f32 %v1791, %v2400
        %v2417 = vld [vmem:[%s1130 + $0x28] sm:$0xff]
        %v2418 = vld [vmem:[%s1130 + $0x30] sm:$0xff]
        %v2419 = vld [vmem:[%s1130 + $0x38] sm:$0xff]
        %v2420 = vld [vmem:[%s1130 + $0x40] sm:$0xff]
        %v2421 = vld [vmem:[%s1130 + $0x48] sm:$0xff]
        %2423 = vset.pattern.permute.xlu0 0
        %2424 = vperm.xlu0 %2423, %v2417
        %v2425 = vpop.permute.xlu0 %2424
        %2428 = vset.pattern.permute.xlu0 0
        %2429 = vperm.xlu0 %2428, %v2418
        %v2430 = vpop.permute.xlu0 %2429
        %2433 = vset.pattern.permute.xlu0 0
        %2434 = vperm.xlu0 %2433, %v2419
        %v2435 = vpop.permute.xlu0 %2434
        %2438 = vset.pattern.permute.xlu0 0
        %2439 = vperm.xlu0 %2438, %v2420
        %v2440 = vpop.permute.xlu0 %2439
        %2443 = vset.pattern.permute.xlu0 0
        %2444 = vperm.xlu0 %2443, %v2421
        %v2445 = vpop.permute.xlu0 %2444
        %v2447 = vmul.f32 %v1778, %v2425
        %v2448 = vmul.f32 %v1779, %v2425
        %v2449 = vmul.f32 %v1781, %v2430
        %v2450 = vmul.f32 %v1782, %v2430
        %v2451 = vmul.f32 %v1784, %v2435
        %v2452 = vmul.f32 %v1785, %v2435
        %v2453 = vmul.f32 %v1787, %v2440
        %v2454 = vmul.f32 %v1788, %v2440
        %v2455 = vmul.f32 %v1790, %v2445
        %v2456 = vmul.f32 %v1791, %v2445
        %2467 = vrot.lane.b32.xlu0 %v2447, 114
        %v2468 = vpop.permute.xlu0 %2467
        %2469 = vrot.lane.b32.xlu0 %v2448, 114
        %v2470 = vpop.permute.xlu0 %2469
        %2471 = vrot.lane.b32.xlu0 %v2449, 114
        %v2472 = vpop.permute.xlu0 %2471
        %2473 = vrot.lane.b32.xlu0 %v2450, 114
        %v2474 = vpop.permute.xlu0 %2473
        %2475 = vrot.lane.b32.xlu0 %v2451, 114
        %v2476 = vpop.permute.xlu0 %2475
        %2477 = vrot.lane.b32.xlu0 %v2452, 114
        %v2478 = vpop.permute.xlu0 %2477
        %2479 = vrot.lane.b32.xlu0 %v2453, 114
        %v2480 = vpop.permute.xlu0 %2479
        %2481 = vrot.lane.b32.xlu0 %v2454, 114
        %v2482 = vpop.permute.xlu0 %2481
        %2483 = vrot.lane.b32.xlu0 %v2455, 114
        %v2484 = vpop.permute.xlu0 %2483
        %2485 = vrot.lane.b32.xlu0 %v2456, 114
        %v2486 = vpop.permute.xlu0 %2485
        %v2487 = vsel %vm678, %v2468, %v2470
        %v2488 = vsel %vm678, %v2472, %v2474
        %v2489 = vsel %vm678, %v2476, %v2478
        %v2490 = vsel %vm678, %v2480, %v2482
        %v2491 = vsel %vm678, %v2484, %v2486
        %v2507 = vadd.f32 %v2402, %v2468
        %v2508 = vadd.f32 %v2403, %v2487
        %v2509 = vadd.f32 %v2404, %v2470
        %v2510 = vadd.f32 %v2405, %v2472
        %v2511 = vadd.f32 %v2406, %v2488
        %v2512 = vadd.f32 %v2407, %v2474
        %v2513 = vadd.f32 %v2408, %v2476
        %v2514 = vadd.f32 %v2409, %v2489
        %v2515 = vadd.f32 %v2410, %v2478
        %v2516 = vadd.f32 %v2411, %v2480
        %v2517 = vadd.f32 %v2412, %v2490
        %v2518 = vadd.f32 %v2413, %v2482
        %v2519 = vadd.f32 %v2414, %v2484
        %v2520 = vadd.f32 %v2415, %v2491
        %v2521 = vadd.f32 %v2416, %v2486
        %v2522 = vld [vmem:[%s1236 + $0x28] sm:$0xff]
        %v2523 = vld [vmem:[%s1236 + $0x30] sm:$0xff]
        %v2524 = vld [vmem:[%s1236 + $0x38] sm:$0xff]
        %v2525 = vld [vmem:[%s1236 + $0x40] sm:$0xff]
        %v2526 = vld [vmem:[%s1236 + $0x48] sm:$0xff]
        %2528 = vset.pattern.permute.xlu0 0
        %2529 = vperm.xlu0 %2528, %v2522
        %v2530 = vpop.permute.xlu0 %2529
        %2533 = vset.pattern.permute.xlu0 0
        %2534 = vperm.xlu0 %2533, %v2523
        %v2535 = vpop.permute.xlu0 %2534
        %2538 = vset.pattern.permute.xlu0 0
        %2539 = vperm.xlu0 %2538, %v2524
        %v2540 = vpop.permute.xlu0 %2539
        %2543 = vset.pattern.permute.xlu0 0
        %2544 = vperm.xlu0 %2543, %v2525
        %v2545 = vpop.permute.xlu0 %2544
        %2548 = vset.pattern.permute.xlu0 0
        %2549 = vperm.xlu0 %2548, %v2526
        %v2550 = vpop.permute.xlu0 %2549
        %v2552 = vmul.f32 %v1778, %v2530
        %v2553 = vmul.f32 %v1779, %v2530
        %v2554 = vmul.f32 %v1781, %v2535
        %v2555 = vmul.f32 %v1782, %v2535
        %v2556 = vmul.f32 %v1784, %v2540
        %v2557 = vmul.f32 %v1785, %v2540
        %v2558 = vmul.f32 %v1787, %v2545
        %v2559 = vmul.f32 %v1788, %v2545
        %v2560 = vmul.f32 %v1790, %v2550
        %v2561 = vmul.f32 %v1791, %v2550
        %2572 = vrot.lane.b32.xlu0 %v2552, 100
        %v2573 = vpop.permute.xlu0 %2572
        %2574 = vrot.lane.b32.xlu0 %v2553, 100
        %v2575 = vpop.permute.xlu0 %2574
        %2576 = vrot.lane.b32.xlu0 %v2554, 100
        %v2577 = vpop.permute.xlu0 %2576
        %2578 = vrot.lane.b32.xlu0 %v2555, 100
        %v2579 = vpop.permute.xlu0 %2578
        %2580 = vrot.lane.b32.xlu0 %v2556, 100
        %v2581 = vpop.permute.xlu0 %2580
        %2582 = vrot.lane.b32.xlu0 %v2557, 100
        %v2583 = vpop.permute.xlu0 %2582
        %2584 = vrot.lane.b32.xlu0 %v2558, 100
        %v2585 = vpop.permute.xlu0 %2584
        %2586 = vrot.lane.b32.xlu0 %v2559, 100
        %v2587 = vpop.permute.xlu0 %2586
        %2588 = vrot.lane.b32.xlu0 %v2560, 100
        %v2589 = vpop.permute.xlu0 %2588
        %2590 = vrot.lane.b32.xlu0 %v2561, 100
        %v2591 = vpop.permute.xlu0 %2590
        %v2592 = vsel %vm951, %v2573, %v2575
        %v2593 = vsel %vm951, %v2577, %v2579
        %v2594 = vsel %vm951, %v2581, %v2583
        %v2595 = vsel %vm951, %v2585, %v2587
        %v2596 = vsel %vm951, %v2589, %v2591
        %v2612 = vadd.f32 %v2507, %v2573
        %v2613 = vadd.f32 %v2508, %v2592
        %v2614 = vadd.f32 %v2509, %v2575
        %v2615 = vadd.f32 %v2510, %v2577
        %v2616 = vadd.f32 %v2511, %v2593
        %v2617 = vadd.f32 %v2512, %v2579
        %v2618 = vadd.f32 %v2513, %v2581
        %v2619 = vadd.f32 %v2514, %v2594
        %v2620 = vadd.f32 %v2515, %v2583
        %v2621 = vadd.f32 %v2516, %v2585
        %v2622 = vadd.f32 %v2517, %v2595
        %v2623 = vadd.f32 %v2518, %v2587
        %v2624 = vadd.f32 %v2519, %v2589
        %v2625 = vadd.f32 %v2520, %v2596
        %v2626 = vadd.f32 %v2521, %v2591
        %2642 = vrot.lane.b32.xlu0 %v2612, 13
        %v2643 = vpop.permute.xlu0 %2642
        %2644 = vrot.lane.b32.xlu0 %v2613, 13
        %v2645 = vpop.permute.xlu0 %2644
        %2646 = vrot.lane.b32.xlu0 %v2614, 13
        %v2647 = vpop.permute.xlu0 %2646
        %2648 = vrot.lane.b32.xlu0 %v2615, 13
        %v2649 = vpop.permute.xlu0 %2648
        %2650 = vrot.lane.b32.xlu0 %v2616, 13
        %v2651 = vpop.permute.xlu0 %2650
        %2652 = vrot.lane.b32.xlu0 %v2617, 13
        %v2653 = vpop.permute.xlu0 %2652
        %2654 = vrot.lane.b32.xlu0 %v2618, 13
        %v2655 = vpop.permute.xlu0 %2654
        %2656 = vrot.lane.b32.xlu0 %v2619, 13
        %v2657 = vpop.permute.xlu0 %2656
        %2658 = vrot.lane.b32.xlu0 %v2620, 13
        %v2659 = vpop.permute.xlu0 %2658
        %2660 = vrot.lane.b32.xlu0 %v2621, 13
        %v2661 = vpop.permute.xlu0 %2660
        %2662 = vrot.lane.b32.xlu0 %v2622, 13
        %v2663 = vpop.permute.xlu0 %2662
        %2664 = vrot.lane.b32.xlu0 %v2623, 13
        %v2665 = vpop.permute.xlu0 %2664
        %2666 = vrot.lane.b32.xlu0 %v2624, 13
        %v2667 = vpop.permute.xlu0 %2666
        %2668 = vrot.lane.b32.xlu0 %v2625, 13
        %v2669 = vpop.permute.xlu0 %2668
        %2670 = vrot.lane.b32.xlu0 %v2626, 13
        %v2671 = vpop.permute.xlu0 %2670
        %v2672 = vsel %vm1398, %v2643, %v2645
        %v2673 = vsel %vm1398, %v2645, %v2647
        %v2674 = vsel %vm1398, %v2649, %v2651
        %v2675 = vsel %vm1398, %v2651, %v2653
        %v2676 = vsel %vm1398, %v2655, %v2657
        %v2677 = vsel %vm1398, %v2657, %v2659
        %v2678 = vsel %vm1398, %v2661, %v2663
        %v2679 = vsel %vm1398, %v2663, %v2665
        %v2680 = vsel %vm1398, %v2667, %v2669
        %v2681 = vsel %vm1398, %v2669, %v2671
        %v2692 = vmul.f32 %v1346, %v2672
        %v2693 = vmul.f32 %v1350, %v2673
        %v2694 = vmul.f32 %v1346, %v2674
        %v2695 = vmul.f32 %v1350, %v2675
        %v2696 = vmul.f32 %v1346, %v2676
        %v2697 = vmul.f32 %v1350, %v2677
        %v2698 = vmul.f32 %v1346, %v2678
        %v2699 = vmul.f32 %v1350, %v2679
        %v2700 = vmul.f32 %v1346, %v2680
        %v2701 = vmul.f32 %v1350, %v2681
        %v2702 = vadd.f32 %v2362, %v2692
        %v2703 = vadd.f32 %v2363, %v2693
        %v2704 = vadd.f32 %v2364, %v2694
        %v2705 = vadd.f32 %v2365, %v2695
        %v2706 = vadd.f32 %v2366, %v2696
        %v2707 = vadd.f32 %v2367, %v2697
        %v2708 = vadd.f32 %v2368, %v2698
        %v2709 = vadd.f32 %v2369, %v2699
        %v2710 = vadd.f32 %v2370, %v2700
        %v2711 = vadd.f32 %v2371, %v2701
        %v2712 = vld [vmem:[%s4 + $0x28] sm:$0xff]
        %v2713 = vld [vmem:[%s4 + $0x30] sm:$0xff]
        %v2714 = vld [vmem:[%s4 + $0x38] sm:$0xff]
        %v2715 = vld [vmem:[%s4 + $0x40] sm:$0xff]
        %v2716 = vld [vmem:[%s4 + $0x48] sm:$0xff]
        %2718 = vset.pattern.permute.xlu0 0
        %2719 = vperm.xlu0 %2718, %v2712
        %v2720 = vpop.permute.xlu0 %2719
        %2723 = vset.pattern.permute.xlu0 0
        %2724 = vperm.xlu0 %2723, %v2713
        %v2725 = vpop.permute.xlu0 %2724
        %2728 = vset.pattern.permute.xlu0 0
        %2729 = vperm.xlu0 %2728, %v2714
        %v2730 = vpop.permute.xlu0 %2729
        %2733 = vset.pattern.permute.xlu0 0
        %2734 = vperm.xlu0 %2733, %v2715
        %v2735 = vpop.permute.xlu0 %2734
        %2738 = vset.pattern.permute.xlu0 0
        %2739 = vperm.xlu0 %2738, %v2716
        %v2740 = vpop.permute.xlu0 %2739
        %v2742 = vadd.f32 %v2702, %v2720
        %v2743 = vadd.f32 %v2703, %v2720
        %v2744 = vadd.f32 %v2704, %v2725
        %v2745 = vadd.f32 %v2705, %v2725
        %v2746 = vadd.f32 %v2706, %v2730
        %v2747 = vadd.f32 %v2707, %v2730
        %v2748 = vadd.f32 %v2708, %v2735
        %v2749 = vadd.f32 %v2709, %v2735
        %v2750 = vadd.f32 %v2710, %v2740
        %v2751 = vadd.f32 %v2711, %v2740
        %v2752 = vmax.f32 %v2742, 0.0
        %v2753 = vmax.f32 %v2743, 0.0
        %v2754 = vmax.f32 %v2744, 0.0
        %v2755 = vmax.f32 %v2745, 0.0
        %v2756 = vmax.f32 %v2746, 0.0
        %v2757 = vmax.f32 %v2747, 0.0
        %v2758 = vmax.f32 %v2748, 0.0
        %v2759 = vmax.f32 %v2749, 0.0
        %v2760 = vmax.f32 %v2750, 0.0
        %v2761 = vmax.f32 %v2751, 0.0
        %s2762 = scalar_lea.vmem %s5, 48
        %v2763 = vld [vmem:[%s2762] sm:$0xff]
        %v2764 = vld [vmem:[%s2762 + $0x8] sm:$0xff]
        %v2765 = vld [vmem:[%s2762 + $0x10] sm:$0xff]
        %v2766 = vld [vmem:[%s2762 + $0x18] sm:$0xff]
        %v2767 = vld [vmem:[%s2762 + $0x20] sm:$0xff]
        %v2768 = vld [vmem:[%s2762 + $0x28] sm:$0xff]
        %v2770 = vsel %vm1495, %v2763, 0
        %v2773 = vsel %vm1495, %v2764, 0
        %v2776 = vsel %vm1495, %v2765, 0
        %v2779 = vsel %vm1495, %v2766, 0
        %v2782 = vsel %vm1495, %v2767, 0
        %v2785 = vsel %vm1495, %v2768, 0
        %2787 = vmatprep.subr.mxu0 %v2753
        %2788 = vmatpush1.msra.mxu0 %v2752
        %2789 = vmatprep.subr.mxu0 %v2755
        %2790 = vmatpush1.msra.mxu0 %v2754
        %2791 = vmatprep.subr.mxu0 %v2757
        %2792 = vmatpush1.msra.mxu0 %v2756
        %2793 = vmatprep.subr.mxu0 %v2759
        %2794 = vmatpush1.msra.mxu0 %v2758
        %2795 = vmatprep.subr.mxu0 %v2761
        %2796 = vmatpush1.msra.mxu0 %v2760
        %2797 = vmatprep.subr.mxu0 0.0
        %2798 = vmatpush1.msra.mxu0 0.0
        %2799 = vmatprep.subr.mxu0 0.0
        %2800 = vmatpush1.msra.mxu0 0.0
        %2801 = vmatprep.subr.mxu0 0.0
        %2802 = vmatpush1.msra.mxu0 0.0
        %2803 = vmatprep.subr.mxu0 0.0
        %2804 = vmatpush1.msra.mxu0 0.0
        %2805 = vmatprep.subr.mxu0 0.0
        %2806 = vmatpush1.msra.mxu0 0.0
        %2807 = vmatprep.subr.mxu0 0.0
        %2808 = vmatpush1.msra.mxu0 0.0
        %2809 = vmatprep.subr.mxu0 0.0
        %2810 = vmatpush1.msra.mxu0 0.0
        %2811 = vmatprep.subr.mxu0 0.0
        %2812 = vmatpush1.msra.mxu0 0.0
        %2813 = vmatprep.subr.mxu0 0.0
        %2814 = vmatpush1.msra.mxu0 0.0
        %2815 = vmatprep.subr.mxu0 0.0
        %2816 = vmatpush1.msra.mxu0 0.0
        %2817 = vmatprep.subr.mxu0 0.0
        %2818 = vmatpush1.msra.mxu0 0.0
        %2819 = vmatprep.subr.mxu0 0.0
        %2820 = vmatpush1.msra.mxu0 0.0
        %2821 = vmatprep.subr.mxu0 0.0
        %2822 = vmatpush1.msra.mxu0 0.0
        %2823 = vmatprep.subr.mxu0 0.0
        %2824 = vmatpush1.msra.mxu0 0.0
        %2825 = vmatprep.subr.mxu0 0.0
        %2826 = vmatpush1.msra.mxu0 0.0
        %2827 = vmatprep.subr.mxu0 0.0
        %2828 = vmatpush1.msra.mxu0 0.0
        %2829 = vmatprep.subr.mxu0 0.0
        %2830 = vmatpush1.msra.mxu0 0.0
        %2831 = vmatprep.subr.mxu0 0.0
        %2832 = vmatpush1.msra.mxu0 0.0
        %2833 = vmatprep.subr.mxu0 0.0
        %2834 = vmatpush1.msra.mxu0 0.0
        %2835 = vmatprep.subr.mxu0 0.0
        %2836 = vmatpush1.msra.mxu0 0.0
        %2837 = vmatprep.subr.mxu0 0.0
        %2838 = vmatpush1.msra.mxu0 0.0
        %2839 = vmatprep.subr.mxu0 0.0
        %2840 = vmatpush1.msra.mxu0 0.0
        %2841 = vmatprep.subr.mxu0 0.0
        %2842 = vmatpush1.msra.mxu0 0.0
        %2843 = vmatprep.subr.mxu0 0.0
        %2844 = vmatpush1.msra.mxu0 0.0
        %2845 = vmatprep.subr.mxu0 0.0
        %2846 = vmatpush1.msra.mxu0 0.0
        %2847 = vmatprep.subr.mxu0 0.0
        %2848 = vmatpush1.msra.mxu0 0.0
        %2849 = vmatprep.subr.mxu0 0.0
        %2850 = vmatpush1.msra.mxu0 0.0
        %2851 = vmatprep.mubr.f32.mxu0 0.0
        %2852 = vmatmul.mubr.f32.gmra.mrb[0].mxu0 %v2770
        %v2853 = vpop.f32.mrb[0].mxu0
        %v2854 = vadd.f32 0.0, %v2853
        %v2855 = vpop.f32.mrb[0].mxu0
        %v2856 = vadd.f32 0.0, %v2855
        %2857 = vmatprep.mubr.f32.mxu0 0.0
        %2858 = vmatmul.mubr.f32.gmra.mrb[0].mxu0 %v2773
        %v2859 = vpop.f32.mrb[0].mxu0
        %v2860 = vadd.f32 0.0, %v2859
        %v2861 = vpop.f32.mrb[0].mxu0
        %v2862 = vadd.f32 0.0, %v2861
        %2863 = vmatprep.mubr.f32.mxu0 0.0
        %2864 = vmatmul.mubr.f32.gmra.mrb[0].mxu0 %v2776
        %v2865 = vpop.f32.mrb[0].mxu0
        %v2866 = vadd.f32 0.0, %v2865
        %v2867 = vpop.f32.mrb[0].mxu0
        %v2868 = vadd.f32 0.0, %v2867
        %2869 = vmatprep.mubr.f32.mxu0 0.0
        %2870 = vmatmul.mubr.f32.gmra.mrb[0].mxu0 %v2779
        %v2871 = vpop.f32.mrb[0].mxu0
        %v2872 = vadd.f32 0.0, %v2871
        %v2873 = vpop.f32.mrb[0].mxu0
        %v2874 = vadd.f32 0.0, %v2873
        %2875 = vmatprep.mubr.f32.mxu0 0.0
        %2876 = vmatmul.mubr.f32.gmra.mrb[0].mxu0 %v2782
        %v2877 = vpop.f32.mrb[0].mxu0
        %v2878 = vadd.f32 0.0, %v2877
        %v2879 = vpop.f32.mrb[0].mxu0
        %v2880 = vadd.f32 0.0, %v2879
        %2881 = vmatprep.mubr.f32.mxu0 0.0
        %2882 = vmatmul.mubr.f32.gmra.mrb[0].mxu0 %v2785
        %v2883 = vpop.f32.mrb[0].mxu0
        %v2884 = vadd.f32 0.0, %v2883
        %v2885 = vpop.f32.mrb[0].mxu0
        %v2886 = vadd.f32 0.0, %v2885
        %2887 = vdwg.mxu0
        %v2888 = vld [vmem:[%s298] sm:$0xff]
        %v2889 = vld [vmem:[%s298 + $0x8] sm:$0xff]
        %v2890 = vld [vmem:[%s298 + $0x10] sm:$0xff]
        %v2891 = vld [vmem:[%s298 + $0x18] sm:$0xff]
        %v2892 = vld [vmem:[%s298 + $0x20] sm:$0xff]
        %v2893 = vld [vmem:[%s298 + $0x28] sm:$0xff]
        %v2894 = vld [vmem:[%s298 + $0x30] sm:$0xff]
        %v2895 = vld [vmem:[%s298 + $0x38] sm:$0xff]
        %v2896 = vld [vmem:[%s298 + $0x40] sm:$0xff]
        %v2897 = vld [vmem:[%s298 + $0x48] sm:$0xff]
        %v2898 = vld [vmem:[%s298 + $0x50] sm:$0xff]
        %v2899 = vld [vmem:[%s298 + $0x58] sm:$0xff]
        %v2900 = vadd.f32 %v2888, %v2854
        %v2901 = vadd.f32 %v2889, %v2856
        %v2902 = vadd.f32 %v2890, %v2860
        %v2903 = vadd.f32 %v2891, %v2862
        %v2904 = vadd.f32 %v2892, %v2866
        %v2905 = vadd.f32 %v2893, %v2868
        %v2906 = vadd.f32 %v2894, %v2872
        %v2907 = vadd.f32 %v2895, %v2874
        %v2908 = vadd.f32 %v2896, %v2878
        %v2909 = vadd.f32 %v2897, %v2880
        %v2910 = vadd.f32 %v2898, %v2884
        %v2911 = vadd.f32 %v2899, %v2886
        %2912 = vst [vmem:[%s298] sm:$0xff] %v2900
        %2913 = vst.msk [vmem:[%s298 + $0x8] sm:$0xff] %vm419, %v2901
        %2914 = vst [vmem:[%s298 + $0x10] sm:$0xff] %v2902
        %2915 = vst.msk [vmem:[%s298 + $0x18] sm:$0xff] %vm419, %v2903
        %2916 = vst [vmem:[%s298 + $0x20] sm:$0xff] %v2904
        %2917 = vst.msk [vmem:[%s298 + $0x28] sm:$0xff] %vm419, %v2905
        %2918 = vst [vmem:[%s298 + $0x30] sm:$0xff] %v2906
        %2919 = vst.msk [vmem:[%s298 + $0x38] sm:$0xff] %vm419, %v2907
        %2920 = vst [vmem:[%s298 + $0x40] sm:$0xff] %v2908
        %2921 = vst.msk [vmem:[%s298 + $0x48] sm:$0xff] %vm419, %v2909
        %2922 = vst [vmem:[%s298 + $0x50] sm:$0xff] %v2910
        %2923 = vst.msk [vmem:[%s298 + $0x58] sm:$0xff] %vm419, %v2911
        %v2924 = vld [vmem:[%s303 + $0xa0] sm:$0xff]
        %v2925 = vld [vmem:[%s303 + $0xa8] sm:$0xff]
        %v2926 = vld [vmem:[%s303 + $0xb0] sm:$0xff]
        %v2927 = vld [vmem:[%s303 + $0xb8] sm:$0xff]
        %v2928 = vld [vmem:[%s303 + $0xc0] sm:$0xff]
        %v2929 = vld [vmem:[%s303 + $0xc8] sm:$0xff]
        %v2930 = vld [vmem:[%s303 + $0xd0] sm:$0xff]
        %v2931 = vld [vmem:[%s303 + $0xd8] sm:$0xff]
        %v2932 = vld [vmem:[%s303 + $0xe0] sm:$0xff]
        %v2933 = vld [vmem:[%s303 + $0xe8] sm:$0xff]
        %v2934 = vld [vmem:[%s1 + $0x50] sm:$0xff]
        %v2935 = vld [vmem:[%s1 + $0x58] sm:$0xff]
        %v2936 = vld [vmem:[%s1 + $0x60] sm:$0xff]
        %v2937 = vld [vmem:[%s1 + $0x68] sm:$0xff]
        %v2938 = vld [vmem:[%s1 + $0x70] sm:$0xff]
        %2940 = vset.pattern.permute.xlu0 0
        %2941 = vperm.xlu0 %2940, %v2934
        %v2942 = vpop.permute.xlu0 %2941
        %2945 = vset.pattern.permute.xlu0 0
        %2946 = vperm.xlu0 %2945, %v2935
        %v2947 = vpop.permute.xlu0 %2946
        %2950 = vset.pattern.permute.xlu0 0
        %2951 = vperm.xlu0 %2950, %v2936
        %v2952 = vpop.permute.xlu0 %2951
        %2955 = vset.pattern.permute.xlu0 0
        %2956 = vperm.xlu0 %2955, %v2937
        %v2957 = vpop.permute.xlu0 %2956
        %2960 = vset.pattern.permute.xlu0 0
        %2961 = vperm.xlu0 %2960, %v2938
        %v2962 = vpop.permute.xlu0 %2961
        %v2964 = vmul.f32 %v2924, %v2942
        %v2965 = vmul.f32 %v2925, %v2942
        %v2966 = vmul.f32 %v2926, %v2947
        %v2967 = vmul.f32 %v2927, %v2947
        %v2968 = vmul.f32 %v2928, %v2952
        %v2969 = vmul.f32 %v2929, %v2952
        %v2970 = vmul.f32 %v2930, %v2957
        %v2971 = vmul.f32 %v2931, %v2957
        %v2972 = vmul.f32 %v2932, %v2962
        %v2973 = vmul.f32 %v2933, %v2962
        %v2974 = vld [vmem:[%s2 + $0x50] sm:$0xff]
        %v2975 = vld [vmem:[%s2 + $0x58] sm:$0xff]
        %v2976 = vld [vmem:[%s2 + $0x60] sm:$0xff]
        %v2977 = vld [vmem:[%s2 + $0x68] sm:$0xff]
        %v2978 = vld [vmem:[%s2 + $0x70] sm:$0xff]
        %2980 = vset.pattern.permute.xlu0 0
        %2981 = vperm.xlu0 %2980, %v2974
        %v2982 = vpop.permute.xlu0 %2981
        %2985 = vset.pattern.permute.xlu0 0
        %2986 = vperm.xlu0 %2985, %v2975
        %v2987 = vpop.permute.xlu0 %2986
        %2990 = vset.pattern.permute.xlu0 0
        %2991 = vperm.xlu0 %2990, %v2976
        %v2992 = vpop.permute.xlu0 %2991
        %2995 = vset.pattern.permute.xlu0 0
        %2996 = vperm.xlu0 %2995, %v2977
        %v2997 = vpop.permute.xlu0 %2996
        %3000 = vset.pattern.permute.xlu0 0
        %3001 = vperm.xlu0 %3000, %v2978
        %v3002 = vpop.permute.xlu0 %3001
        %v3004 = vadd.f32 %v2964, %v2982
        %v3005 = vadd.f32 %v2965, %v2982
        %v3006 = vadd.f32 %v2966, %v2987
        %v3007 = vadd.f32 %v2967, %v2987
        %v3008 = vadd.f32 %v2968, %v2992
        %v3009 = vadd.f32 %v2969, %v2992
        %v3010 = vadd.f32 %v2970, %v2997
        %v3011 = vadd.f32 %v2971, %v2997
        %v3012 = vadd.f32 %v2972, %v3002
        %v3013 = vadd.f32 %v2973, %v3002
        %v3014 = vmax.f32 %v3004, 0.0
        %v3015 = vmax.f32 %v3005, 0.0
        %v3016 = vmax.f32 %v3006, 0.0
        %v3017 = vmax.f32 %v3007, 0.0
        %v3018 = vmax.f32 %v3008, 0.0
        %v3019 = vmax.f32 %v3009, 0.0
        %v3020 = vmax.f32 %v3010, 0.0
        %v3021 = vmax.f32 %v3011, 0.0
        %v3022 = vmax.f32 %v3012, 0.0
        %v3023 = vmax.f32 %v3013, 0.0
        %3024 = vst [vmem:[#allocation2 + $0x8] sm:$0xff] %v3014
        %3025 = vst.msk [vmem:[#allocation2 + $0x10] sm:$0xff] %vm419, %v3015
        %3026 = vst [vmem:[#allocation2 + $0x20] sm:$0xff] %v3016
        %3027 = vst.msk [vmem:[#allocation2 + $0x28] sm:$0xff] %vm419, %v3017
        %3028 = vst [vmem:[#allocation2 + $0x38] sm:$0xff] %v3018
        %3029 = vst.msk [vmem:[#allocation2 + $0x40] sm:$0xff] %vm419, %v3019
        %3030 = vst [vmem:[#allocation2 + $0x50] sm:$0xff] %v3020
        %3031 = vst.msk [vmem:[#allocation2 + $0x58] sm:$0xff] %vm419, %v3021
        %3032 = vst [vmem:[#allocation2 + $0x68] sm:$0xff] %v3022
        %3033 = vst.msk [vmem:[#allocation2 + $0x70] sm:$0xff] %vm419, %v3023
        %v3034 = vld [vmem:[%s429 + $0x50] sm:$0xff]
        %v3035 = vld [vmem:[%s429 + $0x58] sm:$0xff]
        %v3036 = vld [vmem:[%s429 + $0x60] sm:$0xff]
        %v3037 = vld [vmem:[%s429 + $0x68] sm:$0xff]
        %v3038 = vld [vmem:[%s429 + $0x70] sm:$0xff]
        %3040 = vset.pattern.permute.xlu0 0
        %3041 = vperm.xlu0 %3040, %v3034
        %v3042 = vpop.permute.xlu0 %3041
        %3045 = vset.pattern.permute.xlu0 0
        %3046 = vperm.xlu0 %3045, %v3035
        %v3047 = vpop.permute.xlu0 %3046
        %3050 = vset.pattern.permute.xlu0 0
        %3051 = vperm.xlu0 %3050, %v3036
        %v3052 = vpop.permute.xlu0 %3051
        %3055 = vset.pattern.permute.xlu0 0
        %3056 = vperm.xlu0 %3055, %v3037
        %v3057 = vpop.permute.xlu0 %3056
        %3060 = vset.pattern.permute.xlu0 0
        %3061 = vperm.xlu0 %3060, %v3038
        %v3062 = vpop.permute.xlu0 %3061
        %v3064 = vmul.f32 %v3014, %v3042
        %v3065 = vmul.f32 %v3015, %v3042
        %v3066 = vmul.f32 %v3016, %v3047
        %v3067 = vmul.f32 %v3017, %v3047
        %v3068 = vmul.f32 %v3018, %v3052
        %v3069 = vmul.f32 %v3019, %v3052
        %v3070 = vmul.f32 %v3020, %v3057
        %v3071 = vmul.f32 %v3021, %v3057
        %v3072 = vmul.f32 %v3022, %v3062
        %v3073 = vmul.f32 %v3023, %v3062
        %v3074 = vld [vmem:[#allocation2] sm:$0xff]
        %v3075 = vld [vmem:[#allocation2 + $0x8] sm:$0xff]
        %v3076 = vld [vmem:[#allocation2 + $0x10] sm:$0xff]
        %v3077 = vld [vmem:[#allocation2 + $0x18] sm:$0xff]
        %v3078 = vld [vmem:[#allocation2 + $0x20] sm:$0xff]
        %v3079 = vld [vmem:[#allocation2 + $0x28] sm:$0xff]
        %v3080 = vld [vmem:[#allocation2 + $0x30] sm:$0xff]
        %v3081 = vld [vmem:[#allocation2 + $0x38] sm:$0xff]
        %v3082 = vld [vmem:[#allocation2 + $0x40] sm:$0xff]
        %v3083 = vld [vmem:[#allocation2 + $0x48] sm:$0xff]
        %v3084 = vld [vmem:[#allocation2 + $0x50] sm:$0xff]
        %v3085 = vld [vmem:[#allocation2 + $0x58] sm:$0xff]
        %v3086 = vld [vmem:[#allocation2 + $0x60] sm:$0xff]
        %v3087 = vld [vmem:[#allocation2 + $0x68] sm:$0xff]
        %v3088 = vld [vmem:[#allocation2 + $0x70] sm:$0xff]
        %v3089 = vld [vmem:[%s485 + $0x50] sm:$0xff]
        %v3090 = vld [vmem:[%s485 + $0x58] sm:$0xff]
        %v3091 = vld [vmem:[%s485 + $0x60] sm:$0xff]
        %v3092 = vld [vmem:[%s485 + $0x68] sm:$0xff]
        %v3093 = vld [vmem:[%s485 + $0x70] sm:$0xff]
        %3095 = vset.pattern.permute.xlu0 0
        %3096 = vperm.xlu0 %3095, %v3089
        %v3097 = vpop.permute.xlu0 %3096
        %3100 = vset.pattern.permute.xlu0 0
        %3101 = vperm.xlu0 %3100, %v3090
        %v3102 = vpop.permute.xlu0 %3101
        %3105 = vset.pattern.permute.xlu0 0
        %3106 = vperm.xlu0 %3105, %v3091
        %v3107 = vpop.permute.xlu0 %3106
        %3110 = vset.pattern.permute.xlu0 0
        %3111 = vperm.xlu0 %3110, %v3092
        %v3112 = vpop.permute.xlu0 %3111
        %3115 = vset.pattern.permute.xlu0 0
        %3116 = vperm.xlu0 %3115, %v3093
        %v3117 = vpop.permute.xlu0 %3116
        %v3119 = vmul.f32 %v3074, %v3097
        %v3120 = vmul.f32 %v3075, %v3097
        %v3121 = vmul.f32 %v3076, %v3097
        %v3122 = vmul.f32 %v3077, %v3102
        %v3123 = vmul.f32 %v3078, %v3102
        %v3124 = vmul.f32 %v3079, %v3102
        %v3125 = vmul.f32 %v3080, %v3107
        %v3126 = vmul.f32 %v3081, %v3107
        %v3127 = vmul.f32 %v3082, %v3107
        %v3128 = vmul.f32 %v3083, %v3112
        %v3129 = vmul.f32 %v3084, %v3112
        %v3130 = vmul.f32 %v3085, %v3112
        %v3131 = vmul.f32 %v3086, %v3117
        %v3132 = vmul.f32 %v3087, %v3117
        %v3133 = vmul.f32 %v3088, %v3117
        %3149 = vrot.lane.b32.xlu0 %v3119, 14
        %v3150 = vpop.permute.xlu0 %3149
        %3151 = vrot.lane.b32.xlu0 %v3120, 14
        %v3152 = vpop.permute.xlu0 %3151
        %3153 = vrot.lane.b32.xlu0 %v3121, 14
        %v3154 = vpop.permute.xlu0 %3153
        %3155 = vrot.lane.b32.xlu0 %v3122, 14
        %v3156 = vpop.permute.xlu0 %3155
        %3157 = vrot.lane.b32.xlu0 %v3123, 14
        %v3158 = vpop.permute.xlu0 %3157
        %3159 = vrot.lane.b32.xlu0 %v3124, 14
        %v3160 = vpop.permute.xlu0 %3159
        %3161 = vrot.lane.b32.xlu0 %v3125, 14
        %v3162 = vpop.permute.xlu0 %3161
        %3163 = vrot.lane.b32.xlu0 %v3126, 14
        %v3164 = vpop.permute.xlu0 %3163
        %3165 = vrot.lane.b32.xlu0 %v3127, 14
        %v3166 = vpop.permute.xlu0 %3165
        %3167 = vrot.lane.b32.xlu0 %v3128, 14
        %v3168 = vpop.permute.xlu0 %3167
        %3169 = vrot.lane.b32.xlu0 %v3129, 14
        %v3170 = vpop.permute.xlu0 %3169
        %3171 = vrot.lane.b32.xlu0 %v3130, 14
        %v3172 = vpop.permute.xlu0 %3171
        %3173 = vrot.lane.b32.xlu0 %v3131, 14
        %v3174 = vpop.permute.xlu0 %3173
        %3175 = vrot.lane.b32.xlu0 %v3132, 14
        %v3176 = vpop.permute.xlu0 %3175
        %3177 = vrot.lane.b32.xlu0 %v3133, 14
        %v3178 = vpop.permute.xlu0 %3177
        %v3179 = vsel %vm576, %v3150, %v3152
        %v3180 = vsel %vm576, %v3152, %v3154
        %v3181 = vsel %vm576, %v3156, %v3158
        %v3182 = vsel %vm576, %v3158, %v3160
        %v3183 = vsel %vm576, %v3162, %v3164
        %v3184 = vsel %vm576, %v3164, %v3166
        %v3185 = vsel %vm576, %v3168, %v3170
        %v3186 = vsel %vm576, %v3170, %v3172
        %v3187 = vsel %vm576, %v3174, %v3176
        %v3188 = vsel %vm576, %v3176, %v3178
        %v3199 = vadd.f32 %v3064, %v3179
        %v3200 = vadd.f32 %v3065, %v3180
        %v3201 = vadd.f32 %v3066, %v3181
        %v3202 = vadd.f32 %v3067, %v3182
        %v3203 = vadd.f32 %v3068, %v3183
        %v3204 = vadd.f32 %v3069, %v3184
        %v3205 = vadd.f32 %v3070, %v3185
        %v3206 = vadd.f32 %v3071, %v3186
        %v3207 = vadd.f32 %v3072, %v3187
        %v3208 = vadd.f32 %v3073, %v3188
        %v3209 = vld [vmem:[%s607 + $0x50] sm:$0xff]
        %v3210 = vld [vmem:[%s607 + $0x58] sm:$0xff]
        %v3211 = vld [vmem:[%s607 + $0x60] sm:$0xff]
        %v3212 = vld [vmem:[%s607 + $0x68] sm:$0xff]
        %v3213 = vld [vmem:[%s607 + $0x70] sm:$0xff]
        %3215 = vset.pattern.permute.xlu0 0
        %3216 = vperm.xlu0 %3215, %v3209
        %v3217 = vpop.permute.xlu0 %3216
        %3220 = vset.pattern.permute.xlu0 0
        %3221 = vperm.xlu0 %3220, %v3210
        %v3222 = vpop.permute.xlu0 %3221
        %3225 = vset.pattern.permute.xlu0 0
        %3226 = vperm.xlu0 %3225, %v3211
        %v3227 = vpop.permute.xlu0 %3226
        %3230 = vset.pattern.permute.xlu0 0
        %3231 = vperm.xlu0 %3230, %v3212
        %v3232 = vpop.permute.xlu0 %3231
        %3235 = vset.pattern.permute.xlu0 0
        %3236 = vperm.xlu0 %3235, %v3213
        %v3237 = vpop.permute.xlu0 %3236
        %v3239 = vmul.f32 %v3075, %v3217
        %v3240 = vmul.f32 %v3076, %v3217
        %v3241 = vmul.f32 %v3078, %v3222
        %v3242 = vmul.f32 %v3079, %v3222
        %v3243 = vmul.f32 %v3081, %v3227
        %v3244 = vmul.f32 %v3082, %v3227
        %v3245 = vmul.f32 %v3084, %v3232
        %v3246 = vmul.f32 %v3085, %v3232
        %v3247 = vmul.f32 %v3087, %v3237
        %v3248 = vmul.f32 %v3088, %v3237
        %3259 = vrot.lane.b32.xlu0 %v3239, 114
        %v3260 = vpop.permute.xlu0 %3259
        %3261 = vrot.lane.b32.xlu0 %v3240, 114
        %v3262 = vpop.permute.xlu0 %3261
        %3263 = vrot.lane.b32.xlu0 %v3241, 114
        %v3264 = vpop.permute.xlu0 %3263
        %3265 = vrot.lane.b32.xlu0 %v3242, 114
        %v3266 = vpop.permute.xlu0 %3265
        %3267 = vrot.lane.b32.xlu0 %v3243, 114
        %v3268 = vpop.permute.xlu0 %3267
        %3269 = vrot.lane.b32.xlu0 %v3244, 114
        %v3270 = vpop.permute.xlu0 %3269
        %3271 = vrot.lane.b32.xlu0 %v3245, 114
        %v3272 = vpop.permute.xlu0 %3271
        %3273 = vrot.lane.b32.xlu0 %v3246, 114
        %v3274 = vpop.permute.xlu0 %3273
        %3275 = vrot.lane.b32.xlu0 %v3247, 114
        %v3276 = vpop.permute.xlu0 %3275
        %3277 = vrot.lane.b32.xlu0 %v3248, 114
        %v3278 = vpop.permute.xlu0 %3277
        %v3279 = vsel %vm678, %v3260, %v3262
        %v3280 = vsel %vm678, %v3264, %v3266
        %v3281 = vsel %vm678, %v3268, %v3270
        %v3282 = vsel %vm678, %v3272, %v3274
        %v3283 = vsel %vm678, %v3276, %v3278
        %v3294 = vadd.f32 %v3199, %v3279
        %v3295 = vadd.f32 %v3200, %v3262
        %v3296 = vadd.f32 %v3201, %v3280
        %v3297 = vadd.f32 %v3202, %v3266
        %v3298 = vadd.f32 %v3203, %v3281
        %v3299 = vadd.f32 %v3204, %v3270
        %v3300 = vadd.f32 %v3205, %v3282
        %v3301 = vadd.f32 %v3206, %v3274
        %v3302 = vadd.f32 %v3207, %v3283
        %v3303 = vadd.f32 %v3208, %v3278
        %v3304 = vld [vmem:[%s3 + $0x50] sm:$0xff]
        %v3305 = vld [vmem:[%s3 + $0x58] sm:$0xff]
        %v3306 = vld [vmem:[%s3 + $0x60] sm:$0xff]
        %v3307 = vld [vmem:[%s3 + $0x68] sm:$0xff]
        %v3308 = vld [vmem:[%s3 + $0x70] sm:$0xff]
        %3310 = vset.pattern.permute.xlu0 0
        %3311 = vperm.xlu0 %3310, %v3304
        %v3312 = vpop.permute.xlu0 %3311
        %3315 = vset.pattern.permute.xlu0 0
        %3316 = vperm.xlu0 %3315, %v3305
        %v3317 = vpop.permute.xlu0 %3316
        %3320 = vset.pattern.permute.xlu0 0
        %3321 = vperm.xlu0 %3320, %v3306
        %v3322 = vpop.permute.xlu0 %3321
        %3325 = vset.pattern.permute.xlu0 0
        %3326 = vperm.xlu0 %3325, %v3307
        %v3327 = vpop.permute.xlu0 %3326
        %3330 = vset.pattern.permute.xlu0 0
        %3331 = vperm.xlu0 %3330, %v3308
        %v3332 = vpop.permute.xlu0 %3331
        %v3334 = vmul.f32 %v3074, %v3312
        %v3335 = vmul.f32 %v3075, %v3312
        %v3336 = vmul.f32 %v3076, %v3312
        %v3337 = vmul.f32 %v3077, %v3317
        %v3338 = vmul.f32 %v3078, %v3317
        %v3339 = vmul.f32 %v3079, %v3317
        %v3340 = vmul.f32 %v3080, %v3322
        %v3341 = vmul.f32 %v3081, %v3322
        %v3342 = vmul.f32 %v3082, %v3322
        %v3343 = vmul.f32 %v3083, %v3327
        %v3344 = vmul.f32 %v3084, %v3327
        %v3345 = vmul.f32 %v3085, %v3327
        %v3346 = vmul.f32 %v3086, %v3332
        %v3347 = vmul.f32 %v3087, %v3332
        %v3348 = vmul.f32 %v3088, %v3332
        %v3349 = vld [vmem:[%s749 + $0x50] sm:$0xff]
        %v3350 = vld [vmem:[%s749 + $0x58] sm:$0xff]
        %v3351 = vld [vmem:[%s749 + $0x60] sm:$0xff]
        %v3352 = vld [vmem:[%s749 + $0x68] sm:$0xff]
        %v3353 = vld [vmem:[%s749 + $0x70] sm:$0xff]
        %3355 = vset.pattern.permute.xlu0 0
        %3356 = vperm.xlu0 %3355, %v3349
        %v3357 = vpop.permute.xlu0 %3356
        %3360 = vset.pattern.permute.xlu0 0
        %3361 = vperm.xlu0 %3360, %v3350
        %v3362 = vpop.permute.xlu0 %3361
        %3365 = vset.pattern.permute.xlu0 0
        %3366 = vperm.xlu0 %3365, %v3351
        %v3367 = vpop.permute.xlu0 %3366
        %3370 = vset.pattern.permute.xlu0 0
        %3371 = vperm.xlu0 %3370, %v3352
        %v3372 = vpop.permute.xlu0 %3371
        %3375 = vset.pattern.permute.xlu0 0
        %3376 = vperm.xlu0 %3375, %v3353
        %v3377 = vpop.permute.xlu0 %3376
        %v3379 = vmul.f32 %v3074, %v3357
        %v3380 = vmul.f32 %v3075, %v3357
        %v3381 = vmul.f32 %v3076, %v3357
        %v3382 = vmul.f32 %v3077, %v3362
        %v3383 = vmul.f32 %v3078, %v3362
        %v3384 = vmul.f32 %v3079, %v3362
        %v3385 = vmul.f32 %v3080, %v3367
        %v3386 = vmul.f32 %v3081, %v3367
        %v3387 = vmul.f32 %v3082, %v3367
        %v3388 = vmul.f32 %v3083, %v3372
        %v3389 = vmul.f32 %v3084, %v3372
        %v3390 = vmul.f32 %v3085, %v3372
        %v3391 = vmul.f32 %v3086, %v3377
        %v3392 = vmul.f32 %v3087, %v3377
        %v3393 = vmul.f32 %v3088, %v3377
        %3409 = vrot.lane.b32.xlu0 %v3379, 114
        %v3410 = vpop.permute.xlu0 %3409
        %3411 = vrot.lane.b32.xlu0 %v3380, 114
        %v3412 = vpop.permute.xlu0 %3411
        %3413 = vrot.lane.b32.xlu0 %v3381, 114
        %v3414 = vpop.permute.xlu0 %3413
        %3415 = vrot.lane.b32.xlu0 %v3382, 114
        %v3416 = vpop.permute.xlu0 %3415
        %3417 = vrot.lane.b32.xlu0 %v3383, 114
        %v3418 = vpop.permute.xlu0 %3417
        %3419 = vrot.lane.b32.xlu0 %v3384, 114
        %v3420 = vpop.permute.xlu0 %3419
        %3421 = vrot.lane.b32.xlu0 %v3385, 114
        %v3422 = vpop.permute.xlu0 %3421
        %3423 = vrot.lane.b32.xlu0 %v3386, 114
        %v3424 = vpop.permute.xlu0 %3423
        %3425 = vrot.lane.b32.xlu0 %v3387, 114
        %v3426 = vpop.permute.xlu0 %3425
        %3427 = vrot.lane.b32.xlu0 %v3388, 114
        %v3428 = vpop.permute.xlu0 %3427
        %3429 = vrot.lane.b32.xlu0 %v3389, 114
        %v3430 = vpop.permute.xlu0 %3429
        %3431 = vrot.lane.b32.xlu0 %v3390, 114
        %v3432 = vpop.permute.xlu0 %3431
        %3433 = vrot.lane.b32.xlu0 %v3391, 114
        %v3434 = vpop.permute.xlu0 %3433
        %3435 = vrot.lane.b32.xlu0 %v3392, 114
        %v3436 = vpop.permute.xlu0 %3435
        %3437 = vrot.lane.b32.xlu0 %v3393, 114
        %v3438 = vpop.permute.xlu0 %3437
        %v3439 = vsel %vm678, %v3410, %v3412
        %v3440 = vsel %vm678, %v3412, %v3414
        %v3441 = vsel %vm678, %v3416, %v3418
        %v3442 = vsel %vm678, %v3418, %v3420
        %v3443 = vsel %vm678, %v3422, %v3424
        %v3444 = vsel %vm678, %v3424, %v3426
        %v3445 = vsel %vm678, %v3428, %v3430
        %v3446 = vsel %vm678, %v3430, %v3432
        %v3447 = vsel %vm678, %v3434, %v3436
        %v3448 = vsel %vm678, %v3436, %v3438
        %v3464 = vadd.f32 %v3334, %v3439
        %v3465 = vadd.f32 %v3335, %v3440
        %v3466 = vadd.f32 %v3336, %v3414
        %v3467 = vadd.f32 %v3337, %v3441
        %v3468 = vadd.f32 %v3338, %v3442
        %v3469 = vadd.f32 %v3339, %v3420
        %v3470 = vadd.f32 %v3340, %v3443
        %v3471 = vadd.f32 %v3341, %v3444
        %v3472 = vadd.f32 %v3342, %v3426
        %v3473 = vadd.f32 %v3343, %v3445
        %v3474 = vadd.f32 %v3344, %v3446
        %v3475 = vadd.f32 %v3345, %v3432
        %v3476 = vadd.f32 %v3346, %v3447
        %v3477 = vadd.f32 %v3347, %v3448
        %v3478 = vadd.f32 %v3348, %v3438
        %v3479 = vld [vmem:[%s880 + $0x50] sm:$0xff]
        %v3480 = vld [vmem:[%s880 + $0x58] sm:$0xff]
        %v3481 = vld [vmem:[%s880 + $0x60] sm:$0xff]
        %v3482 = vld [vmem:[%s880 + $0x68] sm:$0xff]
        %v3483 = vld [vmem:[%s880 + $0x70] sm:$0xff]
        %3485 = vset.pattern.permute.xlu0 0
        %3486 = vperm.xlu0 %3485, %v3479
        %v3487 = vpop.permute.xlu0 %3486
        %3490 = vset.pattern.permute.xlu0 0
        %3491 = vperm.xlu0 %3490, %v3480
        %v3492 = vpop.permute.xlu0 %3491
        %3495 = vset.pattern.permute.xlu0 0
        %3496 = vperm.xlu0 %3495, %v3481
        %v3497 = vpop.permute.xlu0 %3496
        %3500 = vset.pattern.permute.xlu0 0
        %3501 = vperm.xlu0 %3500, %v3482
        %v3502 = vpop.permute.xlu0 %3501
        %3505 = vset.pattern.permute.xlu0 0
        %3506 = vperm.xlu0 %3505, %v3483
        %v3507 = vpop.permute.xlu0 %3506
        %v3509 = vmul.f32 %v3075, %v3487
        %v3510 = vmul.f32 %v3076, %v3487
        %v3511 = vmul.f32 %v3078, %v3492
        %v3512 = vmul.f32 %v3079, %v3492
        %v3513 = vmul.f32 %v3081, %v3497
        %v3514 = vmul.f32 %v3082, %v3497
        %v3515 = vmul.f32 %v3084, %v3502
        %v3516 = vmul.f32 %v3085, %v3502
        %v3517 = vmul.f32 %v3087, %v3507
        %v3518 = vmul.f32 %v3088, %v3507
        %3529 = vrot.lane.b32.xlu0 %v3509, 100
        %v3530 = vpop.permute.xlu0 %3529
        %3531 = vrot.lane.b32.xlu0 %v3510, 100
        %v3532 = vpop.permute.xlu0 %3531
        %3533 = vrot.lane.b32.xlu0 %v3511, 100
        %v3534 = vpop.permute.xlu0 %3533
        %3535 = vrot.lane.b32.xlu0 %v3512, 100
        %v3536 = vpop.permute.xlu0 %3535
        %3537 = vrot.lane.b32.xlu0 %v3513, 100
        %v3538 = vpop.permute.xlu0 %3537
        %3539 = vrot.lane.b32.xlu0 %v3514, 100
        %v3540 = vpop.permute.xlu0 %3539
        %3541 = vrot.lane.b32.xlu0 %v3515, 100
        %v3542 = vpop.permute.xlu0 %3541
        %3543 = vrot.lane.b32.xlu0 %v3516, 100
        %v3544 = vpop.permute.xlu0 %3543
        %3545 = vrot.lane.b32.xlu0 %v3517, 100
        %v3546 = vpop.permute.xlu0 %3545
        %3547 = vrot.lane.b32.xlu0 %v3518, 100
        %v3548 = vpop.permute.xlu0 %3547
        %v3549 = vsel %vm951, %v3530, %v3532
        %v3550 = vsel %vm951, %v3534, %v3536
        %v3551 = vsel %vm951, %v3538, %v3540
        %v3552 = vsel %vm951, %v3542, %v3544
        %v3553 = vsel %vm951, %v3546, %v3548
        %v3569 = vadd.f32 %v3464, %v3530
        %v3570 = vadd.f32 %v3465, %v3549
        %v3571 = vadd.f32 %v3466, %v3532
        %v3572 = vadd.f32 %v3467, %v3534
        %v3573 = vadd.f32 %v3468, %v3550
        %v3574 = vadd.f32 %v3469, %v3536
        %v3575 = vadd.f32 %v3470, %v3538
        %v3576 = vadd.f32 %v3471, %v3551
        %v3577 = vadd.f32 %v3472, %v3540
        %v3578 = vadd.f32 %v3473, %v3542
        %v3579 = vadd.f32 %v3474, %v3552
        %v3580 = vadd.f32 %v3475, %v3544
        %v3581 = vadd.f32 %v3476, %v3546
        %v3582 = vadd.f32 %v3477, %v3553
        %v3583 = vadd.f32 %v3478, %v3548
        %3599 = vrot.lane.b32.xlu0 %v3569, 15
        %v3600 = vpop.permute.xlu0 %3599
        %3601 = vrot.lane.b32.xlu0 %v3570, 15
        %v3602 = vpop.permute.xlu0 %3601
        %3603 = vrot.lane.b32.xlu0 %v3571, 15
        %v3604 = vpop.permute.xlu0 %3603
        %3605 = vrot.lane.b32.xlu0 %v3572, 15
        %v3606 = vpop.permute.xlu0 %3605
        %3607 = vrot.lane.b32.xlu0 %v3573, 15
        %v3608 = vpop.permute.xlu0 %3607
        %3609 = vrot.lane.b32.xlu0 %v3574, 15
        %v3610 = vpop.permute.xlu0 %3609
        %3611 = vrot.lane.b32.xlu0 %v3575, 15
        %v3612 = vpop.permute.xlu0 %3611
        %3613 = vrot.lane.b32.xlu0 %v3576, 15
        %v3614 = vpop.permute.xlu0 %3613
        %3615 = vrot.lane.b32.xlu0 %v3577, 15
        %v3616 = vpop.permute.xlu0 %3615
        %3617 = vrot.lane.b32.xlu0 %v3578, 15
        %v3618 = vpop.permute.xlu0 %3617
        %3619 = vrot.lane.b32.xlu0 %v3579, 15
        %v3620 = vpop.permute.xlu0 %3619
        %3621 = vrot.lane.b32.xlu0 %v3580, 15
        %v3622 = vpop.permute.xlu0 %3621
        %3623 = vrot.lane.b32.xlu0 %v3581, 15
        %v3624 = vpop.permute.xlu0 %3623
        %3625 = vrot.lane.b32.xlu0 %v3582, 15
        %v3626 = vpop.permute.xlu0 %3625
        %3627 = vrot.lane.b32.xlu0 %v3583, 15
        %v3628 = vpop.permute.xlu0 %3627
        %v3629 = vsel %vm1043, %v3600, %v3602
        %v3630 = vsel %vm1043, %v3602, %v3604
        %v3631 = vsel %vm1043, %v3606, %v3608
        %v3632 = vsel %vm1043, %v3608, %v3610
        %v3633 = vsel %vm1043, %v3612, %v3614
        %v3634 = vsel %vm1043, %v3614, %v3616
        %v3635 = vsel %vm1043, %v3618, %v3620
        %v3636 = vsel %vm1043, %v3620, %v3622
        %v3637 = vsel %vm1043, %v3624, %v3626
        %v3638 = vsel %vm1043, %v3626, %v3628
        %v3649 = vmul.f32 %v991, %v3629
        %v3650 = vmul.f32 %v995, %v3630
        %v3651 = vmul.f32 %v991, %v3631
        %v3652 = vmul.f32 %v995, %v3632
        %v3653 = vmul.f32 %v991, %v3633
        %v3654 = vmul.f32 %v995, %v3634
        %v3655 = vmul.f32 %v991, %v3635
        %v3656 = vmul.f32 %v995, %v3636
        %v3657 = vmul.f32 %v991, %v3637
        %v3658 = vmul.f32 %v995, %v3638
        %v3659 = vadd.f32 %v3294, %v3649
        %v3660 = vadd.f32 %v3295, %v3650
        %v3661 = vadd.f32 %v3296, %v3651
        %v3662 = vadd.f32 %v3297, %v3652
        %v3663 = vadd.f32 %v3298, %v3653
        %v3664 = vadd.f32 %v3299, %v3654
        %v3665 = vadd.f32 %v3300, %v3655
        %v3666 = vadd.f32 %v3301, %v3656
        %v3667 = vadd.f32 %v3302, %v3657
        %v3668 = vadd.f32 %v3303, %v3658
        %v3669 = vld [vmem:[%s1084 + $0x50] sm:$0xff]
        %v3670 = vld [vmem:[%s1084 + $0x58] sm:$0xff]
        %v3671 = vld [vmem:[%s1084 + $0x60] sm:$0xff]
        %v3672 = vld [vmem:[%s1084 + $0x68] sm:$0xff]
        %v3673 = vld [vmem:[%s1084 + $0x70] sm:$0xff]
        %3675 = vset.pattern.permute.xlu0 0
        %3676 = vperm.xlu0 %3675, %v3669
        %v3677 = vpop.permute.xlu0 %3676
        %3680 = vset.pattern.permute.xlu0 0
        %3681 = vperm.xlu0 %3680, %v3670
        %v3682 = vpop.permute.xlu0 %3681
        %3685 = vset.pattern.permute.xlu0 0
        %3686 = vperm.xlu0 %3685, %v3671
        %v3687 = vpop.permute.xlu0 %3686
        %3690 = vset.pattern.permute.xlu0 0
        %3691 = vperm.xlu0 %3690, %v3672
        %v3692 = vpop.permute.xlu0 %3691
        %3695 = vset.pattern.permute.xlu0 0
        %3696 = vperm.xlu0 %3695, %v3673
        %v3697 = vpop.permute.xlu0 %3696
        %v3699 = vmul.f32 %v3074, %v3677
        %v3700 = vmul.f32 %v3075, %v3677
        %v3701 = vmul.f32 %v3076, %v3677
        %v3702 = vmul.f32 %v3077, %v3682
        %v3703 = vmul.f32 %v3078, %v3682
        %v3704 = vmul.f32 %v3079, %v3682
        %v3705 = vmul.f32 %v3080, %v3687
        %v3706 = vmul.f32 %v3081, %v3687
        %v3707 = vmul.f32 %v3082, %v3687
        %v3708 = vmul.f32 %v3083, %v3692
        %v3709 = vmul.f32 %v3084, %v3692
        %v3710 = vmul.f32 %v3085, %v3692
        %v3711 = vmul.f32 %v3086, %v3697
        %v3712 = vmul.f32 %v3087, %v3697
        %v3713 = vmul.f32 %v3088, %v3697
        %v3714 = vld [vmem:[%s1130 + $0x50] sm:$0xff]
        %v3715 = vld [vmem:[%s1130 + $0x58] sm:$0xff]
        %v3716 = vld [vmem:[%s1130 + $0x60] sm:$0xff]
        %v3717 = vld [vmem:[%s1130 + $0x68] sm:$0xff]
        %v3718 = vld [vmem:[%s1130 + $0x70] sm:$0xff]
        %3720 = vset.pattern.permute.xlu0 0
        %3721 = vperm.xlu0 %3720, %v3714
        %v3722 = vpop.permute.xlu0 %3721
        %3725 = vset.pattern.permute.xlu0 0
        %3726 = vperm.xlu0 %3725, %v3715
        %v3727 = vpop.permute.xlu0 %3726
        %3730 = vset.pattern.permute.xlu0 0
        %3731 = vperm.xlu0 %3730, %v3716
        %v3732 = vpop.permute.xlu0 %3731
        %3735 = vset.pattern.permute.xlu0 0
        %3736 = vperm.xlu0 %3735, %v3717
        %v3737 = vpop.permute.xlu0 %3736
        %3740 = vset.pattern.permute.xlu0 0
        %3741 = vperm.xlu0 %3740, %v3718
        %v3742 = vpop.permute.xlu0 %3741
        %v3744 = vmul.f32 %v3075, %v3722
        %v3745 = vmul.f32 %v3076, %v3722
        %v3746 = vmul.f32 %v3078, %v3727
        %v3747 = vmul.f32 %v3079, %v3727
        %v3748 = vmul.f32 %v3081, %v3732
        %v3749 = vmul.f32 %v3082, %v3732
        %v3750 = vmul.f32 %v3084, %v3737
        %v3751 = vmul.f32 %v3085, %v3737
        %v3752 = vmul.f32 %v3087, %v3742
        %v3753 = vmul.f32 %v3088, %v3742
        %3764 = vrot.lane.b32.xlu0 %v3744, 114
        %v3765 = vpop.permute.xlu0 %3764
        %3766 = vrot.lane.b32.xlu0 %v3745, 114
        %v3767 = vpop.permute.xlu0 %3766
        %3768 = vrot.lane.b32.xlu0 %v3746, 114
        %v3769 = vpop.permute.xlu0 %3768
        %3770 = vrot.lane.b32.xlu0 %v3747, 114
        %v3771 = vpop.permute.xlu0 %3770
        %3772 = vrot.lane.b32.xlu0 %v3748, 114
        %v3773 = vpop.permute.xlu0 %3772
        %3774 = vrot.lane.b32.xlu0 %v3749, 114
        %v3775 = vpop.permute.xlu0 %3774
        %3776 = vrot.lane.b32.xlu0 %v3750, 114
        %v3777 = vpop.permute.xlu0 %3776
        %3778 = vrot.lane.b32.xlu0 %v3751, 114
        %v3779 = vpop.permute.xlu0 %3778
        %3780 = vrot.lane.b32.xlu0 %v3752, 114
        %v3781 = vpop.permute.xlu0 %3780
        %3782 = vrot.lane.b32.xlu0 %v3753, 114
        %v3783 = vpop.permute.xlu0 %3782
        %v3784 = vsel %vm678, %v3765, %v3767
        %v3785 = vsel %vm678, %v3769, %v3771
        %v3786 = vsel %vm678, %v3773, %v3775
        %v3787 = vsel %vm678, %v3777, %v3779
        %v3788 = vsel %vm678, %v3781, %v3783
        %v3804 = vadd.f32 %v3699, %v3765
        %v3805 = vadd.f32 %v3700, %v3784
        %v3806 = vadd.f32 %v3701, %v3767
        %v3807 = vadd.f32 %v3702, %v3769
        %v3808 = vadd.f32 %v3703, %v3785
        %v3809 = vadd.f32 %v3704, %v3771
        %v3810 = vadd.f32 %v3705, %v3773
        %v3811 = vadd.f32 %v3706, %v3786
        %v3812 = vadd.f32 %v3707, %v3775
        %v3813 = vadd.f32 %v3708, %v3777
        %v3814 = vadd.f32 %v3709, %v3787
        %v3815 = vadd.f32 %v3710, %v3779
        %v3816 = vadd.f32 %v3711, %v3781
        %v3817 = vadd.f32 %v3712, %v3788
        %v3818 = vadd.f32 %v3713, %v3783
        %v3819 = vld [vmem:[%s1236 + $0x50] sm:$0xff]
        %v3820 = vld [vmem:[%s1236 + $0x58] sm:$0xff]
        %v3821 = vld [vmem:[%s1236 + $0x60] sm:$0xff]
        %v3822 = vld [vmem:[%s1236 + $0x68] sm:$0xff]
        %v3823 = vld [vmem:[%s1236 + $0x70] sm:$0xff]
        %3825 = vset.pattern.permute.xlu0 0
        %3826 = vperm.xlu0 %3825, %v3819
        %v3827 = vpop.permute.xlu0 %3826
        %3830 = vset.pattern.permute.xlu0 0
        %3831 = vperm.xlu0 %3830, %v3820
        %v3832 = vpop.permute.xlu0 %3831
        %3835 = vset.pattern.permute.xlu0 0
        %3836 = vperm.xlu0 %3835, %v3821
        %v3837 = vpop.permute.xlu0 %3836
        %3840 = vset.pattern.permute.xlu0 0
        %3841 = vperm.xlu0 %3840, %v3822
        %v3842 = vpop.permute.xlu0 %3841
        %3845 = vset.pattern.permute.xlu0 0
        %3846 = vperm.xlu0 %3845, %v3823
        %v3847 = vpop.permute.xlu0 %3846
        %v3849 = vmul.f32 %v3075, %v3827
        %v3850 = vmul.f32 %v3076, %v3827
        %v3851 = vmul.f32 %v3078, %v3832
        %v3852 = vmul.f32 %v3079, %v3832
        %v3853 = vmul.f32 %v3081, %v3837
        %v3854 = vmul.f32 %v3082, %v3837
        %v3855 = vmul.f32 %v3084, %v3842
        %v3856 = vmul.f32 %v3085, %v3842
        %v3857 = vmul.f32 %v3087, %v3847
        %v3858 = vmul.f32 %v3088, %v3847
        %3869 = vrot.lane.b32.xlu0 %v3849, 100
        %v3870 = vpop.permute.xlu0 %3869
        %3871 = vrot.lane.b32.xlu0 %v3850, 100
        %v3872 = vpop.permute.xlu0 %3871
        %3873 = vrot.lane.b32.xlu0 %v3851, 100
        %v3874 = vpop.permute.xlu0 %3873
        %3875 = vrot.lane.b32.xlu0 %v3852, 100
        %v3876 = vpop.permute.xlu0 %3875
        %3877 = vrot.lane.b32.xlu0 %v3853, 100
        %v3878 = vpop.permute.xlu0 %3877
        %3879 = vrot.lane.b32.xlu0 %v3854, 100
        %v3880 = vpop.permute.xlu0 %3879
        %3881 = vrot.lane.b32.xlu0 %v3855, 100
        %v3882 = vpop.permute.xlu0 %3881
        %3883 = vrot.lane.b32.xlu0 %v3856, 100
        %v3884 = vpop.permute.xlu0 %3883
        %3885 = vrot.lane.b32.xlu0 %v3857, 100
        %v3886 = vpop.permute.xlu0 %3885
        %3887 = vrot.lane.b32.xlu0 %v3858, 100
        %v3888 = vpop.permute.xlu0 %3887
        %v3889 = vsel %vm951, %v3870, %v3872
        %v3890 = vsel %vm951, %v3874, %v3876
        %v3891 = vsel %vm951, %v3878, %v3880
        %v3892 = vsel %vm951, %v3882, %v3884
        %v3893 = vsel %vm951, %v3886, %v3888
        %v3909 = vadd.f32 %v3804, %v3870
        %v3910 = vadd.f32 %v3805, %v3889
        %v3911 = vadd.f32 %v3806, %v3872
        %v3912 = vadd.f32 %v3807, %v3874
        %v3913 = vadd.f32 %v3808, %v3890
        %v3914 = vadd.f32 %v3809, %v3876
        %v3915 = vadd.f32 %v3810, %v3878
        %v3916 = vadd.f32 %v3811, %v3891
        %v3917 = vadd.f32 %v3812, %v3880
        %v3918 = vadd.f32 %v3813, %v3882
        %v3919 = vadd.f32 %v3814, %v3892
        %v3920 = vadd.f32 %v3815, %v3884
        %v3921 = vadd.f32 %v3816, %v3886
        %v3922 = vadd.f32 %v3817, %v3893
        %v3923 = vadd.f32 %v3818, %v3888
        %3939 = vrot.lane.b32.xlu0 %v3909, 13
        %v3940 = vpop.permute.xlu0 %3939
        %3941 = vrot.lane.b32.xlu0 %v3910, 13
        %v3942 = vpop.permute.xlu0 %3941
        %3943 = vrot.lane.b32.xlu0 %v3911, 13
        %v3944 = vpop.permute.xlu0 %3943
        %3945 = vrot.lane.b32.xlu0 %v3912, 13
        %v3946 = vpop.permute.xlu0 %3945
        %3947 = vrot.lane.b32.xlu0 %v3913, 13
        %v3948 = vpop.permute.xlu0 %3947
        %3949 = vrot.lane.b32.xlu0 %v3914, 13
        %v3950 = vpop.permute.xlu0 %3949
        %3951 = vrot.lane.b32.xlu0 %v3915, 13
        %v3952 = vpop.permute.xlu0 %3951
        %3953 = vrot.lane.b32.xlu0 %v3916, 13
        %v3954 = vpop.permute.xlu0 %3953
        %3955 = vrot.lane.b32.xlu0 %v3917, 13
        %v3956 = vpop.permute.xlu0 %3955
        %3957 = vrot.lane.b32.xlu0 %v3918, 13
        %v3958 = vpop.permute.xlu0 %3957
        %3959 = vrot.lane.b32.xlu0 %v3919, 13
        %v3960 = vpop.permute.xlu0 %3959
        %3961 = vrot.lane.b32.xlu0 %v3920, 13
        %v3962 = vpop.permute.xlu0 %3961
        %3963 = vrot.lane.b32.xlu0 %v3921, 13
        %v3964 = vpop.permute.xlu0 %3963
        %3965 = vrot.lane.b32.xlu0 %v3922, 13
        %v3966 = vpop.permute.xlu0 %3965
        %3967 = vrot.lane.b32.xlu0 %v3923, 13
        %v3968 = vpop.permute.xlu0 %3967
        %v3969 = vsel %vm1398, %v3940, %v3942
        %v3970 = vsel %vm1398, %v3942, %v3944
        %v3971 = vsel %vm1398, %v3946, %v3948
        %v3972 = vsel %vm1398, %v3948, %v3950
        %v3973 = vsel %vm1398, %v3952, %v3954
        %v3974 = vsel %vm1398, %v3954, %v3956
        %v3975 = vsel %vm1398, %v3958, %v3960
        %v3976 = vsel %vm1398, %v3960, %v3962
        %v3977 = vsel %vm1398, %v3964, %v3966
        %v3978 = vsel %vm1398, %v3966, %v3968
        %v3989 = vmul.f32 %v1346, %v3969
        %v3990 = vmul.f32 %v1350, %v3970
        %v3991 = vmul.f32 %v1346, %v3971
        %v3992 = vmul.f32 %v1350, %v3972
        %v3993 = vmul.f32 %v1346, %v3973
        %v3994 = vmul.f32 %v1350, %v3974
        %v3995 = vmul.f32 %v1346, %v3975
        %v3996 = vmul.f32 %v1350, %v3976
        %v3997 = vmul.f32 %v1346, %v3977
        %v3998 = vmul.f32 %v1350, %v3978
        %v3999 = vadd.f32 %v3659, %v3989
        %v4000 = vadd.f32 %v3660, %v3990
        %v4001 = vadd.f32 %v3661, %v3991
        %v4002 = vadd.f32 %v3662, %v3992
        %v4003 = vadd.f32 %v3663, %v3993
        %v4004 = vadd.f32 %v3664, %v3994
        %v4005 = vadd.f32 %v3665, %v3995
        %v4006 = vadd.f32 %v3666, %v3996
        %v4007 = vadd.f32 %v3667, %v3997
        %v4008 = vadd.f32 %v3668, %v3998
        %v4009 = vld [vmem:[%s4 + $0x50] sm:$0xff]
        %v4010 = vld [vmem:[%s4 + $0x58] sm:$0xff]
        %v4011 = vld [vmem:[%s4 + $0x60] sm:$0xff]
        %v4012 = vld [vmem:[%s4 + $0x68] sm:$0xff]
        %v4013 = vld [vmem:[%s4 + $0x70] sm:$0xff]
        %4015 = vset.pattern.permute.xlu0 0
        %4016 = vperm.xlu0 %4015, %v4009
        %v4017 = vpop.permute.xlu0 %4016
        %4020 = vset.pattern.permute.xlu0 0
        %4021 = vperm.xlu0 %4020, %v4010
        %v4022 = vpop.permute.xlu0 %4021
        %4025 = vset.pattern.permute.xlu0 0
        %4026 = vperm.xlu0 %4025, %v4011
        %v4027 = vpop.permute.xlu0 %4026
        %4030 = vset.pattern.permute.xlu0 0
        %4031 = vperm.xlu0 %4030, %v4012
        %v4032 = vpop.permute.xlu0 %4031
        %4035 = vset.pattern.permute.xlu0 0
        %4036 = vperm.xlu0 %4035, %v4013
        %v4037 = vpop.permute.xlu0 %4036
        %v4039 = vadd.f32 %v3999, %v4017
        %v4040 = vadd.f32 %v4000, %v4017
        %v4041 = vadd.f32 %v4001, %v4022
        %v4042 = vadd.f32 %v4002, %v4022
        %v4043 = vadd.f32 %v4003, %v4027
        %v4044 = vadd.f32 %v4004, %v4027
        %v4045 = vadd.f32 %v4005, %v4032
        %v4046 = vadd.f32 %v4006, %v4032
        %v4047 = vadd.f32 %v4007, %v4037
        %v4048 = vadd.f32 %v4008, %v4037
        %v4049 = vmax.f32 %v4039, 0.0
        %v4050 = vmax.f32 %v4040, 0.0
        %v4051 = vmax.f32 %v4041, 0.0
        %v4052 = vmax.f32 %v4042, 0.0
        %v4053 = vmax.f32 %v4043, 0.0
        %v4054 = vmax.f32 %v4044, 0.0
        %v4055 = vmax.f32 %v4045, 0.0
        %v4056 = vmax.f32 %v4046, 0.0
        %v4057 = vmax.f32 %v4047, 0.0
        %v4058 = vmax.f32 %v4048, 0.0
        %s4059 = scalar_lea.vmem %s5, 96
        %v4060 = vld [vmem:[%s4059] sm:$0xff]
        %v4061 = vld [vmem:[%s4059 + $0x8] sm:$0xff]
        %v4062 = vld [vmem:[%s4059 + $0x10] sm:$0xff]
        %v4063 = vld [vmem:[%s4059 + $0x18] sm:$0xff]
        %v4064 = vld [vmem:[%s4059 + $0x20] sm:$0xff]
        %v4065 = vld [vmem:[%s4059 + $0x28] sm:$0xff]
        %v4067 = vsel %vm1495, %v4060, 0
        %v4070 = vsel %vm1495, %v4061, 0
        %v4073 = vsel %vm1495, %v4062, 0
        %v4076 = vsel %vm1495, %v4063, 0
        %v4079 = vsel %vm1495, %v4064, 0
        %v4082 = vsel %vm1495, %v4065, 0
        %4084 = vmatprep.subr.mxu0 %v4050
        %4085 = vmatpush1.msra.mxu0 %v4049
        %4086 = vmatprep.subr.mxu0 %v4052
        %4087 = vmatpush1.msra.mxu0 %v4051
        %4088 = vmatprep.subr.mxu0 %v4054
        %4089 = vmatpush1.msra.mxu0 %v4053
        %4090 = vmatprep.subr.mxu0 %v4056
        %4091 = vmatpush1.msra.mxu0 %v4055
        %4092 = vmatprep.subr.mxu0 %v4058
        %4093 = vmatpush1.msra.mxu0 %v4057
        %4094 = vmatprep.subr.mxu0 0.0
        %4095 = vmatpush1.msra.mxu0 0.0
        %4096 = vmatprep.subr.mxu0 0.0
        %4097 = vmatpush1.msra.mxu0 0.0
        %4098 = vmatprep.subr.mxu0 0.0
        %4099 = vmatpush1.msra.mxu0 0.0
        %4100 = vmatprep.subr.mxu0 0.0
        %4101 = vmatpush1.msra.mxu0 0.0
        %4102 = vmatprep.subr.mxu0 0.0
        %4103 = vmatpush1.msra.mxu0 0.0
        %4104 = vmatprep.subr.mxu0 0.0
        %4105 = vmatpush1.msra.mxu0 0.0
        %4106 = vmatprep.subr.mxu0 0.0
        %4107 = vmatpush1.msra.mxu0 0.0
        %4108 = vmatprep.subr.mxu0 0.0
        %4109 = vmatpush1.msra.mxu0 0.0
        %4110 = vmatprep.subr.mxu0 0.0
        %4111 = vmatpush1.msra.mxu0 0.0
        %4112 = vmatprep.subr.mxu0 0.0
        %4113 = vmatpush1.msra.mxu0 0.0
        %4114 = vmatprep.subr.mxu0 0.0
        %4115 = vmatpush1.msra.mxu0 0.0
        %4116 = vmatprep.subr.mxu0 0.0
        %4117 = vmatpush1.msra.mxu0 0.0
        %4118 = vmatprep.subr.mxu0 0.0
        %4119 = vmatpush1.msra.mxu0 0.0
        %4120 = vmatprep.subr.mxu0 0.0
        %4121 = vmatpush1.msra.mxu0 0.0
        %4122 = vmatprep.subr.mxu0 0.0
        %4123 = vmatpush1.msra.mxu0 0.0
        %4124 = vmatprep.subr.mxu0 0.0
        %4125 = vmatpush1.msra.mxu0 0.0
        %4126 = vmatprep.subr.mxu0 0.0
        %4127 = vmatpush1.msra.mxu0 0.0
        %4128 = vmatprep.subr.mxu0 0.0
        %4129 = vmatpush1.msra.mxu0 0.0
        %4130 = vmatprep.subr.mxu0 0.0
        %4131 = vmatpush1.msra.mxu0 0.0
        %4132 = vmatprep.subr.mxu0 0.0
        %4133 = vmatpush1.msra.mxu0 0.0
        %4134 = vmatprep.subr.mxu0 0.0
        %4135 = vmatpush1.msra.mxu0 0.0
        %4136 = vmatprep.subr.mxu0 0.0
        %4137 = vmatpush1.msra.mxu0 0.0
        %4138 = vmatprep.subr.mxu0 0.0
        %4139 = vmatpush1.msra.mxu0 0.0
        %4140 = vmatprep.subr.mxu0 0.0
        %4141 = vmatpush1.msra.mxu0 0.0
        %4142 = vmatprep.subr.mxu0 0.0
        %4143 = vmatpush1.msra.mxu0 0.0
        %4144 = vmatprep.subr.mxu0 0.0
        %4145 = vmatpush1.msra.mxu0 0.0
        %4146 = vmatprep.subr.mxu0 0.0
        %4147 = vmatpush1.msra.mxu0 0.0
        %4148 = vmatprep.mubr.f32.mxu0 0.0
        %4149 = vmatmul.mubr.f32.gmra.mrb[0].mxu0 %v4067
        %v4150 = vpop.f32.mrb[0].mxu0
        %v4151 = vadd.f32 0.0, %v4150
        %v4152 = vpop.f32.mrb[0].mxu0
        %v4153 = vadd.f32 0.0, %v4152
        %4154 = vmatprep.mubr.f32.mxu0 0.0
        %4155 = vmatmul.mubr.f32.gmra.mrb[0].mxu0 %v4070
        %v4156 = vpop.f32.mrb[0].mxu0
        %v4157 = vadd.f32 0.0, %v4156
        %v4158 = vpop.f32.mrb[0].mxu0
        %v4159 = vadd.f32 0.0, %v4158
        %4160 = vmatprep.mubr.f32.mxu0 0.0
        %4161 = vmatmul.mubr.f32.gmra.mrb[0].mxu0 %v4073
        %v4162 = vpop.f32.mrb[0].mxu0
        %v4163 = vadd.f32 0.0, %v4162
        %v4164 = vpop.f32.mrb[0].mxu0
        %v4165 = vadd.f32 0.0, %v4164
        %4166 = vmatprep.mubr.f32.mxu0 0.0
        %4167 = vmatmul.mubr.f32.gmra.mrb[0].mxu0 %v4076
        %v4168 = vpop.f32.mrb[0].mxu0
        %v4169 = vadd.f32 0.0, %v4168
        %v4170 = vpop.f32.mrb[0].mxu0
        %v4171 = vadd.f32 0.0, %v4170
        %4172 = vmatprep.mubr.f32.mxu0 0.0
        %4173 = vmatmul.mubr.f32.gmra.mrb[0].mxu0 %v4079
        %v4174 = vpop.f32.mrb[0].mxu0
        %v4175 = vadd.f32 0.0, %v4174
        %v4176 = vpop.f32.mrb[0].mxu0
        %v4177 = vadd.f32 0.0, %v4176
        %4178 = vmatprep.mubr.f32.mxu0 0.0
        %4179 = vmatmul.mubr.f32.gmra.mrb[0].mxu0 %v4082
        %v4180 = vpop.f32.mrb[0].mxu0
        %v4181 = vadd.f32 0.0, %v4180
        %v4182 = vpop.f32.mrb[0].mxu0
        %v4183 = vadd.f32 0.0, %v4182
        %4184 = vdwg.mxu0
        %v4185 = vld [vmem:[%s298] sm:$0xff]
        %v4186 = vld [vmem:[%s298 + $0x8] sm:$0xff]
        %v4187 = vld [vmem:[%s298 + $0x10] sm:$0xff]
        %v4188 = vld [vmem:[%s298 + $0x18] sm:$0xff]
        %v4189 = vld [vmem:[%s298 + $0x20] sm:$0xff]
        %v4190 = vld [vmem:[%s298 + $0x28] sm:$0xff]
        %v4191 = vld [vmem:[%s298 + $0x30] sm:$0xff]
        %v4192 = vld [vmem:[%s298 + $0x38] sm:$0xff]
        %v4193 = vld [vmem:[%s298 + $0x40] sm:$0xff]
        %v4194 = vld [vmem:[%s298 + $0x48] sm:$0xff]
        %v4195 = vld [vmem:[%s298 + $0x50] sm:$0xff]
        %v4196 = vld [vmem:[%s298 + $0x58] sm:$0xff]
        %v4197 = vadd.f32 %v4185, %v4151
        %v4198 = vadd.f32 %v4186, %v4153
        %v4199 = vadd.f32 %v4187, %v4157
        %v4200 = vadd.f32 %v4188, %v4159
        %v4201 = vadd.f32 %v4189, %v4163
        %v4202 = vadd.f32 %v4190, %v4165
        %v4203 = vadd.f32 %v4191, %v4169
        %v4204 = vadd.f32 %v4192, %v4171
        %v4205 = vadd.f32 %v4193, %v4175
        %v4206 = vadd.f32 %v4194, %v4177
        %v4207 = vadd.f32 %v4195, %v4181
        %v4208 = vadd.f32 %v4196, %v4183
        %4209 = vst [vmem:[%s298] sm:$0xff] %v4197
        %4210 = vst.msk [vmem:[%s298 + $0x8] sm:$0xff] %vm419, %v4198
        %4211 = vst [vmem:[%s298 + $0x10] sm:$0xff] %v4199
        %4212 = vst.msk [vmem:[%s298 + $0x18] sm:$0xff] %vm419, %v4200
        %4213 = vst [vmem:[%s298 + $0x20] sm:$0xff] %v4201
        %4214 = vst.msk [vmem:[%s298 + $0x28] sm:$0xff] %vm419, %v4202
        %4215 = vst [vmem:[%s298 + $0x30] sm:$0xff] %v4203
        %4216 = vst.msk [vmem:[%s298 + $0x38] sm:$0xff] %vm419, %v4204
        %4217 = vst [vmem:[%s298 + $0x40] sm:$0xff] %v4205
        %4218 = vst.msk [vmem:[%s298 + $0x48] sm:$0xff] %vm419, %v4206
        %4219 = vst [vmem:[%s298 + $0x50] sm:$0xff] %v4207
        %4220 = vst.msk [vmem:[%s298 + $0x58] sm:$0xff] %vm419, %v4208
        %v4221 = vld [vmem:[%s303 + $0xf0] sm:$0xff]
        %v4222 = vld [vmem:[%s303 + $0xf8] sm:$0xff]
        %v4223 = vld [vmem:[%s303 + $0x100] sm:$0xff]
        %v4224 = vld [vmem:[%s303 + $0x108] sm:$0xff]
        %v4225 = vld [vmem:[%s303 + $0x110] sm:$0xff]
        %v4226 = vld [vmem:[%s303 + $0x118] sm:$0xff]
        %v4227 = vld [vmem:[%s303 + $0x120] sm:$0xff]
        %v4228 = vld [vmem:[%s303 + $0x128] sm:$0xff]
        %v4229 = vld [vmem:[%s303 + $0x130] sm:$0xff]
        %v4230 = vld [vmem:[%s303 + $0x138] sm:$0xff]
        %v4231 = vld [vmem:[%s1 + $0x78] sm:$0xff]
        %v4232 = vld [vmem:[%s1 + $0x80] sm:$0xff]
        %v4233 = vld [vmem:[%s1 + $0x88] sm:$0xff]
        %v4234 = vld [vmem:[%s1 + $0x90] sm:$0xff]
        %v4235 = vld [vmem:[%s1 + $0x98] sm:$0xff]
        %4237 = vset.pattern.permute.xlu0 0
        %4238 = vperm.xlu0 %4237, %v4231
        %v4239 = vpop.permute.xlu0 %4238
        %4242 = vset.pattern.permute.xlu0 0
        %4243 = vperm.xlu0 %4242, %v4232
        %v4244 = vpop.permute.xlu0 %4243
        %4247 = vset.pattern.permute.xlu0 0
        %4248 = vperm.xlu0 %4247, %v4233
        %v4249 = vpop.permute.xlu0 %4248
        %4252 = vset.pattern.permute.xlu0 0
        %4253 = vperm.xlu0 %4252, %v4234
        %v4254 = vpop.permute.xlu0 %4253
        %4257 = vset.pattern.permute.xlu0 0
        %4258 = vperm.xlu0 %4257, %v4235
        %v4259 = vpop.permute.xlu0 %4258
        %v4261 = vmul.f32 %v4221, %v4239
        %v4262 = vmul.f32 %v4222, %v4239
        %v4263 = vmul.f32 %v4223, %v4244
        %v4264 = vmul.f32 %v4224, %v4244
        %v4265 = vmul.f32 %v4225, %v4249
        %v4266 = vmul.f32 %v4226, %v4249
        %v4267 = vmul.f32 %v4227, %v4254
        %v4268 = vmul.f32 %v4228, %v4254
        %v4269 = vmul.f32 %v4229, %v4259
        %v4270 = vmul.f32 %v4230, %v4259
        %v4271 = vld [vmem:[%s2 + $0x78] sm:$0xff]
        %v4272 = vld [vmem:[%s2 + $0x80] sm:$0xff]
        %v4273 = vld [vmem:[%s2 + $0x88] sm:$0xff]
        %v4274 = vld [vmem:[%s2 + $0x90] sm:$0xff]
        %v4275 = vld [vmem:[%s2 + $0x98] sm:$0xff]
        %4277 = vset.pattern.permute.xlu0 0
        %4278 = vperm.xlu0 %4277, %v4271
        %v4279 = vpop.permute.xlu0 %4278
        %4282 = vset.pattern.permute.xlu0 0
        %4283 = vperm.xlu0 %4282, %v4272
        %v4284 = vpop.permute.xlu0 %4283
        %4287 = vset.pattern.permute.xlu0 0
        %4288 = vperm.xlu0 %4287, %v4273
        %v4289 = vpop.permute.xlu0 %4288
        %4292 = vset.pattern.permute.xlu0 0
        %4293 = vperm.xlu0 %4292, %v4274
        %v4294 = vpop.permute.xlu0 %4293
        %4297 = vset.pattern.permute.xlu0 0
        %4298 = vperm.xlu0 %4297, %v4275
        %v4299 = vpop.permute.xlu0 %4298
        %v4301 = vadd.f32 %v4261, %v4279
        %v4302 = vadd.f32 %v4262, %v4279
        %v4303 = vadd.f32 %v4263, %v4284
        %v4304 = vadd.f32 %v4264, %v4284
        %v4305 = vadd.f32 %v4265, %v4289
        %v4306 = vadd.f32 %v4266, %v4289
        %v4307 = vadd.f32 %v4267, %v4294
        %v4308 = vadd.f32 %v4268, %v4294
        %v4309 = vadd.f32 %v4269, %v4299
        %v4310 = vadd.f32 %v4270, %v4299
        %v4311 = vmax.f32 %v4301, 0.0
        %v4312 = vmax.f32 %v4302, 0.0
        %v4313 = vmax.f32 %v4303, 0.0
        %v4314 = vmax.f32 %v4304, 0.0
        %v4315 = vmax.f32 %v4305, 0.0
        %v4316 = vmax.f32 %v4306, 0.0
        %v4317 = vmax.f32 %v4307, 0.0
        %v4318 = vmax.f32 %v4308, 0.0
        %v4319 = vmax.f32 %v4309, 0.0
        %v4320 = vmax.f32 %v4310, 0.0
        %4321 = vst [vmem:[#allocation2 + $0x8] sm:$0xff] %v4311
        %4322 = vst.msk [vmem:[#allocation2 + $0x10] sm:$0xff] %vm419, %v4312
        %4323 = vst [vmem:[#allocation2 + $0x20] sm:$0xff] %v4313
        %4324 = vst.msk [vmem:[#allocation2 + $0x28] sm:$0xff] %vm419, %v4314
        %4325 = vst [vmem:[#allocation2 + $0x38] sm:$0xff] %v4315
        %4326 = vst.msk [vmem:[#allocation2 + $0x40] sm:$0xff] %vm419, %v4316
        %4327 = vst [vmem:[#allocation2 + $0x50] sm:$0xff] %v4317
        %4328 = vst.msk [vmem:[#allocation2 + $0x58] sm:$0xff] %vm419, %v4318
        %4329 = vst [vmem:[#allocation2 + $0x68] sm:$0xff] %v4319
        %4330 = vst.msk [vmem:[#allocation2 + $0x70] sm:$0xff] %vm419, %v4320
        %v4331 = vld [vmem:[%s429 + $0x78] sm:$0xff]
        %v4332 = vld [vmem:[%s429 + $0x80] sm:$0xff]
        %v4333 = vld [vmem:[%s429 + $0x88] sm:$0xff]
        %v4334 = vld [vmem:[%s429 + $0x90] sm:$0xff]
        %v4335 = vld [vmem:[%s429 + $0x98] sm:$0xff]
        %4337 = vset.pattern.permute.xlu0 0
        %4338 = vperm.xlu0 %4337, %v4331
        %v4339 = vpop.permute.xlu0 %4338
        %4342 = vset.pattern.permute.xlu0 0
        %4343 = vperm.xlu0 %4342, %v4332
        %v4344 = vpop.permute.xlu0 %4343
        %4347 = vset.pattern.permute.xlu0 0
        %4348 = vperm.xlu0 %4347, %v4333
        %v4349 = vpop.permute.xlu0 %4348
        %4352 = vset.pattern.permute.xlu0 0
        %4353 = vperm.xlu0 %4352, %v4334
        %v4354 = vpop.permute.xlu0 %4353
        %4357 = vset.pattern.permute.xlu0 0
        %4358 = vperm.xlu0 %4357, %v4335
        %v4359 = vpop.permute.xlu0 %4358
        %v4361 = vmul.f32 %v4311, %v4339
        %v4362 = vmul.f32 %v4312, %v4339
        %v4363 = vmul.f32 %v4313, %v4344
        %v4364 = vmul.f32 %v4314, %v4344
        %v4365 = vmul.f32 %v4315, %v4349
        %v4366 = vmul.f32 %v4316, %v4349
        %v4367 = vmul.f32 %v4317, %v4354
        %v4368 = vmul.f32 %v4318, %v4354
        %v4369 = vmul.f32 %v4319, %v4359
        %v4370 = vmul.f32 %v4320, %v4359
        %v4371 = vld [vmem:[#allocation2] sm:$0xff]
        %v4372 = vld [vmem:[#allocation2 + $0x8] sm:$0xff]
        %v4373 = vld [vmem:[#allocation2 + $0x10] sm:$0xff]
        %v4374 = vld [vmem:[#allocation2 + $0x18] sm:$0xff]
        %v4375 = vld [vmem:[#allocation2 + $0x20] sm:$0xff]
        %v4376 = vld [vmem:[#allocation2 + $0x28] sm:$0xff]
        %v4377 = vld [vmem:[#allocation2 + $0x30] sm:$0xff]
        %v4378 = vld [vmem:[#allocation2 + $0x38] sm:$0xff]
        %v4379 = vld [vmem:[#allocation2 + $0x40] sm:$0xff]
        %v4380 = vld [vmem:[#allocation2 + $0x48] sm:$0xff]
        %v4381 = vld [vmem:[#allocation2 + $0x50] sm:$0xff]
        %v4382 = vld [vmem:[#allocation2 + $0x58] sm:$0xff]
        %v4383 = vld [vmem:[#allocation2 + $0x60] sm:$0xff]
        %v4384 = vld [vmem:[#allocation2 + $0x68] sm:$0xff]
        %v4385 = vld [vmem:[#allocation2 + $0x70] sm:$0xff]
        %v4386 = vld [vmem:[%s485 + $0x78] sm:$0xff]
        %v4387 = vld [vmem:[%s485 + $0x80] sm:$0xff]
        %v4388 = vld [vmem:[%s485 + $0x88] sm:$0xff]
        %v4389 = vld [vmem:[%s485 + $0x90] sm:$0xff]
        %v4390 = vld [vmem:[%s485 + $0x98] sm:$0xff]
        %4392 = vset.pattern.permute.xlu0 0
        %4393 = vperm.xlu0 %4392, %v4386
        %v4394 = vpop.permute.xlu0 %4393
        %4397 = vset.pattern.permute.xlu0 0
        %4398 = vperm.xlu0 %4397, %v4387
        %v4399 = vpop.permute.xlu0 %4398
        %4402 = vset.pattern.permute.xlu0 0
        %4403 = vperm.xlu0 %4402, %v4388
        %v4404 = vpop.permute.xlu0 %4403
        %4407 = vset.pattern.permute.xlu0 0
        %4408 = vperm.xlu0 %4407, %v4389
        %v4409 = vpop.permute.xlu0 %4408
        %4412 = vset.pattern.permute.xlu0 0
        %4413 = vperm.xlu0 %4412, %v4390
        %v4414 = vpop.permute.xlu0 %4413
        %v4416 = vmul.f32 %v4371, %v4394
        %v4417 = vmul.f32 %v4372, %v4394
        %v4418 = vmul.f32 %v4373, %v4394
        %v4419 = vmul.f32 %v4374, %v4399
        %v4420 = vmul.f32 %v4375, %v4399
        %v4421 = vmul.f32 %v4376, %v4399
        %v4422 = vmul.f32 %v4377, %v4404
        %v4423 = vmul.f32 %v4378, %v4404
        %v4424 = vmul.f32 %v4379, %v4404
        %v4425 = vmul.f32 %v4380, %v4409
        %v4426 = vmul.f32 %v4381, %v4409
        %v4427 = vmul.f32 %v4382, %v4409
        %v4428 = vmul.f32 %v4383, %v4414
        %v4429 = vmul.f32 %v4384, %v4414
        %v4430 = vmul.f32 %v4385, %v4414
        %4446 = vrot.lane.b32.xlu0 %v4416, 14
        %v4447 = vpop.permute.xlu0 %4446
        %4448 = vrot.lane.b32.xlu0 %v4417, 14
        %v4449 = vpop.permute.xlu0 %4448
        %4450 = vrot.lane.b32.xlu0 %v4418, 14
        %v4451 = vpop.permute.xlu0 %4450
        %4452 = vrot.lane.b32.xlu0 %v4419, 14
        %v4453 = vpop.permute.xlu0 %4452
        %4454 = vrot.lane.b32.xlu0 %v4420, 14
        %v4455 = vpop.permute.xlu0 %4454
        %4456 = vrot.lane.b32.xlu0 %v4421, 14
        %v4457 = vpop.permute.xlu0 %4456
        %4458 = vrot.lane.b32.xlu0 %v4422, 14
        %v4459 = vpop.permute.xlu0 %4458
        %4460 = vrot.lane.b32.xlu0 %v4423, 14
        %v4461 = vpop.permute.xlu0 %4460
        %4462 = vrot.lane.b32.xlu0 %v4424, 14
        %v4463 = vpop.permute.xlu0 %4462
        %4464 = vrot.lane.b32.xlu0 %v4425, 14
        %v4465 = vpop.permute.xlu0 %4464
        %4466 = vrot.lane.b32.xlu0 %v4426, 14
        %v4467 = vpop.permute.xlu0 %4466
        %4468 = vrot.lane.b32.xlu0 %v4427, 14
        %v4469 = vpop.permute.xlu0 %4468
        %4470 = vrot.lane.b32.xlu0 %v4428, 14
        %v4471 = vpop.permute.xlu0 %4470
        %4472 = vrot.lane.b32.xlu0 %v4429, 14
        %v4473 = vpop.permute.xlu0 %4472
        %4474 = vrot.lane.b32.xlu0 %v4430, 14
        %v4475 = vpop.permute.xlu0 %4474
        %v4476 = vsel %vm576, %v4447, %v4449
        %v4477 = vsel %vm576, %v4449, %v4451
        %v4478 = vsel %vm576, %v4453, %v4455
        %v4479 = vsel %vm576, %v4455, %v4457
        %v4480 = vsel %vm576, %v4459, %v4461
        %v4481 = vsel %vm576, %v4461, %v4463
        %v4482 = vsel %vm576, %v4465, %v4467
        %v4483 = vsel %vm576, %v4467, %v4469
        %v4484 = vsel %vm576, %v4471, %v4473
        %v4485 = vsel %vm576, %v4473, %v4475
        %v4496 = vadd.f32 %v4361, %v4476
        %v4497 = vadd.f32 %v4362, %v4477
        %v4498 = vadd.f32 %v4363, %v4478
        %v4499 = vadd.f32 %v4364, %v4479
        %v4500 = vadd.f32 %v4365, %v4480
        %v4501 = vadd.f32 %v4366, %v4481
        %v4502 = vadd.f32 %v4367, %v4482
        %v4503 = vadd.f32 %v4368, %v4483
        %v4504 = vadd.f32 %v4369, %v4484
        %v4505 = vadd.f32 %v4370, %v4485
        %v4506 = vld [vmem:[%s607 + $0x78] sm:$0xff]
        %v4507 = vld [vmem:[%s607 + $0x80] sm:$0xff]
        %v4508 = vld [vmem:[%s607 + $0x88] sm:$0xff]
        %v4509 = vld [vmem:[%s607 + $0x90] sm:$0xff]
        %v4510 = vld [vmem:[%s607 + $0x98] sm:$0xff]
        %4512 = vset.pattern.permute.xlu0 0
        %4513 = vperm.xlu0 %4512, %v4506
        %v4514 = vpop.permute.xlu0 %4513
        %4517 = vset.pattern.permute.xlu0 0
        %4518 = vperm.xlu0 %4517, %v4507
        %v4519 = vpop.permute.xlu0 %4518
        %4522 = vset.pattern.permute.xlu0 0
        %4523 = vperm.xlu0 %4522, %v4508
        %v4524 = vpop.permute.xlu0 %4523
        %4527 = vset.pattern.permute.xlu0 0
        %4528 = vperm.xlu0 %4527, %v4509
        %v4529 = vpop.permute.xlu0 %4528
        %4532 = vset.pattern.permute.xlu0 0
        %4533 = vperm.xlu0 %4532, %v4510
        %v4534 = vpop.permute.xlu0 %4533
        %v4536 = vmul.f32 %v4372, %v4514
        %v4537 = vmul.f32 %v4373, %v4514
        %v4538 = vmul.f32 %v4375, %v4519
        %v4539 = vmul.f32 %v4376, %v4519
        %v4540 = vmul.f32 %v4378, %v4524
        %v4541 = vmul.f32 %v4379, %v4524
        %v4542 = vmul.f32 %v4381, %v4529
        %v4543 = vmul.f32 %v4382, %v4529
        %v4544 = vmul.f32 %v4384, %v4534
        %v4545 = vmul.f32 %v4385, %v4534
        %4556 = vrot.lane.b32.xlu0 %v4536, 114
        %v4557 = vpop.permute.xlu0 %4556
        %4558 = vrot.lane.b32.xlu0 %v4537, 114
        %v4559 = vpop.permute.xlu0 %4558
        %4560 = vrot.lane.b32.xlu0 %v4538, 114
        %v4561 = vpop.permute.xlu0 %4560
        %4562 = vrot.lane.b32.xlu0 %v4539, 114
        %v4563 = vpop.permute.xlu0 %4562
        %4564 = vrot.lane.b32.xlu0 %v4540, 114
        %v4565 = vpop.permute.xlu0 %4564
        %4566 = vrot.lane.b32.xlu0 %v4541, 114
        %v4567 = vpop.permute.xlu0 %4566
        %4568 = vrot.lane.b32.xlu0 %v4542, 114
        %v4569 = vpop.permute.xlu0 %4568
        %4570 = vrot.lane.b32.xlu0 %v4543, 114
        %v4571 = vpop.permute.xlu0 %4570
        %4572 = vrot.lane.b32.xlu0 %v4544, 114
        %v4573 = vpop.permute.xlu0 %4572
        %4574 = vrot.lane.b32.xlu0 %v4545, 114
        %v4575 = vpop.permute.xlu0 %4574
        %v4576 = vsel %vm678, %v4557, %v4559
        %v4577 = vsel %vm678, %v4561, %v4563
        %v4578 = vsel %vm678, %v4565, %v4567
        %v4579 = vsel %vm678, %v4569, %v4571
        %v4580 = vsel %vm678, %v4573, %v4575
        %v4591 = vadd.f32 %v4496, %v4576
        %v4592 = vadd.f32 %v4497, %v4559
        %v4593 = vadd.f32 %v4498, %v4577
        %v4594 = vadd.f32 %v4499, %v4563
        %v4595 = vadd.f32 %v4500, %v4578
        %v4596 = vadd.f32 %v4501, %v4567
        %v4597 = vadd.f32 %v4502, %v4579
        %v4598 = vadd.f32 %v4503, %v4571
        %v4599 = vadd.f32 %v4504, %v4580
        %v4600 = vadd.f32 %v4505, %v4575
        %v4601 = vld [vmem:[%s3 + $0x78] sm:$0xff]
        %v4602 = vld [vmem:[%s3 + $0x80] sm:$0xff]
        %v4603 = vld [vmem:[%s3 + $0x88] sm:$0xff]
        %v4604 = vld [vmem:[%s3 + $0x90] sm:$0xff]
        %v4605 = vld [vmem:[%s3 + $0x98] sm:$0xff]
        %4607 = vset.pattern.permute.xlu0 0
        %4608 = vperm.xlu0 %4607, %v4601
        %v4609 = vpop.permute.xlu0 %4608
        %4612 = vset.pattern.permute.xlu0 0
        %4613 = vperm.xlu0 %4612, %v4602
        %v4614 = vpop.permute.xlu0 %4613
        %4617 = vset.pattern.permute.xlu0 0
        %4618 = vperm.xlu0 %4617, %v4603
        %v4619 = vpop.permute.xlu0 %4618
        %4622 = vset.pattern.permute.xlu0 0
        %4623 = vperm.xlu0 %4622, %v4604
        %v4624 = vpop.permute.xlu0 %4623
        %4627 = vset.pattern.permute.xlu0 0
        %4628 = vperm.xlu0 %4627, %v4605
        %v4629 = vpop.permute.xlu0 %4628
        %v4631 = vmul.f32 %v4371, %v4609
        %v4632 = vmul.f32 %v4372, %v4609
        %v4633 = vmul.f32 %v4373, %v4609
        %v4634 = vmul.f32 %v4374, %v4614
        %v4635 = vmul.f32 %v4375, %v4614
        %v4636 = vmul.f32 %v4376, %v4614
        %v4637 = vmul.f32 %v4377, %v4619
        %v4638 = vmul.f32 %v4378, %v4619
        %v4639 = vmul.f32 %v4379, %v4619
        %v4640 = vmul.f32 %v4380, %v4624
        %v4641 = vmul.f32 %v4381, %v4624
        %v4642 = vmul.f32 %v4382, %v4624
        %v4643 = vmul.f32 %v4383, %v4629
        %v4644 = vmul.f32 %v4384, %v4629
        %v4645 = vmul.f32 %v4385, %v4629
        %v4646 = vld [vmem:[%s749 + $0x78] sm:$0xff]
        %v4647 = vld [vmem:[%s749 + $0x80] sm:$0xff]
        %v4648 = vld [vmem:[%s749 + $0x88] sm:$0xff]
        %v4649 = vld [vmem:[%s749 + $0x90] sm:$0xff]
        %v4650 = vld [vmem:[%s749 + $0x98] sm:$0xff]
        %4652 = vset.pattern.permute.xlu0 0
        %4653 = vperm.xlu0 %4652, %v4646
        %v4654 = vpop.permute.xlu0 %4653
        %4657 = vset.pattern.permute.xlu0 0
        %4658 = vperm.xlu0 %4657, %v4647
        %v4659 = vpop.permute.xlu0 %4658
        %4662 = vset.pattern.permute.xlu0 0
        %4663 = vperm.xlu0 %4662, %v4648
        %v4664 = vpop.permute.xlu0 %4663
        %4667 = vset.pattern.permute.xlu0 0
        %4668 = vperm.xlu0 %4667, %v4649
        %v4669 = vpop.permute.xlu0 %4668
        %4672 = vset.pattern.permute.xlu0 0
        %4673 = vperm.xlu0 %4672, %v4650
        %v4674 = vpop.permute.xlu0 %4673
        %v4676 = vmul.f32 %v4371, %v4654
        %v4677 = vmul.f32 %v4372, %v4654
        %v4678 = vmul.f32 %v4373, %v4654
        %v4679 = vmul.f32 %v4374, %v4659
        %v4680 = vmul.f32 %v4375, %v4659
        %v4681 = vmul.f32 %v4376, %v4659
        %v4682 = vmul.f32 %v4377, %v4664
        %v4683 = vmul.f32 %v4378, %v4664
        %v4684 = vmul.f32 %v4379, %v4664
        %v4685 = vmul.f32 %v4380, %v4669
        %v4686 = vmul.f32 %v4381, %v4669
        %v4687 = vmul.f32 %v4382, %v4669
        %v4688 = vmul.f32 %v4383, %v4674
        %v4689 = vmul.f32 %v4384, %v4674
        %v4690 = vmul.f32 %v4385, %v4674
        %4706 = vrot.lane.b32.xlu0 %v4676, 114
        %v4707 = vpop.permute.xlu0 %4706
        %4708 = vrot.lane.b32.xlu0 %v4677, 114
        %v4709 = vpop.permute.xlu0 %4708
        %4710 = vrot.lane.b32.xlu0 %v4678, 114
        %v4711 = vpop.permute.xlu0 %4710
        %4712 = vrot.lane.b32.xlu0 %v4679, 114
        %v4713 = vpop.permute.xlu0 %4712
        %4714 = vrot.lane.b32.xlu0 %v4680, 114
        %v4715 = vpop.permute.xlu0 %4714
        %4716 = vrot.lane.b32.xlu0 %v4681, 114
        %v4717 = vpop.permute.xlu0 %4716
        %4718 = vrot.lane.b32.xlu0 %v4682, 114
        %v4719 = vpop.permute.xlu0 %4718
        %4720 = vrot.lane.b32.xlu0 %v4683, 114
        %v4721 = vpop.permute.xlu0 %4720
        %4722 = vrot.lane.b32.xlu0 %v4684, 114
        %v4723 = vpop.permute.xlu0 %4722
        %4724 = vrot.lane.b32.xlu0 %v4685, 114
        %v4725 = vpop.permute.xlu0 %4724
        %4726 = vrot.lane.b32.xlu0 %v4686, 114
        %v4727 = vpop.permute.xlu0 %4726
        %4728 = vrot.lane.b32.xlu0 %v4687, 114
        %v4729 = vpop.permute.xlu0 %4728
        %4730 = vrot.lane.b32.xlu0 %v4688, 114
        %v4731 = vpop.permute.xlu0 %4730
        %4732 = vrot.lane.b32.xlu0 %v4689, 114
        %v4733 = vpop.permute.xlu0 %4732
        %4734 = vrot.lane.b32.xlu0 %v4690, 114
        %v4735 = vpop.permute.xlu0 %4734
        %v4736 = vsel %vm678, %v4707, %v4709
        %v4737 = vsel %vm678, %v4709, %v4711
        %v4738 = vsel %vm678, %v4713, %v4715
        %v4739 = vsel %vm678, %v4715, %v4717
        %v4740 = vsel %vm678, %v4719, %v4721
        %v4741 = vsel %vm678, %v4721, %v4723
        %v4742 = vsel %vm678, %v4725, %v4727
        %v4743 = vsel %vm678, %v4727, %v4729
        %v4744 = vsel %vm678, %v4731, %v4733
        %v4745 = vsel %vm678, %v4733, %v4735
        %v4761 = vadd.f32 %v4631, %v4736
        %v4762 = vadd.f32 %v4632, %v4737
        %v4763 = vadd.f32 %v4633, %v4711
        %v4764 = vadd.f32 %v4634, %v4738
        %v4765 = vadd.f32 %v4635, %v4739
        %v4766 = vadd.f32 %v4636, %v4717
        %v4767 = vadd.f32 %v4637, %v4740
        %v4768 = vadd.f32 %v4638, %v4741
        %v4769 = vadd.f32 %v4639, %v4723
        %v4770 = vadd.f32 %v4640, %v4742
        %v4771 = vadd.f32 %v4641, %v4743
        %v4772 = vadd.f32 %v4642, %v4729
        %v4773 = vadd.f32 %v4643, %v4744
        %v4774 = vadd.f32 %v4644, %v4745
        %v4775 = vadd.f32 %v4645, %v4735
        %v4776 = vld [vmem:[%s880 + $0x78] sm:$0xff]
        %v4777 = vld [vmem:[%s880 + $0x80] sm:$0xff]
        %v4778 = vld [vmem:[%s880 + $0x88] sm:$0xff]
        %v4779 = vld [vmem:[%s880 + $0x90] sm:$0xff]
        %v4780 = vld [vmem:[%s880 + $0x98] sm:$0xff]
        %4782 = vset.pattern.permute.xlu0 0
        %4783 = vperm.xlu0 %4782, %v4776
        %v4784 = vpop.permute.xlu0 %4783
        %4787 = vset.pattern.permute.xlu0 0
        %4788 = vperm.xlu0 %4787, %v4777
        %v4789 = vpop.permute.xlu0 %4788
        %4792 = vset.pattern.permute.xlu0 0
        %4793 = vperm.xlu0 %4792, %v4778
        %v4794 = vpop.permute.xlu0 %4793
        %4797 = vset.pattern.permute.xlu0 0
        %4798 = vperm.xlu0 %4797, %v4779
        %v4799 = vpop.permute.xlu0 %4798
        %4802 = vset.pattern.permute.xlu0 0
        %4803 = vperm.xlu0 %4802, %v4780
        %v4804 = vpop.permute.xlu0 %4803
        %v4806 = vmul.f32 %v4372, %v4784
        %v4807 = vmul.f32 %v4373, %v4784
        %v4808 = vmul.f32 %v4375, %v4789
        %v4809 = vmul.f32 %v4376, %v4789
        %v4810 = vmul.f32 %v4378, %v4794
        %v4811 = vmul.f32 %v4379, %v4794
        %v4812 = vmul.f32 %v4381, %v4799
        %v4813 = vmul.f32 %v4382, %v4799
        %v4814 = vmul.f32 %v4384, %v4804
        %v4815 = vmul.f32 %v4385, %v4804
        %4826 = vrot.lane.b32.xlu0 %v4806, 100
        %v4827 = vpop.permute.xlu0 %4826
        %4828 = vrot.lane.b32.xlu0 %v4807, 100
        %v4829 = vpop.permute.xlu0 %4828
        %4830 = vrot.lane.b32.xlu0 %v4808, 100
        %v4831 = vpop.permute.xlu0 %4830
        %4832 = vrot.lane.b32.xlu0 %v4809, 100
        %v4833 = vpop.permute.xlu0 %4832
        %4834 = vrot.lane.b32.xlu0 %v4810, 100
        %v4835 = vpop.permute.xlu0 %4834
        %4836 = vrot.lane.b32.xlu0 %v4811, 100
        %v4837 = vpop.permute.xlu0 %4836
        %4838 = vrot.lane.b32.xlu0 %v4812, 100
        %v4839 = vpop.permute.xlu0 %4838
        %4840 = vrot.lane.b32.xlu0 %v4813, 100
        %v4841 = vpop.permute.xlu0 %4840
        %4842 = vrot.lane.b32.xlu0 %v4814, 100
        %v4843 = vpop.permute.xlu0 %4842
        %4844 = vrot.lane.b32.xlu0 %v4815, 100
        %v4845 = vpop.permute.xlu0 %4844
        %v4846 = vsel %vm951, %v4827, %v4829
        %v4847 = vsel %vm951, %v4831, %v4833
        %v4848 = vsel %vm951, %v4835, %v4837
        %v4849 = vsel %vm951, %v4839, %v4841
        %v4850 = vsel %vm951, %v4843, %v4845
        %v4866 = vadd.f32 %v4761, %v4827
        %v4867 = vadd.f32 %v4762, %v4846
        %v4868 = vadd.f32 %v4763, %v4829
        %v4869 = vadd.f32 %v4764, %v4831
        %v4870 = vadd.f32 %v4765, %v4847
        %v4871 = vadd.f32 %v4766, %v4833
        %v4872 = vadd.f32 %v4767, %v4835
        %v4873 = vadd.f32 %v4768, %v4848
        %v4874 = vadd.f32 %v4769, %v4837
        %v4875 = vadd.f32 %v4770, %v4839
        %v4876 = vadd.f32 %v4771, %v4849
        %v4877 = vadd.f32 %v4772, %v4841
        %v4878 = vadd.f32 %v4773, %v4843
        %v4879 = vadd.f32 %v4774, %v4850
        %v4880 = vadd.f32 %v4775, %v4845
        %4896 = vrot.lane.b32.xlu0 %v4866, 15
        %v4897 = vpop.permute.xlu0 %4896
        %4898 = vrot.lane.b32.xlu0 %v4867, 15
        %v4899 = vpop.permute.xlu0 %4898
        %4900 = vrot.lane.b32.xlu0 %v4868, 15
        %v4901 = vpop.permute.xlu0 %4900
        %4902 = vrot.lane.b32.xlu0 %v4869, 15
        %v4903 = vpop.permute.xlu0 %4902
        %4904 = vrot.lane.b32.xlu0 %v4870, 15
        %v4905 = vpop.permute.xlu0 %4904
        %4906 = vrot.lane.b32.xlu0 %v4871, 15
        %v4907 = vpop.permute.xlu0 %4906
        %4908 = vrot.lane.b32.xlu0 %v4872, 15
        %v4909 = vpop.permute.xlu0 %4908
        %4910 = vrot.lane.b32.xlu0 %v4873, 15
        %v4911 = vpop.permute.xlu0 %4910
        %4912 = vrot.lane.b32.xlu0 %v4874, 15
        %v4913 = vpop.permute.xlu0 %4912
        %4914 = vrot.lane.b32.xlu0 %v4875, 15
        %v4915 = vpop.permute.xlu0 %4914
        %4916 = vrot.lane.b32.xlu0 %v4876, 15
        %v4917 = vpop.permute.xlu0 %4916
        %4918 = vrot.lane.b32.xlu0 %v4877, 15
        %v4919 = vpop.permute.xlu0 %4918
        %4920 = vrot.lane.b32.xlu0 %v4878, 15
        %v4921 = vpop.permute.xlu0 %4920
        %4922 = vrot.lane.b32.xlu0 %v4879, 15
        %v4923 = vpop.permute.xlu0 %4922
        %4924 = vrot.lane.b32.xlu0 %v4880, 15
        %v4925 = vpop.permute.xlu0 %4924
        %v4926 = vsel %vm1043, %v4897, %v4899
        %v4927 = vsel %vm1043, %v4899, %v4901
        %v4928 = vsel %vm1043, %v4903, %v4905
        %v4929 = vsel %vm1043, %v4905, %v4907
        %v4930 = vsel %vm1043, %v4909, %v4911
        %v4931 = vsel %vm1043, %v4911, %v4913
        %v4932 = vsel %vm1043, %v4915, %v4917
        %v4933 = vsel %vm1043, %v4917, %v4919
        %v4934 = vsel %vm1043, %v4921, %v4923
        %v4935 = vsel %vm1043, %v4923, %v4925
        %v4946 = vmul.f32 %v991, %v4926
        %v4947 = vmul.f32 %v995, %v4927
        %v4948 = vmul.f32 %v991, %v4928
        %v4949 = vmul.f32 %v995, %v4929
        %v4950 = vmul.f32 %v991, %v4930
        %v4951 = vmul.f32 %v995, %v4931
        %v4952 = vmul.f32 %v991, %v4932
        %v4953 = vmul.f32 %v995, %v4933
        %v4954 = vmul.f32 %v991, %v4934
        %v4955 = vmul.f32 %v995, %v4935
        %v4956 = vadd.f32 %v4591, %v4946
        %v4957 = vadd.f32 %v4592, %v4947
        %v4958 = vadd.f32 %v4593, %v4948
        %v4959 = vadd.f32 %v4594, %v4949
        %v4960 = vadd.f32 %v4595, %v4950
        %v4961 = vadd.f32 %v4596, %v4951
        %v4962 = vadd.f32 %v4597, %v4952
        %v4963 = vadd.f32 %v4598, %v4953
        %v4964 = vadd.f32 %v4599, %v4954
        %v4965 = vadd.f32 %v4600, %v4955
        %v4966 = vld [vmem:[%s1084 + $0x78] sm:$0xff]
        %v4967 = vld [vmem:[%s1084 + $0x80] sm:$0xff]
        %v4968 = vld [vmem:[%s1084 + $0x88] sm:$0xff]
        %v4969 = vld [vmem:[%s1084 + $0x90] sm:$0xff]
        %v4970 = vld [vmem:[%s1084 + $0x98] sm:$0xff]
        %4972 = vset.pattern.permute.xlu0 0
        %4973 = vperm.xlu0 %4972, %v4966
        %v4974 = vpop.permute.xlu0 %4973
        %4977 = vset.pattern.permute.xlu0 0
        %4978 = vperm.xlu0 %4977, %v4967
        %v4979 = vpop.permute.xlu0 %4978
        %4982 = vset.pattern.permute.xlu0 0
        %4983 = vperm.xlu0 %4982, %v4968
        %v4984 = vpop.permute.xlu0 %4983
        %4987 = vset.pattern.permute.xlu0 0
        %4988 = vperm.xlu0 %4987, %v4969
        %v4989 = vpop.permute.xlu0 %4988
        %4992 = vset.pattern.permute.xlu0 0
        %4993 = vperm.xlu0 %4992, %v4970
        %v4994 = vpop.permute.xlu0 %4993
        %v4996 = vmul.f32 %v4371, %v4974
        %v4997 = vmul.f32 %v4372, %v4974
        %v4998 = vmul.f32 %v4373, %v4974
        %v4999 = vmul.f32 %v4374, %v4979
        %v5000 = vmul.f32 %v4375, %v4979
        %v5001 = vmul.f32 %v4376, %v4979
        %v5002 = vmul.f32 %v4377, %v4984
        %v5003 = vmul.f32 %v4378, %v4984
        %v5004 = vmul.f32 %v4379, %v4984
        %v5005 = vmul.f32 %v4380, %v4989
        %v5006 = vmul.f32 %v4381, %v4989
        %v5007 = vmul.f32 %v4382, %v4989
        %v5008 = vmul.f32 %v4383, %v4994
        %v5009 = vmul.f32 %v4384, %v4994
        %v5010 = vmul.f32 %v4385, %v4994
        %v5011 = vld [vmem:[%s1130 + $0x78] sm:$0xff]
        %v5012 = vld [vmem:[%s1130 + $0x80] sm:$0xff]
        %v5013 = vld [vmem:[%s1130 + $0x88] sm:$0xff]
        %v5014 = vld [vmem:[%s1130 + $0x90] sm:$0xff]
        %v5015 = vld [vmem:[%s1130 + $0x98] sm:$0xff]
        %5017 = vset.pattern.permute.xlu0 0
        %5018 = vperm.xlu0 %5017, %v5011
        %v5019 = vpop.permute.xlu0 %5018
        %5022 = vset.pattern.permute.xlu0 0
        %5023 = vperm.xlu0 %5022, %v5012
        %v5024 = vpop.permute.xlu0 %5023
        %5027 = vset.pattern.permute.xlu0 0
        %5028 = vperm.xlu0 %5027, %v5013
        %v5029 = vpop.permute.xlu0 %5028
        %5032 = vset.pattern.permute.xlu0 0
        %5033 = vperm.xlu0 %5032, %v5014
        %v5034 = vpop.permute.xlu0 %5033
        %5037 = vset.pattern.permute.xlu0 0
        %5038 = vperm.xlu0 %5037, %v5015
        %v5039 = vpop.permute.xlu0 %5038
        %v5041 = vmul.f32 %v4372, %v5019
        %v5042 = vmul.f32 %v4373, %v5019
        %v5043 = vmul.f32 %v4375, %v5024
        %v5044 = vmul.f32 %v4376, %v5024
        %v5045 = vmul.f32 %v4378, %v5029
        %v5046 = vmul.f32 %v4379, %v5029
        %v5047 = vmul.f32 %v4381, %v5034
        %v5048 = vmul.f32 %v4382, %v5034
        %v5049 = vmul.f32 %v4384, %v5039
        %v5050 = vmul.f32 %v4385, %v5039
        %5061 = vrot.lane.b32.xlu0 %v5041, 114
        %v5062 = vpop.permute.xlu0 %5061
        %5063 = vrot.lane.b32.xlu0 %v5042, 114
        %v5064 = vpop.permute.xlu0 %5063
        %5065 = vrot.lane.b32.xlu0 %v5043, 114
        %v5066 = vpop.permute.xlu0 %5065
        %5067 = vrot.lane.b32.xlu0 %v5044, 114
        %v5068 = vpop.permute.xlu0 %5067
        %5069 = vrot.lane.b32.xlu0 %v5045, 114
        %v5070 = vpop.permute.xlu0 %5069
        %5071 = vrot.lane.b32.xlu0 %v5046, 114
        %v5072 = vpop.permute.xlu0 %5071
        %5073 = vrot.lane.b32.xlu0 %v5047, 114
        %v5074 = vpop.permute.xlu0 %5073
        %5075 = vrot.lane.b32.xlu0 %v5048, 114
        %v5076 = vpop.permute.xlu0 %5075
        %5077 = vrot.lane.b32.xlu0 %v5049, 114
        %v5078 = vpop.permute.xlu0 %5077
        %5079 = vrot.lane.b32.xlu0 %v5050, 114
        %v5080 = vpop.permute.xlu0 %5079
        %v5081 = vsel %vm678, %v5062, %v5064
        %v5082 = vsel %vm678, %v5066, %v5068
        %v5083 = vsel %vm678, %v5070, %v5072
        %v5084 = vsel %vm678, %v5074, %v5076
        %v5085 = vsel %vm678, %v5078, %v5080
        %v5101 = vadd.f32 %v4996, %v5062
        %v5102 = vadd.f32 %v4997, %v5081
        %v5103 = vadd.f32 %v4998, %v5064
        %v5104 = vadd.f32 %v4999, %v5066
        %v5105 = vadd.f32 %v5000, %v5082
        %v5106 = vadd.f32 %v5001, %v5068
        %v5107 = vadd.f32 %v5002, %v5070
        %v5108 = vadd.f32 %v5003, %v5083
        %v5109 = vadd.f32 %v5004, %v5072
        %v5110 = vadd.f32 %v5005, %v5074
        %v5111 = vadd.f32 %v5006, %v5084
        %v5112 = vadd.f32 %v5007, %v5076
        %v5113 = vadd.f32 %v5008, %v5078
        %v5114 = vadd.f32 %v5009, %v5085
        %v5115 = vadd.f32 %v5010, %v5080
        %v5116 = vld [vmem:[%s1236 + $0x78] sm:$0xff]
        %v5117 = vld [vmem:[%s1236 + $0x80] sm:$0xff]
        %v5118 = vld [vmem:[%s1236 + $0x88] sm:$0xff]
        %v5119 = vld [vmem:[%s1236 + $0x90] sm:$0xff]
        %v5120 = vld [vmem:[%s1236 + $0x98] sm:$0xff]
        %5122 = vset.pattern.permute.xlu0 0
        %5123 = vperm.xlu0 %5122, %v5116
        %v5124 = vpop.permute.xlu0 %5123
        %5127 = vset.pattern.permute.xlu0 0
        %5128 = vperm.xlu0 %5127, %v5117
        %v5129 = vpop.permute.xlu0 %5128
        %5132 = vset.pattern.permute.xlu0 0
        %5133 = vperm.xlu0 %5132, %v5118
        %v5134 = vpop.permute.xlu0 %5133
        %5137 = vset.pattern.permute.xlu0 0
        %5138 = vperm.xlu0 %5137, %v5119
        %v5139 = vpop.permute.xlu0 %5138
        %5142 = vset.pattern.permute.xlu0 0
        %5143 = vperm.xlu0 %5142, %v5120
        %v5144 = vpop.permute.xlu0 %5143
        %v5146 = vmul.f32 %v4372, %v5124
        %v5147 = vmul.f32 %v4373, %v5124
        %v5148 = vmul.f32 %v4375, %v5129
        %v5149 = vmul.f32 %v4376, %v5129
        %v5150 = vmul.f32 %v4378, %v5134
        %v5151 = vmul.f32 %v4379, %v5134
        %v5152 = vmul.f32 %v4381, %v5139
        %v5153 = vmul.f32 %v4382, %v5139
        %v5154 = vmul.f32 %v4384, %v5144
        %v5155 = vmul.f32 %v4385, %v5144
        %5166 = vrot.lane.b32.xlu0 %v5146, 100
        %v5167 = vpop.permute.xlu0 %5166
        %5168 = vrot.lane.b32.xlu0 %v5147, 100
        %v5169 = vpop.permute.xlu0 %5168
        %5170 = vrot.lane.b32.xlu0 %v5148, 100
        %v5171 = vpop.permute.xlu0 %5170
        %5172 = vrot.lane.b32.xlu0 %v5149, 100
        %v5173 = vpop.permute.xlu0 %5172
        %5174 = vrot.lane.b32.xlu0 %v5150, 100
        %v5175 = vpop.permute.xlu0 %5174
        %5176 = vrot.lane.b32.xlu0 %v5151, 100
        %v5177 = vpop.permute.xlu0 %5176
        %5178 = vrot.lane.b32.xlu0 %v5152, 100
        %v5179 = vpop.permute.xlu0 %5178
        %5180 = vrot.lane.b32.xlu0 %v5153, 100
        %v5181 = vpop.permute.xlu0 %5180
        %5182 = vrot.lane.b32.xlu0 %v5154, 100
        %v5183 = vpop.permute.xlu0 %5182
        %5184 = vrot.lane.b32.xlu0 %v5155, 100
        %v5185 = vpop.permute.xlu0 %5184
        %v5186 = vsel %vm951, %v5167, %v5169
        %v5187 = vsel %vm951, %v5171, %v5173
        %v5188 = vsel %vm951, %v5175, %v5177
        %v5189 = vsel %vm951, %v5179, %v5181
        %v5190 = vsel %vm951, %v5183, %v5185
        %v5206 = vadd.f32 %v5101, %v5167
        %v5207 = vadd.f32 %v5102, %v5186
        %v5208 = vadd.f32 %v5103, %v5169
        %v5209 = vadd.f32 %v5104, %v5171
        %v5210 = vadd.f32 %v5105, %v5187
        %v5211 = vadd.f32 %v5106, %v5173
        %v5212 = vadd.f32 %v5107, %v5175
        %v5213 = vadd.f32 %v5108, %v5188
        %v5214 = vadd.f32 %v5109, %v5177
        %v5215 = vadd.f32 %v5110, %v5179
        %v5216 = vadd.f32 %v5111, %v5189
        %v5217 = vadd.f32 %v5112, %v5181
        %v5218 = vadd.f32 %v5113, %v5183
        %v5219 = vadd.f32 %v5114, %v5190
        %v5220 = vadd.f32 %v5115, %v5185
        %5236 = vrot.lane.b32.xlu0 %v5206, 13
        %v5237 = vpop.permute.xlu0 %5236
        %5238 = vrot.lane.b32.xlu0 %v5207, 13
        %v5239 = vpop.permute.xlu0 %5238
        %5240 = vrot.lane.b32.xlu0 %v5208, 13
        %v5241 = vpop.permute.xlu0 %5240
        %5242 = vrot.lane.b32.xlu0 %v5209, 13
        %v5243 = vpop.permute.xlu0 %5242
        %5244 = vrot.lane.b32.xlu0 %v5210, 13
        %v5245 = vpop.permute.xlu0 %5244
        %5246 = vrot.lane.b32.xlu0 %v5211, 13
        %v5247 = vpop.permute.xlu0 %5246
        %5248 = vrot.lane.b32.xlu0 %v5212, 13
        %v5249 = vpop.permute.xlu0 %5248
        %5250 = vrot.lane.b32.xlu0 %v5213, 13
        %v5251 = vpop.permute.xlu0 %5250
        %5252 = vrot.lane.b32.xlu0 %v5214, 13
        %v5253 = vpop.permute.xlu0 %5252
        %5254 = vrot.lane.b32.xlu0 %v5215, 13
        %v5255 = vpop.permute.xlu0 %5254
        %5256 = vrot.lane.b32.xlu0 %v5216, 13
        %v5257 = vpop.permute.xlu0 %5256
        %5258 = vrot.lane.b32.xlu0 %v5217, 13
        %v5259 = vpop.permute.xlu0 %5258
        %5260 = vrot.lane.b32.xlu0 %v5218, 13
        %v5261 = vpop.permute.xlu0 %5260
        %5262 = vrot.lane.b32.xlu0 %v5219, 13
        %v5263 = vpop.permute.xlu0 %5262
        %5264 = vrot.lane.b32.xlu0 %v5220, 13
        %v5265 = vpop.permute.xlu0 %5264
        %v5266 = vsel %vm1398, %v5237, %v5239
        %v5267 = vsel %vm1398, %v5239, %v5241
        %v5268 = vsel %vm1398, %v5243, %v5245
        %v5269 = vsel %vm1398, %v5245, %v5247
        %v5270 = vsel %vm1398, %v5249, %v5251
        %v5271 = vsel %vm1398, %v5251, %v5253
        %v5272 = vsel %vm1398, %v5255, %v5257
        %v5273 = vsel %vm1398, %v5257, %v5259
        %v5274 = vsel %vm1398, %v5261, %v5263
        %v5275 = vsel %vm1398, %v5263, %v5265
        %v5286 = vmul.f32 %v1346, %v5266
        %v5287 = vmul.f32 %v1350, %v5267
        %v5288 = vmul.f32 %v1346, %v5268
        %v5289 = vmul.f32 %v1350, %v5269
        %v5290 = vmul.f32 %v1346, %v5270
        %v5291 = vmul.f32 %v1350, %v5271
        %v5292 = vmul.f32 %v1346, %v5272
        %v5293 = vmul.f32 %v1350, %v5273
        %v5294 = vmul.f32 %v1346, %v5274
        %v5295 = vmul.f32 %v1350, %v5275
        %v5296 = vadd.f32 %v4956, %v5286
        %v5297 = vadd.f32 %v4957, %v5287
        %v5298 = vadd.f32 %v4958, %v5288
        %v5299 = vadd.f32 %v4959, %v5289
        %v5300 = vadd.f32 %v4960, %v5290
        %v5301 = vadd.f32 %v4961, %v5291
        %v5302 = vadd.f32 %v4962, %v5292
        %v5303 = vadd.f32 %v4963, %v5293
        %v5304 = vadd.f32 %v4964, %v5294
        %v5305 = vadd.f32 %v4965, %v5295
        %v5306 = vld [vmem:[%s4 + $0x78] sm:$0xff]
        %v5307 = vld [vmem:[%s4 + $0x80] sm:$0xff]
        %v5308 = vld [vmem:[%s4 + $0x88] sm:$0xff]
        %v5309 = vld [vmem:[%s4 + $0x90] sm:$0xff]
        %v5310 = vld [vmem:[%s4 + $0x98] sm:$0xff]
        %5312 = vset.pattern.permute.xlu0 0
        %5313 = vperm.xlu0 %5312, %v5306
        %v5314 = vpop.permute.xlu0 %5313
        %5317 = vset.pattern.permute.xlu0 0
        %5318 = vperm.xlu0 %5317, %v5307
        %v5319 = vpop.permute.xlu0 %5318
        %5322 = vset.pattern.permute.xlu0 0
        %5323 = vperm.xlu0 %5322, %v5308
        %v5324 = vpop.permute.xlu0 %5323
        %5327 = vset.pattern.permute.xlu0 0
        %5328 = vperm.xlu0 %5327, %v5309
        %v5329 = vpop.permute.xlu0 %5328
        %5332 = vset.pattern.permute.xlu0 0
        %5333 = vperm.xlu0 %5332, %v5310
        %v5334 = vpop.permute.xlu0 %5333
        %v5336 = vadd.f32 %v5296, %v5314
        %v5337 = vadd.f32 %v5297, %v5314
        %v5338 = vadd.f32 %v5298, %v5319
        %v5339 = vadd.f32 %v5299, %v5319
        %v5340 = vadd.f32 %v5300, %v5324
        %v5341 = vadd.f32 %v5301, %v5324
        %v5342 = vadd.f32 %v5302, %v5329
        %v5343 = vadd.f32 %v5303, %v5329
        %v5344 = vadd.f32 %v5304, %v5334
        %v5345 = vadd.f32 %v5305, %v5334
        %v5346 = vmax.f32 %v5336, 0.0
        %v5347 = vmax.f32 %v5337, 0.0
        %v5348 = vmax.f32 %v5338, 0.0
        %v5349 = vmax.f32 %v5339, 0.0
        %v5350 = vmax.f32 %v5340, 0.0
        %v5351 = vmax.f32 %v5341, 0.0
        %v5352 = vmax.f32 %v5342, 0.0
        %v5353 = vmax.f32 %v5343, 0.0
        %v5354 = vmax.f32 %v5344, 0.0
        %v5355 = vmax.f32 %v5345, 0.0
        %s5356 = scalar_lea.vmem %s5, 144
        %v5357 = vld [vmem:[%s5356] sm:$0xff]
        %v5358 = vld [vmem:[%s5356 + $0x8] sm:$0xff]
        %v5359 = vld [vmem:[%s5356 + $0x10] sm:$0xff]
        %v5360 = vld [vmem:[%s5356 + $0x18] sm:$0xff]
        %v5361 = vld [vmem:[%s5356 + $0x20] sm:$0xff]
        %v5362 = vld [vmem:[%s5356 + $0x28] sm:$0xff]
        %v5364 = vsel %vm1495, %v5357, 0
        %v5367 = vsel %vm1495, %v5358, 0
        %v5370 = vsel %vm1495, %v5359, 0
        %v5373 = vsel %vm1495, %v5360, 0
        %v5376 = vsel %vm1495, %v5361, 0
        %v5379 = vsel %vm1495, %v5362, 0
        %5381 = vmatprep.subr.mxu0 %v5347
        %5382 = vmatpush1.msra.mxu0 %v5346
        %5383 = vmatprep.subr.mxu0 %v5349
        %5384 = vmatpush1.msra.mxu0 %v5348
        %5385 = vmatprep.subr.mxu0 %v5351
        %5386 = vmatpush1.msra.mxu0 %v5350
        %5387 = vmatprep.subr.mxu0 %v5353
        %5388 = vmatpush1.msra.mxu0 %v5352
        %5389 = vmatprep.subr.mxu0 %v5355
        %5390 = vmatpush1.msra.mxu0 %v5354
        %5391 = vmatprep.subr.mxu0 0.0
        %5392 = vmatpush1.msra.mxu0 0.0
        %5393 = vmatprep.subr.mxu0 0.0
        %5394 = vmatpush1.msra.mxu0 0.0
        %5395 = vmatprep.subr.mxu0 0.0
        %5396 = vmatpush1.msra.mxu0 0.0
        %5397 = vmatprep.subr.mxu0 0.0
        %5398 = vmatpush1.msra.mxu0 0.0
        %5399 = vmatprep.subr.mxu0 0.0
        %5400 = vmatpush1.msra.mxu0 0.0
        %5401 = vmatprep.subr.mxu0 0.0
        %5402 = vmatpush1.msra.mxu0 0.0
        %5403 = vmatprep.subr.mxu0 0.0
        %5404 = vmatpush1.msra.mxu0 0.0
        %5405 = vmatprep.subr.mxu0 0.0
        %5406 = vmatpush1.msra.mxu0 0.0
        %5407 = vmatprep.subr.mxu0 0.0
        %5408 = vmatpush1.msra.mxu0 0.0
        %5409 = vmatprep.subr.mxu0 0.0
        %5410 = vmatpush1.msra.mxu0 0.0
        %5411 = vmatprep.subr.mxu0 0.0
        %5412 = vmatpush1.msra.mxu0 0.0
        %5413 = vmatprep.subr.mxu0 0.0
        %5414 = vmatpush1.msra.mxu0 0.0
        %5415 = vmatprep.subr.mxu0 0.0
        %5416 = vmatpush1.msra.mxu0 0.0
        %5417 = vmatprep.subr.mxu0 0.0
        %5418 = vmatpush1.msra.mxu0 0.0
        %5419 = vmatprep.subr.mxu0 0.0
        %5420 = vmatpush1.msra.mxu0 0.0
        %5421 = vmatprep.subr.mxu0 0.0
        %5422 = vmatpush1.msra.mxu0 0.0
        %5423 = vmatprep.subr.mxu0 0.0
        %5424 = vmatpush1.msra.mxu0 0.0
        %5425 = vmatprep.subr.mxu0 0.0
        %5426 = vmatpush1.msra.mxu0 0.0
        %5427 = vmatprep.subr.mxu0 0.0
        %5428 = vmatpush1.msra.mxu0 0.0
        %5429 = vmatprep.subr.mxu0 0.0
        %5430 = vmatpush1.msra.mxu0 0.0
        %5431 = vmatprep.subr.mxu0 0.0
        %5432 = vmatpush1.msra.mxu0 0.0
        %5433 = vmatprep.subr.mxu0 0.0
        %5434 = vmatpush1.msra.mxu0 0.0
        %5435 = vmatprep.subr.mxu0 0.0
        %5436 = vmatpush1.msra.mxu0 0.0
        %5437 = vmatprep.subr.mxu0 0.0
        %5438 = vmatpush1.msra.mxu0 0.0
        %5439 = vmatprep.subr.mxu0 0.0
        %5440 = vmatpush1.msra.mxu0 0.0
        %5441 = vmatprep.subr.mxu0 0.0
        %5442 = vmatpush1.msra.mxu0 0.0
        %5443 = vmatprep.subr.mxu0 0.0
        %5444 = vmatpush1.msra.mxu0 0.0
        %5445 = vmatprep.mubr.f32.mxu0 0.0
        %5446 = vmatmul.mubr.f32.gmra.mrb[0].mxu0 %v5364
        %v5447 = vpop.f32.mrb[0].mxu0
        %v5448 = vadd.f32 0.0, %v5447
        %v5449 = vpop.f32.mrb[0].mxu0
        %v5450 = vadd.f32 0.0, %v5449
        %5451 = vmatprep.mubr.f32.mxu0 0.0
        %5452 = vmatmul.mubr.f32.gmra.mrb[0].mxu0 %v5367
        %v5453 = vpop.f32.mrb[0].mxu0
        %v5454 = vadd.f32 0.0, %v5453
        %v5455 = vpop.f32.mrb[0].mxu0
        %v5456 = vadd.f32 0.0, %v5455
        %5457 = vmatprep.mubr.f32.mxu0 0.0
        %5458 = vmatmul.mubr.f32.gmra.mrb[0].mxu0 %v5370
        %v5459 = vpop.f32.mrb[0].mxu0
        %v5460 = vadd.f32 0.0, %v5459
        %v5461 = vpop.f32.mrb[0].mxu0
        %v5462 = vadd.f32 0.0, %v5461
        %5463 = vmatprep.mubr.f32.mxu0 0.0
        %5464 = vmatmul.mubr.f32.gmra.mrb[0].mxu0 %v5373
        %v5465 = vpop.f32.mrb[0].mxu0
        %v5466 = vadd.f32 0.0, %v5465
        %v5467 = vpop.f32.mrb[0].mxu0
        %v5468 = vadd.f32 0.0, %v5467
        %5469 = vmatprep.mubr.f32.mxu0 0.0
        %5470 = vmatmul.mubr.f32.gmra.mrb[0].mxu0 %v5376
        %v5471 = vpop.f32.mrb[0].mxu0
        %v5472 = vadd.f32 0.0, %v5471
        %v5473 = vpop.f32.mrb[0].mxu0
        %v5474 = vadd.f32 0.0, %v5473
        %5475 = vmatprep.mubr.f32.mxu0 0.0
        %5476 = vmatmul.mubr.f32.gmra.mrb[0].mxu0 %v5379
        %v5477 = vpop.f32.mrb[0].mxu0
        %v5478 = vadd.f32 0.0, %v5477
        %v5479 = vpop.f32.mrb[0].mxu0
        %v5480 = vadd.f32 0.0, %v5479
        %5481 = vdwg.mxu0
        %v5482 = vld [vmem:[%s298] sm:$0xff]
        %v5483 = vld [vmem:[%s298 + $0x8] sm:$0xff]
        %v5484 = vld [vmem:[%s298 + $0x10] sm:$0xff]
        %v5485 = vld [vmem:[%s298 + $0x18] sm:$0xff]
        %v5486 = vld [vmem:[%s298 + $0x20] sm:$0xff]
        %v5487 = vld [vmem:[%s298 + $0x28] sm:$0xff]
        %v5488 = vld [vmem:[%s298 + $0x30] sm:$0xff]
        %v5489 = vld [vmem:[%s298 + $0x38] sm:$0xff]
        %v5490 = vld [vmem:[%s298 + $0x40] sm:$0xff]
        %v5491 = vld [vmem:[%s298 + $0x48] sm:$0xff]
        %v5492 = vld [vmem:[%s298 + $0x50] sm:$0xff]
        %v5493 = vld [vmem:[%s298 + $0x58] sm:$0xff]
        %v5494 = vadd.f32 %v5482, %v5448
        %v5495 = vadd.f32 %v5483, %v5450
        %v5496 = vadd.f32 %v5484, %v5454
        %v5497 = vadd.f32 %v5485, %v5456
        %v5498 = vadd.f32 %v5486, %v5460
        %v5499 = vadd.f32 %v5487, %v5462
        %v5500 = vadd.f32 %v5488, %v5466
        %v5501 = vadd.f32 %v5489, %v5468
        %v5502 = vadd.f32 %v5490, %v5472
        %v5503 = vadd.f32 %v5491, %v5474
        %v5504 = vadd.f32 %v5492, %v5478
        %v5505 = vadd.f32 %v5493, %v5480
        %5506 = vst [vmem:[%s298] sm:$0xff] %v5494
        %5507 = vst.msk [vmem:[%s298 + $0x8] sm:$0xff] %vm419, %v5495
        %5508 = vst [vmem:[%s298 + $0x10] sm:$0xff] %v5496
        %5509 = vst.msk [vmem:[%s298 + $0x18] sm:$0xff] %vm419, %v5497
        %5510 = vst [vmem:[%s298 + $0x20] sm:$0xff] %v5498
        %5511 = vst.msk [vmem:[%s298 + $0x28] sm:$0xff] %vm419, %v5499
        %5512 = vst [vmem:[%s298 + $0x30] sm:$0xff] %v5500
        %5513 = vst.msk [vmem:[%s298 + $0x38] sm:$0xff] %vm419, %v5501
        %5514 = vst [vmem:[%s298 + $0x40] sm:$0xff] %v5502
        %5515 = vst.msk [vmem:[%s298 + $0x48] sm:$0xff] %vm419, %v5503
        %5516 = vst [vmem:[%s298 + $0x50] sm:$0xff] %v5504
        %5517 = vst.msk [vmem:[%s298 + $0x58] sm:$0xff] %vm419, %v5505
        %v5518 = vld [vmem:[%s303 + $0x140] sm:$0xff]
        %v5519 = vld [vmem:[%s303 + $0x148] sm:$0xff]
        %v5520 = vld [vmem:[%s303 + $0x150] sm:$0xff]
        %v5521 = vld [vmem:[%s303 + $0x158] sm:$0xff]
        %v5522 = vld [vmem:[%s303 + $0x160] sm:$0xff]
        %v5523 = vld [vmem:[%s303 + $0x168] sm:$0xff]
        %v5524 = vld [vmem:[%s303 + $0x170] sm:$0xff]
        %v5525 = vld [vmem:[%s303 + $0x178] sm:$0xff]
        %v5526 = vld [vmem:[%s303 + $0x180] sm:$0xff]
        %v5527 = vld [vmem:[%s303 + $0x188] sm:$0xff]
        %v5528 = vld [vmem:[%s1 + $0xa0] sm:$0xff]
        %v5529 = vld [vmem:[%s1 + $0xa8] sm:$0xff]
        %v5530 = vld [vmem:[%s1 + $0xb0] sm:$0xff]
        %v5531 = vld [vmem:[%s1 + $0xb8] sm:$0xff]
        %v5532 = vld [vmem:[%s1 + $0xc0] sm:$0xff]
        %5534 = vset.pattern.permute.xlu0 0
        %5535 = vperm.xlu0 %5534, %v5528
        %v5536 = vpop.permute.xlu0 %5535
        %5539 = vset.pattern.permute.xlu0 0
        %5540 = vperm.xlu0 %5539, %v5529
        %v5541 = vpop.permute.xlu0 %5540
        %5544 = vset.pattern.permute.xlu0 0
        %5545 = vperm.xlu0 %5544, %v5530
        %v5546 = vpop.permute.xlu0 %5545
        %5549 = vset.pattern.permute.xlu0 0
        %5550 = vperm.xlu0 %5549, %v5531
        %v5551 = vpop.permute.xlu0 %5550
        %5554 = vset.pattern.permute.xlu0 0
        %5555 = vperm.xlu0 %5554, %v5532
        %v5556 = vpop.permute.xlu0 %5555
        %v5558 = vmul.f32 %v5518, %v5536
        %v5559 = vmul.f32 %v5519, %v5536
        %v5560 = vmul.f32 %v5520, %v5541
        %v5561 = vmul.f32 %v5521, %v5541
        %v5562 = vmul.f32 %v5522, %v5546
        %v5563 = vmul.f32 %v5523, %v5546
        %v5564 = vmul.f32 %v5524, %v5551
        %v5565 = vmul.f32 %v5525, %v5551
        %v5566 = vmul.f32 %v5526, %v5556
        %v5567 = vmul.f32 %v5527, %v5556
        %v5568 = vld [vmem:[%s2 + $0xa0] sm:$0xff]
        %v5569 = vld [vmem:[%s2 + $0xa8] sm:$0xff]
        %v5570 = vld [vmem:[%s2 + $0xb0] sm:$0xff]
        %v5571 = vld [vmem:[%s2 + $0xb8] sm:$0xff]
        %v5572 = vld [vmem:[%s2 + $0xc0] sm:$0xff]
        %5574 = vset.pattern.permute.xlu0 0
        %5575 = vperm.xlu0 %5574, %v5568
        %v5576 = vpop.permute.xlu0 %5575
        %5579 = vset.pattern.permute.xlu0 0
        %5580 = vperm.xlu0 %5579, %v5569
        %v5581 = vpop.permute.xlu0 %5580
        %5584 = vset.pattern.permute.xlu0 0
        %5585 = vperm.xlu0 %5584, %v5570
        %v5586 = vpop.permute.xlu0 %5585
        %5589 = vset.pattern.permute.xlu0 0
        %5590 = vperm.xlu0 %5589, %v5571
        %v5591 = vpop.permute.xlu0 %5590
        %5594 = vset.pattern.permute.xlu0 0
        %5595 = vperm.xlu0 %5594, %v5572
        %v5596 = vpop.permute.xlu0 %5595
        %v5598 = vadd.f32 %v5558, %v5576
        %v5599 = vadd.f32 %v5559, %v5576
        %v5600 = vadd.f32 %v5560, %v5581
        %v5601 = vadd.f32 %v5561, %v5581
        %v5602 = vadd.f32 %v5562, %v5586
        %v5603 = vadd.f32 %v5563, %v5586
        %v5604 = vadd.f32 %v5564, %v5591
        %v5605 = vadd.f32 %v5565, %v5591
        %v5606 = vadd.f32 %v5566, %v5596
        %v5607 = vadd.f32 %v5567, %v5596
        %v5608 = vmax.f32 %v5598, 0.0
        %v5609 = vmax.f32 %v5599, 0.0
        %v5610 = vmax.f32 %v5600, 0.0
        %v5611 = vmax.f32 %v5601, 0.0
        %v5612 = vmax.f32 %v5602, 0.0
        %v5613 = vmax.f32 %v5603, 0.0
        %v5614 = vmax.f32 %v5604, 0.0
        %v5615 = vmax.f32 %v5605, 0.0
        %v5616 = vmax.f32 %v5606, 0.0
        %v5617 = vmax.f32 %v5607, 0.0
        %5618 = vst [vmem:[#allocation2 + $0x8] sm:$0xff] %v5608
        %5619 = vst.msk [vmem:[#allocation2 + $0x10] sm:$0xff] %vm419, %v5609
        %5620 = vst [vmem:[#allocation2 + $0x20] sm:$0xff] %v5610
        %5621 = vst.msk [vmem:[#allocation2 + $0x28] sm:$0xff] %vm419, %v5611
        %5622 = vst [vmem:[#allocation2 + $0x38] sm:$0xff] %v5612
        %5623 = vst.msk [vmem:[#allocation2 + $0x40] sm:$0xff] %vm419, %v5613
        %5624 = vst [vmem:[#allocation2 + $0x50] sm:$0xff] %v5614
        %5625 = vst.msk [vmem:[#allocation2 + $0x58] sm:$0xff] %vm419, %v5615
        %5626 = vst [vmem:[#allocation2 + $0x68] sm:$0xff] %v5616
        %5627 = vst.msk [vmem:[#allocation2 + $0x70] sm:$0xff] %vm419, %v5617
        %v5628 = vld [vmem:[%s429 + $0xa0] sm:$0xff]
        %v5629 = vld [vmem:[%s429 + $0xa8] sm:$0xff]
        %v5630 = vld [vmem:[%s429 + $0xb0] sm:$0xff]
        %v5631 = vld [vmem:[%s429 + $0xb8] sm:$0xff]
        %v5632 = vld [vmem:[%s429 + $0xc0] sm:$0xff]
        %5634 = vset.pattern.permute.xlu0 0
        %5635 = vperm.xlu0 %5634, %v5628
        %v5636 = vpop.permute.xlu0 %5635
        %5639 = vset.pattern.permute.xlu0 0
        %5640 = vperm.xlu0 %5639, %v5629
        %v5641 = vpop.permute.xlu0 %5640
        %5644 = vset.pattern.permute.xlu0 0
        %5645 = vperm.xlu0 %5644, %v5630
        %v5646 = vpop.permute.xlu0 %5645
        %5649 = vset.pattern.permute.xlu0 0
        %5650 = vperm.xlu0 %5649, %v5631
        %v5651 = vpop.permute.xlu0 %5650
        %5654 = vset.pattern.permute.xlu0 0
        %5655 = vperm.xlu0 %5654, %v5632
        %v5656 = vpop.permute.xlu0 %5655
        %v5658 = vmul.f32 %v5608, %v5636
        %v5659 = vmul.f32 %v5609, %v5636
        %v5660 = vmul.f32 %v5610, %v5641
        %v5661 = vmul.f32 %v5611, %v5641
        %v5662 = vmul.f32 %v5612, %v5646
        %v5663 = vmul.f32 %v5613, %v5646
        %v5664 = vmul.f32 %v5614, %v5651
        %v5665 = vmul.f32 %v5615, %v5651
        %v5666 = vmul.f32 %v5616, %v5656
        %v5667 = vmul.f32 %v5617, %v5656
        %v5668 = vld [vmem:[#allocation2] sm:$0xff]
        %v5669 = vld [vmem:[#allocation2 + $0x8] sm:$0xff]
        %v5670 = vld [vmem:[#allocation2 + $0x10] sm:$0xff]
        %v5671 = vld [vmem:[#allocation2 + $0x18] sm:$0xff]
        %v5672 = vld [vmem:[#allocation2 + $0x20] sm:$0xff]
        %v5673 = vld [vmem:[#allocation2 + $0x28] sm:$0xff]
        %v5674 = vld [vmem:[#allocation2 + $0x30] sm:$0xff]
        %v5675 = vld [vmem:[#allocation2 + $0x38] sm:$0xff]
        %v5676 = vld [vmem:[#allocation2 + $0x40] sm:$0xff]
        %v5677 = vld [vmem:[#allocation2 + $0x48] sm:$0xff]
        %v5678 = vld [vmem:[#allocation2 + $0x50] sm:$0xff]
        %v5679 = vld [vmem:[#allocation2 + $0x58] sm:$0xff]
        %v5680 = vld [vmem:[#allocation2 + $0x60] sm:$0xff]
        %v5681 = vld [vmem:[#allocation2 + $0x68] sm:$0xff]
        %v5682 = vld [vmem:[#allocation2 + $0x70] sm:$0xff]
        %v5683 = vld [vmem:[%s485 + $0xa0] sm:$0xff]
        %v5684 = vld [vmem:[%s485 + $0xa8] sm:$0xff]
        %v5685 = vld [vmem:[%s485 + $0xb0] sm:$0xff]
        %v5686 = vld [vmem:[%s485 + $0xb8] sm:$0xff]
        %v5687 = vld [vmem:[%s485 + $0xc0] sm:$0xff]
        %5689 = vset.pattern.permute.xlu0 0
        %5690 = vperm.xlu0 %5689, %v5683
        %v5691 = vpop.permute.xlu0 %5690
        %5694 = vset.pattern.permute.xlu0 0
        %5695 = vperm.xlu0 %5694, %v5684
        %v5696 = vpop.permute.xlu0 %5695
        %5699 = vset.pattern.permute.xlu0 0
        %5700 = vperm.xlu0 %5699, %v5685
        %v5701 = vpop.permute.xlu0 %5700
        %5704 = vset.pattern.permute.xlu0 0
        %5705 = vperm.xlu0 %5704, %v5686
        %v5706 = vpop.permute.xlu0 %5705
        %5709 = vset.pattern.permute.xlu0 0
        %5710 = vperm.xlu0 %5709, %v5687
        %v5711 = vpop.permute.xlu0 %5710
        %v5713 = vmul.f32 %v5668, %v5691
        %v5714 = vmul.f32 %v5669, %v5691
        %v5715 = vmul.f32 %v5670, %v5691
        %v5716 = vmul.f32 %v5671, %v5696
        %v5717 = vmul.f32 %v5672, %v5696
        %v5718 = vmul.f32 %v5673, %v5696
        %v5719 = vmul.f32 %v5674, %v5701
        %v5720 = vmul.f32 %v5675, %v5701
        %v5721 = vmul.f32 %v5676, %v5701
        %v5722 = vmul.f32 %v5677, %v5706
        %v5723 = vmul.f32 %v5678, %v5706
        %v5724 = vmul.f32 %v5679, %v5706
        %v5725 = vmul.f32 %v5680, %v5711
        %v5726 = vmul.f32 %v5681, %v5711
        %v5727 = vmul.f32 %v5682, %v5711
        %5743 = vrot.lane.b32.xlu0 %v5713, 14
        %v5744 = vpop.permute.xlu0 %5743
        %5745 = vrot.lane.b32.xlu0 %v5714, 14
        %v5746 = vpop.permute.xlu0 %5745
        %5747 = vrot.lane.b32.xlu0 %v5715, 14
        %v5748 = vpop.permute.xlu0 %5747
        %5749 = vrot.lane.b32.xlu0 %v5716, 14
        %v5750 = vpop.permute.xlu0 %5749
        %5751 = vrot.lane.b32.xlu0 %v5717, 14
        %v5752 = vpop.permute.xlu0 %5751
        %5753 = vrot.lane.b32.xlu0 %v5718, 14
        %v5754 = vpop.permute.xlu0 %5753
        %5755 = vrot.lane.b32.xlu0 %v5719, 14
        %v5756 = vpop.permute.xlu0 %5755
        %5757 = vrot.lane.b32.xlu0 %v5720, 14
        %v5758 = vpop.permute.xlu0 %5757
        %5759 = vrot.lane.b32.xlu0 %v5721, 14
        %v5760 = vpop.permute.xlu0 %5759
        %5761 = vrot.lane.b32.xlu0 %v5722, 14
        %v5762 = vpop.permute.xlu0 %5761
        %5763 = vrot.lane.b32.xlu0 %v5723, 14
        %v5764 = vpop.permute.xlu0 %5763
        %5765 = vrot.lane.b32.xlu0 %v5724, 14
        %v5766 = vpop.permute.xlu0 %5765
        %5767 = vrot.lane.b32.xlu0 %v5725, 14
        %v5768 = vpop.permute.xlu0 %5767
        %5769 = vrot.lane.b32.xlu0 %v5726, 14
        %v5770 = vpop.permute.xlu0 %5769
        %5771 = vrot.lane.b32.xlu0 %v5727, 14
        %v5772 = vpop.permute.xlu0 %5771
        %v5773 = vsel %vm576, %v5744, %v5746
        %v5774 = vsel %vm576, %v5746, %v5748
        %v5775 = vsel %vm576, %v5750, %v5752
        %v5776 = vsel %vm576, %v5752, %v5754
        %v5777 = vsel %vm576, %v5756, %v5758
        %v5778 = vsel %vm576, %v5758, %v5760
        %v5779 = vsel %vm576, %v5762, %v5764
        %v5780 = vsel %vm576, %v5764, %v5766
        %v5781 = vsel %vm576, %v5768, %v5770
        %v5782 = vsel %vm576, %v5770, %v5772
        %v5793 = vadd.f32 %v5658, %v5773
        %v5794 = vadd.f32 %v5659, %v5774
        %v5795 = vadd.f32 %v5660, %v5775
        %v5796 = vadd.f32 %v5661, %v5776
        %v5797 = vadd.f32 %v5662, %v5777
        %v5798 = vadd.f32 %v5663, %v5778
        %v5799 = vadd.f32 %v5664, %v5779
        %v5800 = vadd.f32 %v5665, %v5780
        %v5801 = vadd.f32 %v5666, %v5781
        %v5802 = vadd.f32 %v5667, %v5782
        %v5803 = vld [vmem:[%s607 + $0xa0] sm:$0xff]
        %v5804 = vld [vmem:[%s607 + $0xa8] sm:$0xff]
        %v5805 = vld [vmem:[%s607 + $0xb0] sm:$0xff]
        %v5806 = vld [vmem:[%s607 + $0xb8] sm:$0xff]
        %v5807 = vld [vmem:[%s607 + $0xc0] sm:$0xff]
        %5809 = vset.pattern.permute.xlu0 0
        %5810 = vperm.xlu0 %5809, %v5803
        %v5811 = vpop.permute.xlu0 %5810
        %5814 = vset.pattern.permute.xlu0 0
        %5815 = vperm.xlu0 %5814, %v5804
        %v5816 = vpop.permute.xlu0 %5815
        %5819 = vset.pattern.permute.xlu0 0
        %5820 = vperm.xlu0 %5819, %v5805
        %v5821 = vpop.permute.xlu0 %5820
        %5824 = vset.pattern.permute.xlu0 0
        %5825 = vperm.xlu0 %5824, %v5806
        %v5826 = vpop.permute.xlu0 %5825
        %5829 = vset.pattern.permute.xlu0 0
        %5830 = vperm.xlu0 %5829, %v5807
        %v5831 = vpop.permute.xlu0 %5830
        %v5833 = vmul.f32 %v5669, %v5811
        %v5834 = vmul.f32 %v5670, %v5811
        %v5835 = vmul.f32 %v5672, %v5816
        %v5836 = vmul.f32 %v5673, %v5816
        %v5837 = vmul.f32 %v5675, %v5821
        %v5838 = vmul.f32 %v5676, %v5821
        %v5839 = vmul.f32 %v5678, %v5826
        %v5840 = vmul.f32 %v5679, %v5826
        %v5841 = vmul.f32 %v5681, %v5831
        %v5842 = vmul.f32 %v5682, %v5831
        %5853 = vrot.lane.b32.xlu0 %v5833, 114
        %v5854 = vpop.permute.xlu0 %5853
        %5855 = vrot.lane.b32.xlu0 %v5834, 114
        %v5856 = vpop.permute.xlu0 %5855
        %5857 = vrot.lane.b32.xlu0 %v5835, 114
        %v5858 = vpop.permute.xlu0 %5857
        %5859 = vrot.lane.b32.xlu0 %v5836, 114
        %v5860 = vpop.permute.xlu0 %5859
        %5861 = vrot.lane.b32.xlu0 %v5837, 114
        %v5862 = vpop.permute.xlu0 %5861
        %5863 = vrot.lane.b32.xlu0 %v5838, 114
        %v5864 = vpop.permute.xlu0 %5863
        %5865 = vrot.lane.b32.xlu0 %v5839, 114
        %v5866 = vpop.permute.xlu0 %5865
        %5867 = vrot.lane.b32.xlu0 %v5840, 114
        %v5868 = vpop.permute.xlu0 %5867
        %5869 = vrot.lane.b32.xlu0 %v5841, 114
        %v5870 = vpop.permute.xlu0 %5869
        %5871 = vrot.lane.b32.xlu0 %v5842, 114
        %v5872 = vpop.permute.xlu0 %5871
        %v5873 = vsel %vm678, %v5854, %v5856
        %v5874 = vsel %vm678, %v5858, %v5860
        %v5875 = vsel %vm678, %v5862, %v5864
        %v5876 = vsel %vm678, %v5866, %v5868
        %v5877 = vsel %vm678, %v5870, %v5872
        %v5888 = vadd.f32 %v5793, %v5873
        %v5889 = vadd.f32 %v5794, %v5856
        %v5890 = vadd.f32 %v5795, %v5874
        %v5891 = vadd.f32 %v5796, %v5860
        %v5892 = vadd.f32 %v5797, %v5875
        %v5893 = vadd.f32 %v5798, %v5864
        %v5894 = vadd.f32 %v5799, %v5876
        %v5895 = vadd.f32 %v5800, %v5868
        %v5896 = vadd.f32 %v5801, %v5877
        %v5897 = vadd.f32 %v5802, %v5872
        %v5898 = vld [vmem:[%s3 + $0xa0] sm:$0xff]
        %v5899 = vld [vmem:[%s3 + $0xa8] sm:$0xff]
        %v5900 = vld [vmem:[%s3 + $0xb0] sm:$0xff]
        %v5901 = vld [vmem:[%s3 + $0xb8] sm:$0xff]
        %v5902 = vld [vmem:[%s3 + $0xc0] sm:$0xff]
        %5904 = vset.pattern.permute.xlu0 0
        %5905 = vperm.xlu0 %5904, %v5898
        %v5906 = vpop.permute.xlu0 %5905
        %5909 = vset.pattern.permute.xlu0 0
        %5910 = vperm.xlu0 %5909, %v5899
        %v5911 = vpop.permute.xlu0 %5910
        %5914 = vset.pattern.permute.xlu0 0
        %5915 = vperm.xlu0 %5914, %v5900
        %v5916 = vpop.permute.xlu0 %5915
        %5919 = vset.pattern.permute.xlu0 0
        %5920 = vperm.xlu0 %5919, %v5901
        %v5921 = vpop.permute.xlu0 %5920
        %5924 = vset.pattern.permute.xlu0 0
        %5925 = vperm.xlu0 %5924, %v5902
        %v5926 = vpop.permute.xlu0 %5925
        %v5928 = vmul.f32 %v5668, %v5906
        %v5929 = vmul.f32 %v5669, %v5906
        %v5930 = vmul.f32 %v5670, %v5906
        %v5931 = vmul.f32 %v5671, %v5911
        %v5932 = vmul.f32 %v5672, %v5911
        %v5933 = vmul.f32 %v5673, %v5911
        %v5934 = vmul.f32 %v5674, %v5916
        %v5935 = vmul.f32 %v5675, %v5916
        %v5936 = vmul.f32 %v5676, %v5916
        %v5937 = vmul.f32 %v5677, %v5921
        %v5938 = vmul.f32 %v5678, %v5921
        %v5939 = vmul.f32 %v5679, %v5921
        %v5940 = vmul.f32 %v5680, %v5926
        %v5941 = vmul.f32 %v5681, %v5926
        %v5942 = vmul.f32 %v5682, %v5926
        %v5943 = vld [vmem:[%s749 + $0xa0] sm:$0xff]
        %v5944 = vld [vmem:[%s749 + $0xa8] sm:$0xff]
        %v5945 = vld [vmem:[%s749 + $0xb0] sm:$0xff]
        %v5946 = vld [vmem:[%s749 + $0xb8] sm:$0xff]
        %v5947 = vld [vmem:[%s749 + $0xc0] sm:$0xff]
        %5949 = vset.pattern.permute.xlu0 0
        %5950 = vperm.xlu0 %5949, %v5943
        %v5951 = vpop.permute.xlu0 %5950
        %5954 = vset.pattern.permute.xlu0 0
        %5955 = vperm.xlu0 %5954, %v5944
        %v5956 = vpop.permute.xlu0 %5955
        %5959 = vset.pattern.permute.xlu0 0
        %5960 = vperm.xlu0 %5959, %v5945
        %v5961 = vpop.permute.xlu0 %5960
        %5964 = vset.pattern.permute.xlu0 0
        %5965 = vperm.xlu0 %5964, %v5946
        %v5966 = vpop.permute.xlu0 %5965
        %5969 = vset.pattern.permute.xlu0 0
        %5970 = vperm.xlu0 %5969, %v5947
        %v5971 = vpop.permute.xlu0 %5970
        %v5973 = vmul.f32 %v5668, %v5951
        %v5974 = vmul.f32 %v5669, %v5951
        %v5975 = vmul.f32 %v5670, %v5951
        %v5976 = vmul.f32 %v5671, %v5956
        %v5977 = vmul.f32 %v5672, %v5956
        %v5978 = vmul.f32 %v5673, %v5956
        %v5979 = vmul.f32 %v5674, %v5961
        %v5980 = vmul.f32 %v5675, %v5961
        %v5981 = vmul.f32 %v5676, %v5961
        %v5982 = vmul.f32 %v5677, %v5966
        %v5983 = vmul.f32 %v5678, %v5966
        %v5984 = vmul.f32 %v5679, %v5966
        %v5985 = vmul.f32 %v5680, %v5971
        %v5986 = vmul.f32 %v5681, %v5971
        %v5987 = vmul.f32 %v5682, %v5971
        %6003 = vrot.lane.b32.xlu0 %v5973, 114
        %v6004 = vpop.permute.xlu0 %6003
        %6005 = vrot.lane.b32.xlu0 %v5974, 114
        %v6006 = vpop.permute.xlu0 %6005
        %6007 = vrot.lane.b32.xlu0 %v5975, 114
        %v6008 = vpop.permute.xlu0 %6007
        %6009 = vrot.lane.b32.xlu0 %v5976, 114
        %v6010 = vpop.permute.xlu0 %6009
        %6011 = vrot.lane.b32.xlu0 %v5977, 114
        %v6012 = vpop.permute.xlu0 %6011
        %6013 = vrot.lane.b32.xlu0 %v5978, 114
        %v6014 = vpop.permute.xlu0 %6013
        %6015 = vrot.lane.b32.xlu0 %v5979, 114
        %v6016 = vpop.permute.xlu0 %6015
        %6017 = vrot.lane.b32.xlu0 %v5980, 114
        %v6018 = vpop.permute.xlu0 %6017
        %6019 = vrot.lane.b32.xlu0 %v5981, 114
        %v6020 = vpop.permute.xlu0 %6019
        %6021 = vrot.lane.b32.xlu0 %v5982, 114
        %v6022 = vpop.permute.xlu0 %6021
        %6023 = vrot.lane.b32.xlu0 %v5983, 114
        %v6024 = vpop.permute.xlu0 %6023
        %6025 = vrot.lane.b32.xlu0 %v5984, 114
        %v6026 = vpop.permute.xlu0 %6025
        %6027 = vrot.lane.b32.xlu0 %v5985, 114
        %v6028 = vpop.permute.xlu0 %6027
        %6029 = vrot.lane.b32.xlu0 %v5986, 114
        %v6030 = vpop.permute.xlu0 %6029
        %6031 = vrot.lane.b32.xlu0 %v5987, 114
        %v6032 = vpop.permute.xlu0 %6031
        %v6033 = vsel %vm678, %v6004, %v6006
        %v6034 = vsel %vm678, %v6006, %v6008
        %v6035 = vsel %vm678, %v6010, %v6012
        %v6036 = vsel %vm678, %v6012, %v6014
        %v6037 = vsel %vm678, %v6016, %v6018
        %v6038 = vsel %vm678, %v6018, %v6020
        %v6039 = vsel %vm678, %v6022, %v6024
        %v6040 = vsel %vm678, %v6024, %v6026
        %v6041 = vsel %vm678, %v6028, %v6030
        %v6042 = vsel %vm678, %v6030, %v6032
        %v6058 = vadd.f32 %v5928, %v6033
        %v6059 = vadd.f32 %v5929, %v6034
        %v6060 = vadd.f32 %v5930, %v6008
        %v6061 = vadd.f32 %v5931, %v6035
        %v6062 = vadd.f32 %v5932, %v6036
        %v6063 = vadd.f32 %v5933, %v6014
        %v6064 = vadd.f32 %v5934, %v6037
        %v6065 = vadd.f32 %v5935, %v6038
        %v6066 = vadd.f32 %v5936, %v6020
        %v6067 = vadd.f32 %v5937, %v6039
        %v6068 = vadd.f32 %v5938, %v6040
        %v6069 = vadd.f32 %v5939, %v6026
        %v6070 = vadd.f32 %v5940, %v6041
        %v6071 = vadd.f32 %v5941, %v6042
        %v6072 = vadd.f32 %v5942, %v6032
        %v6073 = vld [vmem:[%s880 + $0xa0] sm:$0xff]
        %v6074 = vld [vmem:[%s880 + $0xa8] sm:$0xff]
        %v6075 = vld [vmem:[%s880 + $0xb0] sm:$0xff]
        %v6076 = vld [vmem:[%s880 + $0xb8] sm:$0xff]
        %v6077 = vld [vmem:[%s880 + $0xc0] sm:$0xff]
        %6079 = vset.pattern.permute.xlu0 0
        %6080 = vperm.xlu0 %6079, %v6073
        %v6081 = vpop.permute.xlu0 %6080
        %6084 = vset.pattern.permute.xlu0 0
        %6085 = vperm.xlu0 %6084, %v6074
        %v6086 = vpop.permute.xlu0 %6085
        %6089 = vset.pattern.permute.xlu0 0
        %6090 = vperm.xlu0 %6089, %v6075
        %v6091 = vpop.permute.xlu0 %6090
        %6094 = vset.pattern.permute.xlu0 0
        %6095 = vperm.xlu0 %6094, %v6076
        %v6096 = vpop.permute.xlu0 %6095
        %6099 = vset.pattern.permute.xlu0 0
        %6100 = vperm.xlu0 %6099, %v6077
        %v6101 = vpop.permute.xlu0 %6100
        %v6103 = vmul.f32 %v5669, %v6081
        %v6104 = vmul.f32 %v5670, %v6081
        %v6105 = vmul.f32 %v5672, %v6086
        %v6106 = vmul.f32 %v5673, %v6086
        %v6107 = vmul.f32 %v5675, %v6091
        %v6108 = vmul.f32 %v5676, %v6091
        %v6109 = vmul.f32 %v5678, %v6096
        %v6110 = vmul.f32 %v5679, %v6096
        %v6111 = vmul.f32 %v5681, %v6101
        %v6112 = vmul.f32 %v5682, %v6101
        %6123 = vrot.lane.b32.xlu0 %v6103, 100
        %v6124 = vpop.permute.xlu0 %6123
        %6125 = vrot.lane.b32.xlu0 %v6104, 100
        %v6126 = vpop.permute.xlu0 %6125
        %6127 = vrot.lane.b32.xlu0 %v6105, 100
        %v6128 = vpop.permute.xlu0 %6127
        %6129 = vrot.lane.b32.xlu0 %v6106, 100
        %v6130 = vpop.permute.xlu0 %6129
        %6131 = vrot.lane.b32.xlu0 %v6107, 100
        %v6132 = vpop.permute.xlu0 %6131
        %6133 = vrot.lane.b32.xlu0 %v6108, 100
        %v6134 = vpop.permute.xlu0 %6133
        %6135 = vrot.lane.b32.xlu0 %v6109, 100
        %v6136 = vpop.permute.xlu0 %6135
        %6137 = vrot.lane.b32.xlu0 %v6110, 100
        %v6138 = vpop.permute.xlu0 %6137
        %6139 = vrot.lane.b32.xlu0 %v6111, 100
        %v6140 = vpop.permute.xlu0 %6139
        %6141 = vrot.lane.b32.xlu0 %v6112, 100
        %v6142 = vpop.permute.xlu0 %6141
        %v6143 = vsel %vm951, %v6124, %v6126
        %v6144 = vsel %vm951, %v6128, %v6130
        %v6145 = vsel %vm951, %v6132, %v6134
        %v6146 = vsel %vm951, %v6136, %v6138
        %v6147 = vsel %vm951, %v6140, %v6142
        %v6163 = vadd.f32 %v6058, %v6124
        %v6164 = vadd.f32 %v6059, %v6143
        %v6165 = vadd.f32 %v6060, %v6126
        %v6166 = vadd.f32 %v6061, %v6128
        %v6167 = vadd.f32 %v6062, %v6144
        %v6168 = vadd.f32 %v6063, %v6130
        %v6169 = vadd.f32 %v6064, %v6132
        %v6170 = vadd.f32 %v6065, %v6145
        %v6171 = vadd.f32 %v6066, %v6134
        %v6172 = vadd.f32 %v6067, %v6136
        %v6173 = vadd.f32 %v6068, %v6146
        %v6174 = vadd.f32 %v6069, %v6138
        %v6175 = vadd.f32 %v6070, %v6140
        %v6176 = vadd.f32 %v6071, %v6147
        %v6177 = vadd.f32 %v6072, %v6142
        %6193 = vrot.lane.b32.xlu0 %v6163, 15
        %v6194 = vpop.permute.xlu0 %6193
        %6195 = vrot.lane.b32.xlu0 %v6164, 15
        %v6196 = vpop.permute.xlu0 %6195
        %6197 = vrot.lane.b32.xlu0 %v6165, 15
        %v6198 = vpop.permute.xlu0 %6197
        %6199 = vrot.lane.b32.xlu0 %v6166, 15
        %v6200 = vpop.permute.xlu0 %6199
        %6201 = vrot.lane.b32.xlu0 %v6167, 15
        %v6202 = vpop.permute.xlu0 %6201
        %6203 = vrot.lane.b32.xlu0 %v6168, 15
        %v6204 = vpop.permute.xlu0 %6203
        %6205 = vrot.lane.b32.xlu0 %v6169, 15
        %v6206 = vpop.permute.xlu0 %6205
        %6207 = vrot.lane.b32.xlu0 %v6170, 15
        %v6208 = vpop.permute.xlu0 %6207
        %6209 = vrot.lane.b32.xlu0 %v6171, 15
        %v6210 = vpop.permute.xlu0 %6209
        %6211 = vrot.lane.b32.xlu0 %v6172, 15
        %v6212 = vpop.permute.xlu0 %6211
        %6213 = vrot.lane.b32.xlu0 %v6173, 15
        %v6214 = vpop.permute.xlu0 %6213
        %6215 = vrot.lane.b32.xlu0 %v6174, 15
        %v6216 = vpop.permute.xlu0 %6215
        %6217 = vrot.lane.b32.xlu0 %v6175, 15
        %v6218 = vpop.permute.xlu0 %6217
        %6219 = vrot.lane.b32.xlu0 %v6176, 15
        %v6220 = vpop.permute.xlu0 %6219
        %6221 = vrot.lane.b32.xlu0 %v6177, 15
        %v6222 = vpop.permute.xlu0 %6221
        %v6223 = vsel %vm1043, %v6194, %v6196
        %v6224 = vsel %vm1043, %v6196, %v6198
        %v6225 = vsel %vm1043, %v6200, %v6202
        %v6226 = vsel %vm1043, %v6202, %v6204
        %v6227 = vsel %vm1043, %v6206, %v6208
        %v6228 = vsel %vm1043, %v6208, %v6210
        %v6229 = vsel %vm1043, %v6212, %v6214
        %v6230 = vsel %vm1043, %v6214, %v6216
        %v6231 = vsel %vm1043, %v6218, %v6220
        %v6232 = vsel %vm1043, %v6220, %v6222
        %v6243 = vmul.f32 %v991, %v6223
        %v6244 = vmul.f32 %v995, %v6224
        %v6245 = vmul.f32 %v991, %v6225
        %v6246 = vmul.f32 %v995, %v6226
        %v6247 = vmul.f32 %v991, %v6227
        %v6248 = vmul.f32 %v995, %v6228
        %v6249 = vmul.f32 %v991, %v6229
        %v6250 = vmul.f32 %v995, %v6230
        %v6251 = vmul.f32 %v991, %v6231
        %v6252 = vmul.f32 %v995, %v6232
        %v6253 = vadd.f32 %v5888, %v6243
        %v6254 = vadd.f32 %v5889, %v6244
        %v6255 = vadd.f32 %v5890, %v6245
        %v6256 = vadd.f32 %v5891, %v6246
        %v6257 = vadd.f32 %v5892, %v6247
        %v6258 = vadd.f32 %v5893, %v6248
        %v6259 = vadd.f32 %v5894, %v6249
        %v6260 = vadd.f32 %v5895, %v6250
        %v6261 = vadd.f32 %v5896, %v6251
        %v6262 = vadd.f32 %v5897, %v6252
        %v6263 = vld [vmem:[%s1084 + $0xa0] sm:$0xff]
        %v6264 = vld [vmem:[%s1084 + $0xa8] sm:$0xff]
        %v6265 = vld [vmem:[%s1084 + $0xb0] sm:$0xff]
        %v6266 = vld [vmem:[%s1084 + $0xb8] sm:$0xff]
        %v6267 = vld [vmem:[%s1084 + $0xc0] sm:$0xff]
        %6269 = vset.pattern.permute.xlu0 0
        %6270 = vperm.xlu0 %6269, %v6263
        %v6271 = vpop.permute.xlu0 %6270
        %6274 = vset.pattern.permute.xlu0 0
        %6275 = vperm.xlu0 %6274, %v6264
        %v6276 = vpop.permute.xlu0 %6275
        %6279 = vset.pattern.permute.xlu0 0
        %6280 = vperm.xlu0 %6279, %v6265
        %v6281 = vpop.permute.xlu0 %6280
        %6284 = vset.pattern.permute.xlu0 0
        %6285 = vperm.xlu0 %6284, %v6266
        %v6286 = vpop.permute.xlu0 %6285
        %6289 = vset.pattern.permute.xlu0 0
        %6290 = vperm.xlu0 %6289, %v6267
        %v6291 = vpop.permute.xlu0 %6290
        %v6293 = vmul.f32 %v5668, %v6271
        %v6294 = vmul.f32 %v5669, %v6271
        %v6295 = vmul.f32 %v5670, %v6271
        %v6296 = vmul.f32 %v5671, %v6276
        %v6297 = vmul.f32 %v5672, %v6276
        %v6298 = vmul.f32 %v5673, %v6276
        %v6299 = vmul.f32 %v5674, %v6281
        %v6300 = vmul.f32 %v5675, %v6281
        %v6301 = vmul.f32 %v5676, %v6281
        %v6302 = vmul.f32 %v5677, %v6286
        %v6303 = vmul.f32 %v5678, %v6286
        %v6304 = vmul.f32 %v5679, %v6286
        %v6305 = vmul.f32 %v5680, %v6291
        %v6306 = vmul.f32 %v5681, %v6291
        %v6307 = vmul.f32 %v5682, %v6291
        %v6308 = vld [vmem:[%s1130 + $0xa0] sm:$0xff]
        %v6309 = vld [vmem:[%s1130 + $0xa8] sm:$0xff]
        %v6310 = vld [vmem:[%s1130 + $0xb0] sm:$0xff]
        %v6311 = vld [vmem:[%s1130 + $0xb8] sm:$0xff]
        %v6312 = vld [vmem:[%s1130 + $0xc0] sm:$0xff]
        %6314 = vset.pattern.permute.xlu0 0
        %6315 = vperm.xlu0 %6314, %v6308
        %v6316 = vpop.permute.xlu0 %6315
        %6319 = vset.pattern.permute.xlu0 0
        %6320 = vperm.xlu0 %6319, %v6309
        %v6321 = vpop.permute.xlu0 %6320
        %6324 = vset.pattern.permute.xlu0 0
        %6325 = vperm.xlu0 %6324, %v6310
        %v6326 = vpop.permute.xlu0 %6325
        %6329 = vset.pattern.permute.xlu0 0
        %6330 = vperm.xlu0 %6329, %v6311
        %v6331 = vpop.permute.xlu0 %6330
        %6334 = vset.pattern.permute.xlu0 0
        %6335 = vperm.xlu0 %6334, %v6312
        %v6336 = vpop.permute.xlu0 %6335
        %v6338 = vmul.f32 %v5669, %v6316
        %v6339 = vmul.f32 %v5670, %v6316
        %v6340 = vmul.f32 %v5672, %v6321
        %v6341 = vmul.f32 %v5673, %v6321
        %v6342 = vmul.f32 %v5675, %v6326
        %v6343 = vmul.f32 %v5676, %v6326
        %v6344 = vmul.f32 %v5678, %v6331
        %v6345 = vmul.f32 %v5679, %v6331
        %v6346 = vmul.f32 %v5681, %v6336
        %v6347 = vmul.f32 %v5682, %v6336
        %6358 = vrot.lane.b32.xlu0 %v6338, 114
        %v6359 = vpop.permute.xlu0 %6358
        %6360 = vrot.lane.b32.xlu0 %v6339, 114
        %v6361 = vpop.permute.xlu0 %6360
        %6362 = vrot.lane.b32.xlu0 %v6340, 114
        %v6363 = vpop.permute.xlu0 %6362
        %6364 = vrot.lane.b32.xlu0 %v6341, 114
        %v6365 = vpop.permute.xlu0 %6364
        %6366 = vrot.lane.b32.xlu0 %v6342, 114
        %v6367 = vpop.permute.xlu0 %6366
        %6368 = vrot.lane.b32.xlu0 %v6343, 114
        %v6369 = vpop.permute.xlu0 %6368
        %6370 = vrot.lane.b32.xlu0 %v6344, 114
        %v6371 = vpop.permute.xlu0 %6370
        %6372 = vrot.lane.b32.xlu0 %v6345, 114
        %v6373 = vpop.permute.xlu0 %6372
        %6374 = vrot.lane.b32.xlu0 %v6346, 114
        %v6375 = vpop.permute.xlu0 %6374
        %6376 = vrot.lane.b32.xlu0 %v6347, 114
        %v6377 = vpop.permute.xlu0 %6376
        %v6378 = vsel %vm678, %v6359, %v6361
        %v6379 = vsel %vm678, %v6363, %v6365
        %v6380 = vsel %vm678, %v6367, %v6369
        %v6381 = vsel %vm678, %v6371, %v6373
        %v6382 = vsel %vm678, %v6375, %v6377
        %v6398 = vadd.f32 %v6293, %v6359
        %v6399 = vadd.f32 %v6294, %v6378
        %v6400 = vadd.f32 %v6295, %v6361
        %v6401 = vadd.f32 %v6296, %v6363
        %v6402 = vadd.f32 %v6297, %v6379
        %v6403 = vadd.f32 %v6298, %v6365
        %v6404 = vadd.f32 %v6299, %v6367
        %v6405 = vadd.f32 %v6300, %v6380
        %v6406 = vadd.f32 %v6301, %v6369
        %v6407 = vadd.f32 %v6302, %v6371
        %v6408 = vadd.f32 %v6303, %v6381
        %v6409 = vadd.f32 %v6304, %v6373
        %v6410 = vadd.f32 %v6305, %v6375
        %v6411 = vadd.f32 %v6306, %v6382
        %v6412 = vadd.f32 %v6307, %v6377
        %v6413 = vld [vmem:[%s1236 + $0xa0] sm:$0xff]
        %v6414 = vld [vmem:[%s1236 + $0xa8] sm:$0xff]
        %v6415 = vld [vmem:[%s1236 + $0xb0] sm:$0xff]
        %v6416 = vld [vmem:[%s1236 + $0xb8] sm:$0xff]
        %v6417 = vld [vmem:[%s1236 + $0xc0] sm:$0xff]
        %6419 = vset.pattern.permute.xlu0 0
        %6420 = vperm.xlu0 %6419, %v6413
        %v6421 = vpop.permute.xlu0 %6420
        %6424 = vset.pattern.permute.xlu0 0
        %6425 = vperm.xlu0 %6424, %v6414
        %v6426 = vpop.permute.xlu0 %6425
        %6429 = vset.pattern.permute.xlu0 0
        %6430 = vperm.xlu0 %6429, %v6415
        %v6431 = vpop.permute.xlu0 %6430
        %6434 = vset.pattern.permute.xlu0 0
        %6435 = vperm.xlu0 %6434, %v6416
        %v6436 = vpop.permute.xlu0 %6435
        %6439 = vset.pattern.permute.xlu0 0
        %6440 = vperm.xlu0 %6439, %v6417
        %v6441 = vpop.permute.xlu0 %6440
        %v6443 = vmul.f32 %v5669, %v6421
        %v6444 = vmul.f32 %v5670, %v6421
        %v6445 = vmul.f32 %v5672, %v6426
        %v6446 = vmul.f32 %v5673, %v6426
        %v6447 = vmul.f32 %v5675, %v6431
        %v6448 = vmul.f32 %v5676, %v6431
        %v6449 = vmul.f32 %v5678, %v6436
        %v6450 = vmul.f32 %v5679, %v6436
        %v6451 = vmul.f32 %v5681, %v6441
        %v6452 = vmul.f32 %v5682, %v6441
        %6463 = vrot.lane.b32.xlu0 %v6443, 100
        %v6464 = vpop.permute.xlu0 %6463
        %6465 = vrot.lane.b32.xlu0 %v6444, 100
        %v6466 = vpop.permute.xlu0 %6465
        %6467 = vrot.lane.b32.xlu0 %v6445, 100
        %v6468 = vpop.permute.xlu0 %6467
        %6469 = vrot.lane.b32.xlu0 %v6446, 100
        %v6470 = vpop.permute.xlu0 %6469
        %6471 = vrot.lane.b32.xlu0 %v6447, 100
        %v6472 = vpop.permute.xlu0 %6471
        %6473 = vrot.lane.b32.xlu0 %v6448, 100
        %v6474 = vpop.permute.xlu0 %6473
        %6475 = vrot.lane.b32.xlu0 %v6449, 100
        %v6476 = vpop.permute.xlu0 %6475
        %6477 = vrot.lane.b32.xlu0 %v6450, 100
        %v6478 = vpop.permute.xlu0 %6477
        %6479 = vrot.lane.b32.xlu0 %v6451, 100
        %v6480 = vpop.permute.xlu0 %6479
        %6481 = vrot.lane.b32.xlu0 %v6452, 100
        %v6482 = vpop.permute.xlu0 %6481
        %v6483 = vsel %vm951, %v6464, %v6466
        %v6484 = vsel %vm951, %v6468, %v6470
        %v6485 = vsel %vm951, %v6472, %v6474
        %v6486 = vsel %vm951, %v6476, %v6478
        %v6487 = vsel %vm951, %v6480, %v6482
        %v6503 = vadd.f32 %v6398, %v6464
        %v6504 = vadd.f32 %v6399, %v6483
        %v6505 = vadd.f32 %v6400, %v6466
        %v6506 = vadd.f32 %v6401, %v6468
        %v6507 = vadd.f32 %v6402, %v6484
        %v6508 = vadd.f32 %v6403, %v6470
        %v6509 = vadd.f32 %v6404, %v6472
        %v6510 = vadd.f32 %v6405, %v6485
        %v6511 = vadd.f32 %v6406, %v6474
        %v6512 = vadd.f32 %v6407, %v6476
        %v6513 = vadd.f32 %v6408, %v6486
        %v6514 = vadd.f32 %v6409, %v6478
        %v6515 = vadd.f32 %v6410, %v6480
        %v6516 = vadd.f32 %v6411, %v6487
        %v6517 = vadd.f32 %v6412, %v6482
        %6533 = vrot.lane.b32.xlu0 %v6503, 13
        %v6534 = vpop.permute.xlu0 %6533
        %6535 = vrot.lane.b32.xlu0 %v6504, 13
        %v6536 = vpop.permute.xlu0 %6535
        %6537 = vrot.lane.b32.xlu0 %v6505, 13
        %v6538 = vpop.permute.xlu0 %6537
        %6539 = vrot.lane.b32.xlu0 %v6506, 13
        %v6540 = vpop.permute.xlu0 %6539
        %6541 = vrot.lane.b32.xlu0 %v6507, 13
        %v6542 = vpop.permute.xlu0 %6541
        %6543 = vrot.lane.b32.xlu0 %v6508, 13
        %v6544 = vpop.permute.xlu0 %6543
        %6545 = vrot.lane.b32.xlu0 %v6509, 13
        %v6546 = vpop.permute.xlu0 %6545
        %6547 = vrot.lane.b32.xlu0 %v6510, 13
        %v6548 = vpop.permute.xlu0 %6547
        %6549 = vrot.lane.b32.xlu0 %v6511, 13
        %v6550 = vpop.permute.xlu0 %6549
        %6551 = vrot.lane.b32.xlu0 %v6512, 13
        %v6552 = vpop.permute.xlu0 %6551
        %6553 = vrot.lane.b32.xlu0 %v6513, 13
        %v6554 = vpop.permute.xlu0 %6553
        %6555 = vrot.lane.b32.xlu0 %v6514, 13
        %v6556 = vpop.permute.xlu0 %6555
        %6557 = vrot.lane.b32.xlu0 %v6515, 13
        %v6558 = vpop.permute.xlu0 %6557
        %6559 = vrot.lane.b32.xlu0 %v6516, 13
        %v6560 = vpop.permute.xlu0 %6559
        %6561 = vrot.lane.b32.xlu0 %v6517, 13
        %v6562 = vpop.permute.xlu0 %6561
        %v6563 = vsel %vm1398, %v6534, %v6536
        %v6564 = vsel %vm1398, %v6536, %v6538
        %v6565 = vsel %vm1398, %v6540, %v6542
        %v6566 = vsel %vm1398, %v6542, %v6544
        %v6567 = vsel %vm1398, %v6546, %v6548
        %v6568 = vsel %vm1398, %v6548, %v6550
        %v6569 = vsel %vm1398, %v6552, %v6554
        %v6570 = vsel %vm1398, %v6554, %v6556
        %v6571 = vsel %vm1398, %v6558, %v6560
        %v6572 = vsel %vm1398, %v6560, %v6562
        %v6583 = vmul.f32 %v1346, %v6563
        %v6584 = vmul.f32 %v1350, %v6564
        %v6585 = vmul.f32 %v1346, %v6565
        %v6586 = vmul.f32 %v1350, %v6566
        %v6587 = vmul.f32 %v1346, %v6567
        %v6588 = vmul.f32 %v1350, %v6568
        %v6589 = vmul.f32 %v1346, %v6569
        %v6590 = vmul.f32 %v1350, %v6570
        %v6591 = vmul.f32 %v1346, %v6571
        %v6592 = vmul.f32 %v1350, %v6572
        %v6593 = vadd.f32 %v6253, %v6583
        %v6594 = vadd.f32 %v6254, %v6584
        %v6595 = vadd.f32 %v6255, %v6585
        %v6596 = vadd.f32 %v6256, %v6586
        %v6597 = vadd.f32 %v6257, %v6587
        %v6598 = vadd.f32 %v6258, %v6588
        %v6599 = vadd.f32 %v6259, %v6589
        %v6600 = vadd.f32 %v6260, %v6590
        %v6601 = vadd.f32 %v6261, %v6591
        %v6602 = vadd.f32 %v6262, %v6592
        %v6603 = vld [vmem:[%s4 + $0xa0] sm:$0xff]
        %v6604 = vld [vmem:[%s4 + $0xa8] sm:$0xff]
        %v6605 = vld [vmem:[%s4 + $0xb0] sm:$0xff]
        %v6606 = vld [vmem:[%s4 + $0xb8] sm:$0xff]
        %v6607 = vld [vmem:[%s4 + $0xc0] sm:$0xff]
        %6609 = vset.pattern.permute.xlu0 0
        %6610 = vperm.xlu0 %6609, %v6603
        %v6611 = vpop.permute.xlu0 %6610
        %6614 = vset.pattern.permute.xlu0 0
        %6615 = vperm.xlu0 %6614, %v6604
        %v6616 = vpop.permute.xlu0 %6615
        %6619 = vset.pattern.permute.xlu0 0
        %6620 = vperm.xlu0 %6619, %v6605
        %v6621 = vpop.permute.xlu0 %6620
        %6624 = vset.pattern.permute.xlu0 0
        %6625 = vperm.xlu0 %6624, %v6606
        %v6626 = vpop.permute.xlu0 %6625
        %6629 = vset.pattern.permute.xlu0 0
        %6630 = vperm.xlu0 %6629, %v6607
        %v6631 = vpop.permute.xlu0 %6630
        %v6633 = vadd.f32 %v6593, %v6611
        %v6634 = vadd.f32 %v6594, %v6611
        %v6635 = vadd.f32 %v6595, %v6616
        %v6636 = vadd.f32 %v6596, %v6616
        %v6637 = vadd.f32 %v6597, %v6621
        %v6638 = vadd.f32 %v6598, %v6621
        %v6639 = vadd.f32 %v6599, %v6626
        %v6640 = vadd.f32 %v6600, %v6626
        %v6641 = vadd.f32 %v6601, %v6631
        %v6642 = vadd.f32 %v6602, %v6631
        %v6643 = vmax.f32 %v6633, 0.0
        %v6644 = vmax.f32 %v6634, 0.0
        %v6645 = vmax.f32 %v6635, 0.0
        %v6646 = vmax.f32 %v6636, 0.0
        %v6647 = vmax.f32 %v6637, 0.0
        %v6648 = vmax.f32 %v6638, 0.0
        %v6649 = vmax.f32 %v6639, 0.0
        %v6650 = vmax.f32 %v6640, 0.0
        %v6651 = vmax.f32 %v6641, 0.0
        %v6652 = vmax.f32 %v6642, 0.0
        %s6653 = scalar_lea.vmem %s5, 192
        %v6654 = vld [vmem:[%s6653] sm:$0xff]
        %v6655 = vld [vmem:[%s6653 + $0x8] sm:$0xff]
        %v6656 = vld [vmem:[%s6653 + $0x10] sm:$0xff]
        %v6657 = vld [vmem:[%s6653 + $0x18] sm:$0xff]
        %v6658 = vld [vmem:[%s6653 + $0x20] sm:$0xff]
        %v6659 = vld [vmem:[%s6653 + $0x28] sm:$0xff]
        %v6661 = vsel %vm1495, %v6654, 0
        %v6664 = vsel %vm1495, %v6655, 0
        %v6667 = vsel %vm1495, %v6656, 0
        %v6670 = vsel %vm1495, %v6657, 0
        %v6673 = vsel %vm1495, %v6658, 0
        %v6676 = vsel %vm1495, %v6659, 0
        %6678 = vmatprep.subr.mxu0 %v6644
        %6679 = vmatpush1.msra.mxu0 %v6643
        %6680 = vmatprep.subr.mxu0 %v6646
        %6681 = vmatpush1.msra.mxu0 %v6645
        %6682 = vmatprep.subr.mxu0 %v6648
        %6683 = vmatpush1.msra.mxu0 %v6647
        %6684 = vmatprep.subr.mxu0 %v6650
        %6685 = vmatpush1.msra.mxu0 %v6649
        %6686 = vmatprep.subr.mxu0 %v6652
        %6687 = vmatpush1.msra.mxu0 %v6651
        %6688 = vmatprep.subr.mxu0 0.0
        %6689 = vmatpush1.msra.mxu0 0.0
        %6690 = vmatprep.subr.mxu0 0.0
        %6691 = vmatpush1.msra.mxu0 0.0
        %6692 = vmatprep.subr.mxu0 0.0
        %6693 = vmatpush1.msra.mxu0 0.0
        %6694 = vmatprep.subr.mxu0 0.0
        %6695 = vmatpush1.msra.mxu0 0.0
        %6696 = vmatprep.subr.mxu0 0.0
        %6697 = vmatpush1.msra.mxu0 0.0
        %6698 = vmatprep.subr.mxu0 0.0
        %6699 = vmatpush1.msra.mxu0 0.0
        %6700 = vmatprep.subr.mxu0 0.0
        %6701 = vmatpush1.msra.mxu0 0.0
        %6702 = vmatprep.subr.mxu0 0.0
        %6703 = vmatpush1.msra.mxu0 0.0
        %6704 = vmatprep.subr.mxu0 0.0
        %6705 = vmatpush1.msra.mxu0 0.0
        %6706 = vmatprep.subr.mxu0 0.0
        %6707 = vmatpush1.msra.mxu0 0.0
        %6708 = vmatprep.subr.mxu0 0.0
        %6709 = vmatpush1.msra.mxu0 0.0
        %6710 = vmatprep.subr.mxu0 0.0
        %6711 = vmatpush1.msra.mxu0 0.0
        %6712 = vmatprep.subr.mxu0 0.0
        %6713 = vmatpush1.msra.mxu0 0.0
        %6714 = vmatprep.subr.mxu0 0.0
        %6715 = vmatpush1.msra.mxu0 0.0
        %6716 = vmatprep.subr.mxu0 0.0
        %6717 = vmatpush1.msra.mxu0 0.0
        %6718 = vmatprep.subr.mxu0 0.0
        %6719 = vmatpush1.msra.mxu0 0.0
        %6720 = vmatprep.subr.mxu0 0.0
        %6721 = vmatpush1.msra.mxu0 0.0
        %6722 = vmatprep.subr.mxu0 0.0
        %6723 = vmatpush1.msra.mxu0 0.0
        %6724 = vmatprep.subr.mxu0 0.0
        %6725 = vmatpush1.msra.mxu0 0.0
        %6726 = vmatprep.subr.mxu0 0.0
        %6727 = vmatpush1.msra.mxu0 0.0
        %6728 = vmatprep.subr.mxu0 0.0
        %6729 = vmatpush1.msra.mxu0 0.0
        %6730 = vmatprep.subr.mxu0 0.0
        %6731 = vmatpush1.msra.mxu0 0.0
        %6732 = vmatprep.subr.mxu0 0.0
        %6733 = vmatpush1.msra.mxu0 0.0
        %6734 = vmatprep.subr.mxu0 0.0
        %6735 = vmatpush1.msra.mxu0 0.0
        %6736 = vmatprep.subr.mxu0 0.0
        %6737 = vmatpush1.msra.mxu0 0.0
        %6738 = vmatprep.subr.mxu0 0.0
        %6739 = vmatpush1.msra.mxu0 0.0
        %6740 = vmatprep.subr.mxu0 0.0
        %6741 = vmatpush1.msra.mxu0 0.0
        %6742 = vmatprep.mubr.f32.mxu0 0.0
        %6743 = vmatmul.mubr.f32.gmra.mrb[0].mxu0 %v6661
        %v6744 = vpop.f32.mrb[0].mxu0
        %v6745 = vadd.f32 0.0, %v6744
        %v6746 = vpop.f32.mrb[0].mxu0
        %v6747 = vadd.f32 0.0, %v6746
        %6748 = vmatprep.mubr.f32.mxu0 0.0
        %6749 = vmatmul.mubr.f32.gmra.mrb[0].mxu0 %v6664
        %v6750 = vpop.f32.mrb[0].mxu0
        %v6751 = vadd.f32 0.0, %v6750
        %v6752 = vpop.f32.mrb[0].mxu0
        %v6753 = vadd.f32 0.0, %v6752
        %6754 = vmatprep.mubr.f32.mxu0 0.0
        %6755 = vmatmul.mubr.f32.gmra.mrb[0].mxu0 %v6667
        %v6756 = vpop.f32.mrb[0].mxu0
        %v6757 = vadd.f32 0.0, %v6756
        %v6758 = vpop.f32.mrb[0].mxu0
        %v6759 = vadd.f32 0.0, %v6758
        %6760 = vmatprep.mubr.f32.mxu0 0.0
        %6761 = vmatmul.mubr.f32.gmra.mrb[0].mxu0 %v6670
        %v6762 = vpop.f32.mrb[0].mxu0
        %v6763 = vadd.f32 0.0, %v6762
        %v6764 = vpop.f32.mrb[0].mxu0
        %v6765 = vadd.f32 0.0, %v6764
        %6766 = vmatprep.mubr.f32.mxu0 0.0
        %6767 = vmatmul.mubr.f32.gmra.mrb[0].mxu0 %v6673
        %v6768 = vpop.f32.mrb[0].mxu0
        %v6769 = vadd.f32 0.0, %v6768
        %v6770 = vpop.f32.mrb[0].mxu0
        %v6771 = vadd.f32 0.0, %v6770
        %6772 = vmatprep.mubr.f32.mxu0 0.0
        %6773 = vmatmul.mubr.f32.gmra.mrb[0].mxu0 %v6676
        %v6774 = vpop.f32.mrb[0].mxu0
        %v6775 = vadd.f32 0.0, %v6774
        %v6776 = vpop.f32.mrb[0].mxu0
        %v6777 = vadd.f32 0.0, %v6776
        %6778 = vdwg.mxu0
        %v6779 = vld [vmem:[%s298] sm:$0xff]
        %v6780 = vld [vmem:[%s298 + $0x8] sm:$0xff]
        %v6781 = vld [vmem:[%s298 + $0x10] sm:$0xff]
        %v6782 = vld [vmem:[%s298 + $0x18] sm:$0xff]
        %v6783 = vld [vmem:[%s298 + $0x20] sm:$0xff]
        %v6784 = vld [vmem:[%s298 + $0x28] sm:$0xff]
        %v6785 = vld [vmem:[%s298 + $0x30] sm:$0xff]
        %v6786 = vld [vmem:[%s298 + $0x38] sm:$0xff]
        %v6787 = vld [vmem:[%s298 + $0x40] sm:$0xff]
        %v6788 = vld [vmem:[%s298 + $0x48] sm:$0xff]
        %v6789 = vld [vmem:[%s298 + $0x50] sm:$0xff]
        %v6790 = vld [vmem:[%s298 + $0x58] sm:$0xff]
        %v6791 = vadd.f32 %v6779, %v6745
        %v6792 = vadd.f32 %v6780, %v6747
        %v6793 = vadd.f32 %v6781, %v6751
        %v6794 = vadd.f32 %v6782, %v6753
        %v6795 = vadd.f32 %v6783, %v6757
        %v6796 = vadd.f32 %v6784, %v6759
        %v6797 = vadd.f32 %v6785, %v6763
        %v6798 = vadd.f32 %v6786, %v6765
        %v6799 = vadd.f32 %v6787, %v6769
        %v6800 = vadd.f32 %v6788, %v6771
        %v6801 = vadd.f32 %v6789, %v6775
        %v6802 = vadd.f32 %v6790, %v6777
        %6803 = vst [vmem:[%s298] sm:$0xff] %v6791
        %6804 = vst.msk [vmem:[%s298 + $0x8] sm:$0xff] %vm419, %v6792
        %6805 = vst [vmem:[%s298 + $0x10] sm:$0xff] %v6793
        %6806 = vst.msk [vmem:[%s298 + $0x18] sm:$0xff] %vm419, %v6794
        %6807 = vst [vmem:[%s298 + $0x20] sm:$0xff] %v6795
        %6808 = vst.msk [vmem:[%s298 + $0x28] sm:$0xff] %vm419, %v6796
        %6809 = vst [vmem:[%s298 + $0x30] sm:$0xff] %v6797
        %6810 = vst.msk [vmem:[%s298 + $0x38] sm:$0xff] %vm419, %v6798
        %6811 = vst [vmem:[%s298 + $0x40] sm:$0xff] %v6799
        %6812 = vst.msk [vmem:[%s298 + $0x48] sm:$0xff] %vm419, %v6800
        %6813 = vst [vmem:[%s298 + $0x50] sm:$0xff] %v6801
        %6814 = vst.msk [vmem:[%s298 + $0x58] sm:$0xff] %vm419, %v6802
        %v6815 = vld [vmem:[%s303 + $0x190] sm:$0xff]
        %v6816 = vld [vmem:[%s303 + $0x198] sm:$0xff]
        %v6817 = vld [vmem:[%s303 + $0x1a0] sm:$0xff]
        %v6818 = vld [vmem:[%s303 + $0x1a8] sm:$0xff]
        %v6819 = vld [vmem:[%s303 + $0x1b0] sm:$0xff]
        %v6820 = vld [vmem:[%s303 + $0x1b8] sm:$0xff]
        %v6821 = vld [vmem:[%s303 + $0x1c0] sm:$0xff]
        %v6822 = vld [vmem:[%s303 + $0x1c8] sm:$0xff]
        %v6823 = vld [vmem:[%s303 + $0x1d0] sm:$0xff]
        %v6824 = vld [vmem:[%s303 + $0x1d8] sm:$0xff]
        %v6825 = vld [vmem:[%s1 + $0xc8] sm:$0xff]
        %v6826 = vld [vmem:[%s1 + $0xd0] sm:$0xff]
        %v6827 = vld [vmem:[%s1 + $0xd8] sm:$0xff]
        %v6828 = vld [vmem:[%s1 + $0xe0] sm:$0xff]
        %v6829 = vld [vmem:[%s1 + $0xe8] sm:$0xff]
        %6831 = vset.pattern.permute.xlu0 0
        %6832 = vperm.xlu0 %6831, %v6825
        %v6833 = vpop.permute.xlu0 %6832
        %6836 = vset.pattern.permute.xlu0 0
        %6837 = vperm.xlu0 %6836, %v6826
        %v6838 = vpop.permute.xlu0 %6837
        %6841 = vset.pattern.permute.xlu0 0
        %6842 = vperm.xlu0 %6841, %v6827
        %v6843 = vpop.permute.xlu0 %6842
        %6846 = vset.pattern.permute.xlu0 0
        %6847 = vperm.xlu0 %6846, %v6828
        %v6848 = vpop.permute.xlu0 %6847
        %6851 = vset.pattern.permute.xlu0 0
        %6852 = vperm.xlu0 %6851, %v6829
        %v6853 = vpop.permute.xlu0 %6852
        %v6855 = vmul.f32 %v6815, %v6833
        %v6856 = vmul.f32 %v6816, %v6833
        %v6857 = vmul.f32 %v6817, %v6838
        %v6858 = vmul.f32 %v6818, %v6838
        %v6859 = vmul.f32 %v6819, %v6843
        %v6860 = vmul.f32 %v6820, %v6843
        %v6861 = vmul.f32 %v6821, %v6848
        %v6862 = vmul.f32 %v6822, %v6848
        %v6863 = vmul.f32 %v6823, %v6853
        %v6864 = vmul.f32 %v6824, %v6853
        %v6865 = vld [vmem:[%s2 + $0xc8] sm:$0xff]
        %v6866 = vld [vmem:[%s2 + $0xd0] sm:$0xff]
        %v6867 = vld [vmem:[%s2 + $0xd8] sm:$0xff]
        %v6868 = vld [vmem:[%s2 + $0xe0] sm:$0xff]
        %v6869 = vld [vmem:[%s2 + $0xe8] sm:$0xff]
        %6871 = vset.pattern.permute.xlu0 0
        %6872 = vperm.xlu0 %6871, %v6865
        %v6873 = vpop.permute.xlu0 %6872
        %6876 = vset.pattern.permute.xlu0 0
        %6877 = vperm.xlu0 %6876, %v6866
        %v6878 = vpop.permute.xlu0 %6877
        %6881 = vset.pattern.permute.xlu0 0
        %6882 = vperm.xlu0 %6881, %v6867
        %v6883 = vpop.permute.xlu0 %6882
        %6886 = vset.pattern.permute.xlu0 0
        %6887 = vperm.xlu0 %6886, %v6868
        %v6888 = vpop.permute.xlu0 %6887
        %6891 = vset.pattern.permute.xlu0 0
        %6892 = vperm.xlu0 %6891, %v6869
        %v6893 = vpop.permute.xlu0 %6892
        %v6895 = vadd.f32 %v6855, %v6873
        %v6896 = vadd.f32 %v6856, %v6873
        %v6897 = vadd.f32 %v6857, %v6878
        %v6898 = vadd.f32 %v6858, %v6878
        %v6899 = vadd.f32 %v6859, %v6883
        %v6900 = vadd.f32 %v6860, %v6883
        %v6901 = vadd.f32 %v6861, %v6888
        %v6902 = vadd.f32 %v6862, %v6888
        %v6903 = vadd.f32 %v6863, %v6893
        %v6904 = vadd.f32 %v6864, %v6893
        %v6905 = vmax.f32 %v6895, 0.0
        %v6906 = vmax.f32 %v6896, 0.0
        %v6907 = vmax.f32 %v6897, 0.0
        %v6908 = vmax.f32 %v6898, 0.0
        %v6909 = vmax.f32 %v6899, 0.0
        %v6910 = vmax.f32 %v6900, 0.0
        %v6911 = vmax.f32 %v6901, 0.0
        %v6912 = vmax.f32 %v6902, 0.0
        %v6913 = vmax.f32 %v6903, 0.0
        %v6914 = vmax.f32 %v6904, 0.0
        %6915 = vst [vmem:[#allocation2 + $0x8] sm:$0xff] %v6905
        %6916 = vst.msk [vmem:[#allocation2 + $0x10] sm:$0xff] %vm419, %v6906
        %6917 = vst [vmem:[#allocation2 + $0x20] sm:$0xff] %v6907
        %6918 = vst.msk [vmem:[#allocation2 + $0x28] sm:$0xff] %vm419, %v6908
        %6919 = vst [vmem:[#allocation2 + $0x38] sm:$0xff] %v6909
        %6920 = vst.msk [vmem:[#allocation2 + $0x40] sm:$0xff] %vm419, %v6910
        %6921 = vst [vmem:[#allocation2 + $0x50] sm:$0xff] %v6911
        %6922 = vst.msk [vmem:[#allocation2 + $0x58] sm:$0xff] %vm419, %v6912
        %6923 = vst [vmem:[#allocation2 + $0x68] sm:$0xff] %v6913
        %6924 = vst.msk [vmem:[#allocation2 + $0x70] sm:$0xff] %vm419, %v6914
        %v6925 = vld [vmem:[%s429 + $0xc8] sm:$0xff]
        %v6926 = vld [vmem:[%s429 + $0xd0] sm:$0xff]
        %v6927 = vld [vmem:[%s429 + $0xd8] sm:$0xff]
        %v6928 = vld [vmem:[%s429 + $0xe0] sm:$0xff]
        %v6929 = vld [vmem:[%s429 + $0xe8] sm:$0xff]
        %6931 = vset.pattern.permute.xlu0 0
        %6932 = vperm.xlu0 %6931, %v6925
        %v6933 = vpop.permute.xlu0 %6932
        %6936 = vset.pattern.permute.xlu0 0
        %6937 = vperm.xlu0 %6936, %v6926
        %v6938 = vpop.permute.xlu0 %6937
        %6941 = vset.pattern.permute.xlu0 0
        %6942 = vperm.xlu0 %6941, %v6927
        %v6943 = vpop.permute.xlu0 %6942
        %6946 = vset.pattern.permute.xlu0 0
        %6947 = vperm.xlu0 %6946, %v6928
        %v6948 = vpop.permute.xlu0 %6947
        %6951 = vset.pattern.permute.xlu0 0
        %6952 = vperm.xlu0 %6951, %v6929
        %v6953 = vpop.permute.xlu0 %6952
        %v6955 = vmul.f32 %v6905, %v6933
        %v6956 = vmul.f32 %v6906, %v6933
        %v6957 = vmul.f32 %v6907, %v6938
        %v6958 = vmul.f32 %v6908, %v6938
        %v6959 = vmul.f32 %v6909, %v6943
        %v6960 = vmul.f32 %v6910, %v6943
        %v6961 = vmul.f32 %v6911, %v6948
        %v6962 = vmul.f32 %v6912, %v6948
        %v6963 = vmul.f32 %v6913, %v6953
        %v6964 = vmul.f32 %v6914, %v6953
        %v6965 = vld [vmem:[#allocation2] sm:$0xff]
        %v6966 = vld [vmem:[#allocation2 + $0x8] sm:$0xff]
        %v6967 = vld [vmem:[#allocation2 + $0x10] sm:$0xff]
        %v6968 = vld [vmem:[#allocation2 + $0x18] sm:$0xff]
        %v6969 = vld [vmem:[#allocation2 + $0x20] sm:$0xff]
        %v6970 = vld [vmem:[#allocation2 + $0x28] sm:$0xff]
        %v6971 = vld [vmem:[#allocation2 + $0x30] sm:$0xff]
        %v6972 = vld [vmem:[#allocation2 + $0x38] sm:$0xff]
        %v6973 = vld [vmem:[#allocation2 + $0x40] sm:$0xff]
        %v6974 = vld [vmem:[#allocation2 + $0x48] sm:$0xff]
        %v6975 = vld [vmem:[#allocation2 + $0x50] sm:$0xff]
        %v6976 = vld [vmem:[#allocation2 + $0x58] sm:$0xff]
        %v6977 = vld [vmem:[#allocation2 + $0x60] sm:$0xff]
        %v6978 = vld [vmem:[#allocation2 + $0x68] sm:$0xff]
        %v6979 = vld [vmem:[#allocation2 + $0x70] sm:$0xff]
        %v6980 = vld [vmem:[%s485 + $0xc8] sm:$0xff]
        %v6981 = vld [vmem:[%s485 + $0xd0] sm:$0xff]
        %v6982 = vld [vmem:[%s485 + $0xd8] sm:$0xff]
        %v6983 = vld [vmem:[%s485 + $0xe0] sm:$0xff]
        %v6984 = vld [vmem:[%s485 + $0xe8] sm:$0xff]
        %6986 = vset.pattern.permute.xlu0 0
        %6987 = vperm.xlu0 %6986, %v6980
        %v6988 = vpop.permute.xlu0 %6987
        %6991 = vset.pattern.permute.xlu0 0
        %6992 = vperm.xlu0 %6991, %v6981
        %v6993 = vpop.permute.xlu0 %6992
        %6996 = vset.pattern.permute.xlu0 0
        %6997 = vperm.xlu0 %6996, %v6982
        %v6998 = vpop.permute.xlu0 %6997
        %7001 = vset.pattern.permute.xlu0 0
        %7002 = vperm.xlu0 %7001, %v6983
        %v7003 = vpop.permute.xlu0 %7002
        %7006 = vset.pattern.permute.xlu0 0
        %7007 = vperm.xlu0 %7006, %v6984
        %v7008 = vpop.permute.xlu0 %7007
        %v7010 = vmul.f32 %v6965, %v6988
        %v7011 = vmul.f32 %v6966, %v6988
        %v7012 = vmul.f32 %v6967, %v6988
        %v7013 = vmul.f32 %v6968, %v6993
        %v7014 = vmul.f32 %v6969, %v6993
        %v7015 = vmul.f32 %v6970, %v6993
        %v7016 = vmul.f32 %v6971, %v6998
        %v7017 = vmul.f32 %v6972, %v6998
        %v7018 = vmul.f32 %v6973, %v6998
        %v7019 = vmul.f32 %v6974, %v7003
        %v7020 = vmul.f32 %v6975, %v7003
        %v7021 = vmul.f32 %v6976, %v7003
        %v7022 = vmul.f32 %v6977, %v7008
        %v7023 = vmul.f32 %v6978, %v7008
        %v7024 = vmul.f32 %v6979, %v7008
        %7040 = vrot.lane.b32.xlu0 %v7010, 14
        %v7041 = vpop.permute.xlu0 %7040
        %7042 = vrot.lane.b32.xlu0 %v7011, 14
        %v7043 = vpop.permute.xlu0 %7042
        %7044 = vrot.lane.b32.xlu0 %v7012, 14
        %v7045 = vpop.permute.xlu0 %7044
        %7046 = vrot.lane.b32.xlu0 %v7013, 14
        %v7047 = vpop.permute.xlu0 %7046
        %7048 = vrot.lane.b32.xlu0 %v7014, 14
        %v7049 = vpop.permute.xlu0 %7048
        %7050 = vrot.lane.b32.xlu0 %v7015, 14
        %v7051 = vpop.permute.xlu0 %7050
        %7052 = vrot.lane.b32.xlu0 %v7016, 14
        %v7053 = vpop.permute.xlu0 %7052
        %7054 = vrot.lane.b32.xlu0 %v7017, 14
        %v7055 = vpop.permute.xlu0 %7054
        %7056 = vrot.lane.b32.xlu0 %v7018, 14
        %v7057 = vpop.permute.xlu0 %7056
        %7058 = vrot.lane.b32.xlu0 %v7019, 14
        %v7059 = vpop.permute.xlu0 %7058
        %7060 = vrot.lane.b32.xlu0 %v7020, 14
        %v7061 = vpop.permute.xlu0 %7060
        %7062 = vrot.lane.b32.xlu0 %v7021, 14
        %v7063 = vpop.permute.xlu0 %7062
        %7064 = vrot.lane.b32.xlu0 %v7022, 14
        %v7065 = vpop.permute.xlu0 %7064
        %7066 = vrot.lane.b32.xlu0 %v7023, 14
        %v7067 = vpop.permute.xlu0 %7066
        %7068 = vrot.lane.b32.xlu0 %v7024, 14
        %v7069 = vpop.permute.xlu0 %7068
        %v7070 = vsel %vm576, %v7041, %v7043
        %v7071 = vsel %vm576, %v7043, %v7045
        %v7072 = vsel %vm576, %v7047, %v7049
        %v7073 = vsel %vm576, %v7049, %v7051
        %v7074 = vsel %vm576, %v7053, %v7055
        %v7075 = vsel %vm576, %v7055, %v7057
        %v7076 = vsel %vm576, %v7059, %v7061
        %v7077 = vsel %vm576, %v7061, %v7063
        %v7078 = vsel %vm576, %v7065, %v7067
        %v7079 = vsel %vm576, %v7067, %v7069
        %v7090 = vadd.f32 %v6955, %v7070
        %v7091 = vadd.f32 %v6956, %v7071
        %v7092 = vadd.f32 %v6957, %v7072
        %v7093 = vadd.f32 %v6958, %v7073
        %v7094 = vadd.f32 %v6959, %v7074
        %v7095 = vadd.f32 %v6960, %v7075
        %v7096 = vadd.f32 %v6961, %v7076
        %v7097 = vadd.f32 %v6962, %v7077
        %v7098 = vadd.f32 %v6963, %v7078
        %v7099 = vadd.f32 %v6964, %v7079
        %v7100 = vld [vmem:[%s607 + $0xc8] sm:$0xff]
        %v7101 = vld [vmem:[%s607 + $0xd0] sm:$0xff]
        %v7102 = vld [vmem:[%s607 + $0xd8] sm:$0xff]
        %v7103 = vld [vmem:[%s607 + $0xe0] sm:$0xff]
        %v7104 = vld [vmem:[%s607 + $0xe8] sm:$0xff]
        %7106 = vset.pattern.permute.xlu0 0
        %7107 = vperm.xlu0 %7106, %v7100
        %v7108 = vpop.permute.xlu0 %7107
        %7111 = vset.pattern.permute.xlu0 0
        %7112 = vperm.xlu0 %7111, %v7101
        %v7113 = vpop.permute.xlu0 %7112
        %7116 = vset.pattern.permute.xlu0 0
        %7117 = vperm.xlu0 %7116, %v7102
        %v7118 = vpop.permute.xlu0 %7117
        %7121 = vset.pattern.permute.xlu0 0
        %7122 = vperm.xlu0 %7121, %v7103
        %v7123 = vpop.permute.xlu0 %7122
        %7126 = vset.pattern.permute.xlu0 0
        %7127 = vperm.xlu0 %7126, %v7104
        %v7128 = vpop.permute.xlu0 %7127
        %v7130 = vmul.f32 %v6966, %v7108
        %v7131 = vmul.f32 %v6967, %v7108
        %v7132 = vmul.f32 %v6969, %v7113
        %v7133 = vmul.f32 %v6970, %v7113
        %v7134 = vmul.f32 %v6972, %v7118
        %v7135 = vmul.f32 %v6973, %v7118
        %v7136 = vmul.f32 %v6975, %v7123
        %v7137 = vmul.f32 %v6976, %v7123
        %v7138 = vmul.f32 %v6978, %v7128
        %v7139 = vmul.f32 %v6979, %v7128
        %7150 = vrot.lane.b32.xlu0 %v7130, 114
        %v7151 = vpop.permute.xlu0 %7150
        %7152 = vrot.lane.b32.xlu0 %v7131, 114
        %v7153 = vpop.permute.xlu0 %7152
        %7154 = vrot.lane.b32.xlu0 %v7132, 114
        %v7155 = vpop.permute.xlu0 %7154
        %7156 = vrot.lane.b32.xlu0 %v7133, 114
        %v7157 = vpop.permute.xlu0 %7156
        %7158 = vrot.lane.b32.xlu0 %v7134, 114
        %v7159 = vpop.permute.xlu0 %7158
        %7160 = vrot.lane.b32.xlu0 %v7135, 114
        %v7161 = vpop.permute.xlu0 %7160
        %7162 = vrot.lane.b32.xlu0 %v7136, 114
        %v7163 = vpop.permute.xlu0 %7162
        %7164 = vrot.lane.b32.xlu0 %v7137, 114
        %v7165 = vpop.permute.xlu0 %7164
        %7166 = vrot.lane.b32.xlu0 %v7138, 114
        %v7167 = vpop.permute.xlu0 %7166
        %7168 = vrot.lane.b32.xlu0 %v7139, 114
        %v7169 = vpop.permute.xlu0 %7168
        %v7170 = vsel %vm678, %v7151, %v7153
        %v7171 = vsel %vm678, %v7155, %v7157
        %v7172 = vsel %vm678, %v7159, %v7161
        %v7173 = vsel %vm678, %v7163, %v7165
        %v7174 = vsel %vm678, %v7167, %v7169
        %v7185 = vadd.f32 %v7090, %v7170
        %v7186 = vadd.f32 %v7091, %v7153
        %v7187 = vadd.f32 %v7092, %v7171
        %v7188 = vadd.f32 %v7093, %v7157
        %v7189 = vadd.f32 %v7094, %v7172
        %v7190 = vadd.f32 %v7095, %v7161
        %v7191 = vadd.f32 %v7096, %v7173
        %v7192 = vadd.f32 %v7097, %v7165
        %v7193 = vadd.f32 %v7098, %v7174
        %v7194 = vadd.f32 %v7099, %v7169
        %v7195 = vld [vmem:[%s3 + $0xc8] sm:$0xff]
        %v7196 = vld [vmem:[%s3 + $0xd0] sm:$0xff]
        %v7197 = vld [vmem:[%s3 + $0xd8] sm:$0xff]
        %v7198 = vld [vmem:[%s3 + $0xe0] sm:$0xff]
        %v7199 = vld [vmem:[%s3 + $0xe8] sm:$0xff]
        %7201 = vset.pattern.permute.xlu0 0
        %7202 = vperm.xlu0 %7201, %v7195
        %v7203 = vpop.permute.xlu0 %7202
        %7206 = vset.pattern.permute.xlu0 0
        %7207 = vperm.xlu0 %7206, %v7196
        %v7208 = vpop.permute.xlu0 %7207
        %7211 = vset.pattern.permute.xlu0 0
        %7212 = vperm.xlu0 %7211, %v7197
        %v7213 = vpop.permute.xlu0 %7212
        %7216 = vset.pattern.permute.xlu0 0
        %7217 = vperm.xlu0 %7216, %v7198
        %v7218 = vpop.permute.xlu0 %7217
        %7221 = vset.pattern.permute.xlu0 0
        %7222 = vperm.xlu0 %7221, %v7199
        %v7223 = vpop.permute.xlu0 %7222
        %v7225 = vmul.f32 %v6965, %v7203
        %v7226 = vmul.f32 %v6966, %v7203
        %v7227 = vmul.f32 %v6967, %v7203
        %v7228 = vmul.f32 %v6968, %v7208
        %v7229 = vmul.f32 %v6969, %v7208
        %v7230 = vmul.f32 %v6970, %v7208
        %v7231 = vmul.f32 %v6971, %v7213
        %v7232 = vmul.f32 %v6972, %v7213
        %v7233 = vmul.f32 %v6973, %v7213
        %v7234 = vmul.f32 %v6974, %v7218
        %v7235 = vmul.f32 %v6975, %v7218
        %v7236 = vmul.f32 %v6976, %v7218
        %v7237 = vmul.f32 %v6977, %v7223
        %v7238 = vmul.f32 %v6978, %v7223
        %v7239 = vmul.f32 %v6979, %v7223
        %v7240 = vld [vmem:[%s749 + $0xc8] sm:$0xff]
        %v7241 = vld [vmem:[%s749 + $0xd0] sm:$0xff]
        %v7242 = vld [vmem:[%s749 + $0xd8] sm:$0xff]
        %v7243 = vld [vmem:[%s749 + $0xe0] sm:$0xff]
        %v7244 = vld [vmem:[%s749 + $0xe8] sm:$0xff]
        %7246 = vset.pattern.permute.xlu0 0
        %7247 = vperm.xlu0 %7246, %v7240
        %v7248 = vpop.permute.xlu0 %7247
        %7251 = vset.pattern.permute.xlu0 0
        %7252 = vperm.xlu0 %7251, %v7241
        %v7253 = vpop.permute.xlu0 %7252
        %7256 = vset.pattern.permute.xlu0 0
        %7257 = vperm.xlu0 %7256, %v7242
        %v7258 = vpop.permute.xlu0 %7257
        %7261 = vset.pattern.permute.xlu0 0
        %7262 = vperm.xlu0 %7261, %v7243
        %v7263 = vpop.permute.xlu0 %7262
        %7266 = vset.pattern.permute.xlu0 0
        %7267 = vperm.xlu0 %7266, %v7244
        %v7268 = vpop.permute.xlu0 %7267
        %v7270 = vmul.f32 %v6965, %v7248
        %v7271 = vmul.f32 %v6966, %v7248
        %v7272 = vmul.f32 %v6967, %v7248
        %v7273 = vmul.f32 %v6968, %v7253
        %v7274 = vmul.f32 %v6969, %v7253
        %v7275 = vmul.f32 %v6970, %v7253
        %v7276 = vmul.f32 %v6971, %v7258
        %v7277 = vmul.f32 %v6972, %v7258
        %v7278 = vmul.f32 %v6973, %v7258
        %v7279 = vmul.f32 %v6974, %v7263
        %v7280 = vmul.f32 %v6975, %v7263
        %v7281 = vmul.f32 %v6976, %v7263
        %v7282 = vmul.f32 %v6977, %v7268
        %v7283 = vmul.f32 %v6978, %v7268
        %v7284 = vmul.f32 %v6979, %v7268
        %7300 = vrot.lane.b32.xlu0 %v7270, 114
        %v7301 = vpop.permute.xlu0 %7300
        %7302 = vrot.lane.b32.xlu0 %v7271, 114
        %v7303 = vpop.permute.xlu0 %7302
        %7304 = vrot.lane.b32.xlu0 %v7272, 114
        %v7305 = vpop.permute.xlu0 %7304
        %7306 = vrot.lane.b32.xlu0 %v7273, 114
        %v7307 = vpop.permute.xlu0 %7306
        %7308 = vrot.lane.b32.xlu0 %v7274, 114
        %v7309 = vpop.permute.xlu0 %7308
        %7310 = vrot.lane.b32.xlu0 %v7275, 114
        %v7311 = vpop.permute.xlu0 %7310
        %7312 = vrot.lane.b32.xlu0 %v7276, 114
        %v7313 = vpop.permute.xlu0 %7312
        %7314 = vrot.lane.b32.xlu0 %v7277, 114
        %v7315 = vpop.permute.xlu0 %7314
        %7316 = vrot.lane.b32.xlu0 %v7278, 114
        %v7317 = vpop.permute.xlu0 %7316
        %7318 = vrot.lane.b32.xlu0 %v7279, 114
        %v7319 = vpop.permute.xlu0 %7318
        %7320 = vrot.lane.b32.xlu0 %v7280, 114
        %v7321 = vpop.permute.xlu0 %7320
        %7322 = vrot.lane.b32.xlu0 %v7281, 114
        %v7323 = vpop.permute.xlu0 %7322
        %7324 = vrot.lane.b32.xlu0 %v7282, 114
        %v7325 = vpop.permute.xlu0 %7324
        %7326 = vrot.lane.b32.xlu0 %v7283, 114
        %v7327 = vpop.permute.xlu0 %7326
        %7328 = vrot.lane.b32.xlu0 %v7284, 114
        %v7329 = vpop.permute.xlu0 %7328
        %v7330 = vsel %vm678, %v7301, %v7303
        %v7331 = vsel %vm678, %v7303, %v7305
        %v7332 = vsel %vm678, %v7307, %v7309
        %v7333 = vsel %vm678, %v7309, %v7311
        %v7334 = vsel %vm678, %v7313, %v7315
        %v7335 = vsel %vm678, %v7315, %v7317
        %v7336 = vsel %vm678, %v7319, %v7321
        %v7337 = vsel %vm678, %v7321, %v7323
        %v7338 = vsel %vm678, %v7325, %v7327
        %v7339 = vsel %vm678, %v7327, %v7329
        %v7355 = vadd.f32 %v7225, %v7330
        %v7356 = vadd.f32 %v7226, %v7331
        %v7357 = vadd.f32 %v7227, %v7305
        %v7358 = vadd.f32 %v7228, %v7332
        %v7359 = vadd.f32 %v7229, %v7333
        %v7360 = vadd.f32 %v7230, %v7311
        %v7361 = vadd.f32 %v7231, %v7334
        %v7362 = vadd.f32 %v7232, %v7335
        %v7363 = vadd.f32 %v7233, %v7317
        %v7364 = vadd.f32 %v7234, %v7336
        %v7365 = vadd.f32 %v7235, %v7337
        %v7366 = vadd.f32 %v7236, %v7323
        %v7367 = vadd.f32 %v7237, %v7338
        %v7368 = vadd.f32 %v7238, %v7339
        %v7369 = vadd.f32 %v7239, %v7329
        %v7370 = vld [vmem:[%s880 + $0xc8] sm:$0xff]
        %v7371 = vld [vmem:[%s880 + $0xd0] sm:$0xff]
        %v7372 = vld [vmem:[%s880 + $0xd8] sm:$0xff]
        %v7373 = vld [vmem:[%s880 + $0xe0] sm:$0xff]
        %v7374 = vld [vmem:[%s880 + $0xe8] sm:$0xff]
        %7376 = vset.pattern.permute.xlu0 0
        %7377 = vperm.xlu0 %7376, %v7370
        %v7378 = vpop.permute.xlu0 %7377
        %7381 = vset.pattern.permute.xlu0 0
        %7382 = vperm.xlu0 %7381, %v7371
        %v7383 = vpop.permute.xlu0 %7382
        %7386 = vset.pattern.permute.xlu0 0
        %7387 = vperm.xlu0 %7386, %v7372
        %v7388 = vpop.permute.xlu0 %7387
        %7391 = vset.pattern.permute.xlu0 0
        %7392 = vperm.xlu0 %7391, %v7373
        %v7393 = vpop.permute.xlu0 %7392
        %7396 = vset.pattern.permute.xlu0 0
        %7397 = vperm.xlu0 %7396, %v7374
        %v7398 = vpop.permute.xlu0 %7397
        %v7400 = vmul.f32 %v6966, %v7378
        %v7401 = vmul.f32 %v6967, %v7378
        %v7402 = vmul.f32 %v6969, %v7383
        %v7403 = vmul.f32 %v6970, %v7383
        %v7404 = vmul.f32 %v6972, %v7388
        %v7405 = vmul.f32 %v6973, %v7388
        %v7406 = vmul.f32 %v6975, %v7393
        %v7407 = vmul.f32 %v6976, %v7393
        %v7408 = vmul.f32 %v6978, %v7398
        %v7409 = vmul.f32 %v6979, %v7398
        %7420 = vrot.lane.b32.xlu0 %v7400, 100
        %v7421 = vpop.permute.xlu0 %7420
        %7422 = vrot.lane.b32.xlu0 %v7401, 100
        %v7423 = vpop.permute.xlu0 %7422
        %7424 = vrot.lane.b32.xlu0 %v7402, 100
        %v7425 = vpop.permute.xlu0 %7424
        %7426 = vrot.lane.b32.xlu0 %v7403, 100
        %v7427 = vpop.permute.xlu0 %7426
        %7428 = vrot.lane.b32.xlu0 %v7404, 100
        %v7429 = vpop.permute.xlu0 %7428
        %7430 = vrot.lane.b32.xlu0 %v7405, 100
        %v7431 = vpop.permute.xlu0 %7430
        %7432 = vrot.lane.b32.xlu0 %v7406, 100
        %v7433 = vpop.permute.xlu0 %7432
        %7434 = vrot.lane.b32.xlu0 %v7407, 100
        %v7435 = vpop.permute.xlu0 %7434
        %7436 = vrot.lane.b32.xlu0 %v7408, 100
        %v7437 = vpop.permute.xlu0 %7436
        %7438 = vrot.lane.b32.xlu0 %v7409, 100
        %v7439 = vpop.permute.xlu0 %7438
        %v7440 = vsel %vm951, %v7421, %v7423
        %v7441 = vsel %vm951, %v7425, %v7427
        %v7442 = vsel %vm951, %v7429, %v7431
        %v7443 = vsel %vm951, %v7433, %v7435
        %v7444 = vsel %vm951, %v7437, %v7439
        %v7460 = vadd.f32 %v7355, %v7421
        %v7461 = vadd.f32 %v7356, %v7440
        %v7462 = vadd.f32 %v7357, %v7423
        %v7463 = vadd.f32 %v7358, %v7425
        %v7464 = vadd.f32 %v7359, %v7441
        %v7465 = vadd.f32 %v7360, %v7427
        %v7466 = vadd.f32 %v7361, %v7429
        %v7467 = vadd.f32 %v7362, %v7442
        %v7468 = vadd.f32 %v7363, %v7431
        %v7469 = vadd.f32 %v7364, %v7433
        %v7470 = vadd.f32 %v7365, %v7443
        %v7471 = vadd.f32 %v7366, %v7435
        %v7472 = vadd.f32 %v7367, %v7437
        %v7473 = vadd.f32 %v7368, %v7444
        %v7474 = vadd.f32 %v7369, %v7439
        %7490 = vrot.lane.b32.xlu0 %v7460, 15
        %v7491 = vpop.permute.xlu0 %7490
        %7492 = vrot.lane.b32.xlu0 %v7461, 15
        %v7493 = vpop.permute.xlu0 %7492
        %7494 = vrot.lane.b32.xlu0 %v7462, 15
        %v7495 = vpop.permute.xlu0 %7494
        %7496 = vrot.lane.b32.xlu0 %v7463, 15
        %v7497 = vpop.permute.xlu0 %7496
        %7498 = vrot.lane.b32.xlu0 %v7464, 15
        %v7499 = vpop.permute.xlu0 %7498
        %7500 = vrot.lane.b32.xlu0 %v7465, 15
        %v7501 = vpop.permute.xlu0 %7500
        %7502 = vrot.lane.b32.xlu0 %v7466, 15
        %v7503 = vpop.permute.xlu0 %7502
        %7504 = vrot.lane.b32.xlu0 %v7467, 15
        %v7505 = vpop.permute.xlu0 %7504
        %7506 = vrot.lane.b32.xlu0 %v7468, 15
        %v7507 = vpop.permute.xlu0 %7506
        %7508 = vrot.lane.b32.xlu0 %v7469, 15
        %v7509 = vpop.permute.xlu0 %7508
        %7510 = vrot.lane.b32.xlu0 %v7470, 15
        %v7511 = vpop.permute.xlu0 %7510
        %7512 = vrot.lane.b32.xlu0 %v7471, 15
        %v7513 = vpop.permute.xlu0 %7512
        %7514 = vrot.lane.b32.xlu0 %v7472, 15
        %v7515 = vpop.permute.xlu0 %7514
        %7516 = vrot.lane.b32.xlu0 %v7473, 15
        %v7517 = vpop.permute.xlu0 %7516
        %7518 = vrot.lane.b32.xlu0 %v7474, 15
        %v7519 = vpop.permute.xlu0 %7518
        %v7520 = vsel %vm1043, %v7491, %v7493
        %v7521 = vsel %vm1043, %v7493, %v7495
        %v7522 = vsel %vm1043, %v7497, %v7499
        %v7523 = vsel %vm1043, %v7499, %v7501
        %v7524 = vsel %vm1043, %v7503, %v7505
        %v7525 = vsel %vm1043, %v7505, %v7507
        %v7526 = vsel %vm1043, %v7509, %v7511
        %v7527 = vsel %vm1043, %v7511, %v7513
        %v7528 = vsel %vm1043, %v7515, %v7517
        %v7529 = vsel %vm1043, %v7517, %v7519
        %v7540 = vmul.f32 %v991, %v7520
        %v7541 = vmul.f32 %v995, %v7521
        %v7542 = vmul.f32 %v991, %v7522
        %v7543 = vmul.f32 %v995, %v7523
        %v7544 = vmul.f32 %v991, %v7524
        %v7545 = vmul.f32 %v995, %v7525
        %v7546 = vmul.f32 %v991, %v7526
        %v7547 = vmul.f32 %v995, %v7527
        %v7548 = vmul.f32 %v991, %v7528
        %v7549 = vmul.f32 %v995, %v7529
        %v7550 = vadd.f32 %v7185, %v7540
        %v7551 = vadd.f32 %v7186, %v7541
        %v7552 = vadd.f32 %v7187, %v7542
        %v7553 = vadd.f32 %v7188, %v7543
        %v7554 = vadd.f32 %v7189, %v7544
        %v7555 = vadd.f32 %v7190, %v7545
        %v7556 = vadd.f32 %v7191, %v7546
        %v7557 = vadd.f32 %v7192, %v7547
        %v7558 = vadd.f32 %v7193, %v7548
        %v7559 = vadd.f32 %v7194, %v7549
        %v7560 = vld [vmem:[%s1084 + $0xc8] sm:$0xff]
        %v7561 = vld [vmem:[%s1084 + $0xd0] sm:$0xff]
        %v7562 = vld [vmem:[%s1084 + $0xd8] sm:$0xff]
        %v7563 = vld [vmem:[%s1084 + $0xe0] sm:$0xff]
        %v7564 = vld [vmem:[%s1084 + $0xe8] sm:$0xff]
        %7566 = vset.pattern.permute.xlu0 0
        %7567 = vperm.xlu0 %7566, %v7560
        %v7568 = vpop.permute.xlu0 %7567
        %7571 = vset.pattern.permute.xlu0 0
        %7572 = vperm.xlu0 %7571, %v7561
        %v7573 = vpop.permute.xlu0 %7572
        %7576 = vset.pattern.permute.xlu0 0
        %7577 = vperm.xlu0 %7576, %v7562
        %v7578 = vpop.permute.xlu0 %7577
        %7581 = vset.pattern.permute.xlu0 0
        %7582 = vperm.xlu0 %7581, %v7563
        %v7583 = vpop.permute.xlu0 %7582
        %7586 = vset.pattern.permute.xlu0 0
        %7587 = vperm.xlu0 %7586, %v7564
        %v7588 = vpop.permute.xlu0 %7587
        %v7590 = vmul.f32 %v6965, %v7568
        %v7591 = vmul.f32 %v6966, %v7568
        %v7592 = vmul.f32 %v6967, %v7568
        %v7593 = vmul.f32 %v6968, %v7573
        %v7594 = vmul.f32 %v6969, %v7573
        %v7595 = vmul.f32 %v6970, %v7573
        %v7596 = vmul.f32 %v6971, %v7578
        %v7597 = vmul.f32 %v6972, %v7578
        %v7598 = vmul.f32 %v6973, %v7578
        %v7599 = vmul.f32 %v6974, %v7583
        %v7600 = vmul.f32 %v6975, %v7583
        %v7601 = vmul.f32 %v6976, %v7583
        %v7602 = vmul.f32 %v6977, %v7588
        %v7603 = vmul.f32 %v6978, %v7588
        %v7604 = vmul.f32 %v6979, %v7588
        %v7605 = vld [vmem:[%s1130 + $0xc8] sm:$0xff]
        %v7606 = vld [vmem:[%s1130 + $0xd0] sm:$0xff]
        %v7607 = vld [vmem:[%s1130 + $0xd8] sm:$0xff]
        %v7608 = vld [vmem:[%s1130 + $0xe0] sm:$0xff]
        %v7609 = vld [vmem:[%s1130 + $0xe8] sm:$0xff]
        %7611 = vset.pattern.permute.xlu0 0
        %7612 = vperm.xlu0 %7611, %v7605
        %v7613 = vpop.permute.xlu0 %7612
        %7616 = vset.pattern.permute.xlu0 0
        %7617 = vperm.xlu0 %7616, %v7606
        %v7618 = vpop.permute.xlu0 %7617
        %7621 = vset.pattern.permute.xlu0 0
        %7622 = vperm.xlu0 %7621, %v7607
        %v7623 = vpop.permute.xlu0 %7622
        %7626 = vset.pattern.permute.xlu0 0
        %7627 = vperm.xlu0 %7626, %v7608
        %v7628 = vpop.permute.xlu0 %7627
        %7631 = vset.pattern.permute.xlu0 0
        %7632 = vperm.xlu0 %7631, %v7609
        %v7633 = vpop.permute.xlu0 %7632
        %v7635 = vmul.f32 %v6966, %v7613
        %v7636 = vmul.f32 %v6967, %v7613
        %v7637 = vmul.f32 %v6969, %v7618
        %v7638 = vmul.f32 %v6970, %v7618
        %v7639 = vmul.f32 %v6972, %v7623
        %v7640 = vmul.f32 %v6973, %v7623
        %v7641 = vmul.f32 %v6975, %v7628
        %v7642 = vmul.f32 %v6976, %v7628
        %v7643 = vmul.f32 %v6978, %v7633
        %v7644 = vmul.f32 %v6979, %v7633
        %7655 = vrot.lane.b32.xlu0 %v7635, 114
        %v7656 = vpop.permute.xlu0 %7655
        %7657 = vrot.lane.b32.xlu0 %v7636, 114
        %v7658 = vpop.permute.xlu0 %7657
        %7659 = vrot.lane.b32.xlu0 %v7637, 114
        %v7660 = vpop.permute.xlu0 %7659
        %7661 = vrot.lane.b32.xlu0 %v7638, 114
        %v7662 = vpop.permute.xlu0 %7661
        %7663 = vrot.lane.b32.xlu0 %v7639, 114
        %v7664 = vpop.permute.xlu0 %7663
        %7665 = vrot.lane.b32.xlu0 %v7640, 114
        %v7666 = vpop.permute.xlu0 %7665
        %7667 = vrot.lane.b32.xlu0 %v7641, 114
        %v7668 = vpop.permute.xlu0 %7667
        %7669 = vrot.lane.b32.xlu0 %v7642, 114
        %v7670 = vpop.permute.xlu0 %7669
        %7671 = vrot.lane.b32.xlu0 %v7643, 114
        %v7672 = vpop.permute.xlu0 %7671
        %7673 = vrot.lane.b32.xlu0 %v7644, 114
        %v7674 = vpop.permute.xlu0 %7673
        %v7675 = vsel %vm678, %v7656, %v7658
        %v7676 = vsel %vm678, %v7660, %v7662
        %v7677 = vsel %vm678, %v7664, %v7666
        %v7678 = vsel %vm678, %v7668, %v7670
        %v7679 = vsel %vm678, %v7672, %v7674
        %v7695 = vadd.f32 %v7590, %v7656
        %v7696 = vadd.f32 %v7591, %v7675
        %v7697 = vadd.f32 %v7592, %v7658
        %v7698 = vadd.f32 %v7593, %v7660
        %v7699 = vadd.f32 %v7594, %v7676
        %v7700 = vadd.f32 %v7595, %v7662
        %v7701 = vadd.f32 %v7596, %v7664
        %v7702 = vadd.f32 %v7597, %v7677
        %v7703 = vadd.f32 %v7598, %v7666
        %v7704 = vadd.f32 %v7599, %v7668
        %v7705 = vadd.f32 %v7600, %v7678
        %v7706 = vadd.f32 %v7601, %v7670
        %v7707 = vadd.f32 %v7602, %v7672
        %v7708 = vadd.f32 %v7603, %v7679
        %v7709 = vadd.f32 %v7604, %v7674
        %v7710 = vld [vmem:[%s1236 + $0xc8] sm:$0xff]
        %v7711 = vld [vmem:[%s1236 + $0xd0] sm:$0xff]
        %v7712 = vld [vmem:[%s1236 + $0xd8] sm:$0xff]
        %v7713 = vld [vmem:[%s1236 + $0xe0] sm:$0xff]
        %v7714 = vld [vmem:[%s1236 + $0xe8] sm:$0xff]
        %7716 = vset.pattern.permute.xlu0 0
        %7717 = vperm.xlu0 %7716, %v7710
        %v7718 = vpop.permute.xlu0 %7717
        %7721 = vset.pattern.permute.xlu0 0
        %7722 = vperm.xlu0 %7721, %v7711
        %v7723 = vpop.permute.xlu0 %7722
        %7726 = vset.pattern.permute.xlu0 0
        %7727 = vperm.xlu0 %7726, %v7712
        %v7728 = vpop.permute.xlu0 %7727
        %7731 = vset.pattern.permute.xlu0 0
        %7732 = vperm.xlu0 %7731, %v7713
        %v7733 = vpop.permute.xlu0 %7732
        %7736 = vset.pattern.permute.xlu0 0
        %7737 = vperm.xlu0 %7736, %v7714
        %v7738 = vpop.permute.xlu0 %7737
        %v7740 = vmul.f32 %v6966, %v7718
        %v7741 = vmul.f32 %v6967, %v7718
        %v7742 = vmul.f32 %v6969, %v7723
        %v7743 = vmul.f32 %v6970, %v7723
        %v7744 = vmul.f32 %v6972, %v7728
        %v7745 = vmul.f32 %v6973, %v7728
        %v7746 = vmul.f32 %v6975, %v7733
        %v7747 = vmul.f32 %v6976, %v7733
        %v7748 = vmul.f32 %v6978, %v7738
        %v7749 = vmul.f32 %v6979, %v7738
        %7760 = vrot.lane.b32.xlu0 %v7740, 100
        %v7761 = vpop.permute.xlu0 %7760
        %7762 = vrot.lane.b32.xlu0 %v7741, 100
        %v7763 = vpop.permute.xlu0 %7762
        %7764 = vrot.lane.b32.xlu0 %v7742, 100
        %v7765 = vpop.permute.xlu0 %7764
        %7766 = vrot.lane.b32.xlu0 %v7743, 100
        %v7767 = vpop.permute.xlu0 %7766
        %7768 = vrot.lane.b32.xlu0 %v7744, 100
        %v7769 = vpop.permute.xlu0 %7768
        %7770 = vrot.lane.b32.xlu0 %v7745, 100
        %v7771 = vpop.permute.xlu0 %7770
        %7772 = vrot.lane.b32.xlu0 %v7746, 100
        %v7773 = vpop.permute.xlu0 %7772
        %7774 = vrot.lane.b32.xlu0 %v7747, 100
        %v7775 = vpop.permute.xlu0 %7774
        %7776 = vrot.lane.b32.xlu0 %v7748, 100
        %v7777 = vpop.permute.xlu0 %7776
        %7778 = vrot.lane.b32.xlu0 %v7749, 100
        %v7779 = vpop.permute.xlu0 %7778
        %v7780 = vsel %vm951, %v7761, %v7763
        %v7781 = vsel %vm951, %v7765, %v7767
        %v7782 = vsel %vm951, %v7769, %v7771
        %v7783 = vsel %vm951, %v7773, %v7775
        %v7784 = vsel %vm951, %v7777, %v7779
        %v7800 = vadd.f32 %v7695, %v7761
        %v7801 = vadd.f32 %v7696, %v7780
        %v7802 = vadd.f32 %v7697, %v7763
        %v7803 = vadd.f32 %v7698, %v7765
        %v7804 = vadd.f32 %v7699, %v7781
        %v7805 = vadd.f32 %v7700, %v7767
        %v7806 = vadd.f32 %v7701, %v7769
        %v7807 = vadd.f32 %v7702, %v7782
        %v7808 = vadd.f32 %v7703, %v7771
        %v7809 = vadd.f32 %v7704, %v7773
        %v7810 = vadd.f32 %v7705, %v7783
        %v7811 = vadd.f32 %v7706, %v7775
        %v7812 = vadd.f32 %v7707, %v7777
        %v7813 = vadd.f32 %v7708, %v7784
        %v7814 = vadd.f32 %v7709, %v7779
        %7830 = vrot.lane.b32.xlu0 %v7800, 13
        %v7831 = vpop.permute.xlu0 %7830
        %7832 = vrot.lane.b32.xlu0 %v7801, 13
        %v7833 = vpop.permute.xlu0 %7832
        %7834 = vrot.lane.b32.xlu0 %v7802, 13
        %v7835 = vpop.permute.xlu0 %7834
        %7836 = vrot.lane.b32.xlu0 %v7803, 13
        %v7837 = vpop.permute.xlu0 %7836
        %7838 = vrot.lane.b32.xlu0 %v7804, 13
        %v7839 = vpop.permute.xlu0 %7838
        %7840 = vrot.lane.b32.xlu0 %v7805, 13
        %v7841 = vpop.permute.xlu0 %7840
        %7842 = vrot.lane.b32.xlu0 %v7806, 13
        %v7843 = vpop.permute.xlu0 %7842
        %7844 = vrot.lane.b32.xlu0 %v7807, 13
        %v7845 = vpop.permute.xlu0 %7844
        %7846 = vrot.lane.b32.xlu0 %v7808, 13
        %v7847 = vpop.permute.xlu0 %7846
        %7848 = vrot.lane.b32.xlu0 %v7809, 13
        %v7849 = vpop.permute.xlu0 %7848
        %7850 = vrot.lane.b32.xlu0 %v7810, 13
        %v7851 = vpop.permute.xlu0 %7850
        %7852 = vrot.lane.b32.xlu0 %v7811, 13
        %v7853 = vpop.permute.xlu0 %7852
        %7854 = vrot.lane.b32.xlu0 %v7812, 13
        %v7855 = vpop.permute.xlu0 %7854
        %7856 = vrot.lane.b32.xlu0 %v7813, 13
        %v7857 = vpop.permute.xlu0 %7856
        %7858 = vrot.lane.b32.xlu0 %v7814, 13
        %v7859 = vpop.permute.xlu0 %7858
        %v7860 = vsel %vm1398, %v7831, %v7833
        %v7861 = vsel %vm1398, %v7833, %v7835
        %v7862 = vsel %vm1398, %v7837, %v7839
        %v7863 = vsel %vm1398, %v7839, %v7841
        %v7864 = vsel %vm1398, %v7843, %v7845
        %v7865 = vsel %vm1398, %v7845, %v7847
        %v7866 = vsel %vm1398, %v7849, %v7851
        %v7867 = vsel %vm1398, %v7851, %v7853
        %v7868 = vsel %vm1398, %v7855, %v7857
        %v7869 = vsel %vm1398, %v7857, %v7859
        %v7880 = vmul.f32 %v1346, %v7860
        %v7881 = vmul.f32 %v1350, %v7861
        %v7882 = vmul.f32 %v1346, %v7862
        %v7883 = vmul.f32 %v1350, %v7863
        %v7884 = vmul.f32 %v1346, %v7864
        %v7885 = vmul.f32 %v1350, %v7865
        %v7886 = vmul.f32 %v1346, %v7866
        %v7887 = vmul.f32 %v1350, %v7867
        %v7888 = vmul.f32 %v1346, %v7868
        %v7889 = vmul.f32 %v1350, %v7869
        %v7890 = vadd.f32 %v7550, %v7880
        %v7891 = vadd.f32 %v7551, %v7881
        %v7892 = vadd.f32 %v7552, %v7882
        %v7893 = vadd.f32 %v7553, %v7883
        %v7894 = vadd.f32 %v7554, %v7884
        %v7895 = vadd.f32 %v7555, %v7885
        %v7896 = vadd.f32 %v7556, %v7886
        %v7897 = vadd.f32 %v7557, %v7887
        %v7898 = vadd.f32 %v7558, %v7888
        %v7899 = vadd.f32 %v7559, %v7889
        %v7900 = vld [vmem:[%s4 + $0xc8] sm:$0xff]
        %v7901 = vld [vmem:[%s4 + $0xd0] sm:$0xff]
        %v7902 = vld [vmem:[%s4 + $0xd8] sm:$0xff]
        %v7903 = vld [vmem:[%s4 + $0xe0] sm:$0xff]
        %v7904 = vld [vmem:[%s4 + $0xe8] sm:$0xff]
        %7906 = vset.pattern.permute.xlu0 0
        %7907 = vperm.xlu0 %7906, %v7900
        %v7908 = vpop.permute.xlu0 %7907
        %7911 = vset.pattern.permute.xlu0 0
        %7912 = vperm.xlu0 %7911, %v7901
        %v7913 = vpop.permute.xlu0 %7912
        %7916 = vset.pattern.permute.xlu0 0
        %7917 = vperm.xlu0 %7916, %v7902
        %v7918 = vpop.permute.xlu0 %7917
        %7921 = vset.pattern.permute.xlu0 0
        %7922 = vperm.xlu0 %7921, %v7903
        %v7923 = vpop.permute.xlu0 %7922
        %7926 = vset.pattern.permute.xlu0 0
        %7927 = vperm.xlu0 %7926, %v7904
        %v7928 = vpop.permute.xlu0 %7927
        %v7930 = vadd.f32 %v7890, %v7908
        %v7931 = vadd.f32 %v7891, %v7908
        %v7932 = vadd.f32 %v7892, %v7913
        %v7933 = vadd.f32 %v7893, %v7913
        %v7934 = vadd.f32 %v7894, %v7918
        %v7935 = vadd.f32 %v7895, %v7918
        %v7936 = vadd.f32 %v7896, %v7923
        %v7937 = vadd.f32 %v7897, %v7923
        %v7938 = vadd.f32 %v7898, %v7928
        %v7939 = vadd.f32 %v7899, %v7928
        %v7940 = vmax.f32 %v7930, 0.0
        %v7941 = vmax.f32 %v7931, 0.0
        %v7942 = vmax.f32 %v7932, 0.0
        %v7943 = vmax.f32 %v7933, 0.0
        %v7944 = vmax.f32 %v7934, 0.0
        %v7945 = vmax.f32 %v7935, 0.0
        %v7946 = vmax.f32 %v7936, 0.0
        %v7947 = vmax.f32 %v7937, 0.0
        %v7948 = vmax.f32 %v7938, 0.0
        %v7949 = vmax.f32 %v7939, 0.0
        %s7950 = scalar_lea.vmem %s5, 240
        %v7951 = vld [vmem:[%s7950] sm:$0xff]
        %v7952 = vld [vmem:[%s7950 + $0x8] sm:$0xff]
        %v7953 = vld [vmem:[%s7950 + $0x10] sm:$0xff]
        %v7954 = vld [vmem:[%s7950 + $0x18] sm:$0xff]
        %v7955 = vld [vmem:[%s7950 + $0x20] sm:$0xff]
        %v7956 = vld [vmem:[%s7950 + $0x28] sm:$0xff]
        %v7958 = vsel %vm1495, %v7951, 0
        %v7961 = vsel %vm1495, %v7952, 0
        %v7964 = vsel %vm1495, %v7953, 0
        %v7967 = vsel %vm1495, %v7954, 0
        %v7970 = vsel %vm1495, %v7955, 0
        %v7973 = vsel %vm1495, %v7956, 0
        %7975 = vmatprep.subr.mxu0 %v7941
        %7976 = vmatpush1.msra.mxu0 %v7940
        %7977 = vmatprep.subr.mxu0 %v7943
        %7978 = vmatpush1.msra.mxu0 %v7942
        %7979 = vmatprep.subr.mxu0 %v7945
        %7980 = vmatpush1.msra.mxu0 %v7944
        %7981 = vmatprep.subr.mxu0 %v7947
        %7982 = vmatpush1.msra.mxu0 %v7946
        %7983 = vmatprep.subr.mxu0 %v7949
        %7984 = vmatpush1.msra.mxu0 %v7948
        %7985 = vmatprep.subr.mxu0 0.0
        %7986 = vmatpush1.msra.mxu0 0.0
        %7987 = vmatprep.subr.mxu0 0.0
        %7988 = vmatpush1.msra.mxu0 0.0
        %7989 = vmatprep.subr.mxu0 0.0
        %7990 = vmatpush1.msra.mxu0 0.0
        %7991 = vmatprep.subr.mxu0 0.0
        %7992 = vmatpush1.msra.mxu0 0.0
        %7993 = vmatprep.subr.mxu0 0.0
        %7994 = vmatpush1.msra.mxu0 0.0
        %7995 = vmatprep.subr.mxu0 0.0
        %7996 = vmatpush1.msra.mxu0 0.0
        %7997 = vmatprep.subr.mxu0 0.0
        %7998 = vmatpush1.msra.mxu0 0.0
        %7999 = vmatprep.subr.mxu0 0.0
        %8000 = vmatpush1.msra.mxu0 0.0
        %8001 = vmatprep.subr.mxu0 0.0
        %8002 = vmatpush1.msra.mxu0 0.0
        %8003 = vmatprep.subr.mxu0 0.0
        %8004 = vmatpush1.msra.mxu0 0.0
        %8005 = vmatprep.subr.mxu0 0.0
        %8006 = vmatpush1.msra.mxu0 0.0
        %8007 = vmatprep.subr.mxu0 0.0
        %8008 = vmatpush1.msra.mxu0 0.0
        %8009 = vmatprep.subr.mxu0 0.0
        %8010 = vmatpush1.msra.mxu0 0.0
        %8011 = vmatprep.subr.mxu0 0.0
        %8012 = vmatpush1.msra.mxu0 0.0
        %8013 = vmatprep.subr.mxu0 0.0
        %8014 = vmatpush1.msra.mxu0 0.0
        %8015 = vmatprep.subr.mxu0 0.0
        %8016 = vmatpush1.msra.mxu0 0.0
        %8017 = vmatprep.subr.mxu0 0.0
        %8018 = vmatpush1.msra.mxu0 0.0
        %8019 = vmatprep.subr.mxu0 0.0
        %8020 = vmatpush1.msra.mxu0 0.0
        %8021 = vmatprep.subr.mxu0 0.0
        %8022 = vmatpush1.msra.mxu0 0.0
        %8023 = vmatprep.subr.mxu0 0.0
        %8024 = vmatpush1.msra.mxu0 0.0
        %8025 = vmatprep.subr.mxu0 0.0
        %8026 = vmatpush1.msra.mxu0 0.0
        %8027 = vmatprep.subr.mxu0 0.0
        %8028 = vmatpush1.msra.mxu0 0.0
        %8029 = vmatprep.subr.mxu0 0.0
        %8030 = vmatpush1.msra.mxu0 0.0
        %8031 = vmatprep.subr.mxu0 0.0
        %8032 = vmatpush1.msra.mxu0 0.0
        %8033 = vmatprep.subr.mxu0 0.0
        %8034 = vmatpush1.msra.mxu0 0.0
        %8035 = vmatprep.subr.mxu0 0.0
        %8036 = vmatpush1.msra.mxu0 0.0
        %8037 = vmatprep.subr.mxu0 0.0
        %8038 = vmatpush1.msra.mxu0 0.0
        %8039 = vmatprep.mubr.f32.mxu0 0.0
        %8040 = vmatmul.mubr.f32.gmra.mrb[0].mxu0 %v7958
        %v8041 = vpop.f32.mrb[0].mxu0
        %v8042 = vadd.f32 0.0, %v8041
        %v8043 = vpop.f32.mrb[0].mxu0
        %v8044 = vadd.f32 0.0, %v8043
        %8045 = vmatprep.mubr.f32.mxu0 0.0
        %8046 = vmatmul.mubr.f32.gmra.mrb[0].mxu0 %v7961
        %v8047 = vpop.f32.mrb[0].mxu0
        %v8048 = vadd.f32 0.0, %v8047
        %v8049 = vpop.f32.mrb[0].mxu0
        %v8050 = vadd.f32 0.0, %v8049
        %8051 = vmatprep.mubr.f32.mxu0 0.0
        %8052 = vmatmul.mubr.f32.gmra.mrb[0].mxu0 %v7964
        %v8053 = vpop.f32.mrb[0].mxu0
        %v8054 = vadd.f32 0.0, %v8053
        %v8055 = vpop.f32.mrb[0].mxu0
        %v8056 = vadd.f32 0.0, %v8055
        %8057 = vmatprep.mubr.f32.mxu0 0.0
        %8058 = vmatmul.mubr.f32.gmra.mrb[0].mxu0 %v7967
        %v8059 = vpop.f32.mrb[0].mxu0
        %v8060 = vadd.f32 0.0, %v8059
        %v8061 = vpop.f32.mrb[0].mxu0
        %v8062 = vadd.f32 0.0, %v8061
        %8063 = vmatprep.mubr.f32.mxu0 0.0
        %8064 = vmatmul.mubr.f32.gmra.mrb[0].mxu0 %v7970
        %v8065 = vpop.f32.mrb[0].mxu0
        %v8066 = vadd.f32 0.0, %v8065
        %v8067 = vpop.f32.mrb[0].mxu0
        %v8068 = vadd.f32 0.0, %v8067
        %8069 = vmatprep.mubr.f32.mxu0 0.0
        %8070 = vmatmul.mubr.f32.gmra.mrb[0].mxu0 %v7973
        %v8071 = vpop.f32.mrb[0].mxu0
        %v8072 = vadd.f32 0.0, %v8071
        %v8073 = vpop.f32.mrb[0].mxu0
        %v8074 = vadd.f32 0.0, %v8073
        %8075 = vdwg.mxu0
        %v8076 = vld [vmem:[%s298] sm:$0xff]
        %v8077 = vld [vmem:[%s298 + $0x8] sm:$0xff]
        %v8078 = vld [vmem:[%s298 + $0x10] sm:$0xff]
        %v8079 = vld [vmem:[%s298 + $0x18] sm:$0xff]
        %v8080 = vld [vmem:[%s298 + $0x20] sm:$0xff]
        %v8081 = vld [vmem:[%s298 + $0x28] sm:$0xff]
        %v8082 = vld [vmem:[%s298 + $0x30] sm:$0xff]
        %v8083 = vld [vmem:[%s298 + $0x38] sm:$0xff]
        %v8084 = vld [vmem:[%s298 + $0x40] sm:$0xff]
        %v8085 = vld [vmem:[%s298 + $0x48] sm:$0xff]
        %v8086 = vld [vmem:[%s298 + $0x50] sm:$0xff]
        %v8087 = vld [vmem:[%s298 + $0x58] sm:$0xff]
        %v8088 = vadd.f32 %v8076, %v8042
        %v8089 = vadd.f32 %v8077, %v8044
        %v8090 = vadd.f32 %v8078, %v8048
        %v8091 = vadd.f32 %v8079, %v8050
        %v8092 = vadd.f32 %v8080, %v8054
        %v8093 = vadd.f32 %v8081, %v8056
        %v8094 = vadd.f32 %v8082, %v8060
        %v8095 = vadd.f32 %v8083, %v8062
        %v8096 = vadd.f32 %v8084, %v8066
        %v8097 = vadd.f32 %v8085, %v8068
        %v8098 = vadd.f32 %v8086, %v8072
        %v8099 = vadd.f32 %v8087, %v8074
        %8100 = vst [vmem:[%s298] sm:$0xff] %v8088
        %8101 = vst.msk [vmem:[%s298 + $0x8] sm:$0xff] %vm419, %v8089
        %8102 = vst [vmem:[%s298 + $0x10] sm:$0xff] %v8090
        %8103 = vst.msk [vmem:[%s298 + $0x18] sm:$0xff] %vm419, %v8091
        %8104 = vst [vmem:[%s298 + $0x20] sm:$0xff] %v8092
        %8105 = vst.msk [vmem:[%s298 + $0x28] sm:$0xff] %vm419, %v8093
        %8106 = vst [vmem:[%s298 + $0x30] sm:$0xff] %v8094
        %8107 = vst.msk [vmem:[%s298 + $0x38] sm:$0xff] %vm419, %v8095
        %8108 = vst [vmem:[%s298 + $0x40] sm:$0xff] %v8096
        %8109 = vst.msk [vmem:[%s298 + $0x48] sm:$0xff] %vm419, %v8097
        %8110 = vst [vmem:[%s298 + $0x50] sm:$0xff] %v8098
        %8111 = vst.msk [vmem:[%s298 + $0x58] sm:$0xff] %vm419, %v8099
        %s8112 = sand.u32 %s203, 1
        %s8113 = scalar_lea.sflag [#allocation4], %s8112
        %s8114 = sand.u32 %s203, 1
        %s8115 = smul.addr %s8114, 96
        %s8116 = scalar_lea.vmem [#allocation3], %s8115
        // Predicated region
        $region53: #{tpu_custom_call.1} parent=51 // pred_check
          %p8117 = pneg %p213
        $region54: #{tpu_custom_call.1} parent=51 // pred_check_branch
          %8119 = sbr.rel (%p8117) target = $region56
        $region55: #{tpu_custom_call.1} parent=51 // pred_region
          %s8121 = ssub.s32 1536, 1536
          %8122 = vsyncadd %s8113, %s8121
          %s8123 = smul.addr %s22, 12
          %s8124 = smul.addr %s8123, 128
          %s8125 = scalar_lea.hbm %s8, %s8124
          %s8126 = sshll.u32 %s8116, 4
          %s8127 = int_to_ptr.vmem [resolvable:$true] %s8126
          %8132 = dma.vmem_to_hbm [thread:$0]  %s8127, 1536, %s8125, %s8113, 256, 256, 16
        $region56: #{tpu_custom_call.1} parent=51 // pred_fallthru
          _
      $region52: #{tpu_custom_call.1} parent=5 // pred_fallthru
        _
      %p8133 = scmp.le.s32.totalorder 2, %s17
      // Predicated region
      $region57: #{tpu_custom_call.1} parent=5 // pred_check
        %p8134 = pneg %p8133
      $region58: #{tpu_custom_call.1} parent=5 // pred_check_branch
        %8136 = sbr.rel (%p8134) target = $region60
      $region59: #{tpu_custom_call.1} parent=5 // pred_region
        %s8137 = ssub.s32 %s17, 2
        // Predicated region
        $region61: #{tpu_custom_call.1} parent=59 // pred_check
          %p8138 = pneg %p219
        $region62: #{tpu_custom_call.1} parent=59 // pred_check_branch
          %8140 = sbr.rel (%p8138) target = $region64
        $region63: #{tpu_custom_call.1} parent=59 // pred_region
          %s8141 = sand.u32 %s204, 1
          %s8142 = scalar_lea.sflag [#allocation4], %s8141
          %s8143 = sand.u32 %s204, 1
          %s8144 = smul.addr %s8143, 96
          %s8145 = scalar_lea.vmem [#allocation3], %s8144
          %8146 = dma.done %s8142, 1536
        $region64: #{tpu_custom_call.1} parent=59 // pred_fallthru
          _
      $region60: #{tpu_custom_call.1} parent=5 // pred_fallthru
        _
    $region6: #{tpu_custom_call.1} parent=1 // loop_footer
      %s21 = sadd.s32 1, %s17
    $region7: #{tpu_custom_call.1} parent=1 // loop_footer_branch
      %16 = sbr.rel target = $region3
    $region8: #{tpu_custom_call.1} parent=1 // loop_exit
      _
    %8147 = vsyncpa [#allocation4], 1
    %s8148 = scalar_lea.sflag [#allocation4], 1
    %8149 = vsyncpa %s8148, 1

</llo_original>
